<compile_context>
chip_gen: v5e
topology: v5e:2x2
jax: 0.10.0
libtpu: 0.0.40
codegen_flags: <defaults>
</compile_context>

<pallas_src>
import functools
import math

import jax
import jax.numpy as jnp
from jax.experimental import pallas as pl
from jax.experimental.pallas import tpu as pltpu

_BN_EPS = 1e-5
_LANE = 128
_SUBLANE = 8
_VMEM_LIMIT = 48 * 1024 * 1024      # fits under v7x's 64 MiB physical VMEM


def _round_up(x, m):
    return (x + m - 1) // m * m


def _cpad(c):
    # pad channel counts up to a multiple of the 128-lane width
    return _round_up(max(c, _LANE), _LANE)


def _pick_k_tile(kp):
    q = kp // _LANE
    for d in (4, 3, 2):
        if q % d == 0:
            return _LANE * d
    return _LANE


def _pick_n_tile(np_):
    q = np_ // _LANE
    return _LANE * (2 if q % 2 == 0 else 1)


# ----------------------------- Pallas kernels ------------------------------

def _mm_bn_kernel(a_ref, b_ref, scale_ref, bias_ref, o_ref, acc_ref, *, relu):
    # tiled (tm, tk) @ (tk, tn) on the MXU; BN affine (+ ReLU) fused at k==last.
    @pl.when(pl.program_id(2) == 0)
    def _():
        acc_ref[...] = jnp.zeros_like(acc_ref)

    acc_ref[...] += jnp.dot(a_ref[...], b_ref[...],
                            preferred_element_type=jnp.float32)

    @pl.when(pl.program_id(2) == pl.num_programs(2) - 1)
    def _():
        r = acc_ref[...] * scale_ref[...] + bias_ref[...]
        if relu:
            r = jnp.maximum(r, 0.0)
        o_ref[...] = r.astype(o_ref.dtype)


def _mm_bn_res_kernel(a_ref, b_ref, scale_ref, bias_ref, res_ref, o_ref,
                      acc_ref, *, relu):
    # same as above plus the residual branch added before the activation.
    @pl.when(pl.program_id(2) == 0)
    def _():
        acc_ref[...] = jnp.zeros_like(acc_ref)

    acc_ref[...] += jnp.dot(a_ref[...], b_ref[...],
                            preferred_element_type=jnp.float32)

    @pl.when(pl.program_id(2) == pl.num_programs(2) - 1)
    def _():
        r = (acc_ref[...] * scale_ref[...] + bias_ref[...]
             + res_ref[...].astype(jnp.float32))
        if relu:
            r = jnp.maximum(r, 0.0)
        o_ref[...] = r.astype(o_ref.dtype)


def _maxpool_kernel(x_ref, o_ref):
    # x_ref: (9, tm, C) -- max-reduce over the 9 window taps on the VPU.
    acc = x_ref[0]
    for i in range(1, x_ref.shape[0]):
        acc = jnp.maximum(acc, x_ref[i])
    o_ref[...] = acc


def _head_kernel(x_ref, w_ref, b_ref, o_ref):
    # x_ref: (N, HW, C) -- adaptive avg-pool to (1,1), then Linear (N padded to 128).
    hw = x_ref.shape[1]
    pooled = jnp.sum(x_ref[...].astype(jnp.float32), axis=1) * (1.0 / hw)
    o_ref[...] = (jnp.dot(pooled, w_ref[...],
                          preferred_element_type=jnp.float32) + b_ref[...])


# ----------------------------- Pallas wrappers ------------------------------

def _matmul_bn(a, b, scale, bias, residual=None, relu=False,
               out_dtype=jnp.bfloat16):
    """(M, K) @ (K, N) with fused BN affine / residual / ReLU, tiled on a
    (M, N, K) grid with an f32 VMEM accumulator.  A/B are cast to bf16."""
    m, k = a.shape
    _, n = b.shape

    kp = _round_up(k, _LANE)
    np_ = _round_up(n, _LANE)
    tm = min(512, _round_up(m, _SUBLANE))
    tk = _pick_k_tile(kp)
    tn = _pick_n_tile(np_)
    mp = _round_up(m, tm)

    a_p = jnp.pad(a, ((0, mp - m), (0, kp - k))).astype(jnp.bfloat16)
    b_p = jnp.pad(b, ((0, kp - k), (0, np_ - n))).astype(jnp.bfloat16)
    scale_p = jnp.pad(scale.reshape(1, n), ((0, 0), (0, np_ - n))).astype(jnp.float32)
    bias_p = jnp.pad(bias.reshape(1, n), ((0, 0), (0, np_ - n))).astype(jnp.float32)

    in_specs = [
        pl.BlockSpec((tm, tk), lambda i, j, kk: (i, kk)),
        pl.BlockSpec((tk, tn), lambda i, j, kk: (kk, j)),
        pl.BlockSpec((1, tn), lambda i, j, kk: (0, j)),
        pl.BlockSpec((1, tn), lambda i, j, kk: (0, j)),
    ]
    args = [a_p, b_p, scale_p, bias_p]
    if residual is None:
        kernel = functools.partial(_mm_bn_kernel, relu=relu)
    else:
        res_p = jnp.pad(residual, ((0, mp - m), (0, np_ - n))).astype(jnp.bfloat16)
        in_specs.append(pl.BlockSpec((tm, tn), lambda i, j, kk: (i, j)))
        args.append(res_p)
        kernel = functools.partial(_mm_bn_res_kernel, relu=relu)

    grid = (mp // tm, np_ // tn, kp // tk)
    cost = pl.CostEstimate(
        flops=2 * mp * kp * np_,
        transcendentals=0,
        bytes_accessed=2 * (mp * kp + kp * np_ + 2 * mp * np_),
    )

    out = pl.pallas_call(
        kernel,
        out_shape=jax.ShapeDtypeStruct((mp, np_), out_dtype),
        grid_spec=pltpu.PrefetchScalarGridSpec(
            num_scalar_prefetch=0,
            grid=grid,
            in_specs=in_specs,
            out_specs=pl.BlockSpec((tm, tn), lambda i, j, kk: (i, j)),
            scratch_shapes=[pltpu.VMEM((tm, tn), jnp.float32)],
        ),
        compiler_params=pltpu.CompilerParams(
            dimension_semantics=("parallel", "parallel", "arbitrary"),
            vmem_limit_bytes=_VMEM_LIMIT,
        ),
        cost_estimate=cost,
    )(*args)
    return out[:m, :n]


def conv_bn(x, w, bn, stride, pad, relu=False, residual=None):
    """Conv2d(bias=False) + folded BatchNorm2d (+ residual) (+ ReLU), NHWC.

    The output channel axis is zero-padded to a multiple of 128 (lane-dense);
    padded channels carry exact zeros so downstream math is unaffected."""
    x = x.astype(jnp.bfloat16)
    n, h, wdt, cin_x = x.shape
    kh, kw, cin_w, cout = w.shape
    cout_p = _cpad(cout)

    ho = (h + 2 * pad - kh) // stride + 1
    wo = (wdt + 2 * pad - kw) // stride + 1

    # fold BN (running statistics) into a per-channel affine, zero-pad channels
    inv_std = 1.0 / jnp.sqrt(bn["var"] + _BN_EPS)
    scale = jnp.pad(bn["gamma"] * inv_std, (0, cout_p - cout))
    bias = jnp.pad(bn["beta"] - bn["mean"] * bn["gamma"] * inv_std,
                   (0, cout_p - cout))

    # zero-pad the weight to the channel-padded input / lane-padded output
    w_p = jnp.pad(w, ((0, 0), (0, 0), (0, cin_x - cin_w), (0, cout_p - cout)))
    b2d = w_p.reshape(kh * kw * cin_x, cout_p)

    # im2col (pure-JAX layout glue, bf16).
    # TODO(synk): read the kh*kw taps directly inside the kernel (tap as a K
    # grid axis over strided windows) to avoid materializing the im2col matrix.
    xp = jnp.pad(x, ((0, 0), (pad, pad), (pad, pad), (0, 0)))
    cols = [xp[:, di:di + stride * ho:stride, dj:dj + stride * wo:stride, :]
            for di in range(kh) for dj in range(kw)]
    a = jnp.concatenate(cols, axis=-1).reshape(n * ho * wo, kh * kw * cin_x)

    res = None
    if residual is not None:
        res = residual.reshape(n * ho * wo, cout_p)

    out = _matmul_bn(a, b2d, scale, bias, residual=res, relu=relu,
                     out_dtype=jnp.bfloat16)
    return out.reshape(n, ho, wo, cout_p)


def maxpool_3x3_s2_p1(x):
    """MaxPool2d(kernel_size=3, stride=2, padding=1), NHWC, grid-tiled."""
    n, h, w, c = x.shape
    ho = (h + 2 - 3) // 2 + 1
    wo = (w + 2 - 3) // 2 + 1
    xp = jnp.pad(x, ((0, 0), (1, 1), (1, 1), (0, 0)),
                 constant_values=-jnp.inf)
    views = [xp[:, di:di + 2 * ho:2, dj:dj + 2 * wo:2, :]
             for di in range(3) for dj in range(3)]
    stacked = jnp.stack(views, axis=0).reshape(9, n * ho * wo, c)

    m = n * ho * wo
    tm = min(512, _round_up(m, _SUBLANE))
    mp = _round_up(m, tm)
    stacked = jnp.pad(stacked, ((0, 0), (0, mp - m), (0, 0)))

    out = pl.pallas_call(
        _maxpool_kernel,
        out_shape=jax.ShapeDtypeStruct((mp, c), x.dtype),
        grid=(mp // tm,),
        in_specs=[pl.BlockSpec((9, tm, c), lambda i: (0, i, 0))],
        out_specs=pl.BlockSpec((tm, c), lambda i: (i, 0)),
        compiler_params=pltpu.CompilerParams(
            dimension_semantics=("parallel",),
            vmem_limit_bytes=_VMEM_LIMIT,
        ),
    )(stacked)
    return out[:m].reshape(n, ho, wo, c)


def avgpool_fc(x, fc_w, fc_b):
    """AdaptiveAvgPool2d((1,1)) + flatten + Linear (classes padded to 128)."""
    n, h, w, c = x.shape
    num_classes = fc_w.shape[1]
    ncp = _round_up(num_classes, _LANE)
    x2 = x.reshape(n, h * w, c)
    w_p = jnp.pad(fc_w, ((0, 0), (0, ncp - num_classes))).astype(jnp.float32)
    b_p = jnp.pad(fc_b, ((0, 0), (0, ncp - num_classes))).astype(jnp.float32)

    out = pl.pallas_call(
        _head_kernel,
        out_shape=jax.ShapeDtypeStruct((n, ncp), jnp.float32),
        in_specs=[pl.BlockSpec(memory_space=pltpu.MemorySpace.VMEM)] * 3,
        out_specs=pl.BlockSpec(memory_space=pltpu.MemorySpace.VMEM),
        compiler_params=pltpu.CompilerParams(vmem_limit_bytes=_VMEM_LIMIT),
    )(x2, w_p, b_p)
    return out[:, :num_classes]


# ----------------------------- parameters -----------------------------------

def _init_conv(key, kh, kw, cin, cout):
    # kaiming_normal_(mode='fan_out', nonlinearity='relu'): std = sqrt(2/fan_out)
    fan_out = kh * kw * cout
    std = math.sqrt(2.0 / fan_out)
    return std * jax.random.normal(key, (kh, kw, cin, cout), jnp.float32)


def _init_bn(c):
    return {"gamma": jnp.ones((c,), jnp.float32),
            "beta": jnp.zeros((c,), jnp.float32),
            "mean": jnp.zeros((c,), jnp.float32),
            "var": jnp.ones((c,), jnp.float32)}


def build_resnet_params(key, blocks_num=(1, 1, 1, 1), num_classes=5):
    keys = list(jax.random.split(key, 128))
    kit = iter(keys)
    params = {"conv1_w": _init_conv(next(kit), 7, 7, 3, 64),
              "bn1": _init_bn(64)}

    in_ch = 64
    layers = []
    for ch, nb, stride0 in zip((64, 128, 256, 512), blocks_num, (1, 2, 2, 2)):
        blocks = []
        for bi in range(nb):
            s = stride0 if bi == 0 else 1
            blk = {"w1": _init_conv(next(kit), 3, 3, in_ch, ch),
                   "bn1": _init_bn(ch),
                   "w2": _init_conv(next(kit), 3, 3, ch, ch),
                   "bn2": _init_bn(ch)}
            if s != 1 or in_ch != ch:          # BasicBlock expansion = 1
                blk["ds_w"] = _init_conv(next(kit), 1, 1, in_ch, ch)
                blk["ds_bn"] = _init_bn(ch)
            in_ch = ch
            blocks.append(blk)
        layers.append(blocks)
    params["layers"] = layers

    bound = 1.0 / math.sqrt(512)
    params["fc_w"] = jax.random.uniform(next(kit), (512, num_classes),
                                        jnp.float32, -bound, bound)
    params["fc_b"] = jax.random.uniform(next(kit), (1, num_classes),
                                        jnp.float32, -bound, bound)
    return params


# ----------------------------- forward pass ---------------------------------

def basic_block(x, p, stride):
    identity = x
    if "ds_w" in p:
        identity = conv_bn(x, p["ds_w"], p["ds_bn"], stride=stride, pad=0,
                           relu=False)
    out = conv_bn(x, p["w1"], p["bn1"], stride=stride, pad=1, relu=True)
    out = conv_bn(out, p["w2"], p["bn2"], stride=1, pad=1, relu=True,
                  residual=identity)
    return out


def resnet_forward(x_nchw, params):
    # external layout: NCHW (PyTorch); internal: NHWC bf16, lane-padded channels.
    x = jnp.transpose(x_nchw, (0, 2, 3, 1)).astype(jnp.float32)
    x = conv_bn(x, params["conv1_w"], params["bn1"], stride=2, pad=3, relu=True)
    x = maxpool_3x3_s2_p1(x)
    for blocks, stride0 in zip(params["layers"], (1, 2, 2, 2)):
        for bi, blk in enumerate(blocks):
            x = basic_block(x, blk, stride=(stride0 if bi == 0 else 1))
    return avgpool_fc(x, params["fc_w"], params["fc_b"])


# --------------------------------- main --------------------------------------

if __name__ == "__main__":
    key = jax.random.PRNGKey(0)
    k_in, k_par = jax.random.split(key)
    x = jax.random.normal(k_in, (2, 3, 16, 16), jnp.float32)   # NCHW input
    params = build_resnet_params(k_par, blocks_num=(1, 1, 1, 1), num_classes=5)

    fwd = jax.jit(resnet_forward)
    out = jax.block_until_ready(fwd(x, params))
    assert out.shape == (2, 5), out.shape
    assert bool(jnp.all(jnp.isfinite(out)))
    print("KERNEL_OK")
</pallas_src>

<mosaic_0001>
module attributes {stable_mosaic.version = 11 : i64} {
  func.func @_mm_bn_kernel(%arg0: i32, %arg1: i32, %arg2: i32, %arg3: memref<128x256xbf16, #tpu.memory_space<vmem>>, %arg4: memref<256x128xbf16, #tpu.memory_space<vmem>>, %arg5: memref<1x128xf32, #tpu.memory_space<vmem>>, %arg6: memref<1x128xf32, #tpu.memory_space<vmem>>, %arg7: memref<128x128xbf16, #tpu.memory_space<vmem>>, %arg8: memref<128x128xf32, #tpu.memory_space<vmem>>) attributes {dimension_semantics = [#tpu.dimension_semantics<parallel>, #tpu.dimension_semantics<parallel>, #tpu.dimension_semantics<arbitrary>], iteration_bounds = array<i64: 1, 1, 1>, scalar_prefetch = 0 : i64, scratch_operands = 1 : i64, tpu.core_type = #tpu.core_type<tc>, window_params = [{transform_indices = @transform_0, window_bounds = array<i64: 128, 256>}, {transform_indices = @transform_1, window_bounds = array<i64: 256, 128>}, {transform_indices = @transform_2, window_bounds = array<i64: 1, 128>}, {transform_indices = @transform_3, window_bounds = array<i64: 1, 128>}, {transform_indices = @transform_4, window_bounds = array<i64: 128, 128>}]} {
    %c0_i32 = arith.constant 0 : i32
    %0 = arith.cmpi eq, %arg2, %c0_i32 : i32
    %1 = arith.extui %0 : i1 to i32
    %c0_i32_0 = arith.constant 0 : i32
    %2 = arith.cmpi ne, %1, %c0_i32_0 : i32
    scf.if %2 {
      %cst_10 = arith.constant 0.000000e+00 : f32
      %12 = vector.broadcast %cst_10 : f32 to vector<128x128xf32>
      %c0_11 = arith.constant 0 : index
      %c0_12 = arith.constant 0 : index
      %13 = vector.load %arg8[%c0_11, %c0_12] : memref<128x128xf32, #tpu.memory_space<vmem>>, vector<128x128xf32>
      tpu.vector_store %arg8[%c0_11, %c0_12], %12 {strides = array<i32>} : memref<128x128xf32, #tpu.memory_space<vmem>>, vector<128x128xf32>,
    } else {
    }
    %c0 = arith.constant 0 : index
    %c0_1 = arith.constant 0 : index
    %3 = vector.load %arg8[%c0, %c0_1] : memref<128x128xf32, #tpu.memory_space<vmem>>, vector<128x128xf32>
    %c0_2 = arith.constant 0 : index
    %c0_3 = arith.constant 0 : index
    %4 = vector.load %arg3[%c0_2, %c0_3] : memref<128x256xbf16, #tpu.memory_space<vmem>>, vector<128x256xbf16>
    %c0_4 = arith.constant 0 : index
    %c0_5 = arith.constant 0 : index
    %5 = vector.load %arg4[%c0_4, %c0_5] : memref<256x128xbf16, #tpu.memory_space<vmem>>, vector<256x128xbf16>
    %cst = arith.constant dense<0.000000e+00> : vector<128x128xf32>
    %6 = tpu.matmul %4, %5, %cst {dimension_numbers = #tpu.dot_dimension_numbers<[1], [0], [0], [1], [0, 0, 1, 1], [], []>} : vector<128x256xbf16>, vector<256x128xbf16>, vector<128x128xf32> -> vector<128x128xf32>
    %7 = arith.addf %3, %6 : vector<128x128xf32>
    %c0_6 = arith.constant 0 : index
    %c0_7 = arith.constant 0 : index
    %8 = vector.load %arg8[%c0_6, %c0_7] : memref<128x128xf32, #tpu.memory_space<vmem>>, vector<128x128xf32>
    tpu.vector_store %arg8[%c0_6, %c0_7], %7 {strides = array<i32>} : memref<128x128xf32, #tpu.memory_space<vmem>>, vector<128x128xf32>,
    %c0_i32_8 = arith.constant 0 : i32
    %9 = arith.cmpi eq, %arg2, %c0_i32_8 : i32
    %10 = arith.extui %9 : i1 to i32
    %c0_i32_9 = arith.constant 0 : i32
    %11 = arith.cmpi ne, %10, %c0_i32_9 : i32
    scf.if %11 {
      %c0_10 = arith.constant 0 : index
      %c0_11 = arith.constant 0 : index
      %12 = vector.load %arg8[%c0_10, %c0_11] : memref<128x128xf32, #tpu.memory_space<vmem>>, vector<128x128xf32>
      %c0_12 = arith.constant 0 : index
      %c0_13 = arith.constant 0 : index
      %13 = vector.load %arg5[%c0_12, %c0_13] : memref<1x128xf32, #tpu.memory_space<vmem>>, vector<1x128xf32>
      %14 = vector.broadcast %13 : vector<1x128xf32> to vector<128x128xf32>
      %15 = arith.mulf %12, %14 : vector<128x128xf32>
      %c0_14 = arith.constant 0 : index
      %c0_15 = arith.constant 0 : index
      %16 = vector.load %arg6[%c0_14, %c0_15] : memref<1x128xf32, #tpu.memory_space<vmem>>, vector<1x128xf32>
      %17 = vector.broadcast %16 : vector<1x128xf32> to vector<128x128xf32>
      %18 = arith.addf %15, %17 : vector<128x128xf32>
      %cst_16 = arith.constant 0.000000e+00 : f32
      %19 = vector.broadcast %cst_16 : f32 to vector<128x128xf32>
      %20 = arith.maximumf %18, %19 : vector<128x128xf32>
      %21 = arith.truncf %20 : vector<128x128xf32> to vector<128x128xbf16>
      %c0_17 = arith.constant 0 : index
      %c0_18 = arith.constant 0 : index
      %22 = vector.load %arg7[%c0_17, %c0_18] : memref<128x128xbf16, #tpu.memory_space<vmem>>, vector<128x128xbf16>
      tpu.vector_store %arg7[%c0_17, %c0_18], %21 {strides = array<i32>} : memref<128x128xbf16, #tpu.memory_space<vmem>>, vector<128x128xbf16>,
    } else {
    }
    return
  }
  func.func @transform_0(%arg0: i32, %arg1: i32, %arg2: i32) -> (i32, i32) {
    %c0_i32 = arith.constant 0 : i32
    return %arg0, %arg2 : i32, i32
  }
  func.func @transform_1(%arg0: i32, %arg1: i32, %arg2: i32) -> (i32, i32) {
    %c0_i32 = arith.constant 0 : i32
    return %arg2, %arg1 : i32, i32
  }
  func.func @transform_2(%arg0: i32, %arg1: i32, %arg2: i32) -> (i32, i32) {
    %c0_i32 = arith.constant 0 : i32
    %c0_i32_0 = arith.constant 0 : i32
    return %c0_i32, %arg1 : i32, i32
  }
  func.func @transform_3(%arg0: i32, %arg1: i32, %arg2: i32) -> (i32, i32) {
    %c0_i32 = arith.constant 0 : i32
    %c0_i32_0 = arith.constant 0 : i32
    return %c0_i32, %arg1 : i32, i32
  }
  func.func @transform_4(%arg0: i32, %arg1: i32, %arg2: i32) -> (i32, i32) {
    %c0_i32 = arith.constant 0 : i32
    return %arg0, %arg1 : i32, i32
  }
}

module attributes {stable_mosaic.version = 11 : i64} {
  func.func @_maxpool_kernel(%arg0: i32, %arg1: memref<9x32x128xbf16, #tpu.memory_space<vmem>>, %arg2: memref<32x128xbf16, #tpu.memory_space<vmem>>) attributes {dimension_semantics = [#tpu.dimension_semantics<parallel>], iteration_bounds = array<i64: 1>, scalar_prefetch = 0 : i64, scratch_operands = 0 : i64, tpu.core_type = #tpu.core_type<tc>, window_params = [{transform_indices = @transform_0, window_bounds = array<i64: 9, 32, 128>}, {transform_indices = @transform_1, window_bounds = array<i64: 32, 128>}]} {
    %c0 = arith.constant 0 : index
    %c0_0 = arith.constant 0 : index
    %c0_1 = arith.constant 0 : index
    %0 = vector.load %arg1[%c0, %c0_0, %c0_1] : memref<9x32x128xbf16, #tpu.memory_space<vmem>>, vector<1x32x128xbf16>
    %1 = vector.shape_cast %0 : vector<1x32x128xbf16> to vector<32x128xbf16>
    %c1 = arith.constant 1 : index
    %c0_2 = arith.constant 0 : index
    %c0_3 = arith.constant 0 : index
    %2 = vector.load %arg1[%c1, %c0_2, %c0_3] : memref<9x32x128xbf16, #tpu.memory_space<vmem>>, vector<1x32x128xbf16>
    %3 = vector.shape_cast %2 : vector<1x32x128xbf16> to vector<32x128xbf16>
    %4 = arith.maximumf %1, %3 : vector<32x128xbf16>
    %c2 = arith.constant 2 : index
    %c0_4 = arith.constant 0 : index
    %c0_5 = arith.constant 0 : index
    %5 = vector.load %arg1[%c2, %c0_4, %c0_5] : memref<9x32x128xbf16, #tpu.memory_space<vmem>>, vector<1x32x128xbf16>
    %6 = vector.shape_cast %5 : vector<1x32x128xbf16> to vector<32x128xbf16>
    %7 = arith.maximumf %4, %6 : vector<32x128xbf16>
    %c3 = arith.constant 3 : index
    %c0_6 = arith.constant 0 : index
    %c0_7 = arith.constant 0 : index
    %8 = vector.load %arg1[%c3, %c0_6, %c0_7] : memref<9x32x128xbf16, #tpu.memory_space<vmem>>, vector<1x32x128xbf16>
    %9 = vector.shape_cast %8 : vector<1x32x128xbf16> to vector<32x128xbf16>
    %10 = arith.maximumf %7, %9 : vector<32x128xbf16>
    %c4 = arith.constant 4 : index
    %c0_8 = arith.constant 0 : index
    %c0_9 = arith.constant 0 : index
    %11 = vector.load %arg1[%c4, %c0_8, %c0_9] : memref<9x32x128xbf16, #tpu.memory_space<vmem>>, vector<1x32x128xbf16>
    %12 = vector.shape_cast %11 : vector<1x32x128xbf16> to vector<32x128xbf16>
    %13 = arith.maximumf %10, %12 : vector<32x128xbf16>
    %c5 = arith.constant 5 : index
    %c0_10 = arith.constant 0 : index
    %c0_11 = arith.constant 0 : index
    %14 = vector.load %arg1[%c5, %c0_10, %c0_11] : memref<9x32x128xbf16, #tpu.memory_space<vmem>>, vector<1x32x128xbf16>
    %15 = vector.shape_cast %14 : vector<1x32x128xbf16> to vector<32x128xbf16>
    %16 = arith.maximumf %13, %15 : vector<32x128xbf16>
    %c6 = arith.constant 6 : index
    %c0_12 = arith.constant 0 : index
    %c0_13 = arith.constant 0 : index
    %17 = vector.load %arg1[%c6, %c0_12, %c0_13] : memref<9x32x128xbf16, #tpu.memory_space<vmem>>, vector<1x32x128xbf16>
    %18 = vector.shape_cast %17 : vector<1x32x128xbf16> to vector<32x128xbf16>
    %19 = arith.maximumf %16, %18 : vector<32x128xbf16>
    %c7 = arith.constant 7 : index
    %c0_14 = arith.constant 0 : index
    %c0_15 = arith.constant 0 : index
    %20 = vector.load %arg1[%c7, %c0_14, %c0_15] : memref<9x32x128xbf16, #tpu.memory_space<vmem>>, vector<1x32x128xbf16>
    %21 = vector.shape_cast %20 : vector<1x32x128xbf16> to vector<32x128xbf16>
    %22 = arith.maximumf %19, %21 : vector<32x128xbf16>
    %c8 = arith.constant 8 : index
    %c0_16 = arith.constant 0 : index
    %c0_17 = arith.constant 0 : index
    %23 = vector.load %arg1[%c8, %c0_16, %c0_17] : memref<9x32x128xbf16, #tpu.memory_space<vmem>>, vector<1x32x128xbf16>
    %24 = vector.shape_cast %23 : vector<1x32x128xbf16> to vector<32x128xbf16>
    %25 = arith.maximumf %22, %24 : vector<32x128xbf16>
    %c0_18 = arith.constant 0 : index
    %c0_19 = arith.constant 0 : index
    %26 = vector.load %arg2[%c0_18, %c0_19] : memref<32x128xbf16, #tpu.memory_space<vmem>>, vector<32x128xbf16>
    tpu.vector_store %arg2[%c0_18, %c0_19], %25 {strides = array<i32>} : memref<32x128xbf16, #tpu.memory_space<vmem>>, vector<32x128xbf16>,
    return
  }
  func.func @transform_0(%arg0: i32) -> (i32, i32, i32) {
    %c0_i32 = arith.constant 0 : i32
    %c0_i32_0 = arith.constant 0 : i32
    %c0_i32_1 = arith.constant 0 : i32
    return %c0_i32, %arg0, %c0_i32_0 : i32, i32, i32
  }
  func.func @transform_1(%arg0: i32) -> (i32, i32) {
    %c0_i32 = arith.constant 0 : i32
    %c0_i32_0 = arith.constant 0 : i32
    return %arg0, %c0_i32 : i32, i32
  }
}

module attributes {stable_mosaic.version = 11 : i64} {
  func.func @_mm_bn_kernel(%arg0: i32, %arg1: i32, %arg2: i32, %arg3: memref<32x384xbf16, #tpu.memory_space<vmem>>, %arg4: memref<384x128xbf16, #tpu.memory_space<vmem>>, %arg5: memref<1x128xf32, #tpu.memory_space<vmem>>, %arg6: memref<1x128xf32, #tpu.memory_space<vmem>>, %arg7: memref<32x128xbf16, #tpu.memory_space<vmem>>, %arg8: memref<32x128xf32, #tpu.memory_space<vmem>>) attributes {dimension_semantics = [#tpu.dimension_semantics<parallel>, #tpu.dimension_semantics<parallel>, #tpu.dimension_semantics<arbitrary>], iteration_bounds = array<i64: 1, 1, 3>, scalar_prefetch = 0 : i64, scratch_operands = 1 : i64, tpu.core_type = #tpu.core_type<tc>, window_params = [{transform_indices = @transform_0, window_bounds = array<i64: 32, 384>}, {transform_indices = @transform_1, window_bounds = array<i64: 384, 128>}, {transform_indices = @transform_2, window_bounds = array<i64: 1, 128>}, {transform_indices = @transform_3, window_bounds = array<i64: 1, 128>}, {transform_indices = @transform_4, window_bounds = array<i64: 32, 128>}]} {
    %c0_i32 = arith.constant 0 : i32
    %0 = arith.cmpi eq, %arg2, %c0_i32 : i32
    %1 = arith.extui %0 : i1 to i32
    %c0_i32_0 = arith.constant 0 : i32
    %2 = arith.cmpi ne, %1, %c0_i32_0 : i32
    scf.if %2 {
      %cst_9 = arith.constant 0.000000e+00 : f32
      %12 = vector.broadcast %cst_9 : f32 to vector<32x128xf32>
      %c0_10 = arith.constant 0 : index
      %c0_11 = arith.constant 0 : index
      %13 = vector.load %arg8[%c0_10, %c0_11] : memref<32x128xf32, #tpu.memory_space<vmem>>, vector<32x128xf32>
      tpu.vector_store %arg8[%c0_10, %c0_11], %12 {strides = array<i32>} : memref<32x128xf32, #tpu.memory_space<vmem>>, vector<32x128xf32>,
    } else {
    }
    %c0 = arith.constant 0 : index
    %c0_1 = arith.constant 0 : index
    %3 = vector.load %arg8[%c0, %c0_1] : memref<32x128xf32, #tpu.memory_space<vmem>>, vector<32x128xf32>
    %c0_2 = arith.constant 0 : index
    %c0_3 = arith.constant 0 : index
    %4 = vector.load %arg3[%c0_2, %c0_3] : memref<32x384xbf16, #tpu.memory_space<vmem>>, vector<32x384xbf16>
    %c0_4 = arith.constant 0 : index
    %c0_5 = arith.constant 0 : index
    %5 = vector.load %arg4[%c0_4, %c0_5] : memref<384x128xbf16, #tpu.memory_space<vmem>>, vector<384x128xbf16>
    %cst = arith.constant dense<0.000000e+00> : vector<32x128xf32>
    %6 = tpu.matmul %4, %5, %cst {dimension_numbers = #tpu.dot_dimension_numbers<[1], [0], [0], [1], [0, 0, 1, 1], [], []>} : vector<32x384xbf16>, vector<384x128xbf16>, vector<32x128xf32> -> vector<32x128xf32>
    %7 = arith.addf %3, %6 : vector<32x128xf32>
    %c0_6 = arith.constant 0 : index
    %c0_7 = arith.constant 0 : index
    %8 = vector.load %arg8[%c0_6, %c0_7] : memref<32x128xf32, #tpu.memory_space<vmem>>, vector<32x128xf32>
    tpu.vector_store %arg8[%c0_6, %c0_7], %7 {strides = array<i32>} : memref<32x128xf32, #tpu.memory_space<vmem>>, vector<32x128xf32>,
    %c2_i32 = arith.constant 2 : i32
    %9 = arith.cmpi eq, %arg2, %c2_i32 : i32
    %10 = arith.extui %9 : i1 to i32
    %c0_i32_8 = arith.constant 0 : i32
    %11 = arith.cmpi ne, %10, %c0_i32_8 : i32
    scf.if %11 {
      %c0_9 = arith.constant 0 : index
      %c0_10 = arith.constant 0 : index
      %12 = vector.load %arg8[%c0_9, %c0_10] : memref<32x128xf32, #tpu.memory_space<vmem>>, vector<32x128xf32>
      %c0_11 = arith.constant 0 : index
      %c0_12 = arith.constant 0 : index
      %13 = vector.load %arg5[%c0_11, %c0_12] : memref<1x128xf32, #tpu.memory_space<vmem>>, vector<1x128xf32>
      %14 = vector.broadcast %13 : vector<1x128xf32> to vector<32x128xf32>
      %15 = arith.mulf %12, %14 : vector<32x128xf32>
      %c0_13 = arith.constant 0 : index
      %c0_14 = arith.constant 0 : index
      %16 = vector.load %arg6[%c0_13, %c0_14] : memref<1x128xf32, #tpu.memory_space<vmem>>, vector<1x128xf32>
      %17 = vector.broadcast %16 : vector<1x128xf32> to vector<32x128xf32>
      %18 = arith.addf %15, %17 : vector<32x128xf32>
      %cst_15 = arith.constant 0.000000e+00 : f32
      %19 = vector.broadcast %cst_15 : f32 to vector<32x128xf32>
      %20 = arith.maximumf %18, %19 : vector<32x128xf32>
      %21 = arith.truncf %20 : vector<32x128xf32> to vector<32x128xbf16>
      %c0_16 = arith.constant 0 : index
      %c0_17 = arith.constant 0 : index
      %22 = vector.load %arg7[%c0_16, %c0_17] : memref<32x128xbf16, #tpu.memory_space<vmem>>, vector<32x128xbf16>
      tpu.vector_store %arg7[%c0_16, %c0_17], %21 {strides = array<i32>} : memref<32x128xbf16, #tpu.memory_space<vmem>>, vector<32x128xbf16>,
    } else {
    }
    return
  }
  func.func @transform_0(%arg0: i32, %arg1: i32, %arg2: i32) -> (i32, i32) {
    %c0_i32 = arith.constant 0 : i32
    return %arg0, %arg2 : i32, i32
  }
  func.func @transform_1(%arg0: i32, %arg1: i32, %arg2: i32) -> (i32, i32) {
    %c0_i32 = arith.constant 0 : i32
    return %arg2, %arg1 : i32, i32
  }
  func.func @transform_2(%arg0: i32, %arg1: i32, %arg2: i32) -> (i32, i32) {
    %c0_i32 = arith.constant 0 : i32
    %c0_i32_0 = arith.constant 0 : i32
    return %c0_i32, %arg1 : i32, i32
  }
  func.func @transform_3(%arg0: i32, %arg1: i32, %arg2: i32) -> (i32, i32) {
    %c0_i32 = arith.constant 0 : i32
    %c0_i32_0 = arith.constant 0 : i32
    return %c0_i32, %arg1 : i32, i32
  }
  func.func @transform_4(%arg0: i32, %arg1: i32, %arg2: i32) -> (i32, i32) {
    %c0_i32 = arith.constant 0 : i32
    return %arg0, %arg1 : i32, i32
  }
}

module attributes {stable_mosaic.version = 11 : i64} {
  func.func @_mm_bn_res_kernel(%arg0: i32, %arg1: i32, %arg2: i32, %arg3: memref<32x384xbf16, #tpu.memory_space<vmem>>, %arg4: memref<384x128xbf16, #tpu.memory_space<vmem>>, %arg5: memref<1x128xf32, #tpu.memory_space<vmem>>, %arg6: memref<1x128xf32, #tpu.memory_space<vmem>>, %arg7: memref<32x128xbf16, #tpu.memory_space<vmem>>, %arg8: memref<32x128xbf16, #tpu.memory_space<vmem>>, %arg9: memref<32x128xf32, #tpu.memory_space<vmem>>) attributes {dimension_semantics = [#tpu.dimension_semantics<parallel>, #tpu.dimension_semantics<parallel>, #tpu.dimension_semantics<arbitrary>], iteration_bounds = array<i64: 1, 1, 3>, scalar_prefetch = 0 : i64, scratch_operands = 1 : i64, tpu.core_type = #tpu.core_type<tc>, window_params = [{transform_indices = @transform_0, window_bounds = array<i64: 32, 384>}, {transform_indices = @transform_1, window_bounds = array<i64: 384, 128>}, {transform_indices = @transform_2, window_bounds = array<i64: 1, 128>}, {transform_indices = @transform_3, window_bounds = array<i64: 1, 128>}, {transform_indices = @transform_4, window_bounds = array<i64: 32, 128>}, {transform_indices = @transform_5, window_bounds = array<i64: 32, 128>}]} {
    %c0_i32 = arith.constant 0 : i32
    %0 = arith.cmpi eq, %arg2, %c0_i32 : i32
    %1 = arith.extui %0 : i1 to i32
    %c0_i32_0 = arith.constant 0 : i32
    %2 = arith.cmpi ne, %1, %c0_i32_0 : i32
    scf.if %2 {
      %cst_9 = arith.constant 0.000000e+00 : f32
      %12 = vector.broadcast %cst_9 : f32 to vector<32x128xf32>
      %c0_10 = arith.constant 0 : index
      %c0_11 = arith.constant 0 : index
      %13 = vector.load %arg9[%c0_10, %c0_11] : memref<32x128xf32, #tpu.memory_space<vmem>>, vector<32x128xf32>
      tpu.vector_store %arg9[%c0_10, %c0_11], %12 {strides = array<i32>} : memref<32x128xf32, #tpu.memory_space<vmem>>, vector<32x128xf32>,
    } else {
    }
    %c0 = arith.constant 0 : index
    %c0_1 = arith.constant 0 : index
    %3 = vector.load %arg9[%c0, %c0_1] : memref<32x128xf32, #tpu.memory_space<vmem>>, vector<32x128xf32>
    %c0_2 = arith.constant 0 : index
    %c0_3 = arith.constant 0 : index
    %4 = vector.load %arg3[%c0_2, %c0_3] : memref<32x384xbf16, #tpu.memory_space<vmem>>, vector<32x384xbf16>
    %c0_4 = arith.constant 0 : index
    %c0_5 = arith.constant 0 : index
    %5 = vector.load %arg4[%c0_4, %c0_5] : memref<384x128xbf16, #tpu.memory_space<vmem>>, vector<384x128xbf16>
    %cst = arith.constant dense<0.000000e+00> : vector<32x128xf32>
    %6 = tpu.matmul %4, %5, %cst {dimension_numbers = #tpu.dot_dimension_numbers<[1], [0], [0], [1], [0, 0, 1, 1], [], []>} : vector<32x384xbf16>, vector<384x128xbf16>, vector<32x128xf32> -> vector<32x128xf32>
    %7 = arith.addf %3, %6 : vector<32x128xf32>
    %c0_6 = arith.constant 0 : index
    %c0_7 = arith.constant 0 : index
    %8 = vector.load %arg9[%c0_6, %c0_7] : memref<32x128xf32, #tpu.memory_space<vmem>>, vector<32x128xf32>
    tpu.vector_store %arg9[%c0_6, %c0_7], %7 {strides = array<i32>} : memref<32x128xf32, #tpu.memory_space<vmem>>, vector<32x128xf32>,
    %c2_i32 = arith.constant 2 : i32
    %9 = arith.cmpi eq, %arg2, %c2_i32 : i32
    %10 = arith.extui %9 : i1 to i32
    %c0_i32_8 = arith.constant 0 : i32
    %11 = arith.cmpi ne, %10, %c0_i32_8 : i32
    scf.if %11 {
      %c0_9 = arith.constant 0 : index
      %c0_10 = arith.constant 0 : index
      %12 = vector.load %arg9[%c0_9, %c0_10] : memref<32x128xf32, #tpu.memory_space<vmem>>, vector<32x128xf32>
      %c0_11 = arith.constant 0 : index
      %c0_12 = arith.constant 0 : index
      %13 = vector.load %arg5[%c0_11, %c0_12] : memref<1x128xf32, #tpu.memory_space<vmem>>, vector<1x128xf32>
      %14 = vector.broadcast %13 : vector<1x128xf32> to vector<32x128xf32>
      %15 = arith.mulf %12, %14 : vector<32x128xf32>
      %c0_13 = arith.constant 0 : index
      %c0_14 = arith.constant 0 : index
      %16 = vector.load %arg6[%c0_13, %c0_14] : memref<1x128xf32, #tpu.memory_space<vmem>>, vector<1x128xf32>
      %17 = vector.broadcast %16 : vector<1x128xf32> to vector<32x128xf32>
      %18 = arith.addf %15, %17 : vector<32x128xf32>
      %c0_15 = arith.constant 0 : index
      %c0_16 = arith.constant 0 : index
      %19 = vector.load %arg7[%c0_15, %c0_16] : memref<32x128xbf16, #tpu.memory_space<vmem>>, vector<32x128xbf16>
      %20 = arith.extf %19 : vector<32x128xbf16> to vector<32x128xf32>
      %21 = arith.addf %18, %20 : vector<32x128xf32>
      %cst_17 = arith.constant 0.000000e+00 : f32
      %22 = vector.broadcast %cst_17 : f32 to vector<32x128xf32>
      %23 = arith.maximumf %21, %22 : vector<32x128xf32>
      %24 = arith.truncf %23 : vector<32x128xf32> to vector<32x128xbf16>
      %c0_18 = arith.constant 0 : index
      %c0_19 = arith.constant 0 : index
      %25 = vector.load %arg8[%c0_18, %c0_19] : memref<32x128xbf16, #tpu.memory_space<vmem>>, vector<32x128xbf16>
      tpu.vector_store %arg8[%c0_18, %c0_19], %24 {strides = array<i32>} : memref<32x128xbf16, #tpu.memory_space<vmem>>, vector<32x128xbf16>,
    } else {
    }
    return
  }
  func.func @transform_0(%arg0: i32, %arg1: i32, %arg2: i32) -> (i32, i32) {
    %c0_i32 = arith.constant 0 : i32
    return %arg0, %arg2 : i32, i32
  }
  func.func @transform_1(%arg0: i32, %arg1: i32, %arg2: i32) -> (i32, i32) {
    %c0_i32 = arith.constant 0 : i32
    return %arg2, %arg1 : i32, i32
  }
  func.func @transform_2(%arg0: i32, %arg1: i32, %arg2: i32) -> (i32, i32) {
    %c0_i32 = arith.constant 0 : i32
    %c0_i32_0 = arith.constant 0 : i32
    return %c0_i32, %arg1 : i32, i32
  }
  func.func @transform_3(%arg0: i32, %arg1: i32, %arg2: i32) -> (i32, i32) {
    %c0_i32 = arith.constant 0 : i32
    %c0_i32_0 = arith.constant 0 : i32
    return %c0_i32, %arg1 : i32, i32
  }
  func.func @transform_4(%arg0: i32, %arg1: i32, %arg2: i32) -> (i32, i32) {
    %c0_i32 = arith.constant 0 : i32
    return %arg0, %arg1 : i32, i32
  }
  func.func @transform_5(%arg0: i32, %arg1: i32, %arg2: i32) -> (i32, i32) {
    %c0_i32 = arith.constant 0 : i32
    return %arg0, %arg1 : i32, i32
  }
}

module attributes {stable_mosaic.version = 11 : i64} {
  func.func @_mm_bn_kernel(%arg0: i32, %arg1: i32, %arg2: i32, %arg3: memref<8x384xbf16, #tpu.memory_space<vmem>>, %arg4: memref<384x128xbf16, #tpu.memory_space<vmem>>, %arg5: memref<1x128xf32, #tpu.memory_space<vmem>>, %arg6: memref<1x128xf32, #tpu.memory_space<vmem>>, %arg7: memref<8x128xbf16, #tpu.memory_space<vmem>>, %arg8: memref<8x128xf32, #tpu.memory_space<vmem>>) attributes {dimension_semantics = [#tpu.dimension_semantics<parallel>, #tpu.dimension_semantics<parallel>, #tpu.dimension_semantics<arbitrary>], iteration_bounds = array<i64: 1, 1, 3>, scalar_prefetch = 0 : i64, scratch_operands = 1 : i64, tpu.core_type = #tpu.core_type<tc>, window_params = [{transform_indices = @transform_0, window_bounds = array<i64: 8, 384>}, {transform_indices = @transform_1, window_bounds = array<i64: 384, 128>}, {transform_indices = @transform_2, window_bounds = array<i64: 1, 128>}, {transform_indices = @transform_3, window_bounds = array<i64: 1, 128>}, {transform_indices = @transform_4, window_bounds = array<i64: 8, 128>}]} {
    %c0_i32 = arith.constant 0 : i32
    %0 = arith.cmpi eq, %arg2, %c0_i32 : i32
    %1 = arith.extui %0 : i1 to i32
    %c0_i32_0 = arith.constant 0 : i32
    %2 = arith.cmpi ne, %1, %c0_i32_0 : i32
    scf.if %2 {
      %cst_9 = arith.constant 0.000000e+00 : f32
      %12 = vector.broadcast %cst_9 : f32 to vector<8x128xf32>
      %c0_10 = arith.constant 0 : index
      %c0_11 = arith.constant 0 : index
      %13 = vector.load %arg8[%c0_10, %c0_11] : memref<8x128xf32, #tpu.memory_space<vmem>>, vector<8x128xf32>
      tpu.vector_store %arg8[%c0_10, %c0_11], %12 {strides = array<i32>} : memref<8x128xf32, #tpu.memory_space<vmem>>, vector<8x128xf32>,
    } else {
    }
    %c0 = arith.constant 0 : index
    %c0_1 = arith.constant 0 : index
    %3 = vector.load %arg8[%c0, %c0_1] : memref<8x128xf32, #tpu.memory_space<vmem>>, vector<8x128xf32>
    %c0_2 = arith.constant 0 : index
    %c0_3 = arith.constant 0 : index
    %4 = vector.load %arg3[%c0_2, %c0_3] : memref<8x384xbf16, #tpu.memory_space<vmem>>, vector<8x384xbf16>
    %c0_4 = arith.constant 0 : index
    %c0_5 = arith.constant 0 : index
    %5 = vector.load %arg4[%c0_4, %c0_5] : memref<384x128xbf16, #tpu.memory_space<vmem>>, vector<384x128xbf16>
    %cst = arith.constant dense<0.000000e+00> : vector<8x128xf32>
    %6 = tpu.matmul %4, %5, %cst {dimension_numbers = #tpu.dot_dimension_numbers<[1], [0], [0], [1], [0, 0, 1, 1], [], []>} : vector<8x384xbf16>, vector<384x128xbf16>, vector<8x128xf32> -> vector<8x128xf32>
    %7 = arith.addf %3, %6 : vector<8x128xf32>
    %c0_6 = arith.constant 0 : index
    %c0_7 = arith.constant 0 : index
    %8 = vector.load %arg8[%c0_6, %c0_7] : memref<8x128xf32, #tpu.memory_space<vmem>>, vector<8x128xf32>
    tpu.vector_store %arg8[%c0_6, %c0_7], %7 {strides = array<i32>} : memref<8x128xf32, #tpu.memory_space<vmem>>, vector<8x128xf32>,
    %c2_i32 = arith.constant 2 : i32
    %9 = arith.cmpi eq, %arg2, %c2_i32 : i32
    %10 = arith.extui %9 : i1 to i32
    %c0_i32_8 = arith.constant 0 : i32
    %11 = arith.cmpi ne, %10, %c0_i32_8 : i32
    scf.if %11 {
      %c0_9 = arith.constant 0 : index
      %c0_10 = arith.constant 0 : index
      %12 = vector.load %arg8[%c0_9, %c0_10] : memref<8x128xf32, #tpu.memory_space<vmem>>, vector<8x128xf32>
      %c0_11 = arith.constant 0 : index
      %c0_12 = arith.constant 0 : index
      %13 = vector.load %arg5[%c0_11, %c0_12] : memref<1x128xf32, #tpu.memory_space<vmem>>, vector<1x128xf32>
      %14 = vector.broadcast %13 : vector<1x128xf32> to vector<8x128xf32>
      %15 = arith.mulf %12, %14 : vector<8x128xf32>
      %c0_13 = arith.constant 0 : index
      %c0_14 = arith.constant 0 : index
      %16 = vector.load %arg6[%c0_13, %c0_14] : memref<1x128xf32, #tpu.memory_space<vmem>>, vector<1x128xf32>
      %17 = vector.broadcast %16 : vector<1x128xf32> to vector<8x128xf32>
      %18 = arith.addf %15, %17 : vector<8x128xf32>
      %cst_15 = arith.constant 0.000000e+00 : f32
      %19 = vector.broadcast %cst_15 : f32 to vector<8x128xf32>
      %20 = arith.maximumf %18, %19 : vector<8x128xf32>
      %21 = arith.truncf %20 : vector<8x128xf32> to vector<8x128xbf16>
      %c0_16 = arith.constant 0 : index
      %c0_17 = arith.constant 0 : index
      %22 = vector.load %arg7[%c0_16, %c0_17] : memref<8x128xbf16, #tpu.memory_space<vmem>>, vector<8x128xbf16>
      tpu.vector_store %arg7[%c0_16, %c0_17], %21 {strides = array<i32>} : memref<8x128xbf16, #tpu.memory_space<vmem>>, vector<8x128xbf16>,
    } else {
    }
    return
  }
  func.func @transform_0(%arg0: i32, %arg1: i32, %arg2: i32) -> (i32, i32) {
    %c0_i32 = arith.constant 0 : i32
    return %arg0, %arg2 : i32, i32
  }
  func.func @transform_1(%arg0: i32, %arg1: i32, %arg2: i32) -> (i32, i32) {
    %c0_i32 = arith.constant 0 : i32
    return %arg2, %arg1 : i32, i32
  }
  func.func @transform_2(%arg0: i32, %arg1: i32, %arg2: i32) -> (i32, i32) {
    %c0_i32 = arith.constant 0 : i32
    %c0_i32_0 = arith.constant 0 : i32
    return %c0_i32, %arg1 : i32, i32
  }
  func.func @transform_3(%arg0: i32, %arg1: i32, %arg2: i32) -> (i32, i32) {
    %c0_i32 = arith.constant 0 : i32
    %c0_i32_0 = arith.constant 0 : i32
    return %c0_i32, %arg1 : i32, i32
  }
  func.func @transform_4(%arg0: i32, %arg1: i32, %arg2: i32) -> (i32, i32) {
    %c0_i32 = arith.constant 0 : i32
    return %arg0, %arg1 : i32, i32
  }
}

module attributes {stable_mosaic.version = 11 : i64} {
  func.func @_mm_bn_kernel(%arg0: i32, %arg1: i32, %arg2: i32, %arg3: memref<8x128xbf16, #tpu.memory_space<vmem>>, %arg4: memref<128x128xbf16, #tpu.memory_space<vmem>>, %arg5: memref<1x128xf32, #tpu.memory_space<vmem>>, %arg6: memref<1x128xf32, #tpu.memory_space<vmem>>, %arg7: memref<8x128xbf16, #tpu.memory_space<vmem>>, %arg8: memref<8x128xf32, #tpu.memory_space<vmem>>) attributes {dimension_semantics = [#tpu.dimension_semantics<parallel>, #tpu.dimension_semantics<parallel>, #tpu.dimension_semantics<arbitrary>], iteration_bounds = array<i64: 1, 1, 1>, scalar_prefetch = 0 : i64, scratch_operands = 1 : i64, tpu.core_type = #tpu.core_type<tc>, window_params = [{transform_indices = @transform_0, window_bounds = array<i64: 8, 128>}, {transform_indices = @transform_1, window_bounds = array<i64: 128, 128>}, {transform_indices = @transform_2, window_bounds = array<i64: 1, 128>}, {transform_indices = @transform_3, window_bounds = array<i64: 1, 128>}, {transform_indices = @transform_4, window_bounds = array<i64: 8, 128>}]} {
    %c0_i32 = arith.constant 0 : i32
    %0 = arith.cmpi eq, %arg2, %c0_i32 : i32
    %1 = arith.extui %0 : i1 to i32
    %c0_i32_0 = arith.constant 0 : i32
    %2 = arith.cmpi ne, %1, %c0_i32_0 : i32
    scf.if %2 {
      %cst_10 = arith.constant 0.000000e+00 : f32
      %12 = vector.broadcast %cst_10 : f32 to vector<8x128xf32>
      %c0_11 = arith.constant 0 : index
      %c0_12 = arith.constant 0 : index
      %13 = vector.load %arg8[%c0_11, %c0_12] : memref<8x128xf32, #tpu.memory_space<vmem>>, vector<8x128xf32>
      tpu.vector_store %arg8[%c0_11, %c0_12], %12 {strides = array<i32>} : memref<8x128xf32, #tpu.memory_space<vmem>>, vector<8x128xf32>,
    } else {
    }
    %c0 = arith.constant 0 : index
    %c0_1 = arith.constant 0 : index
    %3 = vector.load %arg8[%c0, %c0_1] : memref<8x128xf32, #tpu.memory_space<vmem>>, vector<8x128xf32>
    %c0_2 = arith.constant 0 : index
    %c0_3 = arith.constant 0 : index
    %4 = vector.load %arg3[%c0_2, %c0_3] : memref<8x128xbf16, #tpu.memory_space<vmem>>, vector<8x128xbf16>
    %c0_4 = arith.constant 0 : index
    %c0_5 = arith.constant 0 : index
    %5 = vector.load %arg4[%c0_4, %c0_5] : memref<128x128xbf16, #tpu.memory_space<vmem>>, vector<128x128xbf16>
    %cst = arith.constant dense<0.000000e+00> : vector<8x128xf32>
    %6 = tpu.matmul %4, %5, %cst {dimension_numbers = #tpu.dot_dimension_numbers<[1], [0], [0], [1], [0, 0, 1, 1], [], []>} : vector<8x128xbf16>, vector<128x128xbf16>, vector<8x128xf32> -> vector<8x128xf32>
    %7 = arith.addf %3, %6 : vector<8x128xf32>
    %c0_6 = arith.constant 0 : index
    %c0_7 = arith.constant 0 : index
    %8 = vector.load %arg8[%c0_6, %c0_7] : memref<8x128xf32, #tpu.memory_space<vmem>>, vector<8x128xf32>
    tpu.vector_store %arg8[%c0_6, %c0_7], %7 {strides = array<i32>} : memref<8x128xf32, #tpu.memory_space<vmem>>, vector<8x128xf32>,
    %c0_i32_8 = arith.constant 0 : i32
    %9 = arith.cmpi eq, %arg2, %c0_i32_8 : i32
    %10 = arith.extui %9 : i1 to i32
    %c0_i32_9 = arith.constant 0 : i32
    %11 = arith.cmpi ne, %10, %c0_i32_9 : i32
    scf.if %11 {
      %c0_10 = arith.constant 0 : index
      %c0_11 = arith.constant 0 : index
      %12 = vector.load %arg8[%c0_10, %c0_11] : memref<8x128xf32, #tpu.memory_space<vmem>>, vector<8x128xf32>
      %c0_12 = arith.constant 0 : index
      %c0_13 = arith.constant 0 : index
      %13 = vector.load %arg5[%c0_12, %c0_13] : memref<1x128xf32, #tpu.memory_space<vmem>>, vector<1x128xf32>
      %14 = vector.broadcast %13 : vector<1x128xf32> to vector<8x128xf32>
      %15 = arith.mulf %12, %14 : vector<8x128xf32>
      %c0_14 = arith.constant 0 : index
      %c0_15 = arith.constant 0 : index
      %16 = vector.load %arg6[%c0_14, %c0_15] : memref<1x128xf32, #tpu.memory_space<vmem>>, vector<1x128xf32>
      %17 = vector.broadcast %16 : vector<1x128xf32> to vector<8x128xf32>
      %18 = arith.addf %15, %17 : vector<8x128xf32>
      %19 = arith.truncf %18 : vector<8x128xf32> to vector<8x128xbf16>
      %c0_16 = arith.constant 0 : index
      %c0_17 = arith.constant 0 : index
      %20 = vector.load %arg7[%c0_16, %c0_17] : memref<8x128xbf16, #tpu.memory_space<vmem>>, vector<8x128xbf16>
      tpu.vector_store %arg7[%c0_16, %c0_17], %19 {strides = array<i32>} : memref<8x128xbf16, #tpu.memory_space<vmem>>, vector<8x128xbf16>,
    } else {
    }
    return
  }
  func.func @transform_0(%arg0: i32, %arg1: i32, %arg2: i32) -> (i32, i32) {
    %c0_i32 = arith.constant 0 : i32
    return %arg0, %arg2 : i32, i32
  }
  func.func @transform_1(%arg0: i32, %arg1: i32, %arg2: i32) -> (i32, i32) {
    %c0_i32 = arith.constant 0 : i32
    return %arg2, %arg1 : i32, i32
  }
  func.func @transform_2(%arg0: i32, %arg1: i32, %arg2: i32) -> (i32, i32) {
    %c0_i32 = arith.constant 0 : i32
    %c0_i32_0 = arith.constant 0 : i32
    return %c0_i32, %arg1 : i32, i32
  }
  func.func @transform_3(%arg0: i32, %arg1: i32, %arg2: i32) -> (i32, i32) {
    %c0_i32 = arith.constant 0 : i32
    %c0_i32_0 = arith.constant 0 : i32
    return %c0_i32, %arg1 : i32, i32
  }
  func.func @transform_4(%arg0: i32, %arg1: i32, %arg2: i32) -> (i32, i32) {
    %c0_i32 = arith.constant 0 : i32
    return %arg0, %arg1 : i32, i32
  }
}

module attributes {stable_mosaic.version = 11 : i64} {
  func.func @_mm_bn_res_kernel(%arg0: i32, %arg1: i32, %arg2: i32, %arg3: memref<8x384xbf16, #tpu.memory_space<vmem>>, %arg4: memref<384x128xbf16, #tpu.memory_space<vmem>>, %arg5: memref<1x128xf32, #tpu.memory_space<vmem>>, %arg6: memref<1x128xf32, #tpu.memory_space<vmem>>, %arg7: memref<8x128xbf16, #tpu.memory_space<vmem>>, %arg8: memref<8x128xbf16, #tpu.memory_space<vmem>>, %arg9: memref<8x128xf32, #tpu.memory_space<vmem>>) attributes {dimension_semantics = [#tpu.dimension_semantics<parallel>, #tpu.dimension_semantics<parallel>, #tpu.dimension_semantics<arbitrary>], iteration_bounds = array<i64: 1, 1, 3>, scalar_prefetch = 0 : i64, scratch_operands = 1 : i64, tpu.core_type = #tpu.core_type<tc>, window_params = [{transform_indices = @transform_0, window_bounds = array<i64: 8, 384>}, {transform_indices = @transform_1, window_bounds = array<i64: 384, 128>}, {transform_indices = @transform_2, window_bounds = array<i64: 1, 128>}, {transform_indices = @transform_3, window_bounds = array<i64: 1, 128>}, {transform_indices = @transform_4, window_bounds = array<i64: 8, 128>}, {transform_indices = @transform_5, window_bounds = array<i64: 8, 128>}]} {
    %c0_i32 = arith.constant 0 : i32
    %0 = arith.cmpi eq, %arg2, %c0_i32 : i32
    %1 = arith.extui %0 : i1 to i32
    %c0_i32_0 = arith.constant 0 : i32
    %2 = arith.cmpi ne, %1, %c0_i32_0 : i32
    scf.if %2 {
      %cst_9 = arith.constant 0.000000e+00 : f32
      %12 = vector.broadcast %cst_9 : f32 to vector<8x128xf32>
      %c0_10 = arith.constant 0 : index
      %c0_11 = arith.constant 0 : index
      %13 = vector.load %arg9[%c0_10, %c0_11] : memref<8x128xf32, #tpu.memory_space<vmem>>, vector<8x128xf32>
      tpu.vector_store %arg9[%c0_10, %c0_11], %12 {strides = array<i32>} : memref<8x128xf32, #tpu.memory_space<vmem>>, vector<8x128xf32>,
    } else {
    }
    %c0 = arith.constant 0 : index
    %c0_1 = arith.constant 0 : index
    %3 = vector.load %arg9[%c0, %c0_1] : memref<8x128xf32, #tpu.memory_space<vmem>>, vector<8x128xf32>
    %c0_2 = arith.constant 0 : index
    %c0_3 = arith.constant 0 : index
    %4 = vector.load %arg3[%c0_2, %c0_3] : memref<8x384xbf16, #tpu.memory_space<vmem>>, vector<8x384xbf16>
    %c0_4 = arith.constant 0 : index
    %c0_5 = arith.constant 0 : index
    %5 = vector.load %arg4[%c0_4, %c0_5] : memref<384x128xbf16, #tpu.memory_space<vmem>>, vector<384x128xbf16>
    %cst = arith.constant dense<0.000000e+00> : vector<8x128xf32>
    %6 = tpu.matmul %4, %5, %cst {dimension_numbers = #tpu.dot_dimension_numbers<[1], [0], [0], [1], [0, 0, 1, 1], [], []>} : vector<8x384xbf16>, vector<384x128xbf16>, vector<8x128xf32> -> vector<8x128xf32>
    %7 = arith.addf %3, %6 : vector<8x128xf32>
    %c0_6 = arith.constant 0 : index
    %c0_7 = arith.constant 0 : index
    %8 = vector.load %arg9[%c0_6, %c0_7] : memref<8x128xf32, #tpu.memory_space<vmem>>, vector<8x128xf32>
    tpu.vector_store %arg9[%c0_6, %c0_7], %7 {strides = array<i32>} : memref<8x128xf32, #tpu.memory_space<vmem>>, vector<8x128xf32>,
    %c2_i32 = arith.constant 2 : i32
    %9 = arith.cmpi eq, %arg2, %c2_i32 : i32
    %10 = arith.extui %9 : i1 to i32
    %c0_i32_8 = arith.constant 0 : i32
    %11 = arith.cmpi ne, %10, %c0_i32_8 : i32
    scf.if %11 {
      %c0_9 = arith.constant 0 : index
      %c0_10 = arith.constant 0 : index
      %12 = vector.load %arg9[%c0_9, %c0_10] : memref<8x128xf32, #tpu.memory_space<vmem>>, vector<8x128xf32>
      %c0_11 = arith.constant 0 : index
      %c0_12 = arith.constant 0 : index
      %13 = vector.load %arg5[%c0_11, %c0_12] : memref<1x128xf32, #tpu.memory_space<vmem>>, vector<1x128xf32>
      %14 = vector.broadcast %13 : vector<1x128xf32> to vector<8x128xf32>
      %15 = arith.mulf %12, %14 : vector<8x128xf32>
      %c0_13 = arith.constant 0 : index
      %c0_14 = arith.constant 0 : index
      %16 = vector.load %arg6[%c0_13, %c0_14] : memref<1x128xf32, #tpu.memory_space<vmem>>, vector<1x128xf32>
      %17 = vector.broadcast %16 : vector<1x128xf32> to vector<8x128xf32>
      %18 = arith.addf %15, %17 : vector<8x128xf32>
      %c0_15 = arith.constant 0 : index
      %c0_16 = arith.constant 0 : index
      %19 = vector.load %arg7[%c0_15, %c0_16] : memref<8x128xbf16, #tpu.memory_space<vmem>>, vector<8x128xbf16>
      %20 = arith.extf %19 : vector<8x128xbf16> to vector<8x128xf32>
      %21 = arith.addf %18, %20 : vector<8x128xf32>
      %cst_17 = arith.constant 0.000000e+00 : f32
      %22 = vector.broadcast %cst_17 : f32 to vector<8x128xf32>
      %23 = arith.maximumf %21, %22 : vector<8x128xf32>
      %24 = arith.truncf %23 : vector<8x128xf32> to vector<8x128xbf16>
      %c0_18 = arith.constant 0 : index
      %c0_19 = arith.constant 0 : index
      %25 = vector.load %arg8[%c0_18, %c0_19] : memref<8x128xbf16, #tpu.memory_space<vmem>>, vector<8x128xbf16>
      tpu.vector_store %arg8[%c0_18, %c0_19], %24 {strides = array<i32>} : memref<8x128xbf16, #tpu.memory_space<vmem>>, vector<8x128xbf16>,
    } else {
    }
    return
  }
  func.func @transform_0(%arg0: i32, %arg1: i32, %arg2: i32) -> (i32, i32) {
    %c0_i32 = arith.constant 0 : i32
    return %arg0, %arg2 : i32, i32
  }
  func.func @transform_1(%arg0: i32, %arg1: i32, %arg2: i32) -> (i32, i32) {
    %c0_i32 = arith.constant 0 : i32
    return %arg2, %arg1 : i32, i32
  }
  func.func @transform_2(%arg0: i32, %arg1: i32, %arg2: i32) -> (i32, i32) {
    %c0_i32 = arith.constant 0 : i32
    %c0_i32_0 = arith.constant 0 : i32
    return %c0_i32, %arg1 : i32, i32
  }
  func.func @transform_3(%arg0: i32, %arg1: i32, %arg2: i32) -> (i32, i32) {
    %c0_i32 = arith.constant 0 : i32
    %c0_i32_0 = arith.constant 0 : i32
    return %c0_i32, %arg1 : i32, i32
  }
  func.func @transform_4(%arg0: i32, %arg1: i32, %arg2: i32) -> (i32, i32) {
    %c0_i32 = arith.constant 0 : i32
    return %arg0, %arg1 : i32, i32
  }
  func.func @transform_5(%arg0: i32, %arg1: i32, %arg2: i32) -> (i32, i32) {
    %c0_i32 = arith.constant 0 : i32
    return %arg0, %arg1 : i32, i32
  }
}

module attributes {stable_mosaic.version = 11 : i64} {
  func.func @_mm_bn_kernel(%arg0: i32, %arg1: i32, %arg2: i32, %arg3: memref<8x384xbf16, #tpu.memory_space<vmem>>, %arg4: memref<384x256xbf16, #tpu.memory_space<vmem>>, %arg5: memref<1x256xf32, #tpu.memory_space<vmem>>, %arg6: memref<1x256xf32, #tpu.memory_space<vmem>>, %arg7: memref<8x256xbf16, #tpu.memory_space<vmem>>, %arg8: memref<8x256xf32, #tpu.memory_space<vmem>>) attributes {dimension_semantics = [#tpu.dimension_semantics<parallel>, #tpu.dimension_semantics<parallel>, #tpu.dimension_semantics<arbitrary>], iteration_bounds = array<i64: 1, 1, 3>, scalar_prefetch = 0 : i64, scratch_operands = 1 : i64, tpu.core_type = #tpu.core_type<tc>, window_params = [{transform_indices = @transform_0, window_bounds = array<i64: 8, 384>}, {transform_indices = @transform_1, window_bounds = array<i64: 384, 256>}, {transform_indices = @transform_2, window_bounds = array<i64: 1, 256>}, {transform_indices = @transform_3, window_bounds = array<i64: 1, 256>}, {transform_indices = @transform_4, window_bounds = array<i64: 8, 256>}]} {
    %c0_i32 = arith.constant 0 : i32
    %0 = arith.cmpi eq, %arg2, %c0_i32 : i32
    %1 = arith.extui %0 : i1 to i32
    %c0_i32_0 = arith.constant 0 : i32
    %2 = arith.cmpi ne, %1, %c0_i32_0 : i32
    scf.if %2 {
      %cst_9 = arith.constant 0.000000e+00 : f32
      %12 = vector.broadcast %cst_9 : f32 to vector<8x256xf32>
      %c0_10 = arith.constant 0 : index
      %c0_11 = arith.constant 0 : index
      %13 = vector.load %arg8[%c0_10, %c0_11] : memref<8x256xf32, #tpu.memory_space<vmem>>, vector<8x256xf32>
      tpu.vector_store %arg8[%c0_10, %c0_11], %12 {strides = array<i32>} : memref<8x256xf32, #tpu.memory_space<vmem>>, vector<8x256xf32>,
    } else {
    }
    %c0 = arith.constant 0 : index
    %c0_1 = arith.constant 0 : index
    %3 = vector.load %arg8[%c0, %c0_1] : memref<8x256xf32, #tpu.memory_space<vmem>>, vector<8x256xf32>
    %c0_2 = arith.constant 0 : index
    %c0_3 = arith.constant 0 : index
    %4 = vector.load %arg3[%c0_2, %c0_3] : memref<8x384xbf16, #tpu.memory_space<vmem>>, vector<8x384xbf16>
    %c0_4 = arith.constant 0 : index
    %c0_5 = arith.constant 0 : index
    %5 = vector.load %arg4[%c0_4, %c0_5] : memref<384x256xbf16, #tpu.memory_space<vmem>>, vector<384x256xbf16>
    %cst = arith.constant dense<0.000000e+00> : vector<8x256xf32>
    %6 = tpu.matmul %4, %5, %cst {dimension_numbers = #tpu.dot_dimension_numbers<[1], [0], [0], [1], [0, 0, 1, 1], [], []>} : vector<8x384xbf16>, vector<384x256xbf16>, vector<8x256xf32> -> vector<8x256xf32>
    %7 = arith.addf %3, %6 : vector<8x256xf32>
    %c0_6 = arith.constant 0 : index
    %c0_7 = arith.constant 0 : index
    %8 = vector.load %arg8[%c0_6, %c0_7] : memref<8x256xf32, #tpu.memory_space<vmem>>, vector<8x256xf32>
    tpu.vector_store %arg8[%c0_6, %c0_7], %7 {strides = array<i32>} : memref<8x256xf32, #tpu.memory_space<vmem>>, vector<8x256xf32>,
    %c2_i32 = arith.constant 2 : i32
    %9 = arith.cmpi eq, %arg2, %c2_i32 : i32
    %10 = arith.extui %9 : i1 to i32
    %c0_i32_8 = arith.constant 0 : i32
    %11 = arith.cmpi ne, %10, %c0_i32_8 : i32
    scf.if %11 {
      %c0_9 = arith.constant 0 : index
      %c0_10 = arith.constant 0 : index
      %12 = vector.load %arg8[%c0_9, %c0_10] : memref<8x256xf32, #tpu.memory_space<vmem>>, vector<8x256xf32>
      %c0_11 = arith.constant 0 : index
      %c0_12 = arith.constant 0 : index
      %13 = vector.load %arg5[%c0_11, %c0_12] : memref<1x256xf32, #tpu.memory_space<vmem>>, vector<1x256xf32>
      %14 = vector.broadcast %13 : vector<1x256xf32> to vector<8x256xf32>
      %15 = arith.mulf %12, %14 : vector<8x256xf32>
      %c0_13 = arith.constant 0 : index
      %c0_14 = arith.constant 0 : index
      %16 = vector.load %arg6[%c0_13, %c0_14] : memref<1x256xf32, #tpu.memory_space<vmem>>, vector<1x256xf32>
      %17 = vector.broadcast %16 : vector<1x256xf32> to vector<8x256xf32>
      %18 = arith.addf %15, %17 : vector<8x256xf32>
      %cst_15 = arith.constant 0.000000e+00 : f32
      %19 = vector.broadcast %cst_15 : f32 to vector<8x256xf32>
      %20 = arith.maximumf %18, %19 : vector<8x256xf32>
      %21 = arith.truncf %20 : vector<8x256xf32> to vector<8x256xbf16>
      %c0_16 = arith.constant 0 : index
      %c0_17 = arith.constant 0 : index
      %22 = vector.load %arg7[%c0_16, %c0_17] : memref<8x256xbf16, #tpu.memory_space<vmem>>, vector<8x256xbf16>
      tpu.vector_store %arg7[%c0_16, %c0_17], %21 {strides = array<i32>} : memref<8x256xbf16, #tpu.memory_space<vmem>>, vector<8x256xbf16>,
    } else {
    }
    return
  }
  func.func @transform_0(%arg0: i32, %arg1: i32, %arg2: i32) -> (i32, i32) {
    %c0_i32 = arith.constant 0 : i32
    return %arg0, %arg2 : i32, i32
  }
  func.func @transform_1(%arg0: i32, %arg1: i32, %arg2: i32) -> (i32, i32) {
    %c0_i32 = arith.constant 0 : i32
    return %arg2, %arg1 : i32, i32
  }
  func.func @transform_2(%arg0: i32, %arg1: i32, %arg2: i32) -> (i32, i32) {
    %c0_i32 = arith.constant 0 : i32
    %c0_i32_0 = arith.constant 0 : i32
    return %c0_i32, %arg1 : i32, i32
  }
  func.func @transform_3(%arg0: i32, %arg1: i32, %arg2: i32) -> (i32, i32) {
    %c0_i32 = arith.constant 0 : i32
    %c0_i32_0 = arith.constant 0 : i32
    return %c0_i32, %arg1 : i32, i32
  }
  func.func @transform_4(%arg0: i32, %arg1: i32, %arg2: i32) -> (i32, i32) {
    %c0_i32 = arith.constant 0 : i32
    return %arg0, %arg1 : i32, i32
  }
}

module attributes {stable_mosaic.version = 11 : i64} {
  func.func @_mm_bn_kernel(%arg0: i32, %arg1: i32, %arg2: i32, %arg3: memref<8x128xbf16, #tpu.memory_space<vmem>>, %arg4: memref<128x256xbf16, #tpu.memory_space<vmem>>, %arg5: memref<1x256xf32, #tpu.memory_space<vmem>>, %arg6: memref<1x256xf32, #tpu.memory_space<vmem>>, %arg7: memref<8x256xbf16, #tpu.memory_space<vmem>>, %arg8: memref<8x256xf32, #tpu.memory_space<vmem>>) attributes {dimension_semantics = [#tpu.dimension_semantics<parallel>, #tpu.dimension_semantics<parallel>, #tpu.dimension_semantics<arbitrary>], iteration_bounds = array<i64: 1, 1, 1>, scalar_prefetch = 0 : i64, scratch_operands = 1 : i64, tpu.core_type = #tpu.core_type<tc>, window_params = [{transform_indices = @transform_0, window_bounds = array<i64: 8, 128>}, {transform_indices = @transform_1, window_bounds = array<i64: 128, 256>}, {transform_indices = @transform_2, window_bounds = array<i64: 1, 256>}, {transform_indices = @transform_3, window_bounds = array<i64: 1, 256>}, {transform_indices = @transform_4, window_bounds = array<i64: 8, 256>}]} {
    %c0_i32 = arith.constant 0 : i32
    %0 = arith.cmpi eq, %arg2, %c0_i32 : i32
    %1 = arith.extui %0 : i1 to i32
    %c0_i32_0 = arith.constant 0 : i32
    %2 = arith.cmpi ne, %1, %c0_i32_0 : i32
    scf.if %2 {
      %cst_10 = arith.constant 0.000000e+00 : f32
      %12 = vector.broadcast %cst_10 : f32 to vector<8x256xf32>
      %c0_11 = arith.constant 0 : index
      %c0_12 = arith.constant 0 : index
      %13 = vector.load %arg8[%c0_11, %c0_12] : memref<8x256xf32, #tpu.memory_space<vmem>>, vector<8x256xf32>
      tpu.vector_store %arg8[%c0_11, %c0_12], %12 {strides = array<i32>} : memref<8x256xf32, #tpu.memory_space<vmem>>, vector<8x256xf32>,
    } else {
    }
    %c0 = arith.constant 0 : index
    %c0_1 = arith.constant 0 : index
    %3 = vector.load %arg8[%c0, %c0_1] : memref<8x256xf32, #tpu.memory_space<vmem>>, vector<8x256xf32>
    %c0_2 = arith.constant 0 : index
    %c0_3 = arith.constant 0 : index
    %4 = vector.load %arg3[%c0_2, %c0_3] : memref<8x128xbf16, #tpu.memory_space<vmem>>, vector<8x128xbf16>
    %c0_4 = arith.constant 0 : index
    %c0_5 = arith.constant 0 : index
    %5 = vector.load %arg4[%c0_4, %c0_5] : memref<128x256xbf16, #tpu.memory_space<vmem>>, vector<128x256xbf16>
    %cst = arith.constant dense<0.000000e+00> : vector<8x256xf32>
    %6 = tpu.matmul %4, %5, %cst {dimension_numbers = #tpu.dot_dimension_numbers<[1], [0], [0], [1], [0, 0, 1, 1], [], []>} : vector<8x128xbf16>, vector<128x256xbf16>, vector<8x256xf32> -> vector<8x256xf32>
    %7 = arith.addf %3, %6 : vector<8x256xf32>
    %c0_6 = arith.constant 0 : index
    %c0_7 = arith.constant 0 : index
    %8 = vector.load %arg8[%c0_6, %c0_7] : memref<8x256xf32, #tpu.memory_space<vmem>>, vector<8x256xf32>
    tpu.vector_store %arg8[%c0_6, %c0_7], %7 {strides = array<i32>} : memref<8x256xf32, #tpu.memory_space<vmem>>, vector<8x256xf32>,
    %c0_i32_8 = arith.constant 0 : i32
    %9 = arith.cmpi eq, %arg2, %c0_i32_8 : i32
    %10 = arith.extui %9 : i1 to i32
    %c0_i32_9 = arith.constant 0 : i32
    %11 = arith.cmpi ne, %10, %c0_i32_9 : i32
    scf.if %11 {
      %c0_10 = arith.constant 0 : index
      %c0_11 = arith.constant 0 : index
      %12 = vector.load %arg8[%c0_10, %c0_11] : memref<8x256xf32, #tpu.memory_space<vmem>>, vector<8x256xf32>
      %c0_12 = arith.constant 0 : index
      %c0_13 = arith.constant 0 : index
      %13 = vector.load %arg5[%c0_12, %c0_13] : memref<1x256xf32, #tpu.memory_space<vmem>>, vector<1x256xf32>
      %14 = vector.broadcast %13 : vector<1x256xf32> to vector<8x256xf32>
      %15 = arith.mulf %12, %14 : vector<8x256xf32>
      %c0_14 = arith.constant 0 : index
      %c0_15 = arith.constant 0 : index
      %16 = vector.load %arg6[%c0_14, %c0_15] : memref<1x256xf32, #tpu.memory_space<vmem>>, vector<1x256xf32>
      %17 = vector.broadcast %16 : vector<1x256xf32> to vector<8x256xf32>
      %18 = arith.addf %15, %17 : vector<8x256xf32>
      %19 = arith.truncf %18 : vector<8x256xf32> to vector<8x256xbf16>
      %c0_16 = arith.constant 0 : index
      %c0_17 = arith.constant 0 : index
      %20 = vector.load %arg7[%c0_16, %c0_17] : memref<8x256xbf16, #tpu.memory_space<vmem>>, vector<8x256xbf16>
      tpu.vector_store %arg7[%c0_16, %c0_17], %19 {strides = array<i32>} : memref<8x256xbf16, #tpu.memory_space<vmem>>, vector<8x256xbf16>,
    } else {
    }
    return
  }
  func.func @transform_0(%arg0: i32, %arg1: i32, %arg2: i32) -> (i32, i32) {
    %c0_i32 = arith.constant 0 : i32
    return %arg0, %arg2 : i32, i32
  }
  func.func @transform_1(%arg0: i32, %arg1: i32, %arg2: i32) -> (i32, i32) {
    %c0_i32 = arith.constant 0 : i32
    return %arg2, %arg1 : i32, i32
  }
  func.func @transform_2(%arg0: i32, %arg1: i32, %arg2: i32) -> (i32, i32) {
    %c0_i32 = arith.constant 0 : i32
    %c0_i32_0 = arith.constant 0 : i32
    return %c0_i32, %arg1 : i32, i32
  }
  func.func @transform_3(%arg0: i32, %arg1: i32, %arg2: i32) -> (i32, i32) {
    %c0_i32 = arith.constant 0 : i32
    %c0_i32_0 = arith.constant 0 : i32
    return %c0_i32, %arg1 : i32, i32
  }
  func.func @transform_4(%arg0: i32, %arg1: i32, %arg2: i32) -> (i32, i32) {
    %c0_i32 = arith.constant 0 : i32
    return %arg0, %arg1 : i32, i32
  }
}

module attributes {stable_mosaic.version = 11 : i64} {
  func.func @_mm_bn_res_kernel(%arg0: i32, %arg1: i32, %arg2: i32, %arg3: memref<8x384xbf16, #tpu.memory_space<vmem>>, %arg4: memref<384x256xbf16, #tpu.memory_space<vmem>>, %arg5: memref<1x256xf32, #tpu.memory_space<vmem>>, %arg6: memref<1x256xf32, #tpu.memory_space<vmem>>, %arg7: memref<8x256xbf16, #tpu.memory_space<vmem>>, %arg8: memref<8x256xbf16, #tpu.memory_space<vmem>>, %arg9: memref<8x256xf32, #tpu.memory_space<vmem>>) attributes {dimension_semantics = [#tpu.dimension_semantics<parallel>, #tpu.dimension_semantics<parallel>, #tpu.dimension_semantics<arbitrary>], iteration_bounds = array<i64: 1, 1, 6>, scalar_prefetch = 0 : i64, scratch_operands = 1 : i64, tpu.core_type = #tpu.core_type<tc>, window_params = [{transform_indices = @transform_0, window_bounds = array<i64: 8, 384>}, {transform_indices = @transform_1, window_bounds = array<i64: 384, 256>}, {transform_indices = @transform_2, window_bounds = array<i64: 1, 256>}, {transform_indices = @transform_3, window_bounds = array<i64: 1, 256>}, {transform_indices = @transform_4, window_bounds = array<i64: 8, 256>}, {transform_indices = @transform_5, window_bounds = array<i64: 8, 256>}]} {
    %c0_i32 = arith.constant 0 : i32
    %0 = arith.cmpi eq, %arg2, %c0_i32 : i32
    %1 = arith.extui %0 : i1 to i32
    %c0_i32_0 = arith.constant 0 : i32
    %2 = arith.cmpi ne, %1, %c0_i32_0 : i32
    scf.if %2 {
      %cst_9 = arith.constant 0.000000e+00 : f32
      %12 = vector.broadcast %cst_9 : f32 to vector<8x256xf32>
      %c0_10 = arith.constant 0 : index
      %c0_11 = arith.constant 0 : index
      %13 = vector.load %arg9[%c0_10, %c0_11] : memref<8x256xf32, #tpu.memory_space<vmem>>, vector<8x256xf32>
      tpu.vector_store %arg9[%c0_10, %c0_11], %12 {strides = array<i32>} : memref<8x256xf32, #tpu.memory_space<vmem>>, vector<8x256xf32>,
    } else {
    }
    %c0 = arith.constant 0 : index
    %c0_1 = arith.constant 0 : index
    %3 = vector.load %arg9[%c0, %c0_1] : memref<8x256xf32, #tpu.memory_space<vmem>>, vector<8x256xf32>
    %c0_2 = arith.constant 0 : index
    %c0_3 = arith.constant 0 : index
    %4 = vector.load %arg3[%c0_2, %c0_3] : memref<8x384xbf16, #tpu.memory_space<vmem>>, vector<8x384xbf16>
    %c0_4 = arith.constant 0 : index
    %c0_5 = arith.constant 0 : index
    %5 = vector.load %arg4[%c0_4, %c0_5] : memref<384x256xbf16, #tpu.memory_space<vmem>>, vector<384x256xbf16>
    %cst = arith.constant dense<0.000000e+00> : vector<8x256xf32>
    %6 = tpu.matmul %4, %5, %cst {dimension_numbers = #tpu.dot_dimension_numbers<[1], [0], [0], [1], [0, 0, 1, 1], [], []>} : vector<8x384xbf16>, vector<384x256xbf16>, vector<8x256xf32> -> vector<8x256xf32>
    %7 = arith.addf %3, %6 : vector<8x256xf32>
    %c0_6 = arith.constant 0 : index
    %c0_7 = arith.constant 0 : index
    %8 = vector.load %arg9[%c0_6, %c0_7] : memref<8x256xf32, #tpu.memory_space<vmem>>, vector<8x256xf32>
    tpu.vector_store %arg9[%c0_6, %c0_7], %7 {strides = array<i32>} : memref<8x256xf32, #tpu.memory_space<vmem>>, vector<8x256xf32>,
    %c5_i32 = arith.constant 5 : i32
    %9 = arith.cmpi eq, %arg2, %c5_i32 : i32
    %10 = arith.extui %9 : i1 to i32
    %c0_i32_8 = arith.constant 0 : i32
    %11 = arith.cmpi ne, %10, %c0_i32_8 : i32
    scf.if %11 {
      %c0_9 = arith.constant 0 : index
      %c0_10 = arith.constant 0 : index
      %12 = vector.load %arg9[%c0_9, %c0_10] : memref<8x256xf32, #tpu.memory_space<vmem>>, vector<8x256xf32>
      %c0_11 = arith.constant 0 : index
      %c0_12 = arith.constant 0 : index
      %13 = vector.load %arg5[%c0_11, %c0_12] : memref<1x256xf32, #tpu.memory_space<vmem>>, vector<1x256xf32>
      %14 = vector.broadcast %13 : vector<1x256xf32> to vector<8x256xf32>
      %15 = arith.mulf %12, %14 : vector<8x256xf32>
      %c0_13 = arith.constant 0 : index
      %c0_14 = arith.constant 0 : index
      %16 = vector.load %arg6[%c0_13, %c0_14] : memref<1x256xf32, #tpu.memory_space<vmem>>, vector<1x256xf32>
      %17 = vector.broadcast %16 : vector<1x256xf32> to vector<8x256xf32>
      %18 = arith.addf %15, %17 : vector<8x256xf32>
      %c0_15 = arith.constant 0 : index
      %c0_16 = arith.constant 0 : index
      %19 = vector.load %arg7[%c0_15, %c0_16] : memref<8x256xbf16, #tpu.memory_space<vmem>>, vector<8x256xbf16>
      %20 = arith.extf %19 : vector<8x256xbf16> to vector<8x256xf32>
      %21 = arith.addf %18, %20 : vector<8x256xf32>
      %cst_17 = arith.constant 0.000000e+00 : f32
      %22 = vector.broadcast %cst_17 : f32 to vector<8x256xf32>
      %23 = arith.maximumf %21, %22 : vector<8x256xf32>
      %24 = arith.truncf %23 : vector<8x256xf32> to vector<8x256xbf16>
      %c0_18 = arith.constant 0 : index
      %c0_19 = arith.constant 0 : index
      %25 = vector.load %arg8[%c0_18, %c0_19] : memref<8x256xbf16, #tpu.memory_space<vmem>>, vector<8x256xbf16>
      tpu.vector_store %arg8[%c0_18, %c0_19], %24 {strides = array<i32>} : memref<8x256xbf16, #tpu.memory_space<vmem>>, vector<8x256xbf16>,
    } else {
    }
    return
  }
  func.func @transform_0(%arg0: i32, %arg1: i32, %arg2: i32) -> (i32, i32) {
    %c0_i32 = arith.constant 0 : i32
    return %arg0, %arg2 : i32, i32
  }
  func.func @transform_1(%arg0: i32, %arg1: i32, %arg2: i32) -> (i32, i32) {
    %c0_i32 = arith.constant 0 : i32
    return %arg2, %arg1 : i32, i32
  }
  func.func @transform_2(%arg0: i32, %arg1: i32, %arg2: i32) -> (i32, i32) {
    %c0_i32 = arith.constant 0 : i32
    %c0_i32_0 = arith.constant 0 : i32
    return %c0_i32, %arg1 : i32, i32
  }
  func.func @transform_3(%arg0: i32, %arg1: i32, %arg2: i32) -> (i32, i32) {
    %c0_i32 = arith.constant 0 : i32
    %c0_i32_0 = arith.constant 0 : i32
    return %c0_i32, %arg1 : i32, i32
  }
  func.func @transform_4(%arg0: i32, %arg1: i32, %arg2: i32) -> (i32, i32) {
    %c0_i32 = arith.constant 0 : i32
    return %arg0, %arg1 : i32, i32
  }
  func.func @transform_5(%arg0: i32, %arg1: i32, %arg2: i32) -> (i32, i32) {
    %c0_i32 = arith.constant 0 : i32
    return %arg0, %arg1 : i32, i32
  }
}

module attributes {stable_mosaic.version = 11 : i64} {
  func.func @_mm_bn_kernel(%arg0: i32, %arg1: i32, %arg2: i32, %arg3: memref<8x384xbf16, #tpu.memory_space<vmem>>, %arg4: memref<384x256xbf16, #tpu.memory_space<vmem>>, %arg5: memref<1x256xf32, #tpu.memory_space<vmem>>, %arg6: memref<1x256xf32, #tpu.memory_space<vmem>>, %arg7: memref<8x256xbf16, #tpu.memory_space<vmem>>, %arg8: memref<8x256xf32, #tpu.memory_space<vmem>>) attributes {dimension_semantics = [#tpu.dimension_semantics<parallel>, #tpu.dimension_semantics<parallel>, #tpu.dimension_semantics<arbitrary>], iteration_bounds = array<i64: 1, 2, 6>, scalar_prefetch = 0 : i64, scratch_operands = 1 : i64, tpu.core_type = #tpu.core_type<tc>, window_params = [{transform_indices = @transform_0, window_bounds = array<i64: 8, 384>}, {transform_indices = @transform_1, window_bounds = array<i64: 384, 256>}, {transform_indices = @transform_2, window_bounds = array<i64: 1, 256>}, {transform_indices = @transform_3, window_bounds = array<i64: 1, 256>}, {transform_indices = @transform_4, window_bounds = array<i64: 8, 256>}]} {
    %c0_i32 = arith.constant 0 : i32
    %0 = arith.cmpi eq, %arg2, %c0_i32 : i32
    %1 = arith.extui %0 : i1 to i32
    %c0_i32_0 = arith.constant 0 : i32
    %2 = arith.cmpi ne, %1, %c0_i32_0 : i32
    scf.if %2 {
      %cst_9 = arith.constant 0.000000e+00 : f32
      %12 = vector.broadcast %cst_9 : f32 to vector<8x256xf32>
      %c0_10 = arith.constant 0 : index
      %c0_11 = arith.constant 0 : index
      %13 = vector.load %arg8[%c0_10, %c0_11] : memref<8x256xf32, #tpu.memory_space<vmem>>, vector<8x256xf32>
      tpu.vector_store %arg8[%c0_10, %c0_11], %12 {strides = array<i32>} : memref<8x256xf32, #tpu.memory_space<vmem>>, vector<8x256xf32>,
    } else {
    }
    %c0 = arith.constant 0 : index
    %c0_1 = arith.constant 0 : index
    %3 = vector.load %arg8[%c0, %c0_1] : memref<8x256xf32, #tpu.memory_space<vmem>>, vector<8x256xf32>
    %c0_2 = arith.constant 0 : index
    %c0_3 = arith.constant 0 : index
    %4 = vector.load %arg3[%c0_2, %c0_3] : memref<8x384xbf16, #tpu.memory_space<vmem>>, vector<8x384xbf16>
    %c0_4 = arith.constant 0 : index
    %c0_5 = arith.constant 0 : index
    %5 = vector.load %arg4[%c0_4, %c0_5] : memref<384x256xbf16, #tpu.memory_space<vmem>>, vector<384x256xbf16>
    %cst = arith.constant dense<0.000000e+00> : vector<8x256xf32>
    %6 = tpu.matmul %4, %5, %cst {dimension_numbers = #tpu.dot_dimension_numbers<[1], [0], [0], [1], [0, 0, 1, 1], [], []>} : vector<8x384xbf16>, vector<384x256xbf16>, vector<8x256xf32> -> vector<8x256xf32>
    %7 = arith.addf %3, %6 : vector<8x256xf32>
    %c0_6 = arith.constant 0 : index
    %c0_7 = arith.constant 0 : index
    %8 = vector.load %arg8[%c0_6, %c0_7] : memref<8x256xf32, #tpu.memory_space<vmem>>, vector<8x256xf32>
    tpu.vector_store %arg8[%c0_6, %c0_7], %7 {strides = array<i32>} : memref<8x256xf32, #tpu.memory_space<vmem>>, vector<8x256xf32>,
    %c5_i32 = arith.constant 5 : i32
    %9 = arith.cmpi eq, %arg2, %c5_i32 : i32
    %10 = arith.extui %9 : i1 to i32
    %c0_i32_8 = arith.constant 0 : i32
    %11 = arith.cmpi ne, %10, %c0_i32_8 : i32
    scf.if %11 {
      %c0_9 = arith.constant 0 : index
      %c0_10 = arith.constant 0 : index
      %12 = vector.load %arg8[%c0_9, %c0_10] : memref<8x256xf32, #tpu.memory_space<vmem>>, vector<8x256xf32>
      %c0_11 = arith.constant 0 : index
      %c0_12 = arith.constant 0 : index
      %13 = vector.load %arg5[%c0_11, %c0_12] : memref<1x256xf32, #tpu.memory_space<vmem>>, vector<1x256xf32>
      %14 = vector.broadcast %13 : vector<1x256xf32> to vector<8x256xf32>
      %15 = arith.mulf %12, %14 : vector<8x256xf32>
      %c0_13 = arith.constant 0 : index
      %c0_14 = arith.constant 0 : index
      %16 = vector.load %arg6[%c0_13, %c0_14] : memref<1x256xf32, #tpu.memory_space<vmem>>, vector<1x256xf32>
      %17 = vector.broadcast %16 : vector<1x256xf32> to vector<8x256xf32>
      %18 = arith.addf %15, %17 : vector<8x256xf32>
      %cst_15 = arith.constant 0.000000e+00 : f32
      %19 = vector.broadcast %cst_15 : f32 to vector<8x256xf32>
      %20 = arith.maximumf %18, %19 : vector<8x256xf32>
      %21 = arith.truncf %20 : vector<8x256xf32> to vector<8x256xbf16>
      %c0_16 = arith.constant 0 : index
      %c0_17 = arith.constant 0 : index
      %22 = vector.load %arg7[%c0_16, %c0_17] : memref<8x256xbf16, #tpu.memory_space<vmem>>, vector<8x256xbf16>
      tpu.vector_store %arg7[%c0_16, %c0_17], %21 {strides = array<i32>} : memref<8x256xbf16, #tpu.memory_space<vmem>>, vector<8x256xbf16>,
    } else {
    }
    return
  }
  func.func @transform_0(%arg0: i32, %arg1: i32, %arg2: i32) -> (i32, i32) {
    %c0_i32 = arith.constant 0 : i32
    return %arg0, %arg2 : i32, i32
  }
  func.func @transform_1(%arg0: i32, %arg1: i32, %arg2: i32) -> (i32, i32) {
    %c0_i32 = arith.constant 0 : i32
    return %arg2, %arg1 : i32, i32
  }
  func.func @transform_2(%arg0: i32, %arg1: i32, %arg2: i32) -> (i32, i32) {
    %c0_i32 = arith.constant 0 : i32
    %c0_i32_0 = arith.constant 0 : i32
    return %c0_i32, %arg1 : i32, i32
  }
  func.func @transform_3(%arg0: i32, %arg1: i32, %arg2: i32) -> (i32, i32) {
    %c0_i32 = arith.constant 0 : i32
    %c0_i32_0 = arith.constant 0 : i32
    return %c0_i32, %arg1 : i32, i32
  }
  func.func @transform_4(%arg0: i32, %arg1: i32, %arg2: i32) -> (i32, i32) {
    %c0_i32 = arith.constant 0 : i32
    return %arg0, %arg1 : i32, i32
  }
}

module attributes {stable_mosaic.version = 11 : i64} {
  func.func @_mm_bn_kernel(%arg0: i32, %arg1: i32, %arg2: i32, %arg3: memref<8x256xbf16, #tpu.memory_space<vmem>>, %arg4: memref<256x256xbf16, #tpu.memory_space<vmem>>, %arg5: memref<1x256xf32, #tpu.memory_space<vmem>>, %arg6: memref<1x256xf32, #tpu.memory_space<vmem>>, %arg7: memref<8x256xbf16, #tpu.memory_space<vmem>>, %arg8: memref<8x256xf32, #tpu.memory_space<vmem>>) attributes {dimension_semantics = [#tpu.dimension_semantics<parallel>, #tpu.dimension_semantics<parallel>, #tpu.dimension_semantics<arbitrary>], iteration_bounds = array<i64: 1, 2, 1>, scalar_prefetch = 0 : i64, scratch_operands = 1 : i64, tpu.core_type = #tpu.core_type<tc>, window_params = [{transform_indices = @transform_0, window_bounds = array<i64: 8, 256>}, {transform_indices = @transform_1, window_bounds = array<i64: 256, 256>}, {transform_indices = @transform_2, window_bounds = array<i64: 1, 256>}, {transform_indices = @transform_3, window_bounds = array<i64: 1, 256>}, {transform_indices = @transform_4, window_bounds = array<i64: 8, 256>}]} {
    %c0_i32 = arith.constant 0 : i32
    %0 = arith.cmpi eq, %arg2, %c0_i32 : i32
    %1 = arith.extui %0 : i1 to i32
    %c0_i32_0 = arith.constant 0 : i32
    %2 = arith.cmpi ne, %1, %c0_i32_0 : i32
    scf.if %2 {
      %cst_10 = arith.constant 0.000000e+00 : f32
      %12 = vector.broadcast %cst_10 : f32 to vector<8x256xf32>
      %c0_11 = arith.constant 0 : index
      %c0_12 = arith.constant 0 : index
      %13 = vector.load %arg8[%c0_11, %c0_12] : memref<8x256xf32, #tpu.memory_space<vmem>>, vector<8x256xf32>
      tpu.vector_store %arg8[%c0_11, %c0_12], %12 {strides = array<i32>} : memref<8x256xf32, #tpu.memory_space<vmem>>, vector<8x256xf32>,
    } else {
    }
    %c0 = arith.constant 0 : index
    %c0_1 = arith.constant 0 : index
    %3 = vector.load %arg8[%c0, %c0_1] : memref<8x256xf32, #tpu.memory_space<vmem>>, vector<8x256xf32>
    %c0_2 = arith.constant 0 : index
    %c0_3 = arith.constant 0 : index
    %4 = vector.load %arg3[%c0_2, %c0_3] : memref<8x256xbf16, #tpu.memory_space<vmem>>, vector<8x256xbf16>
    %c0_4 = arith.constant 0 : index
    %c0_5 = arith.constant 0 : index
    %5 = vector.load %arg4[%c0_4, %c0_5] : memref<256x256xbf16, #tpu.memory_space<vmem>>, vector<256x256xbf16>
    %cst = arith.constant dense<0.000000e+00> : vector<8x256xf32>
    %6 = tpu.matmul %4, %5, %cst {dimension_numbers = #tpu.dot_dimension_numbers<[1], [0], [0], [1], [0, 0, 1, 1], [], []>} : vector<8x256xbf16>, vector<256x256xbf16>, vector<8x256xf32> -> vector<8x256xf32>
    %7 = arith.addf %3, %6 : vector<8x256xf32>
    %c0_6 = arith.constant 0 : index
    %c0_7 = arith.constant 0 : index
    %8 = vector.load %arg8[%c0_6, %c0_7] : memref<8x256xf32, #tpu.memory_space<vmem>>, vector<8x256xf32>
    tpu.vector_store %arg8[%c0_6, %c0_7], %7 {strides = array<i32>} : memref<8x256xf32, #tpu.memory_space<vmem>>, vector<8x256xf32>,
    %c0_i32_8 = arith.constant 0 : i32
    %9 = arith.cmpi eq, %arg2, %c0_i32_8 : i32
    %10 = arith.extui %9 : i1 to i32
    %c0_i32_9 = arith.constant 0 : i32
    %11 = arith.cmpi ne, %10, %c0_i32_9 : i32
    scf.if %11 {
      %c0_10 = arith.constant 0 : index
      %c0_11 = arith.constant 0 : index
      %12 = vector.load %arg8[%c0_10, %c0_11] : memref<8x256xf32, #tpu.memory_space<vmem>>, vector<8x256xf32>
      %c0_12 = arith.constant 0 : index
      %c0_13 = arith.constant 0 : index
      %13 = vector.load %arg5[%c0_12, %c0_13] : memref<1x256xf32, #tpu.memory_space<vmem>>, vector<1x256xf32>
      %14 = vector.broadcast %13 : vector<1x256xf32> to vector<8x256xf32>
      %15 = arith.mulf %12, %14 : vector<8x256xf32>
      %c0_14 = arith.constant 0 : index
      %c0_15 = arith.constant 0 : index
      %16 = vector.load %arg6[%c0_14, %c0_15] : memref<1x256xf32, #tpu.memory_space<vmem>>, vector<1x256xf32>
      %17 = vector.broadcast %16 : vector<1x256xf32> to vector<8x256xf32>
      %18 = arith.addf %15, %17 : vector<8x256xf32>
      %19 = arith.truncf %18 : vector<8x256xf32> to vector<8x256xbf16>
      %c0_16 = arith.constant 0 : index
      %c0_17 = arith.constant 0 : index
      %20 = vector.load %arg7[%c0_16, %c0_17] : memref<8x256xbf16, #tpu.memory_space<vmem>>, vector<8x256xbf16>
      tpu.vector_store %arg7[%c0_16, %c0_17], %19 {strides = array<i32>} : memref<8x256xbf16, #tpu.memory_space<vmem>>, vector<8x256xbf16>,
    } else {
    }
    return
  }
  func.func @transform_0(%arg0: i32, %arg1: i32, %arg2: i32) -> (i32, i32) {
    %c0_i32 = arith.constant 0 : i32
    return %arg0, %arg2 : i32, i32
  }
  func.func @transform_1(%arg0: i32, %arg1: i32, %arg2: i32) -> (i32, i32) {
    %c0_i32 = arith.constant 0 : i32
    return %arg2, %arg1 : i32, i32
  }
  func.func @transform_2(%arg0: i32, %arg1: i32, %arg2: i32) -> (i32, i32) {
    %c0_i32 = arith.constant 0 : i32
    %c0_i32_0 = arith.constant 0 : i32
    return %c0_i32, %arg1 : i32, i32
  }
  func.func @transform_3(%arg0: i32, %arg1: i32, %arg2: i32) -> (i32, i32) {
    %c0_i32 = arith.constant 0 : i32
    %c0_i32_0 = arith.constant 0 : i32
    return %c0_i32, %arg1 : i32, i32
  }
  func.func @transform_4(%arg0: i32, %arg1: i32, %arg2: i32) -> (i32, i32) {
    %c0_i32 = arith.constant 0 : i32
    return %arg0, %arg1 : i32, i32
  }
}

module attributes {stable_mosaic.version = 11 : i64} {
  func.func @_mm_bn_res_kernel(%arg0: i32, %arg1: i32, %arg2: i32, %arg3: memref<8x512xbf16, #tpu.memory_space<vmem>>, %arg4: memref<512x256xbf16, #tpu.memory_space<vmem>>, %arg5: memref<1x256xf32, #tpu.memory_space<vmem>>, %arg6: memref<1x256xf32, #tpu.memory_space<vmem>>, %arg7: memref<8x256xbf16, #tpu.memory_space<vmem>>, %arg8: memref<8x256xbf16, #tpu.memory_space<vmem>>, %arg9: memref<8x256xf32, #tpu.memory_space<vmem>>) attributes {dimension_semantics = [#tpu.dimension_semantics<parallel>, #tpu.dimension_semantics<parallel>, #tpu.dimension_semantics<arbitrary>], iteration_bounds = array<i64: 1, 2, 9>, scalar_prefetch = 0 : i64, scratch_operands = 1 : i64, tpu.core_type = #tpu.core_type<tc>, window_params = [{transform_indices = @transform_0, window_bounds = array<i64: 8, 512>}, {transform_indices = @transform_1, window_bounds = array<i64: 512, 256>}, {transform_indices = @transform_2, window_bounds = array<i64: 1, 256>}, {transform_indices = @transform_3, window_bounds = array<i64: 1, 256>}, {transform_indices = @transform_4, window_bounds = array<i64: 8, 256>}, {transform_indices = @transform_5, window_bounds = array<i64: 8, 256>}]} {
    %c0_i32 = arith.constant 0 : i32
    %0 = arith.cmpi eq, %arg2, %c0_i32 : i32
    %1 = arith.extui %0 : i1 to i32
    %c0_i32_0 = arith.constant 0 : i32
    %2 = arith.cmpi ne, %1, %c0_i32_0 : i32
    scf.if %2 {
      %cst_9 = arith.constant 0.000000e+00 : f32
      %12 = vector.broadcast %cst_9 : f32 to vector<8x256xf32>
      %c0_10 = arith.constant 0 : index
      %c0_11 = arith.constant 0 : index
      %13 = vector.load %arg9[%c0_10, %c0_11] : memref<8x256xf32, #tpu.memory_space<vmem>>, vector<8x256xf32>
      tpu.vector_store %arg9[%c0_10, %c0_11], %12 {strides = array<i32>} : memref<8x256xf32, #tpu.memory_space<vmem>>, vector<8x256xf32>,
    } else {
    }
    %c0 = arith.constant 0 : index
    %c0_1 = arith.constant 0 : index
    %3 = vector.load %arg9[%c0, %c0_1] : memref<8x256xf32, #tpu.memory_space<vmem>>, vector<8x256xf32>
    %c0_2 = arith.constant 0 : index
    %c0_3 = arith.constant 0 : index
    %4 = vector.load %arg3[%c0_2, %c0_3] : memref<8x512xbf16, #tpu.memory_space<vmem>>, vector<8x512xbf16>
    %c0_4 = arith.constant 0 : index
    %c0_5 = arith.constant 0 : index
    %5 = vector.load %arg4[%c0_4, %c0_5] : memref<512x256xbf16, #tpu.memory_space<vmem>>, vector<512x256xbf16>
    %cst = arith.constant dense<0.000000e+00> : vector<8x256xf32>
    %6 = tpu.matmul %4, %5, %cst {dimension_numbers = #tpu.dot_dimension_numbers<[1], [0], [0], [1], [0, 0, 1, 1], [], []>} : vector<8x512xbf16>, vector<512x256xbf16>, vector<8x256xf32> -> vector<8x256xf32>
    %7 = arith.addf %3, %6 : vector<8x256xf32>
    %c0_6 = arith.constant 0 : index
    %c0_7 = arith.constant 0 : index
    %8 = vector.load %arg9[%c0_6, %c0_7] : memref<8x256xf32, #tpu.memory_space<vmem>>, vector<8x256xf32>
    tpu.vector_store %arg9[%c0_6, %c0_7], %7 {strides = array<i32>} : memref<8x256xf32, #tpu.memory_space<vmem>>, vector<8x256xf32>,
    %c8_i32 = arith.constant 8 : i32
    %9 = arith.cmpi eq, %arg2, %c8_i32 : i32
    %10 = arith.extui %9 : i1 to i32
    %c0_i32_8 = arith.constant 0 : i32
    %11 = arith.cmpi ne, %10, %c0_i32_8 : i32
    scf.if %11 {
      %c0_9 = arith.constant 0 : index
      %c0_10 = arith.constant 0 : index
      %12 = vector.load %arg9[%c0_9, %c0_10] : memref<8x256xf32, #tpu.memory_space<vmem>>, vector<8x256xf32>
      %c0_11 = arith.constant 0 : index
      %c0_12 = arith.constant 0 : index
      %13 = vector.load %arg5[%c0_11, %c0_12] : memref<1x256xf32, #tpu.memory_space<vmem>>, vector<1x256xf32>
      %14 = vector.broadcast %13 : vector<1x256xf32> to vector<8x256xf32>
      %15 = arith.mulf %12, %14 : vector<8x256xf32>
      %c0_13 = arith.constant 0 : index
      %c0_14 = arith.constant 0 : index
      %16 = vector.load %arg6[%c0_13, %c0_14] : memref<1x256xf32, #tpu.memory_space<vmem>>, vector<1x256xf32>
      %17 = vector.broadcast %16 : vector<1x256xf32> to vector<8x256xf32>
      %18 = arith.addf %15, %17 : vector<8x256xf32>
      %c0_15 = arith.constant 0 : index
      %c0_16 = arith.constant 0 : index
      %19 = vector.load %arg7[%c0_15, %c0_16] : memref<8x256xbf16, #tpu.memory_space<vmem>>, vector<8x256xbf16>
      %20 = arith.extf %19 : vector<8x256xbf16> to vector<8x256xf32>
      %21 = arith.addf %18, %20 : vector<8x256xf32>
      %cst_17 = arith.constant 0.000000e+00 : f32
      %22 = vector.broadcast %cst_17 : f32 to vector<8x256xf32>
      %23 = arith.maximumf %21, %22 : vector<8x256xf32>
      %24 = arith.truncf %23 : vector<8x256xf32> to vector<8x256xbf16>
      %c0_18 = arith.constant 0 : index
      %c0_19 = arith.constant 0 : index
      %25 = vector.load %arg8[%c0_18, %c0_19] : memref<8x256xbf16, #tpu.memory_space<vmem>>, vector<8x256xbf16>
      tpu.vector_store %arg8[%c0_18, %c0_19], %24 {strides = array<i32>} : memref<8x256xbf16, #tpu.memory_space<vmem>>, vector<8x256xbf16>,
    } else {
    }
    return
  }
  func.func @transform_0(%arg0: i32, %arg1: i32, %arg2: i32) -> (i32, i32) {
    %c0_i32 = arith.constant 0 : i32
    return %arg0, %arg2 : i32, i32
  }
  func.func @transform_1(%arg0: i32, %arg1: i32, %arg2: i32) -> (i32, i32) {
    %c0_i32 = arith.constant 0 : i32
    return %arg2, %arg1 : i32, i32
  }
  func.func @transform_2(%arg0: i32, %arg1: i32, %arg2: i32) -> (i32, i32) {
    %c0_i32 = arith.constant 0 : i32
    %c0_i32_0 = arith.constant 0 : i32
    return %c0_i32, %arg1 : i32, i32
  }
  func.func @transform_3(%arg0: i32, %arg1: i32, %arg2: i32) -> (i32, i32) {
    %c0_i32 = arith.constant 0 : i32
    %c0_i32_0 = arith.constant 0 : i32
    return %c0_i32, %arg1 : i32, i32
  }
  func.func @transform_4(%arg0: i32, %arg1: i32, %arg2: i32) -> (i32, i32) {
    %c0_i32 = arith.constant 0 : i32
    return %arg0, %arg1 : i32, i32
  }
  func.func @transform_5(%arg0: i32, %arg1: i32, %arg2: i32) -> (i32, i32) {
    %c0_i32 = arith.constant 0 : i32
    return %arg0, %arg1 : i32, i32
  }
}

module attributes {stable_mosaic.version = 11 : i64} {
  func.func @_head_kernel(%arg0: memref<2x1x512xbf16, #tpu.memory_space<vmem>>, %arg1: memref<512x128xf32, #tpu.memory_space<vmem>>, %arg2: memref<1x128xf32, #tpu.memory_space<vmem>>, %arg3: memref<2x128xf32, #tpu.memory_space<vmem>>) attributes {dimension_semantics = [], scalar_prefetch = 0 : i64, scratch_operands = 0 : i64, tpu.core_type = #tpu.core_type<tc>} {
    %c0 = arith.constant 0 : index
    %c0_0 = arith.constant 0 : index
    %c0_1 = arith.constant 0 : index
    %0 = vector.load %arg0[%c0, %c0_0, %c0_1] : memref<2x1x512xbf16, #tpu.memory_space<vmem>>, vector<2x1x512xbf16>
    %1 = arith.extf %0 : vector<2x1x512xbf16> to vector<2x1x512xf32>
    %cst = arith.constant dense<0.000000e+00> : vector<2x512xf32>
    %2 = vector.multi_reduction <add>, %1, %cst [1] : vector<2x1x512xf32> to vector<2x512xf32>
    %cst_2 = arith.constant 1.000000e+00 : f32
    %3 = vector.broadcast %cst_2 : f32 to vector<2x512xf32>
    %4 = arith.mulf %2, %3 : vector<2x512xf32>
    %c0_3 = arith.constant 0 : index
    %c0_4 = arith.constant 0 : index
    %5 = vector.load %arg1[%c0_3, %c0_4] : memref<512x128xf32, #tpu.memory_space<vmem>>, vector<512x128xf32>
    %cst_5 = arith.constant dense<0.000000e+00> : vector<2x128xf32>
    %6 = tpu.matmul %4, %5, %cst_5 {dimension_numbers = #tpu.dot_dimension_numbers<[1], [0], [0], [1], [0, 0, 1, 1], [], []>} : vector<2x512xf32>, vector<512x128xf32>, vector<2x128xf32> -> vector<2x128xf32>
    %c0_6 = arith.constant 0 : index
    %c0_7 = arith.constant 0 : index
    %7 = vector.load %arg2[%c0_6, %c0_7] : memref<1x128xf32, #tpu.memory_space<vmem>>, vector<1x128xf32>
    %8 = vector.broadcast %7 : vector<1x128xf32> to vector<2x128xf32>
    %9 = arith.addf %6, %8 : vector<2x128xf32>
    %c0_8 = arith.constant 0 : index
    %c0_9 = arith.constant 0 : index
    %10 = vector.load %arg3[%c0_8, %c0_9] : memref<2x128xf32, #tpu.memory_space<vmem>>, vector<2x128xf32>
    tpu.vector_store %arg3[%c0_8, %c0_9], %9 {strides = array<i32>} : memref<2x128xf32, #tpu.memory_space<vmem>>, vector<2x128xf32>,
    return
  }
}

</mosaic_0001>

<llo_original>
// kernel: resnet_forward.14
$region0: #{resnet_forward.14}
  #allocation0 [shape = 'u32[]', space=smem, size = 0x4, offset = 0x4, fixed_abs, tag = 'smem constant byte address 0x4 - core index']
  #allocation1 [shape = 'u32[72,128]{1,0:T(1,128)}', space=vmem, size = 0x9000, scoped, tag = 'internal scratch']
  #allocation2 [shape = 'f32[128,128]{1,0:T(8,128)}', space=vmem, size = 0x10000, scoped, tag = 'scratch operand']
  %s0 = inlined_call_operand.vmem [shape: bf16[128,256], index: 0, kind: input, shape index: {}]
  %s1 = inlined_call_operand.vmem [shape: bf16[256,128], index: 1, kind: input, shape index: {}]
  %s2 = inlined_call_operand.vmem [shape: f32[1,128], index: 2, kind: input, shape index: {}]
  %s3 = inlined_call_operand.vmem [shape: f32[1,128], index: 3, kind: input, shape index: {}]
  %s4 = inlined_call_operand.vmem [shape: bf16[128,128], index: 4, kind: output, shape index: {}]
  %s5 = sld [smem:[#allocation0]]
  $region34: #{resnet_forward.14} parent=0
    _
  %s7 = ssub.s32 1, %s5
  %s8 = scalar_select 0, %s7, %s5
  // Predicated region
  $region2: #{resnet_forward.14} parent=0 // pred_check
    _
  $region3: #{resnet_forward.14} parent=0 // pred_check_branch
    %10 = sbr.rel (0) target = $region5
  $region4: #{resnet_forward.14} parent=0 // pred_region
    _
  $region5: #{resnet_forward.14} parent=0 // pred_fallthru
    _
  // Predicated region
  $region6: #{resnet_forward.14} parent=0 // pred_check
    _
  $region7: #{resnet_forward.14} parent=0 // pred_check_branch
    %12 = sbr.rel (0) target = $region9
  $region8: #{resnet_forward.14} parent=0 // pred_region
    _
  $region9: #{resnet_forward.14} parent=0 // pred_fallthru
    _
  // Predicated region
  $region10: #{resnet_forward.14} parent=0 // pred_check
    _
  $region11: #{resnet_forward.14} parent=0 // pred_check_branch
    %14 = sbr.rel (0) target = $region13
  $region12: #{resnet_forward.14} parent=0 // pred_region
    _
  $region13: #{resnet_forward.14} parent=0 // pred_fallthru
    _
  // Predicated region
  $region14: #{resnet_forward.14} parent=0 // pred_check
    _
  $region15: #{resnet_forward.14} parent=0 // pred_check_branch
    %16 = sbr.rel (0) target = $region17
  $region16: #{resnet_forward.14} parent=0 // pred_region
    _
  $region17: #{resnet_forward.14} parent=0 // pred_fallthru
    _
  %p17 = scmp.eq.s32.totalorder 0, 0
  // Predicated region
  $region18: #{resnet_forward.14} parent=0 // pred_check
    %p18 = pneg %p17
  $region19: #{resnet_forward.14} parent=0 // pred_check_branch
    %20 = sbr.rel (%p18) target = $region21
  $region20: #{resnet_forward.14} parent=0 // pred_region
    %21 = vst [vmem:[#allocation2] sm:$0xff] 0.0
    %22 = vst [vmem:[#allocation2 + $0x8] sm:$0xff] 0.0
    %23 = vst [vmem:[#allocation2 + $0x10] sm:$0xff] 0.0
    %24 = vst [vmem:[#allocation2 + $0x18] sm:$0xff] 0.0
    %25 = vst [vmem:[#allocation2 + $0x20] sm:$0xff] 0.0
    %26 = vst [vmem:[#allocation2 + $0x28] sm:$0xff] 0.0
    %27 = vst [vmem:[#allocation2 + $0x30] sm:$0xff] 0.0
    %28 = vst [vmem:[#allocation2 + $0x38] sm:$0xff] 0.0
    %29 = vst [vmem:[#allocation2 + $0x40] sm:$0xff] 0.0
    %30 = vst [vmem:[#allocation2 + $0x48] sm:$0xff] 0.0
    %31 = vst [vmem:[#allocation2 + $0x50] sm:$0xff] 0.0
    %32 = vst [vmem:[#allocation2 + $0x58] sm:$0xff] 0.0
    %33 = vst [vmem:[#allocation2 + $0x60] sm:$0xff] 0.0
    %34 = vst [vmem:[#allocation2 + $0x68] sm:$0xff] 0.0
    %35 = vst [vmem:[#allocation2 + $0x70] sm:$0xff] 0.0
    %36 = vst [vmem:[#allocation2 + $0x78] sm:$0xff] 0.0
  $region21: #{resnet_forward.14} parent=0 // pred_fallthru
    _
  %v37 = vld [vmem:[#allocation2] sm:$0xff]
  %v38 = vld [vmem:[#allocation2 + $0x8] sm:$0xff]
  %v39 = vld [vmem:[#allocation2 + $0x10] sm:$0xff]
  %v40 = vld [vmem:[#allocation2 + $0x18] sm:$0xff]
  %v41 = vld [vmem:[#allocation2 + $0x20] sm:$0xff]
  %v42 = vld [vmem:[#allocation2 + $0x28] sm:$0xff]
  %v43 = vld [vmem:[#allocation2 + $0x30] sm:$0xff]
  %v44 = vld [vmem:[#allocation2 + $0x38] sm:$0xff]
  %v45 = vld [vmem:[#allocation2 + $0x40] sm:$0xff]
  %v46 = vld [vmem:[#allocation2 + $0x48] sm:$0xff]
  %v47 = vld [vmem:[#allocation2 + $0x50] sm:$0xff]
  %v48 = vld [vmem:[#allocation2 + $0x58] sm:$0xff]
  %v49 = vld [vmem:[#allocation2 + $0x60] sm:$0xff]
  %v50 = vld [vmem:[#allocation2 + $0x68] sm:$0xff]
  %v51 = vld [vmem:[#allocation2 + $0x70] sm:$0xff]
  %v52 = vld [vmem:[#allocation2 + $0x78] sm:$0xff]
  %v53 = vld [vmem:[%s0] sm:$0xff]
  %v54 = vld [vmem:[%s0 + $0x8] sm:$0xff]
  %v55 = vld [vmem:[%s0 + $0x10] sm:$0xff]
  %v56 = vld [vmem:[%s0 + $0x18] sm:$0xff]
  %v57 = vld [vmem:[%s0 + $0x20] sm:$0xff]
  %v58 = vld [vmem:[%s0 + $0x28] sm:$0xff]
  %v59 = vld [vmem:[%s0 + $0x30] sm:$0xff]
  %v60 = vld [vmem:[%s0 + $0x38] sm:$0xff]
  %v61 = vld [vmem:[%s0 + $0x40] sm:$0xff]
  %v62 = vld [vmem:[%s0 + $0x48] sm:$0xff]
  %v63 = vld [vmem:[%s0 + $0x50] sm:$0xff]
  %v64 = vld [vmem:[%s0 + $0x58] sm:$0xff]
  %v65 = vld [vmem:[%s0 + $0x60] sm:$0xff]
  %v66 = vld [vmem:[%s0 + $0x68] sm:$0xff]
  %v67 = vld [vmem:[%s0 + $0x70] sm:$0xff]
  %v68 = vld [vmem:[%s0 + $0x78] sm:$0xff]
  %v69 = vld [vmem:[%s1] sm:$0xf]
  %v70 = vld [vmem:[%s1 + $0x4] sm:$0xf]
  %v71 = vld [vmem:[%s1 + $0x8] sm:$0xf]
  %v72 = vld [vmem:[%s1 + $0xc] sm:$0xf]
  %v73 = vld [vmem:[%s1 + $0x10] sm:$0xf]
  %v74 = vld [vmem:[%s1 + $0x14] sm:$0xf]
  %v75 = vld [vmem:[%s1 + $0x18] sm:$0xf]
  %v76 = vld [vmem:[%s1 + $0x1c] sm:$0xf]
  %v77 = vld [vmem:[%s1 + $0x20] sm:$0xf]
  %v78 = vld [vmem:[%s1 + $0x24] sm:$0xf]
  %v79 = vld [vmem:[%s1 + $0x28] sm:$0xf]
  %v80 = vld [vmem:[%s1 + $0x2c] sm:$0xf]
  %v81 = vld [vmem:[%s1 + $0x30] sm:$0xf]
  %v82 = vld [vmem:[%s1 + $0x34] sm:$0xf]
  %v83 = vld [vmem:[%s1 + $0x38] sm:$0xf]
  %v84 = vld [vmem:[%s1 + $0x3c] sm:$0xf]
  %v85 = vld [vmem:[%s1 + $0x40] sm:$0xf]
  %v86 = vld [vmem:[%s1 + $0x44] sm:$0xf]
  %v87 = vld [vmem:[%s1 + $0x48] sm:$0xf]
  %v88 = vld [vmem:[%s1 + $0x4c] sm:$0xf]
  %v89 = vld [vmem:[%s1 + $0x50] sm:$0xf]
  %v90 = vld [vmem:[%s1 + $0x54] sm:$0xf]
  %v91 = vld [vmem:[%s1 + $0x58] sm:$0xf]
  %v92 = vld [vmem:[%s1 + $0x5c] sm:$0xf]
  %v93 = vld [vmem:[%s1 + $0x60] sm:$0xf]
  %v94 = vld [vmem:[%s1 + $0x64] sm:$0xf]
  %v95 = vld [vmem:[%s1 + $0x68] sm:$0xf]
  %v96 = vld [vmem:[%s1 + $0x6c] sm:$0xf]
  %v97 = vld [vmem:[%s1 + $0x70] sm:$0xf]
  %v98 = vld [vmem:[%s1 + $0x74] sm:$0xf]
  %v99 = vld [vmem:[%s1 + $0x78] sm:$0xf]
  %v100 = vld [vmem:[%s1 + $0x7c] sm:$0xf]
  %v117 = vunpack.c.l.b16 %v53
  %v118 = vunpack.c.h.b16 %v53
  %v119 = vunpack.c.l.b16 %v54
  %v120 = vunpack.c.h.b16 %v54
  %v121 = vunpack.c.l.b16 %v55
  %v122 = vunpack.c.h.b16 %v55
  %v123 = vunpack.c.l.b16 %v56
  %v124 = vunpack.c.h.b16 %v56
  %v125 = vunpack.c.l.b16 %v57
  %v126 = vunpack.c.h.b16 %v57
  %v127 = vunpack.c.l.b16 %v58
  %v128 = vunpack.c.h.b16 %v58
  %v129 = vunpack.c.l.b16 %v59
  %v130 = vunpack.c.h.b16 %v59
  %v131 = vunpack.c.l.b16 %v60
  %v132 = vunpack.c.h.b16 %v60
  %v133 = vunpack.c.l.b16 %v61
  %v134 = vunpack.c.h.b16 %v61
  %v135 = vunpack.c.l.b16 %v62
  %v136 = vunpack.c.h.b16 %v62
  %v137 = vunpack.c.l.b16 %v63
  %v138 = vunpack.c.h.b16 %v63
  %v139 = vunpack.c.l.b16 %v64
  %v140 = vunpack.c.h.b16 %v64
  %v141 = vunpack.c.l.b16 %v65
  %v142 = vunpack.c.h.b16 %v65
  %v143 = vunpack.c.l.b16 %v66
  %v144 = vunpack.c.h.b16 %v66
  %v145 = vunpack.c.l.b16 %v67
  %v146 = vunpack.c.h.b16 %v67
  %v147 = vunpack.c.l.b16 %v68
  %v148 = vunpack.c.h.b16 %v68
  %v149 = vpack.c.b16 %v119, %v117
  %v150 = vpack.c.b16 %v120, %v118
  %v151 = vpack.c.b16 %v123, %v121
  %v152 = vpack.c.b16 %v124, %v122
  %v153 = vpack.c.b16 %v127, %v125
  %v154 = vpack.c.b16 %v128, %v126
  %v155 = vpack.c.b16 %v131, %v129
  %v156 = vpack.c.b16 %v132, %v130
  %v157 = vpack.c.b16 %v135, %v133
  %v158 = vpack.c.b16 %v136, %v134
  %v159 = vpack.c.b16 %v139, %v137
  %v160 = vpack.c.b16 %v140, %v138
  %v161 = vpack.c.b16 %v143, %v141
  %v162 = vpack.c.b16 %v144, %v142
  %v163 = vpack.c.b16 %v147, %v145
  %v164 = vpack.c.b16 %v148, %v146
  %v213 = vunpack.c.l.b16 %v69
  %v214 = vunpack.c.l.b16 %v70
  %v215 = vunpack.c.l.b16 %v71
  %v216 = vunpack.c.l.b16 %v72
  %v217 = vunpack.c.l.b16 %v73
  %v218 = vunpack.c.l.b16 %v74
  %v219 = vunpack.c.l.b16 %v75
  %v220 = vunpack.c.l.b16 %v76
  %v221 = vunpack.c.l.b16 %v77
  %v222 = vunpack.c.l.b16 %v78
  %v223 = vunpack.c.l.b16 %v79
  %v224 = vunpack.c.l.b16 %v80
  %v225 = vunpack.c.l.b16 %v81
  %v226 = vunpack.c.l.b16 %v82
  %v227 = vunpack.c.l.b16 %v83
  %v228 = vunpack.c.l.b16 %v84
  %v229 = vunpack.c.l.b16 %v85
  %v230 = vunpack.c.l.b16 %v86
  %v231 = vunpack.c.l.b16 %v87
  %v232 = vunpack.c.l.b16 %v88
  %v233 = vunpack.c.l.b16 %v89
  %v234 = vunpack.c.l.b16 %v90
  %v235 = vunpack.c.l.b16 %v91
  %v236 = vunpack.c.l.b16 %v92
  %v237 = vunpack.c.l.b16 %v93
  %v238 = vunpack.c.l.b16 %v94
  %v239 = vunpack.c.l.b16 %v95
  %v240 = vunpack.c.l.b16 %v96
  %v241 = vunpack.c.l.b16 %v97
  %v242 = vunpack.c.l.b16 %v98
  %v243 = vunpack.c.l.b16 %v99
  %v244 = vunpack.c.l.b16 %v100
  %v245 = vpack.c.b16 %v214, %v213
  %v246 = vpack.c.b16 %v216, %v215
  %v247 = vpack.c.b16 %v218, %v217
  %v248 = vpack.c.b16 %v220, %v219
  %v249 = vpack.c.b16 %v222, %v221
  %v250 = vpack.c.b16 %v224, %v223
  %v251 = vpack.c.b16 %v226, %v225
  %v252 = vpack.c.b16 %v228, %v227
  %v253 = vpack.c.b16 %v230, %v229
  %v254 = vpack.c.b16 %v232, %v231
  %v255 = vpack.c.b16 %v234, %v233
  %v256 = vpack.c.b16 %v236, %v235
  %v257 = vpack.c.b16 %v238, %v237
  %v258 = vpack.c.b16 %v240, %v239
  %v259 = vpack.c.b16 %v242, %v241
  %v260 = vpack.c.b16 %v244, %v243
  %277 = vmatpush.bf16.msra.mxu0 %v252
  %278 = vmatpush.bf16.msra.mxu0 %v251
  %279 = vmatpush.bf16.msra.mxu0 %v250
  %280 = vmatpush.bf16.msra.mxu0 %v249
  %281 = vmatpush.bf16.msra.mxu0 %v248
  %282 = vmatpush.bf16.msra.mxu0 %v247
  %283 = vmatpush.bf16.msra.mxu0 %v246
  %284 = vmatpush.bf16.msra.mxu0 %v245
  %285 = vmatmul.bf16.gmra.mxu0 %v149
  %v286 = vpop.f32.mrf.mxu0
  %v287 = vadd.f32 0.0, %v286
  %v288 = vpop.f32.mrf.mxu0
  %v289 = vadd.f32 0.0, %v288
  %290 = vmatmul.bf16.gmra.mxu0 %v151
  %v291 = vpop.f32.mrf.mxu0
  %v292 = vadd.f32 0.0, %v291
  %v293 = vpop.f32.mrf.mxu0
  %v294 = vadd.f32 0.0, %v293
  %295 = vmatmul.bf16.gmra.mxu0 %v153
  %v296 = vpop.f32.mrf.mxu0
  %v297 = vadd.f32 0.0, %v296
  %v298 = vpop.f32.mrf.mxu0
  %v299 = vadd.f32 0.0, %v298
  %300 = vmatmul.bf16.gmra.mxu0 %v155
  %v301 = vpop.f32.mrf.mxu0
  %v302 = vadd.f32 0.0, %v301
  %v303 = vpop.f32.mrf.mxu0
  %v304 = vadd.f32 0.0, %v303
  %305 = vmatmul.bf16.gmra.mxu0 %v157
  %v306 = vpop.f32.mrf.mxu0
  %v307 = vadd.f32 0.0, %v306
  %v308 = vpop.f32.mrf.mxu0
  %v309 = vadd.f32 0.0, %v308
  %310 = vmatmul.bf16.gmra.mxu0 %v159
  %v311 = vpop.f32.mrf.mxu0
  %v312 = vadd.f32 0.0, %v311
  %v313 = vpop.f32.mrf.mxu0
  %v314 = vadd.f32 0.0, %v313
  %315 = vmatmul.bf16.gmra.mxu0 %v161
  %v316 = vpop.f32.mrf.mxu0
  %v317 = vadd.f32 0.0, %v316
  %v318 = vpop.f32.mrf.mxu0
  %v319 = vadd.f32 0.0, %v318
  %320 = vmatmul.bf16.gmra.mxu0 %v163
  %v321 = vpop.f32.mrf.mxu0
  %v322 = vadd.f32 0.0, %v321
  %v323 = vpop.f32.mrf.mxu0
  %v324 = vadd.f32 0.0, %v323
  %325 = vdwg.mxu0
  %326 = vmatpush.bf16.msra.mxu0 %v260
  %327 = vmatpush.bf16.msra.mxu0 %v259
  %328 = vmatpush.bf16.msra.mxu0 %v258
  %329 = vmatpush.bf16.msra.mxu0 %v257
  %330 = vmatpush.bf16.msra.mxu0 %v256
  %331 = vmatpush.bf16.msra.mxu0 %v255
  %332 = vmatpush.bf16.msra.mxu0 %v254
  %333 = vmatpush.bf16.msra.mxu0 %v253
  %334 = vmatmul.bf16.gmra.mxu0 %v150
  %v335 = vpop.f32.mrf.mxu0
  %v336 = vadd.f32 %v287, %v335
  %v337 = vpop.f32.mrf.mxu0
  %v338 = vadd.f32 %v289, %v337
  %339 = vmatmul.bf16.gmra.mxu0 %v152
  %v340 = vpop.f32.mrf.mxu0
  %v341 = vadd.f32 %v292, %v340
  %v342 = vpop.f32.mrf.mxu0
  %v343 = vadd.f32 %v294, %v342
  %344 = vmatmul.bf16.gmra.mxu0 %v154
  %v345 = vpop.f32.mrf.mxu0
  %v346 = vadd.f32 %v297, %v345
  %v347 = vpop.f32.mrf.mxu0
  %v348 = vadd.f32 %v299, %v347
  %349 = vmatmul.bf16.gmra.mxu0 %v156
  %v350 = vpop.f32.mrf.mxu0
  %v351 = vadd.f32 %v302, %v350
  %v352 = vpop.f32.mrf.mxu0
  %v353 = vadd.f32 %v304, %v352
  %354 = vmatmul.bf16.gmra.mxu0 %v158
  %v355 = vpop.f32.mrf.mxu0
  %v356 = vadd.f32 %v307, %v355
  %v357 = vpop.f32.mrf.mxu0
  %v358 = vadd.f32 %v309, %v357
  %359 = vmatmul.bf16.gmra.mxu0 %v160
  %v360 = vpop.f32.mrf.mxu0
  %v361 = vadd.f32 %v312, %v360
  %v362 = vpop.f32.mrf.mxu0
  %v363 = vadd.f32 %v314, %v362
  %364 = vmatmul.bf16.gmra.mxu0 %v162
  %v365 = vpop.f32.mrf.mxu0
  %v366 = vadd.f32 %v317, %v365
  %v367 = vpop.f32.mrf.mxu0
  %v368 = vadd.f32 %v319, %v367
  %369 = vmatmul.bf16.gmra.mxu0 %v164
  %v370 = vpop.f32.mrf.mxu0
  %v371 = vadd.f32 %v322, %v370
  %v372 = vpop.f32.mrf.mxu0
  %v373 = vadd.f32 %v324, %v372
  %374 = vdwg.mxu0
  %v375 = vadd.f32 %v37, %v336
  %v376 = vadd.f32 %v38, %v338
  %v377 = vadd.f32 %v39, %v341
  %v378 = vadd.f32 %v40, %v343
  %v379 = vadd.f32 %v41, %v346
  %v380 = vadd.f32 %v42, %v348
  %v381 = vadd.f32 %v43, %v351
  %v382 = vadd.f32 %v44, %v353
  %v383 = vadd.f32 %v45, %v356
  %v384 = vadd.f32 %v46, %v358
  %v385 = vadd.f32 %v47, %v361
  %v386 = vadd.f32 %v48, %v363
  %v387 = vadd.f32 %v49, %v366
  %v388 = vadd.f32 %v50, %v368
  %v389 = vadd.f32 %v51, %v371
  %v390 = vadd.f32 %v52, %v373
  %391 = vst [vmem:[#allocation2] sm:$0xff] %v375
  %392 = vst [vmem:[#allocation2 + $0x8] sm:$0xff] %v376
  %393 = vst [vmem:[#allocation2 + $0x10] sm:$0xff] %v377
  %394 = vst [vmem:[#allocation2 + $0x18] sm:$0xff] %v378
  %395 = vst [vmem:[#allocation2 + $0x20] sm:$0xff] %v379
  %396 = vst [vmem:[#allocation2 + $0x28] sm:$0xff] %v380
  %397 = vst [vmem:[#allocation2 + $0x30] sm:$0xff] %v381
  %398 = vst [vmem:[#allocation2 + $0x38] sm:$0xff] %v382
  %399 = vst [vmem:[#allocation2 + $0x40] sm:$0xff] %v383
  %400 = vst [vmem:[#allocation2 + $0x48] sm:$0xff] %v384
  %401 = vst [vmem:[#allocation2 + $0x50] sm:$0xff] %v385
  %402 = vst [vmem:[#allocation2 + $0x58] sm:$0xff] %v386
  %403 = vst [vmem:[#allocation2 + $0x60] sm:$0xff] %v387
  %404 = vst [vmem:[#allocation2 + $0x68] sm:$0xff] %v388
  %405 = vst [vmem:[#allocation2 + $0x70] sm:$0xff] %v389
  %406 = vst [vmem:[#allocation2 + $0x78] sm:$0xff] %v390
  // Predicated region
  $region22: #{resnet_forward.14} parent=0 // pred_check
    %p407 = pneg %p17
  $region23: #{resnet_forward.14} parent=0 // pred_check_branch
    %409 = sbr.rel (%p407) target = $region25
  $region24: #{resnet_forward.14} parent=0 // pred_region
    %v410 = vld [vmem:[#allocation2] sm:$0xff]
    %v411 = vld [vmem:[#allocation2 + $0x8] sm:$0xff]
    %v412 = vld [vmem:[#allocation2 + $0x10] sm:$0xff]
    %v413 = vld [vmem:[#allocation2 + $0x18] sm:$0xff]
    %v414 = vld [vmem:[#allocation2 + $0x20] sm:$0xff]
    %v415 = vld [vmem:[#allocation2 + $0x28] sm:$0xff]
    %v416 = vld [vmem:[#allocation2 + $0x30] sm:$0xff]
    %v417 = vld [vmem:[#allocation2 + $0x38] sm:$0xff]
    %v418 = vld [vmem:[#allocation2 + $0x40] sm:$0xff]
    %v419 = vld [vmem:[#allocation2 + $0x48] sm:$0xff]
    %v420 = vld [vmem:[#allocation2 + $0x50] sm:$0xff]
    %v421 = vld [vmem:[#allocation2 + $0x58] sm:$0xff]
    %v422 = vld [vmem:[#allocation2 + $0x60] sm:$0xff]
    %v423 = vld [vmem:[#allocation2 + $0x68] sm:$0xff]
    %v424 = vld [vmem:[#allocation2 + $0x70] sm:$0xff]
    %v425 = vld [vmem:[#allocation2 + $0x78] sm:$0xff]
    %v426 = vld [vmem:[%s2] sm:$0x1]
    %v428 = vperm.slane %v426, 0
    %v430 = vmul.f32 %v410, %v428
    %v431 = vmul.f32 %v411, %v428
    %v432 = vmul.f32 %v412, %v428
    %v433 = vmul.f32 %v413, %v428
    %v434 = vmul.f32 %v414, %v428
    %v435 = vmul.f32 %v415, %v428
    %v436 = vmul.f32 %v416, %v428
    %v437 = vmul.f32 %v417, %v428
    %v438 = vmul.f32 %v418, %v428
    %v439 = vmul.f32 %v419, %v428
    %v440 = vmul.f32 %v420, %v428
    %v441 = vmul.f32 %v421, %v428
    %v442 = vmul.f32 %v422, %v428
    %v443 = vmul.f32 %v423, %v428
    %v444 = vmul.f32 %v424, %v428
    %v445 = vmul.f32 %v425, %v428
    %v446 = vld [vmem:[%s3] sm:$0x1]
    %v448 = vperm.slane %v446, 0
    %v450 = vadd.f32 %v430, %v448
    %v451 = vadd.f32 %v431, %v448
    %v452 = vadd.f32 %v432, %v448
    %v453 = vadd.f32 %v433, %v448
    %v454 = vadd.f32 %v434, %v448
    %v455 = vadd.f32 %v435, %v448
    %v456 = vadd.f32 %v436, %v448
    %v457 = vadd.f32 %v437, %v448
    %v458 = vadd.f32 %v438, %v448
    %v459 = vadd.f32 %v439, %v448
    %v460 = vadd.f32 %v440, %v448
    %v461 = vadd.f32 %v441, %v448
    %v462 = vadd.f32 %v442, %v448
    %v463 = vadd.f32 %v443, %v448
    %v464 = vadd.f32 %v444, %v448
    %v465 = vadd.f32 %v445, %v448
    %v466 = vmax.f32 %v450, 0.0
    %v467 = vmax.f32 %v451, 0.0
    %v468 = vmax.f32 %v452, 0.0
    %v469 = vmax.f32 %v453, 0.0
    %v470 = vmax.f32 %v454, 0.0
    %v471 = vmax.f32 %v455, 0.0
    %v472 = vmax.f32 %v456, 0.0
    %v473 = vmax.f32 %v457, 0.0
    %v474 = vmax.f32 %v458, 0.0
    %v475 = vmax.f32 %v459, 0.0
    %v476 = vmax.f32 %v460, 0.0
    %v477 = vmax.f32 %v461, 0.0
    %v478 = vmax.f32 %v462, 0.0
    %v479 = vmax.f32 %v463, 0.0
    %v480 = vmax.f32 %v464, 0.0
    %v481 = vmax.f32 %v465, 0.0
    %v482 = vpack.c.bf16 %v466, %v466
    %v483 = vpack.c.bf16 %v467, %v467
    %v484 = vpack.c.bf16 %v468, %v468
    %v485 = vpack.c.bf16 %v469, %v469
    %v486 = vpack.c.bf16 %v470, %v470
    %v487 = vpack.c.bf16 %v471, %v471
    %v488 = vpack.c.bf16 %v472, %v472
    %v489 = vpack.c.bf16 %v473, %v473
    %v490 = vpack.c.bf16 %v474, %v474
    %v491 = vpack.c.bf16 %v475, %v475
    %v492 = vpack.c.bf16 %v476, %v476
    %v493 = vpack.c.bf16 %v477, %v477
    %v494 = vpack.c.bf16 %v478, %v478
    %v495 = vpack.c.bf16 %v479, %v479
    %v496 = vpack.c.bf16 %v480, %v480
    %v497 = vpack.c.bf16 %v481, %v481
    %498 = vst [vmem:[%s4] sm:$0xf] %v482
    %499 = vst [vmem:[%s4 + $0x4] sm:$0xf] %v483
    %500 = vst [vmem:[%s4 + $0x8] sm:$0xf] %v484
    %501 = vst [vmem:[%s4 + $0xc] sm:$0xf] %v485
    %502 = vst [vmem:[%s4 + $0x10] sm:$0xf] %v486
    %503 = vst [vmem:[%s4 + $0x14] sm:$0xf] %v487
    %504 = vst [vmem:[%s4 + $0x18] sm:$0xf] %v488
    %505 = vst [vmem:[%s4 + $0x1c] sm:$0xf] %v489
    %506 = vst [vmem:[%s4 + $0x20] sm:$0xf] %v490
    %507 = vst [vmem:[%s4 + $0x24] sm:$0xf] %v491
    %508 = vst [vmem:[%s4 + $0x28] sm:$0xf] %v492
    %509 = vst [vmem:[%s4 + $0x2c] sm:$0xf] %v493
    %510 = vst [vmem:[%s4 + $0x30] sm:$0xf] %v494
    %511 = vst [vmem:[%s4 + $0x34] sm:$0xf] %v495
    %512 = vst [vmem:[%s4 + $0x38] sm:$0xf] %v496
    %513 = vst [vmem:[%s4 + $0x3c] sm:$0xf] %v497
  $region25: #{resnet_forward.14} parent=0 // pred_fallthru
    _
  // Predicated region
  $region26: #{resnet_forward.14} parent=0 // pred_check
    _
  $region27: #{resnet_forward.14} parent=0 // pred_check_branch
    %515 = sbr.rel (0) target = $region29
  $region28: #{resnet_forward.14} parent=0 // pred_region
    _
  $region29: #{resnet_forward.14} parent=0 // pred_fallthru
    _
  // Predicated region
  $region30: #{resnet_forward.14} parent=0 // pred_check
    _
  $region31: #{resnet_forward.14} parent=0 // pred_check_branch
    %517 = sbr.rel (0) target = $region33
  $region32: #{resnet_forward.14} parent=0 // pred_region
    _
  $region33: #{resnet_forward.14} parent=0 // pred_fallthru
    _

// kernel: resnet_forward.15
$region0: #{resnet_forward.15}
  #allocation0 [shape = 'u32[]', space=smem, size = 0x4, offset = 0x4, fixed_abs, tag = 'smem constant byte address 0x4 - core index']
  #allocation1 [shape = 'u32[72,128]{1,0:T(1,128)}', space=vmem, size = 0x9000, scoped, tag = 'internal scratch']
  %s0 = inlined_call_operand.vmem [shape: bf16[9,32,128], index: 0, kind: input, shape index: {}]
  %s1 = inlined_call_operand.vmem [shape: bf16[32,128], index: 1, kind: output, shape index: {}]
  %s2 = sld [smem:[#allocation0]]
  $region14: #{resnet_forward.15} parent=0
    _
  %s4 = ssub.s32 1, %s2
  %s5 = scalar_select 0, %s4, %s2
  // Predicated region
  $region2: #{resnet_forward.15} parent=0 // pred_check
    _
  $region3: #{resnet_forward.15} parent=0 // pred_check_branch
    %7 = sbr.rel (0) target = $region5
  $region4: #{resnet_forward.15} parent=0 // pred_region
    _
  $region5: #{resnet_forward.15} parent=0 // pred_fallthru
    _
  %v8 = vld [vmem:[%s0] sm:$0xf]
  %v9 = vld [vmem:[%s0 + $0x4] sm:$0xf]
  %v10 = vld [vmem:[%s0 + $0x8] sm:$0xf]
  %v11 = vld [vmem:[%s0 + $0xc] sm:$0xf]
  %s12 = scalar_lea.vmem %s0, 16
  %v13 = vld [vmem:[%s12] sm:$0xf]
  %v14 = vld [vmem:[%s12 + $0x4] sm:$0xf]
  %v15 = vld [vmem:[%s12 + $0x8] sm:$0xf]
  %v16 = vld [vmem:[%s12 + $0xc] sm:$0xf]
  %v17 = vunpack.c.l.bf16 %v8
  %v18 = vunpack.c.l.bf16 %v9
  %v19 = vunpack.c.l.bf16 %v10
  %v20 = vunpack.c.l.bf16 %v11
  %v21 = vunpack.c.l.bf16 %v13
  %v22 = vunpack.c.l.bf16 %v14
  %v23 = vunpack.c.l.bf16 %v15
  %v24 = vunpack.c.l.bf16 %v16
  %v25 = vmax.f32 %v17, %v21
  %v26 = vmax.f32 %v18, %v22
  %v27 = vmax.f32 %v19, %v23
  %v28 = vmax.f32 %v20, %v24
  %v29 = vpack.c.bf16 %v25, %v25
  %v30 = vpack.c.bf16 %v26, %v26
  %v31 = vpack.c.bf16 %v27, %v27
  %v32 = vpack.c.bf16 %v28, %v28
  %s33 = scalar_lea.vmem %s0, 32
  %v34 = vld [vmem:[%s33] sm:$0xf]
  %v35 = vld [vmem:[%s33 + $0x4] sm:$0xf]
  %v36 = vld [vmem:[%s33 + $0x8] sm:$0xf]
  %v37 = vld [vmem:[%s33 + $0xc] sm:$0xf]
  %v38 = vunpack.c.l.bf16 %v29
  %v39 = vunpack.c.l.bf16 %v30
  %v40 = vunpack.c.l.bf16 %v31
  %v41 = vunpack.c.l.bf16 %v32
  %v42 = vunpack.c.l.bf16 %v34
  %v43 = vunpack.c.l.bf16 %v35
  %v44 = vunpack.c.l.bf16 %v36
  %v45 = vunpack.c.l.bf16 %v37
  %v46 = vmax.f32 %v38, %v42
  %v47 = vmax.f32 %v39, %v43
  %v48 = vmax.f32 %v40, %v44
  %v49 = vmax.f32 %v41, %v45
  %v50 = vpack.c.bf16 %v46, %v46
  %v51 = vpack.c.bf16 %v47, %v47
  %v52 = vpack.c.bf16 %v48, %v48
  %v53 = vpack.c.bf16 %v49, %v49
  %s54 = scalar_lea.vmem %s0, 48
  %v55 = vld [vmem:[%s54] sm:$0xf]
  %v56 = vld [vmem:[%s54 + $0x4] sm:$0xf]
  %v57 = vld [vmem:[%s54 + $0x8] sm:$0xf]
  %v58 = vld [vmem:[%s54 + $0xc] sm:$0xf]
  %v59 = vunpack.c.l.bf16 %v50
  %v60 = vunpack.c.l.bf16 %v51
  %v61 = vunpack.c.l.bf16 %v52
  %v62 = vunpack.c.l.bf16 %v53
  %v63 = vunpack.c.l.bf16 %v55
  %v64 = vunpack.c.l.bf16 %v56
  %v65 = vunpack.c.l.bf16 %v57
  %v66 = vunpack.c.l.bf16 %v58
  %v67 = vmax.f32 %v59, %v63
  %v68 = vmax.f32 %v60, %v64
  %v69 = vmax.f32 %v61, %v65
  %v70 = vmax.f32 %v62, %v66
  %v71 = vpack.c.bf16 %v67, %v67
  %v72 = vpack.c.bf16 %v68, %v68
  %v73 = vpack.c.bf16 %v69, %v69
  %v74 = vpack.c.bf16 %v70, %v70
  %s75 = scalar_lea.vmem %s0, 64
  %v76 = vld [vmem:[%s75] sm:$0xf]
  %v77 = vld [vmem:[%s75 + $0x4] sm:$0xf]
  %v78 = vld [vmem:[%s75 + $0x8] sm:$0xf]
  %v79 = vld [vmem:[%s75 + $0xc] sm:$0xf]
  %v80 = vunpack.c.l.bf16 %v71
  %v81 = vunpack.c.l.bf16 %v72
  %v82 = vunpack.c.l.bf16 %v73
  %v83 = vunpack.c.l.bf16 %v74
  %v84 = vunpack.c.l.bf16 %v76
  %v85 = vunpack.c.l.bf16 %v77
  %v86 = vunpack.c.l.bf16 %v78
  %v87 = vunpack.c.l.bf16 %v79
  %v88 = vmax.f32 %v80, %v84
  %v89 = vmax.f32 %v81, %v85
  %v90 = vmax.f32 %v82, %v86
  %v91 = vmax.f32 %v83, %v87
  %v92 = vpack.c.bf16 %v88, %v88
  %v93 = vpack.c.bf16 %v89, %v89
  %v94 = vpack.c.bf16 %v90, %v90
  %v95 = vpack.c.bf16 %v91, %v91
  %s96 = scalar_lea.vmem %s0, 80
  %v97 = vld [vmem:[%s96] sm:$0xf]
  %v98 = vld [vmem:[%s96 + $0x4] sm:$0xf]
  %v99 = vld [vmem:[%s96 + $0x8] sm:$0xf]
  %v100 = vld [vmem:[%s96 + $0xc] sm:$0xf]
  %v101 = vunpack.c.l.bf16 %v92
  %v102 = vunpack.c.l.bf16 %v93
  %v103 = vunpack.c.l.bf16 %v94
  %v104 = vunpack.c.l.bf16 %v95
  %v105 = vunpack.c.l.bf16 %v97
  %v106 = vunpack.c.l.bf16 %v98
  %v107 = vunpack.c.l.bf16 %v99
  %v108 = vunpack.c.l.bf16 %v100
  %v109 = vmax.f32 %v101, %v105
  %v110 = vmax.f32 %v102, %v106
  %v111 = vmax.f32 %v103, %v107
  %v112 = vmax.f32 %v104, %v108
  %v113 = vpack.c.bf16 %v109, %v109
  %v114 = vpack.c.bf16 %v110, %v110
  %v115 = vpack.c.bf16 %v111, %v111
  %v116 = vpack.c.bf16 %v112, %v112
  %s117 = scalar_lea.vmem %s0, 96
  %v118 = vld [vmem:[%s117] sm:$0xf]
  %v119 = vld [vmem:[%s117 + $0x4] sm:$0xf]
  %v120 = vld [vmem:[%s117 + $0x8] sm:$0xf]
  %v121 = vld [vmem:[%s117 + $0xc] sm:$0xf]
  %v122 = vunpack.c.l.bf16 %v113
  %v123 = vunpack.c.l.bf16 %v114
  %v124 = vunpack.c.l.bf16 %v115
  %v125 = vunpack.c.l.bf16 %v116
  %v126 = vunpack.c.l.bf16 %v118
  %v127 = vunpack.c.l.bf16 %v119
  %v128 = vunpack.c.l.bf16 %v120
  %v129 = vunpack.c.l.bf16 %v121
  %v130 = vmax.f32 %v122, %v126
  %v131 = vmax.f32 %v123, %v127
  %v132 = vmax.f32 %v124, %v128
  %v133 = vmax.f32 %v125, %v129
  %v134 = vpack.c.bf16 %v130, %v130
  %v135 = vpack.c.bf16 %v131, %v131
  %v136 = vpack.c.bf16 %v132, %v132
  %v137 = vpack.c.bf16 %v133, %v133
  %s138 = scalar_lea.vmem %s0, 112
  %v139 = vld [vmem:[%s138] sm:$0xf]
  %v140 = vld [vmem:[%s138 + $0x4] sm:$0xf]
  %v141 = vld [vmem:[%s138 + $0x8] sm:$0xf]
  %v142 = vld [vmem:[%s138 + $0xc] sm:$0xf]
  %v143 = vunpack.c.l.bf16 %v134
  %v144 = vunpack.c.l.bf16 %v135
  %v145 = vunpack.c.l.bf16 %v136
  %v146 = vunpack.c.l.bf16 %v137
  %v147 = vunpack.c.l.bf16 %v139
  %v148 = vunpack.c.l.bf16 %v140
  %v149 = vunpack.c.l.bf16 %v141
  %v150 = vunpack.c.l.bf16 %v142
  %v151 = vmax.f32 %v143, %v147
  %v152 = vmax.f32 %v144, %v148
  %v153 = vmax.f32 %v145, %v149
  %v154 = vmax.f32 %v146, %v150
  %v155 = vpack.c.bf16 %v151, %v151
  %v156 = vpack.c.bf16 %v152, %v152
  %v157 = vpack.c.bf16 %v153, %v153
  %v158 = vpack.c.bf16 %v154, %v154
  %s159 = scalar_lea.vmem %s0, 128
  %v160 = vld [vmem:[%s159] sm:$0xf]
  %v161 = vld [vmem:[%s159 + $0x4] sm:$0xf]
  %v162 = vld [vmem:[%s159 + $0x8] sm:$0xf]
  %v163 = vld [vmem:[%s159 + $0xc] sm:$0xf]
  %v164 = vunpack.c.l.bf16 %v155
  %v165 = vunpack.c.l.bf16 %v156
  %v166 = vunpack.c.l.bf16 %v157
  %v167 = vunpack.c.l.bf16 %v158
  %v168 = vunpack.c.l.bf16 %v160
  %v169 = vunpack.c.l.bf16 %v161
  %v170 = vunpack.c.l.bf16 %v162
  %v171 = vunpack.c.l.bf16 %v163
  %v172 = vmax.f32 %v164, %v168
  %v173 = vmax.f32 %v165, %v169
  %v174 = vmax.f32 %v166, %v170
  %v175 = vmax.f32 %v167, %v171
  %v176 = vpack.c.bf16 %v172, %v172
  %v177 = vpack.c.bf16 %v173, %v173
  %v178 = vpack.c.bf16 %v174, %v174
  %v179 = vpack.c.bf16 %v175, %v175
  %180 = vst [vmem:[%s1] sm:$0xf] %v176
  %181 = vst [vmem:[%s1 + $0x4] sm:$0xf] %v177
  %182 = vst [vmem:[%s1 + $0x8] sm:$0xf] %v178
  %183 = vst [vmem:[%s1 + $0xc] sm:$0xf] %v179
  // Predicated region
  $region6: #{resnet_forward.15} parent=0 // pred_check
    _
  $region7: #{resnet_forward.15} parent=0 // pred_check_branch
    %185 = sbr.rel (0) target = $region9
  $region8: #{resnet_forward.15} parent=0 // pred_region
    _
  $region9: #{resnet_forward.15} parent=0 // pred_fallthru
    _
  // Predicated region
  $region10: #{resnet_forward.15} parent=0 // pred_check
    _
  $region11: #{resnet_forward.15} parent=0 // pred_check_branch
    %187 = sbr.rel (0) target = $region13
  $region12: #{resnet_forward.15} parent=0 // pred_region
    _
  $region13: #{resnet_forward.15} parent=0 // pred_fallthru
    _

// kernel: resnet_forward.16
$region0: #{resnet_forward.16}
  #allocation0 [shape = 'u32[]', space=smem, size = 0x4, offset = 0x4, fixed_abs, tag = 'smem constant byte address 0x4 - core index']
  #allocation1 [shape = 'u32[72,128]{1,0:T(1,128)}', space=vmem, size = 0x9000, scoped, tag = 'internal scratch']
  #allocation2 [shape = 'f32[32,128]{1,0:T(8,128)}', space=vmem, size = 0x4000, scoped, tag = 'scratch operand']
  %s0 = inlined_call_operand.vmem [shape: bf16[32,1152], index: 0, kind: input, shape index: {}]
  %s1 = inlined_call_operand.vmem [shape: bf16[1152,128], index: 1, kind: input, shape index: {}]
  %s2 = inlined_call_operand.vmem [shape: f32[1,128], index: 2, kind: input, shape index: {}]
  %s3 = inlined_call_operand.vmem [shape: f32[1,128], index: 3, kind: input, shape index: {}]
  %s4 = inlined_call_operand.vmem [shape: bf16[32,128], index: 4, kind: output, shape index: {}]
  %s5 = sld [smem:[#allocation0]]
  $region83: #{resnet_forward.16} parent=0
    _
  %s7 = ssub.s32 1, %s5
  %s8 = scalar_select 0, %s7, %s5
  $region1: #{resnet_forward.16} parent=0
    #allocation3 [shape = 'u8[49152]{0}', space=vmem, size = 0xc000, scoped, tag = 'input window, operand 0']
    loop: start=0, step=1, limit=5
    $region2: #{resnet_forward.16} parent=1 // loop_pre_header
      _
    $region3: #{resnet_forward.16} parent=1 // loop_header
      %s10 = sphi 0, %s14
      %p11 = scmp.ge.s32.totalorder %s10, 5
      %s17 = sphi 0, %s36
      %s18 = sphi 0, %s32
      %s19 = sphi 0, %s28
      %s20 = sphi 0, %s17
      %s21 = sphi 0, %s18
      %s22 = sphi 0, %s19
      %s23 = sphi 0, %s20
      %s24 = sphi 0, %s21
      %s25 = sphi 0, %s22
      %s41 = sphi 0, %s43
      %s44 = sphi 0, %s41
      %s45 = sphi 0, %s44
      %s61 = sphi 0, %s45
      %s69 = sphi 0, %s71
      %s72 = sphi 0, %s69
      %s73 = sphi 0, %s72
      %s89 = sphi 0, %s73
      %s95 = sphi 0, %s97
      %s98 = sphi 0, %s95
      %s99 = sphi 0, %s98
      %s115 = sphi 0, %s99
      %s121 = sphi 0, %s123
      %s124 = sphi 0, %s121
      %s125 = sphi 0, %s124
      %s141 = sphi 0, %s125
      %s149 = sphi 0, %s151
      %s152 = sphi 0, %s149
      %s153 = sphi 0, %s152
      %s169 = sphi 0, %s153
    $region4: #{resnet_forward.16} parent=1 // loop_header_branch
      %13 = sbr.rel (%p11) target = $region8
    $region5: #{resnet_forward.16} parent=1 // loop_body
      %s15 = ssub.s32 %s10, 1
      %s16 = ssub.s32 %s10, 2
      %s26 = sadd.s32 1, %s19
      %p27 = scmp.ge.s32.totalorder %s26, 3
      %s28 = scalar_select %p27, 0, %s26
      %s29 = sadd.s32 1, %s18
      %s30 = scalar_select %p27, %s29, %s18
      %p31 = scmp.ge.s32.totalorder %s30, 1
      %s32 = scalar_select %p31, 0, %s30
      %s33 = sadd.s32 1, %s17
      %s34 = scalar_select %p31, %s33, %s17
      %p35 = scmp.ge.s32.totalorder %s34, 1
      %s36 = scalar_select %p35, 0, %s34
      %s37 = ssub.s32 %s17, %s36
      %s38 = ssub.s32 %s19, %s28
      %s39 = sor.u32 %s37, %s38
      %p40 = scmp.eq.s32.totalorder %s39, 0
      %s42 = sadd.s32 %s41, 1
      %s43 = scalar_select %p40, %s41, %s42
      %p46 = pneg %p40
      %p47 = scmp.eq.s32.totalorder %s10, 2
      %p48 = por %p46, %p47
      %p49 = scmp.ne.s32.totalorder %s41, %s44
      %p50 = scmp.eq.s32.totalorder %s10, 0
      %p51 = por %p49, %p50
      %p52 = scmp.ne.s32.totalorder %s41, %s44
      %p53 = scmp.eq.s32.totalorder %s15, 2
      %p54 = por %p52, %p53
      %p55 = scmp.ne.s32.totalorder %s44, %s45
      %p56 = scmp.eq.s32.totalorder %s15, 0
      %p57 = por %p55, %p56
      %p58 = scmp.ne.s32.totalorder %s44, %s45
      %p59 = scmp.eq.s32.totalorder %s16, 2
      %p60 = por %p58, %p59
      %p62 = scmp.ne.s32.totalorder %s45, %s61
      %p63 = scmp.eq.s32.totalorder %s16, 0
      %p64 = por %p62, %p63
      %s65 = ssub.s32 %s19, %s28
      %s66 = ssub.s32 %s18, %s32
      %s67 = sor.u32 %s65, %s66
      %p68 = scmp.eq.s32.totalorder %s67, 0
      %s70 = sadd.s32 %s69, 1
      %s71 = scalar_select %p68, %s69, %s70
      %p74 = pneg %p68
      %p75 = scmp.eq.s32.totalorder %s10, 2
      %p76 = por %p74, %p75
      %p77 = scmp.ne.s32.totalorder %s69, %s72
      %p78 = scmp.eq.s32.totalorder %s10, 0
      %p79 = por %p77, %p78
      %p80 = scmp.ne.s32.totalorder %s69, %s72
      %p81 = scmp.eq.s32.totalorder %s15, 2
      %p82 = por %p80, %p81
      %p83 = scmp.ne.s32.totalorder %s72, %s73
      %p84 = scmp.eq.s32.totalorder %s15, 0
      %p85 = por %p83, %p84
      %p86 = scmp.ne.s32.totalorder %s72, %s73
      %p87 = scmp.eq.s32.totalorder %s16, 2
      %p88 = por %p86, %p87
      %p90 = scmp.ne.s32.totalorder %s73, %s89
      %p91 = scmp.eq.s32.totalorder %s16, 0
      %p92 = por %p90, %p91
      %s93 = ssub.s32 %s18, %s32
      %p94 = scmp.eq.s32.totalorder %s93, 0
      %s96 = sadd.s32 %s95, 1
      %s97 = scalar_select %p94, %s95, %s96
      %p100 = pneg %p94
      %p101 = scmp.eq.s32.totalorder %s10, 2
      %p102 = por %p100, %p101
      %p103 = scmp.ne.s32.totalorder %s95, %s98
      %p104 = scmp.eq.s32.totalorder %s10, 0
      %p105 = por %p103, %p104
      %p106 = scmp.ne.s32.totalorder %s95, %s98
      %p107 = scmp.eq.s32.totalorder %s15, 2
      %p108 = por %p106, %p107
      %p109 = scmp.ne.s32.totalorder %s98, %s99
      %p110 = scmp.eq.s32.totalorder %s15, 0
      %p111 = por %p109, %p110
      %p112 = scmp.ne.s32.totalorder %s98, %s99
      %p113 = scmp.eq.s32.totalorder %s16, 2
      %p114 = por %p112, %p113
      %p116 = scmp.ne.s32.totalorder %s99, %s115
      %p117 = scmp.eq.s32.totalorder %s16, 0
      %p118 = por %p116, %p117
      %s119 = ssub.s32 %s18, %s32
      %p120 = scmp.eq.s32.totalorder %s119, 0
      %s122 = sadd.s32 %s121, 1
      %s123 = scalar_select %p120, %s121, %s122
      %p126 = pneg %p120
      %p127 = scmp.eq.s32.totalorder %s10, 2
      %p128 = por %p126, %p127
      %p129 = scmp.ne.s32.totalorder %s121, %s124
      %p130 = scmp.eq.s32.totalorder %s10, 0
      %p131 = por %p129, %p130
      %p132 = scmp.ne.s32.totalorder %s121, %s124
      %p133 = scmp.eq.s32.totalorder %s15, 2
      %p134 = por %p132, %p133
      %p135 = scmp.ne.s32.totalorder %s124, %s125
      %p136 = scmp.eq.s32.totalorder %s15, 0
      %p137 = por %p135, %p136
      %p138 = scmp.ne.s32.totalorder %s124, %s125
      %p139 = scmp.eq.s32.totalorder %s16, 2
      %p140 = por %p138, %p139
      %p142 = scmp.ne.s32.totalorder %s125, %s141
      %p143 = scmp.eq.s32.totalorder %s16, 0
      %p144 = por %p142, %p143
      %s145 = ssub.s32 %s17, %s36
      %s146 = ssub.s32 %s18, %s32
      %s147 = sor.u32 %s145, %s146
      %p148 = scmp.eq.s32.totalorder %s147, 0
      %s150 = sadd.s32 %s149, 1
      %s151 = scalar_select %p148, %s149, %s150
      %p154 = pneg %p148
      %p155 = scmp.eq.s32.totalorder %s10, 2
      %p156 = por %p154, %p155
      %p157 = scmp.ne.s32.totalorder %s149, %s152
      %p158 = scmp.eq.s32.totalorder %s10, 0
      %p159 = por %p157, %p158
      %p160 = scmp.ne.s32.totalorder %s149, %s152
      %p161 = scmp.eq.s32.totalorder %s15, 2
      %p162 = por %p160, %p161
      %p163 = scmp.ne.s32.totalorder %s152, %s153
      %p164 = scmp.eq.s32.totalorder %s15, 0
      %p165 = por %p163, %p164
      %p166 = scmp.ne.s32.totalorder %s152, %s153
      %p167 = scmp.eq.s32.totalorder %s16, 2
      %p168 = por %p166, %p167
      %p170 = scmp.ne.s32.totalorder %s153, %s169
      %p171 = scmp.eq.s32.totalorder %s16, 0
      %p172 = por %p170, %p171
      %p173 = scmp.le.s32.totalorder 1, %s10
      %p174 = scmp.lt.s32.totalorder %s10, 4
      %p175 = pnand %p173, %p174
      %p176 = pneg %p175
      // Predicated region
      $region9: #{resnet_forward.16} parent=5 // pred_check
        _
      $region10: #{resnet_forward.16} parent=5 // pred_check_branch
        %178 = sbr.rel (%p175) target = $region12
      $region11: #{resnet_forward.16} parent=5 // pred_region
        %s179 = ssub.s32 %s10, 1
        // Predicated region
        $region13: #{resnet_forward.16} parent=11 // pred_check
          %p180 = pneg %p111
        $region14: #{resnet_forward.16} parent=11 // pred_check_branch
          %182 = sbr.rel (%p180) target = $region16
        $region15: #{resnet_forward.16} parent=11 // pred_region
          %p183 = scmp.lt.s32.totalorder %s21, 0
          %s184 = scalar_select %p183, %s21, 0
          %s185 = scalar_lea.vmem %s2, %s184
        $region16: #{resnet_forward.16} parent=11 // pred_fallthru
          _
        // Predicated region
        $region17: #{resnet_forward.16} parent=11 // pred_check
          %p186 = pneg %p137
        $region18: #{resnet_forward.16} parent=11 // pred_check_branch
          %188 = sbr.rel (%p186) target = $region20
        $region19: #{resnet_forward.16} parent=11 // pred_region
          %p189 = scmp.lt.s32.totalorder %s21, 0
          %s190 = scalar_select %p189, %s21, 0
          %s191 = scalar_lea.vmem %s3, %s190
        $region20: #{resnet_forward.16} parent=11 // pred_fallthru
          _
      $region12: #{resnet_forward.16} parent=5 // pred_fallthru
        _
      %p192 = scmp.lt.s32.totalorder %s10, 3
      // Predicated region
      $region21: #{resnet_forward.16} parent=5 // pred_check
        %p193 = pneg %p192
      $region22: #{resnet_forward.16} parent=5 // pred_check_branch
        %195 = sbr.rel (%p193) target = $region24
      $region23: #{resnet_forward.16} parent=5 // pred_region
        // Predicated region
        $region25: #{resnet_forward.16} parent=23 // pred_check
          %p196 = pneg %p51
        $region26: #{resnet_forward.16} parent=23 // pred_check_branch
          %198 = sbr.rel (%p196) target = $region28
        $region27: #{resnet_forward.16} parent=23 // pred_region
          %s199 = sand.u32 %s41, 1
          %s200 = sand.u32 %s41, 1
          %s201 = smul.addr %s200, 48
          %s202 = scalar_lea.vmem [#allocation3], %s201
          %s203 = smul.u32 4, %s17
          %s204 = smul.u32 3, %s19
          %s205 = smul.addr %s203, 9
          %s206 = sadd.s32 %s204, %s205
          %s207 = smul.addr %s206, 4
          %s208 = scalar_lea.vmem %s0, %s207
          // Predicated region
          $region29: #{resnet_forward.16} parent=27 // pred_check
            _
          $region30: #{resnet_forward.16} parent=27 // pred_check_branch
            %210 = sbr.rel (0) target = $region32
          $region31: #{resnet_forward.16} parent=27 // pred_region
            // Predicated region
            $region33: #{resnet_forward.16} parent=31 // pred_check
              _
            $region34: #{resnet_forward.16} parent=31 // pred_check_branch
              %212 = sbr.rel (0) target = $region36
            $region35: #{resnet_forward.16} parent=31 // pred_region
              %s213 = scalar_lea.vmem %s208, 8
              %s214 = scalar_lea.vmem %s202, 8 [#allocation3]
              loop: start=0, step=1, limit=1
              $region37: #{resnet_forward.16} parent=35 // loop_pre_header
                _
              $region38: #{resnet_forward.16} parent=35 // loop_header
                %s216 = sphi 0, %s220
                %p217 = scmp.ge.s32.totalorder %s216, 1
                %s221 = sphi %s208, %s208
                %s222 = sphi %s202, %s202
              $region39: #{resnet_forward.16} parent=35 // loop_header_branch
                %219 = sbr.rel (%p217) target = $region43
              $region40: #{resnet_forward.16} parent=35 // loop_body
                %v223 = vld [vmem:[%s221] sm:$0xff]
                %224 = vst [vmem:[%s222] sm:$0xff] %v223
                %v225 = vld [vmem:[%s221 + $0x24] sm:$0xff]
                %226 = vst [vmem:[%s222 + $0xc] sm:$0xff] %v225
                %v227 = vld [vmem:[%s221 + $0x48] sm:$0xff]
                %228 = vst [vmem:[%s222 + $0x18] sm:$0xff] %v227
                %v229 = vld [vmem:[%s221 + $0x6c] sm:$0xff]
                %230 = vst [vmem:[%s222 + $0x24] sm:$0xff] %v229
              $region41: #{resnet_forward.16} parent=35 // loop_footer
                %s220 = sadd.s32 1, %s216
              $region42: #{resnet_forward.16} parent=35 // loop_footer_branch
                %215 = sbr.rel target = $region38
              $region43: #{resnet_forward.16} parent=35 // loop_exit
                _
              %s232 = ssub.s32 16, 1
              loop: start=0, step=1, limit=1
              $region44: #{resnet_forward.16} parent=35 // loop_pre_header
                _
              $region45: #{resnet_forward.16} parent=35 // loop_header
                %s234 = sphi 0, %s238
                %p235 = scmp.ge.s32.totalorder %s234, 1
                %s239 = sphi %s213, %s213
                %s240 = sphi %s214, %s214
              $region46: #{resnet_forward.16} parent=35 // loop_header_branch
                %237 = sbr.rel (%p235) target = $region50
              $region47: #{resnet_forward.16} parent=35 // loop_body
                %v241 = vld [vmem:[%s239] sm:%s232]
                %242 = vst [vmem:[%s240] sm:%s232] %v241
                %v243 = vld [vmem:[%s239 + $0x24] sm:%s232]
                %244 = vst [vmem:[%s240 + $0xc] sm:%s232] %v243
                %v245 = vld [vmem:[%s239 + $0x48] sm:%s232]
                %246 = vst [vmem:[%s240 + $0x18] sm:%s232] %v245
                %v247 = vld [vmem:[%s239 + $0x6c] sm:%s232]
                %248 = vst [vmem:[%s240 + $0x24] sm:%s232] %v247
              $region48: #{resnet_forward.16} parent=35 // loop_footer
                %s238 = sadd.s32 1, %s234
              $region49: #{resnet_forward.16} parent=35 // loop_footer_branch
                %233 = sbr.rel target = $region45
              $region50: #{resnet_forward.16} parent=35 // loop_exit
                _
            $region36: #{resnet_forward.16} parent=31 // pred_fallthru
              _
          $region32: #{resnet_forward.16} parent=27 // pred_fallthru
            _
          %249 = vnop
        $region28: #{resnet_forward.16} parent=23 // pred_fallthru
          _
        // Predicated region
        $region51: #{resnet_forward.16} parent=23 // pred_check
          %p250 = pneg %p79
        $region52: #{resnet_forward.16} parent=23 // pred_check_branch
          %252 = sbr.rel (%p250) target = $region54
        $region53: #{resnet_forward.16} parent=23 // pred_region
          %s253 = smul.u32 48, %s19
          %p254 = scmp.lt.s32.totalorder %s253, 143
          %s255 = scalar_select %p254, %s253, 143
          %p256 = scmp.lt.s32.totalorder %s18, 0
          %s257 = scalar_select %p256, %s18, 0
          %s258 = sadd.s32 %s257, %s255
          %s259 = smul.addr %s258, 4
          %s260 = scalar_lea.vmem %s1, %s259
          %s261 = smul.u32 48, %s19
        $region54: #{resnet_forward.16} parent=23 // pred_fallthru
          _
      $region24: #{resnet_forward.16} parent=5 // pred_fallthru
        _
      %p262 = scmp.le.s32.totalorder 1, %s10
      %p263 = scmp.lt.s32.totalorder %s10, 4
      %p264 = pnand %p262, %p263
      %p265 = pneg %p264
      // Predicated region
      $region55: #{resnet_forward.16} parent=5 // pred_check
        _
      $region56: #{resnet_forward.16} parent=5 // pred_check_branch
        %267 = sbr.rel (%p264) target = $region58
      $region57: #{resnet_forward.16} parent=5 // pred_region
        %s268 = ssub.s32 %s10, 1
        %s269 = sand.u32 %s44, 1
        %s270 = sand.u32 %s44, 1
        %s271 = smul.addr %s270, 48
        %s272 = scalar_lea.vmem [#allocation3], %s271
        // Predicated region
        $region59: #{resnet_forward.16} parent=57 // pred_check
          %p273 = pneg %p57
        $region60: #{resnet_forward.16} parent=57 // pred_check_branch
          %275 = sbr.rel (%p273) target = $region62
        $region61: #{resnet_forward.16} parent=57 // pred_region
          _
        $region62: #{resnet_forward.16} parent=57 // pred_fallthru
          _
        %s276 = sand.u32 %s44, 1
        %s277 = sand.u32 %s44, 1
        %s278 = smul.addr %s277, 48
        %s279 = scalar_lea.vmem [#allocation3], %s278
        %p280 = pneg %p57
        %p281 = pneg %p54
        %s282 = smul.u32 48, %s22
        %p283 = scmp.lt.s32.totalorder %s282, 143
        %s284 = scalar_select %p283, %s282, 143
        %p285 = scmp.lt.s32.totalorder %s21, 0
        %s286 = scalar_select %p285, %s21, 0
        %s287 = sadd.s32 %s286, %s284
        %s288 = smul.addr %s287, 4
        %s289 = scalar_lea.vmem %s1, %s288
        %p290 = pneg %p85
        %p291 = pneg %p82
        %p292 = scmp.lt.s32.totalorder %s21, 0
        %s293 = scalar_select %p292, %s21, 0
        %s294 = scalar_lea.vmem %s2, %s293
        %p295 = pneg %p111
        %p296 = pneg %p108
        %p297 = scmp.lt.s32.totalorder %s21, 0
        %s298 = scalar_select %p297, %s21, 0
        %s299 = scalar_lea.vmem %s3, %s298
        %p300 = pneg %p137
        %p301 = pneg %p134
        %p302 = pneg %p165
        %p303 = pneg %p162
        %s304 = smul.u32 4, %s20
        %p305 = scmp.lt.s32.totalorder %s304, 3
        %s306 = scalar_select %p305, %s304, 3
        %p307 = scmp.lt.s32.totalorder %s21, 0
        %s308 = scalar_select %p307, %s21, 0
        %s309 = sadd.s32 %s308, %s306
        %s310 = smul.addr %s309, 4
        %s311 = scalar_lea.vmem %s4, %s310
        %s312 = smul.u32 4, %s20
        %s313 = smul.u32 3, %s22
        %s314 = smul.u32 48, %s22
        %p315 = scmp.lt.s32.totalorder %s314, 143
        %s316 = scalar_select %p315, %s314, 143
        %p317 = scmp.lt.s32.totalorder %s21, 0
        %s318 = scalar_select %p317, %s21, 0
        %s319 = sadd.s32 %s318, %s316
        %s320 = smul.addr %s319, 4
        %s321 = scalar_lea.vmem %s1, %s320
        %s322 = smul.u32 48, %s22
        %p323 = scmp.lt.s32.totalorder %s21, 0
        %s324 = scalar_select %p323, %s21, 0
        %s325 = scalar_lea.vmem %s2, %s324
        %p326 = scmp.lt.s32.totalorder %s21, 0
        %s327 = scalar_select %p326, %s21, 0
        %s328 = scalar_lea.vmem %s3, %s327
        %s329 = smul.u32 4, %s20
        %p330 = scmp.lt.s32.totalorder %s329, 3
        %s331 = scalar_select %p330, %s329, 3
        %p332 = scmp.lt.s32.totalorder %s21, 0
        %s333 = scalar_select %p332, %s21, 0
        %s334 = sadd.s32 %s333, %s331
        %s335 = smul.addr %s334, 4
        %s336 = scalar_lea.vmem %s4, %s335
        %s337 = smul.u32 4, %s20
        %p338 = scmp.eq.s32.totalorder %s22, 0
        // Predicated region
        $region63: #{resnet_forward.16} parent=57 // pred_check
          %p339 = pneg %p338
        $region64: #{resnet_forward.16} parent=57 // pred_check_branch
          %341 = sbr.rel (%p339) target = $region66
        $region65: #{resnet_forward.16} parent=57 // pred_region
          %342 = vst [vmem:[#allocation2] sm:$0xff] 0.0
          %343 = vst [vmem:[#allocation2 + $0x8] sm:$0xff] 0.0
          %344 = vst [vmem:[#allocation2 + $0x10] sm:$0xff] 0.0
          %345 = vst [vmem:[#allocation2 + $0x18] sm:$0xff] 0.0
        $region66: #{resnet_forward.16} parent=57 // pred_fallthru
          _
        %v346 = vld [vmem:[#allocation2] sm:$0xff]
        %v347 = vld [vmem:[#allocation2 + $0x8] sm:$0xff]
        %v348 = vld [vmem:[#allocation2 + $0x10] sm:$0xff]
        %v349 = vld [vmem:[#allocation2 + $0x18] sm:$0xff]
        %v350 = vld [vmem:[%s272] sm:$0xff]
        %v351 = vld [vmem:[%s272 + $0x8] sm:$0xf]
        %v352 = vld [vmem:[%s272 + $0xc] sm:$0xff]
        %v353 = vld [vmem:[%s272 + $0x14] sm:$0xf]
        %v354 = vld [vmem:[%s272 + $0x18] sm:$0xff]
        %v355 = vld [vmem:[%s272 + $0x20] sm:$0xf]
        %v356 = vld [vmem:[%s272 + $0x24] sm:$0xff]
        %v357 = vld [vmem:[%s272 + $0x2c] sm:$0xf]
        %v358 = vld [vmem:[%s321] sm:$0xf]
        %v359 = vld [vmem:[%s321 + $0x4] sm:$0xf]
        %v360 = vld [vmem:[%s321 + $0x8] sm:$0xf]
        %v361 = vld [vmem:[%s321 + $0xc] sm:$0xf]
        %v362 = vld [vmem:[%s321 + $0x10] sm:$0xf]
        %v363 = vld [vmem:[%s321 + $0x14] sm:$0xf]
        %v364 = vld [vmem:[%s321 + $0x18] sm:$0xf]
        %v365 = vld [vmem:[%s321 + $0x1c] sm:$0xf]
        %v366 = vld [vmem:[%s321 + $0x20] sm:$0xf]
        %v367 = vld [vmem:[%s321 + $0x24] sm:$0xf]
        %v368 = vld [vmem:[%s321 + $0x28] sm:$0xf]
        %v369 = vld [vmem:[%s321 + $0x2c] sm:$0xf]
        %v370 = vld [vmem:[%s321 + $0x30] sm:$0xf]
        %v371 = vld [vmem:[%s321 + $0x34] sm:$0xf]
        %v372 = vld [vmem:[%s321 + $0x38] sm:$0xf]
        %v373 = vld [vmem:[%s321 + $0x3c] sm:$0xf]
        %v374 = vld [vmem:[%s321 + $0x40] sm:$0xf]
        %v375 = vld [vmem:[%s321 + $0x44] sm:$0xf]
        %v376 = vld [vmem:[%s321 + $0x48] sm:$0xf]
        %v377 = vld [vmem:[%s321 + $0x4c] sm:$0xf]
        %v378 = vld [vmem:[%s321 + $0x50] sm:$0xf]
        %v379 = vld [vmem:[%s321 + $0x54] sm:$0xf]
        %v380 = vld [vmem:[%s321 + $0x58] sm:$0xf]
        %v381 = vld [vmem:[%s321 + $0x5c] sm:$0xf]
        %v382 = vld [vmem:[%s321 + $0x60] sm:$0xf]
        %v383 = vld [vmem:[%s321 + $0x64] sm:$0xf]
        %v384 = vld [vmem:[%s321 + $0x68] sm:$0xf]
        %v385 = vld [vmem:[%s321 + $0x6c] sm:$0xf]
        %v386 = vld [vmem:[%s321 + $0x70] sm:$0xf]
        %v387 = vld [vmem:[%s321 + $0x74] sm:$0xf]
        %v388 = vld [vmem:[%s321 + $0x78] sm:$0xf]
        %v389 = vld [vmem:[%s321 + $0x7c] sm:$0xf]
        %v390 = vld [vmem:[%s321 + $0x80] sm:$0xf]
        %v391 = vld [vmem:[%s321 + $0x84] sm:$0xf]
        %v392 = vld [vmem:[%s321 + $0x88] sm:$0xf]
        %v393 = vld [vmem:[%s321 + $0x8c] sm:$0xf]
        %v394 = vld [vmem:[%s321 + $0x90] sm:$0xf]
        %v395 = vld [vmem:[%s321 + $0x94] sm:$0xf]
        %v396 = vld [vmem:[%s321 + $0x98] sm:$0xf]
        %v397 = vld [vmem:[%s321 + $0x9c] sm:$0xf]
        %v398 = vld [vmem:[%s321 + $0xa0] sm:$0xf]
        %v399 = vld [vmem:[%s321 + $0xa4] sm:$0xf]
        %v400 = vld [vmem:[%s321 + $0xa8] sm:$0xf]
        %v401 = vld [vmem:[%s321 + $0xac] sm:$0xf]
        %v402 = vld [vmem:[%s321 + $0xb0] sm:$0xf]
        %v403 = vld [vmem:[%s321 + $0xb4] sm:$0xf]
        %v404 = vld [vmem:[%s321 + $0xb8] sm:$0xf]
        %v405 = vld [vmem:[%s321 + $0xbc] sm:$0xf]
        %v414 = vunpack.c.l.b16 %v350
        %v415 = vunpack.c.h.b16 %v350
        %v416 = vunpack.c.l.b16 %v351
        %v417 = vunpack.c.l.b16 %v352
        %v418 = vunpack.c.h.b16 %v352
        %v419 = vunpack.c.l.b16 %v353
        %v420 = vunpack.c.l.b16 %v354
        %v421 = vunpack.c.h.b16 %v354
        %v422 = vunpack.c.l.b16 %v355
        %v423 = vunpack.c.l.b16 %v356
        %v424 = vunpack.c.h.b16 %v356
        %v425 = vunpack.c.l.b16 %v357
        %v426 = vpack.c.b16 %v417, %v414
        %v427 = vpack.c.b16 %v418, %v415
        %v428 = vpack.c.b16 %v419, %v416
        %v429 = vpack.c.b16 %v423, %v420
        %v430 = vpack.c.b16 %v424, %v421
        %v431 = vpack.c.b16 %v425, %v422
        %v486 = vunpack.c.l.b16 %v358
        %v487 = vunpack.c.l.b16 %v359
        %v488 = vunpack.c.l.b16 %v360
        %v489 = vunpack.c.l.b16 %v361
        %v490 = vunpack.c.l.b16 %v362
        %v491 = vunpack.c.l.b16 %v363
        %v492 = vunpack.c.l.b16 %v364
        %v493 = vunpack.c.l.b16 %v365
        %v494 = vunpack.c.l.b16 %v366
        %v495 = vunpack.c.l.b16 %v367
        %v496 = vunpack.c.l.b16 %v368
        %v497 = vunpack.c.l.b16 %v369
        %v498 = vunpack.c.l.b16 %v370
        %v499 = vunpack.c.l.b16 %v371
        %v500 = vunpack.c.l.b16 %v372
        %v501 = vunpack.c.l.b16 %v373
        %v502 = vunpack.c.l.b16 %v374
        %v503 = vunpack.c.l.b16 %v375
        %v504 = vunpack.c.l.b16 %v376
        %v505 = vunpack.c.l.b16 %v377
        %v506 = vunpack.c.l.b16 %v378
        %v507 = vunpack.c.l.b16 %v379
        %v508 = vunpack.c.l.b16 %v380
        %v509 = vunpack.c.l.b16 %v381
        %v510 = vunpack.c.l.b16 %v382
        %v511 = vunpack.c.l.b16 %v383
        %v512 = vunpack.c.l.b16 %v384
        %v513 = vunpack.c.l.b16 %v385
        %v514 = vunpack.c.l.b16 %v386
        %v515 = vunpack.c.l.b16 %v387
        %v516 = vunpack.c.l.b16 %v388
        %v517 = vunpack.c.l.b16 %v389
        %v518 = vunpack.c.l.b16 %v390
        %v519 = vunpack.c.l.b16 %v391
        %v520 = vunpack.c.l.b16 %v392
        %v521 = vunpack.c.l.b16 %v393
        %v522 = vunpack.c.l.b16 %v394
        %v523 = vunpack.c.l.b16 %v395
        %v524 = vunpack.c.l.b16 %v396
        %v525 = vunpack.c.l.b16 %v397
        %v526 = vunpack.c.l.b16 %v398
        %v527 = vunpack.c.l.b16 %v399
        %v528 = vunpack.c.l.b16 %v400
        %v529 = vunpack.c.l.b16 %v401
        %v530 = vunpack.c.l.b16 %v402
        %v531 = vunpack.c.l.b16 %v403
        %v532 = vunpack.c.l.b16 %v404
        %v533 = vunpack.c.l.b16 %v405
        %v534 = vpack.c.b16 %v487, %v486
        %v535 = vpack.c.b16 %v489, %v488
        %v536 = vpack.c.b16 %v491, %v490
        %v537 = vpack.c.b16 %v493, %v492
        %v538 = vpack.c.b16 %v495, %v494
        %v539 = vpack.c.b16 %v497, %v496
        %v540 = vpack.c.b16 %v499, %v498
        %v541 = vpack.c.b16 %v501, %v500
        %v542 = vpack.c.b16 %v503, %v502
        %v543 = vpack.c.b16 %v505, %v504
        %v544 = vpack.c.b16 %v507, %v506
        %v545 = vpack.c.b16 %v509, %v508
        %v546 = vpack.c.b16 %v511, %v510
        %v547 = vpack.c.b16 %v513, %v512
        %v548 = vpack.c.b16 %v515, %v514
        %v549 = vpack.c.b16 %v517, %v516
        %v550 = vpack.c.b16 %v519, %v518
        %v551 = vpack.c.b16 %v521, %v520
        %v552 = vpack.c.b16 %v523, %v522
        %v553 = vpack.c.b16 %v525, %v524
        %v554 = vpack.c.b16 %v527, %v526
        %v555 = vpack.c.b16 %v529, %v528
        %v556 = vpack.c.b16 %v531, %v530
        %v557 = vpack.c.b16 %v533, %v532
        %582 = vmatpush.bf16.msra.mxu0 %v541
        %583 = vmatpush.bf16.msra.mxu0 %v540
        %584 = vmatpush.bf16.msra.mxu0 %v539
        %585 = vmatpush.bf16.msra.mxu0 %v538
        %586 = vmatpush.bf16.msra.mxu0 %v537
        %587 = vmatpush.bf16.msra.mxu0 %v536
        %588 = vmatpush.bf16.msra.mxu0 %v535
        %589 = vmatpush.bf16.msra.mxu0 %v534
        %590 = vmatmul.bf16.gmra.mxu0 %v426
        %v591 = vpop.f32.mrf.mxu0
        %v592 = vadd.f32 0.0, %v591
        %v593 = vpop.f32.mrf.mxu0
        %v594 = vadd.f32 0.0, %v593
        %595 = vmatmul.bf16.gmra.mxu0 %v429
        %v596 = vpop.f32.mrf.mxu0
        %v597 = vadd.f32 0.0, %v596
        %v598 = vpop.f32.mrf.mxu0
        %v599 = vadd.f32 0.0, %v598
        %600 = vdwg.mxu0
        %601 = vmatpush.bf16.msra.mxu0 %v549
        %602 = vmatpush.bf16.msra.mxu0 %v548
        %603 = vmatpush.bf16.msra.mxu0 %v547
        %604 = vmatpush.bf16.msra.mxu0 %v546
        %605 = vmatpush.bf16.msra.mxu0 %v545
        %606 = vmatpush.bf16.msra.mxu0 %v544
        %607 = vmatpush.bf16.msra.mxu0 %v543
        %608 = vmatpush.bf16.msra.mxu0 %v542
        %609 = vmatmul.bf16.gmra.mxu0 %v427
        %v610 = vpop.f32.mrf.mxu0
        %v611 = vadd.f32 %v592, %v610
        %v612 = vpop.f32.mrf.mxu0
        %v613 = vadd.f32 %v594, %v612
        %614 = vmatmul.bf16.gmra.mxu0 %v430
        %v615 = vpop.f32.mrf.mxu0
        %v616 = vadd.f32 %v597, %v615
        %v617 = vpop.f32.mrf.mxu0
        %v618 = vadd.f32 %v599, %v617
        %619 = vdwg.mxu0
        %620 = vmatpush.bf16.msra.mxu0 %v557
        %621 = vmatpush.bf16.msra.mxu0 %v556
        %622 = vmatpush.bf16.msra.mxu0 %v555
        %623 = vmatpush.bf16.msra.mxu0 %v554
        %624 = vmatpush.bf16.msra.mxu0 %v553
        %625 = vmatpush.bf16.msra.mxu0 %v552
        %626 = vmatpush.bf16.msra.mxu0 %v551
        %627 = vmatpush.bf16.msra.mxu0 %v550
        %628 = vmatmul.bf16.gmra.mxu0 %v428
        %v629 = vpop.f32.mrf.mxu0
        %v630 = vadd.f32 %v611, %v629
        %v631 = vpop.f32.mrf.mxu0
        %v632 = vadd.f32 %v613, %v631
        %633 = vmatmul.bf16.gmra.mxu0 %v431
        %v634 = vpop.f32.mrf.mxu0
        %v635 = vadd.f32 %v616, %v634
        %v636 = vpop.f32.mrf.mxu0
        %v637 = vadd.f32 %v618, %v636
        %638 = vdwg.mxu0
        %v639 = vadd.f32 %v346, %v630
        %v640 = vadd.f32 %v347, %v632
        %v641 = vadd.f32 %v348, %v635
        %v642 = vadd.f32 %v349, %v637
        %643 = vst [vmem:[#allocation2] sm:$0xff] %v639
        %644 = vst [vmem:[#allocation2 + $0x8] sm:$0xff] %v640
        %645 = vst [vmem:[#allocation2 + $0x10] sm:$0xff] %v641
        %646 = vst [vmem:[#allocation2 + $0x18] sm:$0xff] %v642
        %p647 = scmp.eq.s32.totalorder %s22, 2
        // Predicated region
        $region67: #{resnet_forward.16} parent=57 // pred_check
          %p648 = pneg %p647
        $region68: #{resnet_forward.16} parent=57 // pred_check_branch
          %650 = sbr.rel (%p648) target = $region70
        $region69: #{resnet_forward.16} parent=57 // pred_region
          %v651 = vld [vmem:[#allocation2] sm:$0xff]
          %v652 = vld [vmem:[#allocation2 + $0x8] sm:$0xff]
          %v653 = vld [vmem:[#allocation2 + $0x10] sm:$0xff]
          %v654 = vld [vmem:[#allocation2 + $0x18] sm:$0xff]
          %v655 = vld [vmem:[%s325] sm:$0x1]
          %v657 = vperm.slane %v655, 0
          %v659 = vmul.f32 %v651, %v657
          %v660 = vmul.f32 %v652, %v657
          %v661 = vmul.f32 %v653, %v657
          %v662 = vmul.f32 %v654, %v657
          %v663 = vld [vmem:[%s328] sm:$0x1]
          %v665 = vperm.slane %v663, 0
          %v667 = vadd.f32 %v659, %v665
          %v668 = vadd.f32 %v660, %v665
          %v669 = vadd.f32 %v661, %v665
          %v670 = vadd.f32 %v662, %v665
          %v671 = vmax.f32 %v667, 0.0
          %v672 = vmax.f32 %v668, 0.0
          %v673 = vmax.f32 %v669, 0.0
          %v674 = vmax.f32 %v670, 0.0
          %v675 = vpack.c.bf16 %v671, %v671
          %v676 = vpack.c.bf16 %v672, %v672
          %v677 = vpack.c.bf16 %v673, %v673
          %v678 = vpack.c.bf16 %v674, %v674
          %679 = vst [vmem:[%s336] sm:$0xf] %v675
          %680 = vst [vmem:[%s336 + $0x4] sm:$0xf] %v676
          %681 = vst [vmem:[%s336 + $0x8] sm:$0xf] %v677
          %682 = vst [vmem:[%s336 + $0xc] sm:$0xf] %v678
        $region70: #{resnet_forward.16} parent=57 // pred_fallthru
          _
        %s683 = smul.u32 4, %s20
        %p684 = scmp.lt.s32.totalorder %s683, 3
        %s685 = scalar_select %p684, %s683, 3
        %p686 = scmp.lt.s32.totalorder %s21, 0
        %s687 = scalar_select %p686, %s21, 0
        %s688 = sadd.s32 %s687, %s685
        %s689 = smul.addr %s688, 4
        %s690 = scalar_lea.vmem %s4, %s689
        // Predicated region
        $region71: #{resnet_forward.16} parent=57 // pred_check
          %p691 = pneg %p162
        $region72: #{resnet_forward.16} parent=57 // pred_check_branch
          %693 = sbr.rel (%p691) target = $region74
        $region73: #{resnet_forward.16} parent=57 // pred_region
          %s694 = smul.u32 4, %s20
        $region74: #{resnet_forward.16} parent=57 // pred_fallthru
          _
        // Predicated region
        $region75: #{resnet_forward.16} parent=57 // pred_check
          %p695 = pneg %p162
        $region76: #{resnet_forward.16} parent=57 // pred_check_branch
          %697 = sbr.rel (%p695) target = $region78
        $region77: #{resnet_forward.16} parent=57 // pred_region
          %s698 = smul.u32 4, %s20
          %p699 = scmp.lt.s32.totalorder %s698, 3
          %s700 = scalar_select %p699, %s698, 3
          %p701 = scmp.lt.s32.totalorder %s21, 0
          %s702 = scalar_select %p701, %s21, 0
          %s703 = sadd.s32 %s702, %s700
          %s704 = smul.addr %s703, 4
          %s705 = scalar_lea.vmem %s4, %s704
        $region78: #{resnet_forward.16} parent=57 // pred_fallthru
          _
      $region58: #{resnet_forward.16} parent=5 // pred_fallthru
        _
      %p706 = scmp.le.s32.totalorder 2, %s10
      // Predicated region
      $region79: #{resnet_forward.16} parent=5 // pred_check
        %p707 = pneg %p706
      $region80: #{resnet_forward.16} parent=5 // pred_check_branch
        %709 = sbr.rel (%p707) target = $region82
      $region81: #{resnet_forward.16} parent=5 // pred_region
        %s710 = ssub.s32 %s10, 2
      $region82: #{resnet_forward.16} parent=5 // pred_fallthru
        _
    $region6: #{resnet_forward.16} parent=1 // loop_footer
      %s14 = sadd.s32 1, %s10
    $region7: #{resnet_forward.16} parent=1 // loop_footer_branch
      %9 = sbr.rel target = $region3
    $region8: #{resnet_forward.16} parent=1 // loop_exit
      _

// kernel: resnet_forward.17
$region0: #{resnet_forward.17}
  #allocation0 [shape = 'u32[]', space=smem, size = 0x4, offset = 0x4, fixed_abs, tag = 'smem constant byte address 0x4 - core index']
  #allocation1 [shape = 'u32[72,128]{1,0:T(1,128)}', space=vmem, size = 0x9000, scoped, tag = 'internal scratch']
  #allocation2 [shape = 'f32[32,128]{1,0:T(8,128)}', space=vmem, size = 0x4000, scoped, tag = 'scratch operand']
  %s0 = inlined_call_operand.vmem [shape: bf16[32,1152], index: 0, kind: input, shape index: {}]
  %s1 = inlined_call_operand.vmem [shape: bf16[1152,128], index: 1, kind: input, shape index: {}]
  %s2 = inlined_call_operand.vmem [shape: f32[1,128], index: 2, kind: input, shape index: {}]
  %s3 = inlined_call_operand.vmem [shape: f32[1,128], index: 3, kind: input, shape index: {}]
  %s4 = inlined_call_operand.vmem [shape: bf16[32,128], index: 4, kind: input, shape index: {}]
  %s5 = inlined_call_operand.vmem [shape: bf16[32,128], index: 5, kind: output, shape index: {}]
  %s6 = sld [smem:[#allocation0]]
  $region87: #{resnet_forward.17} parent=0
    _
  %s8 = ssub.s32 1, %s6
  %s9 = scalar_select 0, %s8, %s6
  $region1: #{resnet_forward.17} parent=0
    #allocation3 [shape = 'u8[49152]{0}', space=vmem, size = 0xc000, scoped, tag = 'input window, operand 0']
    loop: start=0, step=1, limit=5
    $region2: #{resnet_forward.17} parent=1 // loop_pre_header
      _
    $region3: #{resnet_forward.17} parent=1 // loop_header
      %s11 = sphi 0, %s15
      %p12 = scmp.ge.s32.totalorder %s11, 5
      %s18 = sphi 0, %s37
      %s19 = sphi 0, %s33
      %s20 = sphi 0, %s29
      %s21 = sphi 0, %s18
      %s22 = sphi 0, %s19
      %s23 = sphi 0, %s20
      %s24 = sphi 0, %s21
      %s25 = sphi 0, %s22
      %s26 = sphi 0, %s23
      %s42 = sphi 0, %s44
      %s45 = sphi 0, %s42
      %s46 = sphi 0, %s45
      %s62 = sphi 0, %s46
      %s70 = sphi 0, %s72
      %s73 = sphi 0, %s70
      %s74 = sphi 0, %s73
      %s90 = sphi 0, %s74
      %s96 = sphi 0, %s98
      %s99 = sphi 0, %s96
      %s100 = sphi 0, %s99
      %s116 = sphi 0, %s100
      %s122 = sphi 0, %s124
      %s125 = sphi 0, %s122
      %s126 = sphi 0, %s125
      %s142 = sphi 0, %s126
      %s150 = sphi 0, %s152
      %s153 = sphi 0, %s150
      %s154 = sphi 0, %s153
      %s170 = sphi 0, %s154
      %s178 = sphi 0, %s180
      %s181 = sphi 0, %s178
      %s182 = sphi 0, %s181
      %s198 = sphi 0, %s182
    $region4: #{resnet_forward.17} parent=1 // loop_header_branch
      %14 = sbr.rel (%p12) target = $region8
    $region5: #{resnet_forward.17} parent=1 // loop_body
      %s16 = ssub.s32 %s11, 1
      %s17 = ssub.s32 %s11, 2
      %s27 = sadd.s32 1, %s20
      %p28 = scmp.ge.s32.totalorder %s27, 3
      %s29 = scalar_select %p28, 0, %s27
      %s30 = sadd.s32 1, %s19
      %s31 = scalar_select %p28, %s30, %s19
      %p32 = scmp.ge.s32.totalorder %s31, 1
      %s33 = scalar_select %p32, 0, %s31
      %s34 = sadd.s32 1, %s18
      %s35 = scalar_select %p32, %s34, %s18
      %p36 = scmp.ge.s32.totalorder %s35, 1
      %s37 = scalar_select %p36, 0, %s35
      %s38 = ssub.s32 %s18, %s37
      %s39 = ssub.s32 %s20, %s29
      %s40 = sor.u32 %s38, %s39
      %p41 = scmp.eq.s32.totalorder %s40, 0
      %s43 = sadd.s32 %s42, 1
      %s44 = scalar_select %p41, %s42, %s43
      %p47 = pneg %p41
      %p48 = scmp.eq.s32.totalorder %s11, 2
      %p49 = por %p47, %p48
      %p50 = scmp.ne.s32.totalorder %s42, %s45
      %p51 = scmp.eq.s32.totalorder %s11, 0
      %p52 = por %p50, %p51
      %p53 = scmp.ne.s32.totalorder %s42, %s45
      %p54 = scmp.eq.s32.totalorder %s16, 2
      %p55 = por %p53, %p54
      %p56 = scmp.ne.s32.totalorder %s45, %s46
      %p57 = scmp.eq.s32.totalorder %s16, 0
      %p58 = por %p56, %p57
      %p59 = scmp.ne.s32.totalorder %s45, %s46
      %p60 = scmp.eq.s32.totalorder %s17, 2
      %p61 = por %p59, %p60
      %p63 = scmp.ne.s32.totalorder %s46, %s62
      %p64 = scmp.eq.s32.totalorder %s17, 0
      %p65 = por %p63, %p64
      %s66 = ssub.s32 %s20, %s29
      %s67 = ssub.s32 %s19, %s33
      %s68 = sor.u32 %s66, %s67
      %p69 = scmp.eq.s32.totalorder %s68, 0
      %s71 = sadd.s32 %s70, 1
      %s72 = scalar_select %p69, %s70, %s71
      %p75 = pneg %p69
      %p76 = scmp.eq.s32.totalorder %s11, 2
      %p77 = por %p75, %p76
      %p78 = scmp.ne.s32.totalorder %s70, %s73
      %p79 = scmp.eq.s32.totalorder %s11, 0
      %p80 = por %p78, %p79
      %p81 = scmp.ne.s32.totalorder %s70, %s73
      %p82 = scmp.eq.s32.totalorder %s16, 2
      %p83 = por %p81, %p82
      %p84 = scmp.ne.s32.totalorder %s73, %s74
      %p85 = scmp.eq.s32.totalorder %s16, 0
      %p86 = por %p84, %p85
      %p87 = scmp.ne.s32.totalorder %s73, %s74
      %p88 = scmp.eq.s32.totalorder %s17, 2
      %p89 = por %p87, %p88
      %p91 = scmp.ne.s32.totalorder %s74, %s90
      %p92 = scmp.eq.s32.totalorder %s17, 0
      %p93 = por %p91, %p92
      %s94 = ssub.s32 %s19, %s33
      %p95 = scmp.eq.s32.totalorder %s94, 0
      %s97 = sadd.s32 %s96, 1
      %s98 = scalar_select %p95, %s96, %s97
      %p101 = pneg %p95
      %p102 = scmp.eq.s32.totalorder %s11, 2
      %p103 = por %p101, %p102
      %p104 = scmp.ne.s32.totalorder %s96, %s99
      %p105 = scmp.eq.s32.totalorder %s11, 0
      %p106 = por %p104, %p105
      %p107 = scmp.ne.s32.totalorder %s96, %s99
      %p108 = scmp.eq.s32.totalorder %s16, 2
      %p109 = por %p107, %p108
      %p110 = scmp.ne.s32.totalorder %s99, %s100
      %p111 = scmp.eq.s32.totalorder %s16, 0
      %p112 = por %p110, %p111
      %p113 = scmp.ne.s32.totalorder %s99, %s100
      %p114 = scmp.eq.s32.totalorder %s17, 2
      %p115 = por %p113, %p114
      %p117 = scmp.ne.s32.totalorder %s100, %s116
      %p118 = scmp.eq.s32.totalorder %s17, 0
      %p119 = por %p117, %p118
      %s120 = ssub.s32 %s19, %s33
      %p121 = scmp.eq.s32.totalorder %s120, 0
      %s123 = sadd.s32 %s122, 1
      %s124 = scalar_select %p121, %s122, %s123
      %p127 = pneg %p121
      %p128 = scmp.eq.s32.totalorder %s11, 2
      %p129 = por %p127, %p128
      %p130 = scmp.ne.s32.totalorder %s122, %s125
      %p131 = scmp.eq.s32.totalorder %s11, 0
      %p132 = por %p130, %p131
      %p133 = scmp.ne.s32.totalorder %s122, %s125
      %p134 = scmp.eq.s32.totalorder %s16, 2
      %p135 = por %p133, %p134
      %p136 = scmp.ne.s32.totalorder %s125, %s126
      %p137 = scmp.eq.s32.totalorder %s16, 0
      %p138 = por %p136, %p137
      %p139 = scmp.ne.s32.totalorder %s125, %s126
      %p140 = scmp.eq.s32.totalorder %s17, 2
      %p141 = por %p139, %p140
      %p143 = scmp.ne.s32.totalorder %s126, %s142
      %p144 = scmp.eq.s32.totalorder %s17, 0
      %p145 = por %p143, %p144
      %s146 = ssub.s32 %s18, %s37
      %s147 = ssub.s32 %s19, %s33
      %s148 = sor.u32 %s146, %s147
      %p149 = scmp.eq.s32.totalorder %s148, 0
      %s151 = sadd.s32 %s150, 1
      %s152 = scalar_select %p149, %s150, %s151
      %p155 = pneg %p149
      %p156 = scmp.eq.s32.totalorder %s11, 2
      %p157 = por %p155, %p156
      %p158 = scmp.ne.s32.totalorder %s150, %s153
      %p159 = scmp.eq.s32.totalorder %s11, 0
      %p160 = por %p158, %p159
      %p161 = scmp.ne.s32.totalorder %s150, %s153
      %p162 = scmp.eq.s32.totalorder %s16, 2
      %p163 = por %p161, %p162
      %p164 = scmp.ne.s32.totalorder %s153, %s154
      %p165 = scmp.eq.s32.totalorder %s16, 0
      %p166 = por %p164, %p165
      %p167 = scmp.ne.s32.totalorder %s153, %s154
      %p168 = scmp.eq.s32.totalorder %s17, 2
      %p169 = por %p167, %p168
      %p171 = scmp.ne.s32.totalorder %s154, %s170
      %p172 = scmp.eq.s32.totalorder %s17, 0
      %p173 = por %p171, %p172
      %s174 = ssub.s32 %s18, %s37
      %s175 = ssub.s32 %s19, %s33
      %s176 = sor.u32 %s174, %s175
      %p177 = scmp.eq.s32.totalorder %s176, 0
      %s179 = sadd.s32 %s178, 1
      %s180 = scalar_select %p177, %s178, %s179
      %p183 = pneg %p177
      %p184 = scmp.eq.s32.totalorder %s11, 2
      %p185 = por %p183, %p184
      %p186 = scmp.ne.s32.totalorder %s178, %s181
      %p187 = scmp.eq.s32.totalorder %s11, 0
      %p188 = por %p186, %p187
      %p189 = scmp.ne.s32.totalorder %s178, %s181
      %p190 = scmp.eq.s32.totalorder %s16, 2
      %p191 = por %p189, %p190
      %p192 = scmp.ne.s32.totalorder %s181, %s182
      %p193 = scmp.eq.s32.totalorder %s16, 0
      %p194 = por %p192, %p193
      %p195 = scmp.ne.s32.totalorder %s181, %s182
      %p196 = scmp.eq.s32.totalorder %s17, 2
      %p197 = por %p195, %p196
      %p199 = scmp.ne.s32.totalorder %s182, %s198
      %p200 = scmp.eq.s32.totalorder %s17, 0
      %p201 = por %p199, %p200
      %p202 = scmp.le.s32.totalorder 1, %s11
      %p203 = scmp.lt.s32.totalorder %s11, 4
      %p204 = pnand %p202, %p203
      %p205 = pneg %p204
      // Predicated region
      $region9: #{resnet_forward.17} parent=5 // pred_check
        _
      $region10: #{resnet_forward.17} parent=5 // pred_check_branch
        %207 = sbr.rel (%p204) target = $region12
      $region11: #{resnet_forward.17} parent=5 // pred_region
        %s208 = ssub.s32 %s11, 1
        // Predicated region
        $region13: #{resnet_forward.17} parent=11 // pred_check
          %p209 = pneg %p112
        $region14: #{resnet_forward.17} parent=11 // pred_check_branch
          %211 = sbr.rel (%p209) target = $region16
        $region15: #{resnet_forward.17} parent=11 // pred_region
          %p212 = scmp.lt.s32.totalorder %s22, 0
          %s213 = scalar_select %p212, %s22, 0
          %s214 = scalar_lea.vmem %s2, %s213
        $region16: #{resnet_forward.17} parent=11 // pred_fallthru
          _
        // Predicated region
        $region17: #{resnet_forward.17} parent=11 // pred_check
          %p215 = pneg %p138
        $region18: #{resnet_forward.17} parent=11 // pred_check_branch
          %217 = sbr.rel (%p215) target = $region20
        $region19: #{resnet_forward.17} parent=11 // pred_region
          %p218 = scmp.lt.s32.totalorder %s22, 0
          %s219 = scalar_select %p218, %s22, 0
          %s220 = scalar_lea.vmem %s3, %s219
        $region20: #{resnet_forward.17} parent=11 // pred_fallthru
          _
        // Predicated region
        $region21: #{resnet_forward.17} parent=11 // pred_check
          %p221 = pneg %p166
        $region22: #{resnet_forward.17} parent=11 // pred_check_branch
          %223 = sbr.rel (%p221) target = $region24
        $region23: #{resnet_forward.17} parent=11 // pred_region
          %s224 = smul.u32 4, %s21
          %p225 = scmp.lt.s32.totalorder %s224, 3
          %s226 = scalar_select %p225, %s224, 3
          %p227 = scmp.lt.s32.totalorder %s22, 0
          %s228 = scalar_select %p227, %s22, 0
          %s229 = sadd.s32 %s228, %s226
          %s230 = smul.addr %s229, 4
          %s231 = scalar_lea.vmem %s4, %s230
          %s232 = smul.u32 4, %s21
        $region24: #{resnet_forward.17} parent=11 // pred_fallthru
          _
      $region12: #{resnet_forward.17} parent=5 // pred_fallthru
        _
      %p233 = scmp.lt.s32.totalorder %s11, 3
      // Predicated region
      $region25: #{resnet_forward.17} parent=5 // pred_check
        %p234 = pneg %p233
      $region26: #{resnet_forward.17} parent=5 // pred_check_branch
        %236 = sbr.rel (%p234) target = $region28
      $region27: #{resnet_forward.17} parent=5 // pred_region
        // Predicated region
        $region29: #{resnet_forward.17} parent=27 // pred_check
          %p237 = pneg %p52
        $region30: #{resnet_forward.17} parent=27 // pred_check_branch
          %239 = sbr.rel (%p237) target = $region32
        $region31: #{resnet_forward.17} parent=27 // pred_region
          %s240 = sand.u32 %s42, 1
          %s241 = sand.u32 %s42, 1
          %s242 = smul.addr %s241, 48
          %s243 = scalar_lea.vmem [#allocation3], %s242
          %s244 = smul.u32 4, %s18
          %s245 = smul.u32 3, %s20
          %s246 = smul.addr %s244, 9
          %s247 = sadd.s32 %s245, %s246
          %s248 = smul.addr %s247, 4
          %s249 = scalar_lea.vmem %s0, %s248
          // Predicated region
          $region33: #{resnet_forward.17} parent=31 // pred_check
            _
          $region34: #{resnet_forward.17} parent=31 // pred_check_branch
            %251 = sbr.rel (0) target = $region36
          $region35: #{resnet_forward.17} parent=31 // pred_region
            // Predicated region
            $region37: #{resnet_forward.17} parent=35 // pred_check
              _
            $region38: #{resnet_forward.17} parent=35 // pred_check_branch
              %253 = sbr.rel (0) target = $region40
            $region39: #{resnet_forward.17} parent=35 // pred_region
              %s254 = scalar_lea.vmem %s249, 8
              %s255 = scalar_lea.vmem %s243, 8 [#allocation3]
              loop: start=0, step=1, limit=1
              $region41: #{resnet_forward.17} parent=39 // loop_pre_header
                _
              $region42: #{resnet_forward.17} parent=39 // loop_header
                %s257 = sphi 0, %s261
                %p258 = scmp.ge.s32.totalorder %s257, 1
                %s262 = sphi %s249, %s249
                %s263 = sphi %s243, %s243
              $region43: #{resnet_forward.17} parent=39 // loop_header_branch
                %260 = sbr.rel (%p258) target = $region47
              $region44: #{resnet_forward.17} parent=39 // loop_body
                %v264 = vld [vmem:[%s262] sm:$0xff]
                %265 = vst [vmem:[%s263] sm:$0xff] %v264
                %v266 = vld [vmem:[%s262 + $0x24] sm:$0xff]
                %267 = vst [vmem:[%s263 + $0xc] sm:$0xff] %v266
                %v268 = vld [vmem:[%s262 + $0x48] sm:$0xff]
                %269 = vst [vmem:[%s263 + $0x18] sm:$0xff] %v268
                %v270 = vld [vmem:[%s262 + $0x6c] sm:$0xff]
                %271 = vst [vmem:[%s263 + $0x24] sm:$0xff] %v270
              $region45: #{resnet_forward.17} parent=39 // loop_footer
                %s261 = sadd.s32 1, %s257
              $region46: #{resnet_forward.17} parent=39 // loop_footer_branch
                %256 = sbr.rel target = $region42
              $region47: #{resnet_forward.17} parent=39 // loop_exit
                _
              %s273 = ssub.s32 16, 1
              loop: start=0, step=1, limit=1
              $region48: #{resnet_forward.17} parent=39 // loop_pre_header
                _
              $region49: #{resnet_forward.17} parent=39 // loop_header
                %s275 = sphi 0, %s279
                %p276 = scmp.ge.s32.totalorder %s275, 1
                %s280 = sphi %s254, %s254
                %s281 = sphi %s255, %s255
              $region50: #{resnet_forward.17} parent=39 // loop_header_branch
                %278 = sbr.rel (%p276) target = $region54
              $region51: #{resnet_forward.17} parent=39 // loop_body
                %v282 = vld [vmem:[%s280] sm:%s273]
                %283 = vst [vmem:[%s281] sm:%s273] %v282
                %v284 = vld [vmem:[%s280 + $0x24] sm:%s273]
                %285 = vst [vmem:[%s281 + $0xc] sm:%s273] %v284
                %v286 = vld [vmem:[%s280 + $0x48] sm:%s273]
                %287 = vst [vmem:[%s281 + $0x18] sm:%s273] %v286
                %v288 = vld [vmem:[%s280 + $0x6c] sm:%s273]
                %289 = vst [vmem:[%s281 + $0x24] sm:%s273] %v288
              $region52: #{resnet_forward.17} parent=39 // loop_footer
                %s279 = sadd.s32 1, %s275
              $region53: #{resnet_forward.17} parent=39 // loop_footer_branch
                %274 = sbr.rel target = $region49
              $region54: #{resnet_forward.17} parent=39 // loop_exit
                _
            $region40: #{resnet_forward.17} parent=35 // pred_fallthru
              _
          $region36: #{resnet_forward.17} parent=31 // pred_fallthru
            _
          %290 = vnop
        $region32: #{resnet_forward.17} parent=27 // pred_fallthru
          _
        // Predicated region
        $region55: #{resnet_forward.17} parent=27 // pred_check
          %p291 = pneg %p80
        $region56: #{resnet_forward.17} parent=27 // pred_check_branch
          %293 = sbr.rel (%p291) target = $region58
        $region57: #{resnet_forward.17} parent=27 // pred_region
          %s294 = smul.u32 48, %s20
          %p295 = scmp.lt.s32.totalorder %s294, 143
          %s296 = scalar_select %p295, %s294, 143
          %p297 = scmp.lt.s32.totalorder %s19, 0
          %s298 = scalar_select %p297, %s19, 0
          %s299 = sadd.s32 %s298, %s296
          %s300 = smul.addr %s299, 4
          %s301 = scalar_lea.vmem %s1, %s300
          %s302 = smul.u32 48, %s20
        $region58: #{resnet_forward.17} parent=27 // pred_fallthru
          _
      $region28: #{resnet_forward.17} parent=5 // pred_fallthru
        _
      %p303 = scmp.le.s32.totalorder 1, %s11
      %p304 = scmp.lt.s32.totalorder %s11, 4
      %p305 = pnand %p303, %p304
      %p306 = pneg %p305
      // Predicated region
      $region59: #{resnet_forward.17} parent=5 // pred_check
        _
      $region60: #{resnet_forward.17} parent=5 // pred_check_branch
        %308 = sbr.rel (%p305) target = $region62
      $region61: #{resnet_forward.17} parent=5 // pred_region
        %s309 = ssub.s32 %s11, 1
        %s310 = sand.u32 %s45, 1
        %s311 = sand.u32 %s45, 1
        %s312 = smul.addr %s311, 48
        %s313 = scalar_lea.vmem [#allocation3], %s312
        // Predicated region
        $region63: #{resnet_forward.17} parent=61 // pred_check
          %p314 = pneg %p58
        $region64: #{resnet_forward.17} parent=61 // pred_check_branch
          %316 = sbr.rel (%p314) target = $region66
        $region65: #{resnet_forward.17} parent=61 // pred_region
          _
        $region66: #{resnet_forward.17} parent=61 // pred_fallthru
          _
        %s317 = sand.u32 %s45, 1
        %s318 = sand.u32 %s45, 1
        %s319 = smul.addr %s318, 48
        %s320 = scalar_lea.vmem [#allocation3], %s319
        %p321 = pneg %p58
        %p322 = pneg %p55
        %s323 = smul.u32 48, %s23
        %p324 = scmp.lt.s32.totalorder %s323, 143
        %s325 = scalar_select %p324, %s323, 143
        %p326 = scmp.lt.s32.totalorder %s22, 0
        %s327 = scalar_select %p326, %s22, 0
        %s328 = sadd.s32 %s327, %s325
        %s329 = smul.addr %s328, 4
        %s330 = scalar_lea.vmem %s1, %s329
        %p331 = pneg %p86
        %p332 = pneg %p83
        %p333 = scmp.lt.s32.totalorder %s22, 0
        %s334 = scalar_select %p333, %s22, 0
        %s335 = scalar_lea.vmem %s2, %s334
        %p336 = pneg %p112
        %p337 = pneg %p109
        %p338 = scmp.lt.s32.totalorder %s22, 0
        %s339 = scalar_select %p338, %s22, 0
        %s340 = scalar_lea.vmem %s3, %s339
        %p341 = pneg %p138
        %p342 = pneg %p135
        %s343 = smul.u32 4, %s21
        %p344 = scmp.lt.s32.totalorder %s343, 3
        %s345 = scalar_select %p344, %s343, 3
        %p346 = scmp.lt.s32.totalorder %s22, 0
        %s347 = scalar_select %p346, %s22, 0
        %s348 = sadd.s32 %s347, %s345
        %s349 = smul.addr %s348, 4
        %s350 = scalar_lea.vmem %s4, %s349
        %p351 = pneg %p166
        %p352 = pneg %p163
        %p353 = pneg %p194
        %p354 = pneg %p191
        %s355 = smul.u32 4, %s21
        %p356 = scmp.lt.s32.totalorder %s355, 3
        %s357 = scalar_select %p356, %s355, 3
        %p358 = scmp.lt.s32.totalorder %s22, 0
        %s359 = scalar_select %p358, %s22, 0
        %s360 = sadd.s32 %s359, %s357
        %s361 = smul.addr %s360, 4
        %s362 = scalar_lea.vmem %s5, %s361
        %s363 = smul.u32 4, %s21
        %s364 = smul.u32 3, %s23
        %s365 = smul.u32 48, %s23
        %p366 = scmp.lt.s32.totalorder %s365, 143
        %s367 = scalar_select %p366, %s365, 143
        %p368 = scmp.lt.s32.totalorder %s22, 0
        %s369 = scalar_select %p368, %s22, 0
        %s370 = sadd.s32 %s369, %s367
        %s371 = smul.addr %s370, 4
        %s372 = scalar_lea.vmem %s1, %s371
        %s373 = smul.u32 48, %s23
        %p374 = scmp.lt.s32.totalorder %s22, 0
        %s375 = scalar_select %p374, %s22, 0
        %s376 = scalar_lea.vmem %s2, %s375
        %p377 = scmp.lt.s32.totalorder %s22, 0
        %s378 = scalar_select %p377, %s22, 0
        %s379 = scalar_lea.vmem %s3, %s378
        %s380 = smul.u32 4, %s21
        %p381 = scmp.lt.s32.totalorder %s380, 3
        %s382 = scalar_select %p381, %s380, 3
        %p383 = scmp.lt.s32.totalorder %s22, 0
        %s384 = scalar_select %p383, %s22, 0
        %s385 = sadd.s32 %s384, %s382
        %s386 = smul.addr %s385, 4
        %s387 = scalar_lea.vmem %s4, %s386
        %s388 = smul.u32 4, %s21
        %s389 = smul.u32 4, %s21
        %p390 = scmp.lt.s32.totalorder %s389, 3
        %s391 = scalar_select %p390, %s389, 3
        %p392 = scmp.lt.s32.totalorder %s22, 0
        %s393 = scalar_select %p392, %s22, 0
        %s394 = sadd.s32 %s393, %s391
        %s395 = smul.addr %s394, 4
        %s396 = scalar_lea.vmem %s5, %s395
        %s397 = smul.u32 4, %s21
        %p398 = scmp.eq.s32.totalorder %s23, 0
        // Predicated region
        $region67: #{resnet_forward.17} parent=61 // pred_check
          %p399 = pneg %p398
        $region68: #{resnet_forward.17} parent=61 // pred_check_branch
          %401 = sbr.rel (%p399) target = $region70
        $region69: #{resnet_forward.17} parent=61 // pred_region
          %402 = vst [vmem:[#allocation2] sm:$0xff] 0.0
          %403 = vst [vmem:[#allocation2 + $0x8] sm:$0xff] 0.0
          %404 = vst [vmem:[#allocation2 + $0x10] sm:$0xff] 0.0
          %405 = vst [vmem:[#allocation2 + $0x18] sm:$0xff] 0.0
        $region70: #{resnet_forward.17} parent=61 // pred_fallthru
          _
        %v406 = vld [vmem:[#allocation2] sm:$0xff]
        %v407 = vld [vmem:[#allocation2 + $0x8] sm:$0xff]
        %v408 = vld [vmem:[#allocation2 + $0x10] sm:$0xff]
        %v409 = vld [vmem:[#allocation2 + $0x18] sm:$0xff]
        %v410 = vld [vmem:[%s313] sm:$0xff]
        %v411 = vld [vmem:[%s313 + $0x8] sm:$0xf]
        %v412 = vld [vmem:[%s313 + $0xc] sm:$0xff]
        %v413 = vld [vmem:[%s313 + $0x14] sm:$0xf]
        %v414 = vld [vmem:[%s313 + $0x18] sm:$0xff]
        %v415 = vld [vmem:[%s313 + $0x20] sm:$0xf]
        %v416 = vld [vmem:[%s313 + $0x24] sm:$0xff]
        %v417 = vld [vmem:[%s313 + $0x2c] sm:$0xf]
        %v418 = vld [vmem:[%s372] sm:$0xf]
        %v419 = vld [vmem:[%s372 + $0x4] sm:$0xf]
        %v420 = vld [vmem:[%s372 + $0x8] sm:$0xf]
        %v421 = vld [vmem:[%s372 + $0xc] sm:$0xf]
        %v422 = vld [vmem:[%s372 + $0x10] sm:$0xf]
        %v423 = vld [vmem:[%s372 + $0x14] sm:$0xf]
        %v424 = vld [vmem:[%s372 + $0x18] sm:$0xf]
        %v425 = vld [vmem:[%s372 + $0x1c] sm:$0xf]
        %v426 = vld [vmem:[%s372 + $0x20] sm:$0xf]
        %v427 = vld [vmem:[%s372 + $0x24] sm:$0xf]
        %v428 = vld [vmem:[%s372 + $0x28] sm:$0xf]
        %v429 = vld [vmem:[%s372 + $0x2c] sm:$0xf]
        %v430 = vld [vmem:[%s372 + $0x30] sm:$0xf]
        %v431 = vld [vmem:[%s372 + $0x34] sm:$0xf]
        %v432 = vld [vmem:[%s372 + $0x38] sm:$0xf]
        %v433 = vld [vmem:[%s372 + $0x3c] sm:$0xf]
        %v434 = vld [vmem:[%s372 + $0x40] sm:$0xf]
        %v435 = vld [vmem:[%s372 + $0x44] sm:$0xf]
        %v436 = vld [vmem:[%s372 + $0x48] sm:$0xf]
        %v437 = vld [vmem:[%s372 + $0x4c] sm:$0xf]
        %v438 = vld [vmem:[%s372 + $0x50] sm:$0xf]
        %v439 = vld [vmem:[%s372 + $0x54] sm:$0xf]
        %v440 = vld [vmem:[%s372 + $0x58] sm:$0xf]
        %v441 = vld [vmem:[%s372 + $0x5c] sm:$0xf]
        %v442 = vld [vmem:[%s372 + $0x60] sm:$0xf]
        %v443 = vld [vmem:[%s372 + $0x64] sm:$0xf]
        %v444 = vld [vmem:[%s372 + $0x68] sm:$0xf]
        %v445 = vld [vmem:[%s372 + $0x6c] sm:$0xf]
        %v446 = vld [vmem:[%s372 + $0x70] sm:$0xf]
        %v447 = vld [vmem:[%s372 + $0x74] sm:$0xf]
        %v448 = vld [vmem:[%s372 + $0x78] sm:$0xf]
        %v449 = vld [vmem:[%s372 + $0x7c] sm:$0xf]
        %v450 = vld [vmem:[%s372 + $0x80] sm:$0xf]
        %v451 = vld [vmem:[%s372 + $0x84] sm:$0xf]
        %v452 = vld [vmem:[%s372 + $0x88] sm:$0xf]
        %v453 = vld [vmem:[%s372 + $0x8c] sm:$0xf]
        %v454 = vld [vmem:[%s372 + $0x90] sm:$0xf]
        %v455 = vld [vmem:[%s372 + $0x94] sm:$0xf]
        %v456 = vld [vmem:[%s372 + $0x98] sm:$0xf]
        %v457 = vld [vmem:[%s372 + $0x9c] sm:$0xf]
        %v458 = vld [vmem:[%s372 + $0xa0] sm:$0xf]
        %v459 = vld [vmem:[%s372 + $0xa4] sm:$0xf]
        %v460 = vld [vmem:[%s372 + $0xa8] sm:$0xf]
        %v461 = vld [vmem:[%s372 + $0xac] sm:$0xf]
        %v462 = vld [vmem:[%s372 + $0xb0] sm:$0xf]
        %v463 = vld [vmem:[%s372 + $0xb4] sm:$0xf]
        %v464 = vld [vmem:[%s372 + $0xb8] sm:$0xf]
        %v465 = vld [vmem:[%s372 + $0xbc] sm:$0xf]
        %v474 = vunpack.c.l.b16 %v410
        %v475 = vunpack.c.h.b16 %v410
        %v476 = vunpack.c.l.b16 %v411
        %v477 = vunpack.c.l.b16 %v412
        %v478 = vunpack.c.h.b16 %v412
        %v479 = vunpack.c.l.b16 %v413
        %v480 = vunpack.c.l.b16 %v414
        %v481 = vunpack.c.h.b16 %v414
        %v482 = vunpack.c.l.b16 %v415
        %v483 = vunpack.c.l.b16 %v416
        %v484 = vunpack.c.h.b16 %v416
        %v485 = vunpack.c.l.b16 %v417
        %v486 = vpack.c.b16 %v477, %v474
        %v487 = vpack.c.b16 %v478, %v475
        %v488 = vpack.c.b16 %v479, %v476
        %v489 = vpack.c.b16 %v483, %v480
        %v490 = vpack.c.b16 %v484, %v481
        %v491 = vpack.c.b16 %v485, %v482
        %v546 = vunpack.c.l.b16 %v418
        %v547 = vunpack.c.l.b16 %v419
        %v548 = vunpack.c.l.b16 %v420
        %v549 = vunpack.c.l.b16 %v421
        %v550 = vunpack.c.l.b16 %v422
        %v551 = vunpack.c.l.b16 %v423
        %v552 = vunpack.c.l.b16 %v424
        %v553 = vunpack.c.l.b16 %v425
        %v554 = vunpack.c.l.b16 %v426
        %v555 = vunpack.c.l.b16 %v427
        %v556 = vunpack.c.l.b16 %v428
        %v557 = vunpack.c.l.b16 %v429
        %v558 = vunpack.c.l.b16 %v430
        %v559 = vunpack.c.l.b16 %v431
        %v560 = vunpack.c.l.b16 %v432
        %v561 = vunpack.c.l.b16 %v433
        %v562 = vunpack.c.l.b16 %v434
        %v563 = vunpack.c.l.b16 %v435
        %v564 = vunpack.c.l.b16 %v436
        %v565 = vunpack.c.l.b16 %v437
        %v566 = vunpack.c.l.b16 %v438
        %v567 = vunpack.c.l.b16 %v439
        %v568 = vunpack.c.l.b16 %v440
        %v569 = vunpack.c.l.b16 %v441
        %v570 = vunpack.c.l.b16 %v442
        %v571 = vunpack.c.l.b16 %v443
        %v572 = vunpack.c.l.b16 %v444
        %v573 = vunpack.c.l.b16 %v445
        %v574 = vunpack.c.l.b16 %v446
        %v575 = vunpack.c.l.b16 %v447
        %v576 = vunpack.c.l.b16 %v448
        %v577 = vunpack.c.l.b16 %v449
        %v578 = vunpack.c.l.b16 %v450
        %v579 = vunpack.c.l.b16 %v451
        %v580 = vunpack.c.l.b16 %v452
        %v581 = vunpack.c.l.b16 %v453
        %v582 = vunpack.c.l.b16 %v454
        %v583 = vunpack.c.l.b16 %v455
        %v584 = vunpack.c.l.b16 %v456
        %v585 = vunpack.c.l.b16 %v457
        %v586 = vunpack.c.l.b16 %v458
        %v587 = vunpack.c.l.b16 %v459
        %v588 = vunpack.c.l.b16 %v460
        %v589 = vunpack.c.l.b16 %v461
        %v590 = vunpack.c.l.b16 %v462
        %v591 = vunpack.c.l.b16 %v463
        %v592 = vunpack.c.l.b16 %v464
        %v593 = vunpack.c.l.b16 %v465
        %v594 = vpack.c.b16 %v547, %v546
        %v595 = vpack.c.b16 %v549, %v548
        %v596 = vpack.c.b16 %v551, %v550
        %v597 = vpack.c.b16 %v553, %v552
        %v598 = vpack.c.b16 %v555, %v554
        %v599 = vpack.c.b16 %v557, %v556
        %v600 = vpack.c.b16 %v559, %v558
        %v601 = vpack.c.b16 %v561, %v560
        %v602 = vpack.c.b16 %v563, %v562
        %v603 = vpack.c.b16 %v565, %v564
        %v604 = vpack.c.b16 %v567, %v566
        %v605 = vpack.c.b16 %v569, %v568
        %v606 = vpack.c.b16 %v571, %v570
        %v607 = vpack.c.b16 %v573, %v572
        %v608 = vpack.c.b16 %v575, %v574
        %v609 = vpack.c.b16 %v577, %v576
        %v610 = vpack.c.b16 %v579, %v578
        %v611 = vpack.c.b16 %v581, %v580
        %v612 = vpack.c.b16 %v583, %v582
        %v613 = vpack.c.b16 %v585, %v584
        %v614 = vpack.c.b16 %v587, %v586
        %v615 = vpack.c.b16 %v589, %v588
        %v616 = vpack.c.b16 %v591, %v590
        %v617 = vpack.c.b16 %v593, %v592
        %642 = vmatpush.bf16.msra.mxu0 %v601
        %643 = vmatpush.bf16.msra.mxu0 %v600
        %644 = vmatpush.bf16.msra.mxu0 %v599
        %645 = vmatpush.bf16.msra.mxu0 %v598
        %646 = vmatpush.bf16.msra.mxu0 %v597
        %647 = vmatpush.bf16.msra.mxu0 %v596
        %648 = vmatpush.bf16.msra.mxu0 %v595
        %649 = vmatpush.bf16.msra.mxu0 %v594
        %650 = vmatmul.bf16.gmra.mxu0 %v486
        %v651 = vpop.f32.mrf.mxu0
        %v652 = vadd.f32 0.0, %v651
        %v653 = vpop.f32.mrf.mxu0
        %v654 = vadd.f32 0.0, %v653
        %655 = vmatmul.bf16.gmra.mxu0 %v489
        %v656 = vpop.f32.mrf.mxu0
        %v657 = vadd.f32 0.0, %v656
        %v658 = vpop.f32.mrf.mxu0
        %v659 = vadd.f32 0.0, %v658
        %660 = vdwg.mxu0
        %661 = vmatpush.bf16.msra.mxu0 %v609
        %662 = vmatpush.bf16.msra.mxu0 %v608
        %663 = vmatpush.bf16.msra.mxu0 %v607
        %664 = vmatpush.bf16.msra.mxu0 %v606
        %665 = vmatpush.bf16.msra.mxu0 %v605
        %666 = vmatpush.bf16.msra.mxu0 %v604
        %667 = vmatpush.bf16.msra.mxu0 %v603
        %668 = vmatpush.bf16.msra.mxu0 %v602
        %669 = vmatmul.bf16.gmra.mxu0 %v487
        %v670 = vpop.f32.mrf.mxu0
        %v671 = vadd.f32 %v652, %v670
        %v672 = vpop.f32.mrf.mxu0
        %v673 = vadd.f32 %v654, %v672
        %674 = vmatmul.bf16.gmra.mxu0 %v490
        %v675 = vpop.f32.mrf.mxu0
        %v676 = vadd.f32 %v657, %v675
        %v677 = vpop.f32.mrf.mxu0
        %v678 = vadd.f32 %v659, %v677
        %679 = vdwg.mxu0
        %680 = vmatpush.bf16.msra.mxu0 %v617
        %681 = vmatpush.bf16.msra.mxu0 %v616
        %682 = vmatpush.bf16.msra.mxu0 %v615
        %683 = vmatpush.bf16.msra.mxu0 %v614
        %684 = vmatpush.bf16.msra.mxu0 %v613
        %685 = vmatpush.bf16.msra.mxu0 %v612
        %686 = vmatpush.bf16.msra.mxu0 %v611
        %687 = vmatpush.bf16.msra.mxu0 %v610
        %688 = vmatmul.bf16.gmra.mxu0 %v488
        %v689 = vpop.f32.mrf.mxu0
        %v690 = vadd.f32 %v671, %v689
        %v691 = vpop.f32.mrf.mxu0
        %v692 = vadd.f32 %v673, %v691
        %693 = vmatmul.bf16.gmra.mxu0 %v491
        %v694 = vpop.f32.mrf.mxu0
        %v695 = vadd.f32 %v676, %v694
        %v696 = vpop.f32.mrf.mxu0
        %v697 = vadd.f32 %v678, %v696
        %698 = vdwg.mxu0
        %v699 = vadd.f32 %v406, %v690
        %v700 = vadd.f32 %v407, %v692
        %v701 = vadd.f32 %v408, %v695
        %v702 = vadd.f32 %v409, %v697
        %703 = vst [vmem:[#allocation2] sm:$0xff] %v699
        %704 = vst [vmem:[#allocation2 + $0x8] sm:$0xff] %v700
        %705 = vst [vmem:[#allocation2 + $0x10] sm:$0xff] %v701
        %706 = vst [vmem:[#allocation2 + $0x18] sm:$0xff] %v702
        %p707 = scmp.eq.s32.totalorder %s23, 2
        // Predicated region
        $region71: #{resnet_forward.17} parent=61 // pred_check
          %p708 = pneg %p707
        $region72: #{resnet_forward.17} parent=61 // pred_check_branch
          %710 = sbr.rel (%p708) target = $region74
        $region73: #{resnet_forward.17} parent=61 // pred_region
          %v711 = vld [vmem:[#allocation2] sm:$0xff]
          %v712 = vld [vmem:[#allocation2 + $0x8] sm:$0xff]
          %v713 = vld [vmem:[#allocation2 + $0x10] sm:$0xff]
          %v714 = vld [vmem:[#allocation2 + $0x18] sm:$0xff]
          %v715 = vld [vmem:[%s376] sm:$0x1]
          %v717 = vperm.slane %v715, 0
          %v719 = vmul.f32 %v711, %v717
          %v720 = vmul.f32 %v712, %v717
          %v721 = vmul.f32 %v713, %v717
          %v722 = vmul.f32 %v714, %v717
          %v723 = vld [vmem:[%s379] sm:$0x1]
          %v725 = vperm.slane %v723, 0
          %v727 = vadd.f32 %v719, %v725
          %v728 = vadd.f32 %v720, %v725
          %v729 = vadd.f32 %v721, %v725
          %v730 = vadd.f32 %v722, %v725
          %v731 = vld [vmem:[%s387] sm:$0xf]
          %v732 = vld [vmem:[%s387 + $0x4] sm:$0xf]
          %v733 = vld [vmem:[%s387 + $0x8] sm:$0xf]
          %v734 = vld [vmem:[%s387 + $0xc] sm:$0xf]
          %v735 = vunpack.c.l.bf16 %v731
          %v736 = vunpack.c.l.bf16 %v732
          %v737 = vunpack.c.l.bf16 %v733
          %v738 = vunpack.c.l.bf16 %v734
          %v739 = vadd.f32 %v727, %v735
          %v740 = vadd.f32 %v728, %v736
          %v741 = vadd.f32 %v729, %v737
          %v742 = vadd.f32 %v730, %v738
          %v743 = vmax.f32 %v739, 0.0
          %v744 = vmax.f32 %v740, 0.0
          %v745 = vmax.f32 %v741, 0.0
          %v746 = vmax.f32 %v742, 0.0
          %v747 = vpack.c.bf16 %v743, %v743
          %v748 = vpack.c.bf16 %v744, %v744
          %v749 = vpack.c.bf16 %v745, %v745
          %v750 = vpack.c.bf16 %v746, %v746
          %751 = vst [vmem:[%s396] sm:$0xf] %v747
          %752 = vst [vmem:[%s396 + $0x4] sm:$0xf] %v748
          %753 = vst [vmem:[%s396 + $0x8] sm:$0xf] %v749
          %754 = vst [vmem:[%s396 + $0xc] sm:$0xf] %v750
        $region74: #{resnet_forward.17} parent=61 // pred_fallthru
          _
        %s755 = smul.u32 4, %s21
        %p756 = scmp.lt.s32.totalorder %s755, 3
        %s757 = scalar_select %p756, %s755, 3
        %p758 = scmp.lt.s32.totalorder %s22, 0
        %s759 = scalar_select %p758, %s22, 0
        %s760 = sadd.s32 %s759, %s757
        %s761 = smul.addr %s760, 4
        %s762 = scalar_lea.vmem %s5, %s761
        // Predicated region
        $region75: #{resnet_forward.17} parent=61 // pred_check
          %p763 = pneg %p191
        $region76: #{resnet_forward.17} parent=61 // pred_check_branch
          %765 = sbr.rel (%p763) target = $region78
        $region77: #{resnet_forward.17} parent=61 // pred_region
          %s766 = smul.u32 4, %s21
        $region78: #{resnet_forward.17} parent=61 // pred_fallthru
          _
        // Predicated region
        $region79: #{resnet_forward.17} parent=61 // pred_check
          %p767 = pneg %p191
        $region80: #{resnet_forward.17} parent=61 // pred_check_branch
          %769 = sbr.rel (%p767) target = $region82
        $region81: #{resnet_forward.17} parent=61 // pred_region
          %s770 = smul.u32 4, %s21
          %p771 = scmp.lt.s32.totalorder %s770, 3
          %s772 = scalar_select %p771, %s770, 3
          %p773 = scmp.lt.s32.totalorder %s22, 0
          %s774 = scalar_select %p773, %s22, 0
          %s775 = sadd.s32 %s774, %s772
          %s776 = smul.addr %s775, 4
          %s777 = scalar_lea.vmem %s5, %s776
        $region82: #{resnet_forward.17} parent=61 // pred_fallthru
          _
      $region62: #{resnet_forward.17} parent=5 // pred_fallthru
        _
      %p778 = scmp.le.s32.totalorder 2, %s11
      // Predicated region
      $region83: #{resnet_forward.17} parent=5 // pred_check
        %p779 = pneg %p778
      $region84: #{resnet_forward.17} parent=5 // pred_check_branch
        %781 = sbr.rel (%p779) target = $region86
      $region85: #{resnet_forward.17} parent=5 // pred_region
        %s782 = ssub.s32 %s11, 2
      $region86: #{resnet_forward.17} parent=5 // pred_fallthru
        _
    $region6: #{resnet_forward.17} parent=1 // loop_footer
      %s15 = sadd.s32 1, %s11
    $region7: #{resnet_forward.17} parent=1 // loop_footer_branch
      %10 = sbr.rel target = $region3
    $region8: #{resnet_forward.17} parent=1 // loop_exit
      _

// kernel: resnet_forward.19
$region0: #{resnet_forward.19}
  #allocation0 [shape = 'u32[]', space=smem, size = 0x4, offset = 0x4, fixed_abs, tag = 'smem constant byte address 0x4 - core index']
  #allocation1 [shape = 'u32[72,128]{1,0:T(1,128)}', space=vmem, size = 0x9000, scoped, tag = 'internal scratch']
  #allocation2 [shape = 'f32[8,128]{1,0:T(8,128)}', space=vmem, size = 0x1000, scoped, tag = 'scratch operand']
  %s0 = inlined_call_operand.vmem [shape: bf16[8,1152], index: 0, kind: input, shape index: {}]
  %s1 = inlined_call_operand.vmem [shape: bf16[1152,128], index: 1, kind: input, shape index: {}]
  %s2 = inlined_call_operand.vmem [shape: f32[1,128], index: 2, kind: input, shape index: {}]
  %s3 = inlined_call_operand.vmem [shape: f32[1,128], index: 3, kind: input, shape index: {}]
  %s4 = inlined_call_operand.vmem [shape: bf16[8,128], index: 4, kind: output, shape index: {}]
  %s5 = sld [smem:[#allocation0]]
  $region57: #{resnet_forward.19} parent=0
    _
  %s7 = ssub.s32 1, %s5
  %s8 = scalar_select 0, %s7, %s5
  loop: start=0, step=1, limit=5
  $region2: #{resnet_forward.19} parent=0 // loop_pre_header
    _
  $region3: #{resnet_forward.19} parent=0 // loop_header
    %s10 = sphi 0, %s14
    %p11 = scmp.ge.s32.totalorder %s10, 5
    %s17 = sphi 0, %s36
    %s18 = sphi 0, %s32
    %s19 = sphi 0, %s28
    %s20 = sphi 0, %s17
    %s21 = sphi 0, %s18
    %s22 = sphi 0, %s19
    %s23 = sphi 0, %s20
    %s24 = sphi 0, %s21
    %s25 = sphi 0, %s22
    %s41 = sphi 0, %s43
    %s44 = sphi 0, %s41
    %s45 = sphi 0, %s44
    %s61 = sphi 0, %s45
    %s69 = sphi 0, %s71
    %s72 = sphi 0, %s69
    %s73 = sphi 0, %s72
    %s89 = sphi 0, %s73
    %s95 = sphi 0, %s97
    %s98 = sphi 0, %s95
    %s99 = sphi 0, %s98
    %s115 = sphi 0, %s99
    %s121 = sphi 0, %s123
    %s124 = sphi 0, %s121
    %s125 = sphi 0, %s124
    %s141 = sphi 0, %s125
    %s149 = sphi 0, %s151
    %s152 = sphi 0, %s149
    %s153 = sphi 0, %s152
    %s169 = sphi 0, %s153
  $region4: #{resnet_forward.19} parent=0 // loop_header_branch
    %13 = sbr.rel (%p11) target = $region8
  $region5: #{resnet_forward.19} parent=0 // loop_body
    %s15 = ssub.s32 %s10, 1
    %s16 = ssub.s32 %s10, 2
    %s26 = sadd.s32 1, %s19
    %p27 = scmp.ge.s32.totalorder %s26, 3
    %s28 = scalar_select %p27, 0, %s26
    %s29 = sadd.s32 1, %s18
    %s30 = scalar_select %p27, %s29, %s18
    %p31 = scmp.ge.s32.totalorder %s30, 1
    %s32 = scalar_select %p31, 0, %s30
    %s33 = sadd.s32 1, %s17
    %s34 = scalar_select %p31, %s33, %s17
    %p35 = scmp.ge.s32.totalorder %s34, 1
    %s36 = scalar_select %p35, 0, %s34
    %s37 = ssub.s32 %s17, %s36
    %s38 = ssub.s32 %s19, %s28
    %s39 = sor.u32 %s37, %s38
    %p40 = scmp.eq.s32.totalorder %s39, 0
    %s42 = sadd.s32 %s41, 1
    %s43 = scalar_select %p40, %s41, %s42
    %p46 = pneg %p40
    %p47 = scmp.eq.s32.totalorder %s10, 2
    %p48 = por %p46, %p47
    %p49 = scmp.ne.s32.totalorder %s41, %s44
    %p50 = scmp.eq.s32.totalorder %s10, 0
    %p51 = por %p49, %p50
    %p52 = scmp.ne.s32.totalorder %s41, %s44
    %p53 = scmp.eq.s32.totalorder %s15, 2
    %p54 = por %p52, %p53
    %p55 = scmp.ne.s32.totalorder %s44, %s45
    %p56 = scmp.eq.s32.totalorder %s15, 0
    %p57 = por %p55, %p56
    %p58 = scmp.ne.s32.totalorder %s44, %s45
    %p59 = scmp.eq.s32.totalorder %s16, 2
    %p60 = por %p58, %p59
    %p62 = scmp.ne.s32.totalorder %s45, %s61
    %p63 = scmp.eq.s32.totalorder %s16, 0
    %p64 = por %p62, %p63
    %s65 = ssub.s32 %s19, %s28
    %s66 = ssub.s32 %s18, %s32
    %s67 = sor.u32 %s65, %s66
    %p68 = scmp.eq.s32.totalorder %s67, 0
    %s70 = sadd.s32 %s69, 1
    %s71 = scalar_select %p68, %s69, %s70
    %p74 = pneg %p68
    %p75 = scmp.eq.s32.totalorder %s10, 2
    %p76 = por %p74, %p75
    %p77 = scmp.ne.s32.totalorder %s69, %s72
    %p78 = scmp.eq.s32.totalorder %s10, 0
    %p79 = por %p77, %p78
    %p80 = scmp.ne.s32.totalorder %s69, %s72
    %p81 = scmp.eq.s32.totalorder %s15, 2
    %p82 = por %p80, %p81
    %p83 = scmp.ne.s32.totalorder %s72, %s73
    %p84 = scmp.eq.s32.totalorder %s15, 0
    %p85 = por %p83, %p84
    %p86 = scmp.ne.s32.totalorder %s72, %s73
    %p87 = scmp.eq.s32.totalorder %s16, 2
    %p88 = por %p86, %p87
    %p90 = scmp.ne.s32.totalorder %s73, %s89
    %p91 = scmp.eq.s32.totalorder %s16, 0
    %p92 = por %p90, %p91
    %s93 = ssub.s32 %s18, %s32
    %p94 = scmp.eq.s32.totalorder %s93, 0
    %s96 = sadd.s32 %s95, 1
    %s97 = scalar_select %p94, %s95, %s96
    %p100 = pneg %p94
    %p101 = scmp.eq.s32.totalorder %s10, 2
    %p102 = por %p100, %p101
    %p103 = scmp.ne.s32.totalorder %s95, %s98
    %p104 = scmp.eq.s32.totalorder %s10, 0
    %p105 = por %p103, %p104
    %p106 = scmp.ne.s32.totalorder %s95, %s98
    %p107 = scmp.eq.s32.totalorder %s15, 2
    %p108 = por %p106, %p107
    %p109 = scmp.ne.s32.totalorder %s98, %s99
    %p110 = scmp.eq.s32.totalorder %s15, 0
    %p111 = por %p109, %p110
    %p112 = scmp.ne.s32.totalorder %s98, %s99
    %p113 = scmp.eq.s32.totalorder %s16, 2
    %p114 = por %p112, %p113
    %p116 = scmp.ne.s32.totalorder %s99, %s115
    %p117 = scmp.eq.s32.totalorder %s16, 0
    %p118 = por %p116, %p117
    %s119 = ssub.s32 %s18, %s32
    %p120 = scmp.eq.s32.totalorder %s119, 0
    %s122 = sadd.s32 %s121, 1
    %s123 = scalar_select %p120, %s121, %s122
    %p126 = pneg %p120
    %p127 = scmp.eq.s32.totalorder %s10, 2
    %p128 = por %p126, %p127
    %p129 = scmp.ne.s32.totalorder %s121, %s124
    %p130 = scmp.eq.s32.totalorder %s10, 0
    %p131 = por %p129, %p130
    %p132 = scmp.ne.s32.totalorder %s121, %s124
    %p133 = scmp.eq.s32.totalorder %s15, 2
    %p134 = por %p132, %p133
    %p135 = scmp.ne.s32.totalorder %s124, %s125
    %p136 = scmp.eq.s32.totalorder %s15, 0
    %p137 = por %p135, %p136
    %p138 = scmp.ne.s32.totalorder %s124, %s125
    %p139 = scmp.eq.s32.totalorder %s16, 2
    %p140 = por %p138, %p139
    %p142 = scmp.ne.s32.totalorder %s125, %s141
    %p143 = scmp.eq.s32.totalorder %s16, 0
    %p144 = por %p142, %p143
    %s145 = ssub.s32 %s17, %s36
    %s146 = ssub.s32 %s18, %s32
    %s147 = sor.u32 %s145, %s146
    %p148 = scmp.eq.s32.totalorder %s147, 0
    %s150 = sadd.s32 %s149, 1
    %s151 = scalar_select %p148, %s149, %s150
    %p154 = pneg %p148
    %p155 = scmp.eq.s32.totalorder %s10, 2
    %p156 = por %p154, %p155
    %p157 = scmp.ne.s32.totalorder %s149, %s152
    %p158 = scmp.eq.s32.totalorder %s10, 0
    %p159 = por %p157, %p158
    %p160 = scmp.ne.s32.totalorder %s149, %s152
    %p161 = scmp.eq.s32.totalorder %s15, 2
    %p162 = por %p160, %p161
    %p163 = scmp.ne.s32.totalorder %s152, %s153
    %p164 = scmp.eq.s32.totalorder %s15, 0
    %p165 = por %p163, %p164
    %p166 = scmp.ne.s32.totalorder %s152, %s153
    %p167 = scmp.eq.s32.totalorder %s16, 2
    %p168 = por %p166, %p167
    %p170 = scmp.ne.s32.totalorder %s153, %s169
    %p171 = scmp.eq.s32.totalorder %s16, 0
    %p172 = por %p170, %p171
    %p173 = scmp.le.s32.totalorder 1, %s10
    %p174 = scmp.lt.s32.totalorder %s10, 4
    %p175 = pnand %p173, %p174
    %p176 = pneg %p175
    // Predicated region
    $region9: #{resnet_forward.19} parent=5 // pred_check
      _
    $region10: #{resnet_forward.19} parent=5 // pred_check_branch
      %178 = sbr.rel (%p175) target = $region12
    $region11: #{resnet_forward.19} parent=5 // pred_region
      %s179 = ssub.s32 %s10, 1
      // Predicated region
      $region13: #{resnet_forward.19} parent=11 // pred_check
        %p180 = pneg %p111
      $region14: #{resnet_forward.19} parent=11 // pred_check_branch
        %182 = sbr.rel (%p180) target = $region16
      $region15: #{resnet_forward.19} parent=11 // pred_region
        %p183 = scmp.lt.s32.totalorder %s21, 0
        %s184 = scalar_select %p183, %s21, 0
        %s185 = scalar_lea.vmem %s2, %s184
      $region16: #{resnet_forward.19} parent=11 // pred_fallthru
        _
      // Predicated region
      $region17: #{resnet_forward.19} parent=11 // pred_check
        %p186 = pneg %p137
      $region18: #{resnet_forward.19} parent=11 // pred_check_branch
        %188 = sbr.rel (%p186) target = $region20
      $region19: #{resnet_forward.19} parent=11 // pred_region
        %p189 = scmp.lt.s32.totalorder %s21, 0
        %s190 = scalar_select %p189, %s21, 0
        %s191 = scalar_lea.vmem %s3, %s190
      $region20: #{resnet_forward.19} parent=11 // pred_fallthru
        _
    $region12: #{resnet_forward.19} parent=5 // pred_fallthru
      _
    %p192 = scmp.lt.s32.totalorder %s10, 3
    // Predicated region
    $region21: #{resnet_forward.19} parent=5 // pred_check
      %p193 = pneg %p192
    $region22: #{resnet_forward.19} parent=5 // pred_check_branch
      %195 = sbr.rel (%p193) target = $region24
    $region23: #{resnet_forward.19} parent=5 // pred_region
      // Predicated region
      $region25: #{resnet_forward.19} parent=23 // pred_check
        %p196 = pneg %p51
      $region26: #{resnet_forward.19} parent=23 // pred_check_branch
        %198 = sbr.rel (%p196) target = $region28
      $region27: #{resnet_forward.19} parent=23 // pred_region
        %s199 = smul.u32 3, %s19
        %p200 = scmp.lt.s32.totalorder %s17, 0
        %s201 = scalar_select %p200, %s17, 0
        %p202 = scmp.lt.s32.totalorder %s199, 8
        %s203 = scalar_select %p202, %s199, 8
        %s204 = smul.addr %s201, 9
        %s205 = sadd.s32 %s203, %s204
        %s206 = smul.addr %s205, 4
        %s207 = scalar_lea.vmem %s0, %s206
        %s208 = smul.u32 3, %s19
      $region28: #{resnet_forward.19} parent=23 // pred_fallthru
        _
      // Predicated region
      $region29: #{resnet_forward.19} parent=23 // pred_check
        %p209 = pneg %p79
      $region30: #{resnet_forward.19} parent=23 // pred_check_branch
        %211 = sbr.rel (%p209) target = $region32
      $region31: #{resnet_forward.19} parent=23 // pred_region
        %s212 = smul.u32 48, %s19
        %p213 = scmp.lt.s32.totalorder %s212, 143
        %s214 = scalar_select %p213, %s212, 143
        %p215 = scmp.lt.s32.totalorder %s18, 0
        %s216 = scalar_select %p215, %s18, 0
        %s217 = sadd.s32 %s216, %s214
        %s218 = smul.addr %s217, 4
        %s219 = scalar_lea.vmem %s1, %s218
        %s220 = smul.u32 48, %s19
      $region32: #{resnet_forward.19} parent=23 // pred_fallthru
        _
    $region24: #{resnet_forward.19} parent=5 // pred_fallthru
      _
    %p221 = scmp.le.s32.totalorder 1, %s10
    %p222 = scmp.lt.s32.totalorder %s10, 4
    %p223 = pnand %p221, %p222
    %p224 = pneg %p223
    // Predicated region
    $region33: #{resnet_forward.19} parent=5 // pred_check
      _
    $region34: #{resnet_forward.19} parent=5 // pred_check_branch
      %226 = sbr.rel (%p223) target = $region36
    $region35: #{resnet_forward.19} parent=5 // pred_region
      %s227 = ssub.s32 %s10, 1
      %s228 = smul.u32 3, %s22
      %p229 = scmp.lt.s32.totalorder %s20, 0
      %s230 = scalar_select %p229, %s20, 0
      %p231 = scmp.lt.s32.totalorder %s228, 8
      %s232 = scalar_select %p231, %s228, 8
      %s233 = smul.addr %s230, 9
      %s234 = sadd.s32 %s232, %s233
      %s235 = smul.addr %s234, 4
      %s236 = scalar_lea.vmem %s0, %s235
      %p237 = pneg %p57
      %p238 = pneg %p54
      %s239 = smul.u32 48, %s22
      %p240 = scmp.lt.s32.totalorder %s239, 143
      %s241 = scalar_select %p240, %s239, 143
      %p242 = scmp.lt.s32.totalorder %s21, 0
      %s243 = scalar_select %p242, %s21, 0
      %s244 = sadd.s32 %s243, %s241
      %s245 = smul.addr %s244, 4
      %s246 = scalar_lea.vmem %s1, %s245
      %p247 = pneg %p85
      %p248 = pneg %p82
      %p249 = scmp.lt.s32.totalorder %s21, 0
      %s250 = scalar_select %p249, %s21, 0
      %s251 = scalar_lea.vmem %s2, %s250
      %p252 = pneg %p111
      %p253 = pneg %p108
      %p254 = scmp.lt.s32.totalorder %s21, 0
      %s255 = scalar_select %p254, %s21, 0
      %s256 = scalar_lea.vmem %s3, %s255
      %p257 = pneg %p137
      %p258 = pneg %p134
      %p259 = pneg %p165
      %p260 = pneg %p162
      %p261 = scmp.lt.s32.totalorder %s20, 0
      %s262 = scalar_select %p261, %s20, 0
      %p263 = scmp.lt.s32.totalorder %s21, 0
      %s264 = scalar_select %p263, %s21, 0
      %s265 = sadd.s32 %s264, %s262
      %s266 = smul.addr %s265, 4
      %s267 = scalar_lea.vmem %s4, %s266
      %s268 = smul.u32 3, %s22
      %p269 = scmp.lt.s32.totalorder %s20, 0
      %s270 = scalar_select %p269, %s20, 0
      %p271 = scmp.lt.s32.totalorder %s268, 8
      %s272 = scalar_select %p271, %s268, 8
      %s273 = smul.addr %s270, 9
      %s274 = sadd.s32 %s272, %s273
      %s275 = smul.addr %s274, 4
      %s276 = scalar_lea.vmem %s0, %s275
      %s277 = smul.u32 3, %s22
      %s278 = smul.u32 48, %s22
      %p279 = scmp.lt.s32.totalorder %s278, 143
      %s280 = scalar_select %p279, %s278, 143
      %p281 = scmp.lt.s32.totalorder %s21, 0
      %s282 = scalar_select %p281, %s21, 0
      %s283 = sadd.s32 %s282, %s280
      %s284 = smul.addr %s283, 4
      %s285 = scalar_lea.vmem %s1, %s284
      %s286 = smul.u32 48, %s22
      %p287 = scmp.lt.s32.totalorder %s21, 0
      %s288 = scalar_select %p287, %s21, 0
      %s289 = scalar_lea.vmem %s2, %s288
      %p290 = scmp.lt.s32.totalorder %s21, 0
      %s291 = scalar_select %p290, %s21, 0
      %s292 = scalar_lea.vmem %s3, %s291
      %p293 = scmp.lt.s32.totalorder %s20, 0
      %s294 = scalar_select %p293, %s20, 0
      %p295 = scmp.lt.s32.totalorder %s21, 0
      %s296 = scalar_select %p295, %s21, 0
      %s297 = sadd.s32 %s296, %s294
      %s298 = smul.addr %s297, 4
      %s299 = scalar_lea.vmem %s4, %s298
      %p300 = scmp.eq.s32.totalorder %s22, 0
      // Predicated region
      $region37: #{resnet_forward.19} parent=35 // pred_check
        %p301 = pneg %p300
      $region38: #{resnet_forward.19} parent=35 // pred_check_branch
        %303 = sbr.rel (%p301) target = $region40
      $region39: #{resnet_forward.19} parent=35 // pred_region
        %304 = vst [vmem:[#allocation2] sm:$0xff] 0.0
      $region40: #{resnet_forward.19} parent=35 // pred_fallthru
        _
      %v305 = vld [vmem:[#allocation2] sm:$0xff]
      %v306 = vld [vmem:[%s276] sm:$0xff]
      %v307 = vld [vmem:[%s276 + $0x8] sm:$0xf]
      %v308 = vld [vmem:[%s285] sm:$0xf]
      %v309 = vld [vmem:[%s285 + $0x4] sm:$0xf]
      %v310 = vld [vmem:[%s285 + $0x8] sm:$0xf]
      %v311 = vld [vmem:[%s285 + $0xc] sm:$0xf]
      %v312 = vld [vmem:[%s285 + $0x10] sm:$0xf]
      %v313 = vld [vmem:[%s285 + $0x14] sm:$0xf]
      %v314 = vld [vmem:[%s285 + $0x18] sm:$0xf]
      %v315 = vld [vmem:[%s285 + $0x1c] sm:$0xf]
      %v316 = vld [vmem:[%s285 + $0x20] sm:$0xf]
      %v317 = vld [vmem:[%s285 + $0x24] sm:$0xf]
      %v318 = vld [vmem:[%s285 + $0x28] sm:$0xf]
      %v319 = vld [vmem:[%s285 + $0x2c] sm:$0xf]
      %v320 = vld [vmem:[%s285 + $0x30] sm:$0xf]
      %v321 = vld [vmem:[%s285 + $0x34] sm:$0xf]
      %v322 = vld [vmem:[%s285 + $0x38] sm:$0xf]
      %v323 = vld [vmem:[%s285 + $0x3c] sm:$0xf]
      %v324 = vld [vmem:[%s285 + $0x40] sm:$0xf]
      %v325 = vld [vmem:[%s285 + $0x44] sm:$0xf]
      %v326 = vld [vmem:[%s285 + $0x48] sm:$0xf]
      %v327 = vld [vmem:[%s285 + $0x4c] sm:$0xf]
      %v328 = vld [vmem:[%s285 + $0x50] sm:$0xf]
      %v329 = vld [vmem:[%s285 + $0x54] sm:$0xf]
      %v330 = vld [vmem:[%s285 + $0x58] sm:$0xf]
      %v331 = vld [vmem:[%s285 + $0x5c] sm:$0xf]
      %v332 = vld [vmem:[%s285 + $0x60] sm:$0xf]
      %v333 = vld [vmem:[%s285 + $0x64] sm:$0xf]
      %v334 = vld [vmem:[%s285 + $0x68] sm:$0xf]
      %v335 = vld [vmem:[%s285 + $0x6c] sm:$0xf]
      %v336 = vld [vmem:[%s285 + $0x70] sm:$0xf]
      %v337 = vld [vmem:[%s285 + $0x74] sm:$0xf]
      %v338 = vld [vmem:[%s285 + $0x78] sm:$0xf]
      %v339 = vld [vmem:[%s285 + $0x7c] sm:$0xf]
      %v340 = vld [vmem:[%s285 + $0x80] sm:$0xf]
      %v341 = vld [vmem:[%s285 + $0x84] sm:$0xf]
      %v342 = vld [vmem:[%s285 + $0x88] sm:$0xf]
      %v343 = vld [vmem:[%s285 + $0x8c] sm:$0xf]
      %v344 = vld [vmem:[%s285 + $0x90] sm:$0xf]
      %v345 = vld [vmem:[%s285 + $0x94] sm:$0xf]
      %v346 = vld [vmem:[%s285 + $0x98] sm:$0xf]
      %v347 = vld [vmem:[%s285 + $0x9c] sm:$0xf]
      %v348 = vld [vmem:[%s285 + $0xa0] sm:$0xf]
      %v349 = vld [vmem:[%s285 + $0xa4] sm:$0xf]
      %v350 = vld [vmem:[%s285 + $0xa8] sm:$0xf]
      %v351 = vld [vmem:[%s285 + $0xac] sm:$0xf]
      %v352 = vld [vmem:[%s285 + $0xb0] sm:$0xf]
      %v353 = vld [vmem:[%s285 + $0xb4] sm:$0xf]
      %v354 = vld [vmem:[%s285 + $0xb8] sm:$0xf]
      %v355 = vld [vmem:[%s285 + $0xbc] sm:$0xf]
      %v358 = vunpack.c.l.b16 %v306
      %v359 = vunpack.c.h.b16 %v306
      %v360 = vunpack.c.l.b16 %v307
      %v361 = vpack.c.b16 %v358, %v358
      %v362 = vpack.c.b16 %v359, %v359
      %v363 = vpack.c.b16 %v360, %v360
      %v415 = vunpack.c.l.b16 %v308
      %v416 = vunpack.c.l.b16 %v309
      %v417 = vunpack.c.l.b16 %v310
      %v418 = vunpack.c.l.b16 %v311
      %v419 = vunpack.c.l.b16 %v312
      %v420 = vunpack.c.l.b16 %v313
      %v421 = vunpack.c.l.b16 %v314
      %v422 = vunpack.c.l.b16 %v315
      %v423 = vunpack.c.l.b16 %v316
      %v424 = vunpack.c.l.b16 %v317
      %v425 = vunpack.c.l.b16 %v318
      %v426 = vunpack.c.l.b16 %v319
      %v427 = vunpack.c.l.b16 %v320
      %v428 = vunpack.c.l.b16 %v321
      %v429 = vunpack.c.l.b16 %v322
      %v430 = vunpack.c.l.b16 %v323
      %v431 = vunpack.c.l.b16 %v324
      %v432 = vunpack.c.l.b16 %v325
      %v433 = vunpack.c.l.b16 %v326
      %v434 = vunpack.c.l.b16 %v327
      %v435 = vunpack.c.l.b16 %v328
      %v436 = vunpack.c.l.b16 %v329
      %v437 = vunpack.c.l.b16 %v330
      %v438 = vunpack.c.l.b16 %v331
      %v439 = vunpack.c.l.b16 %v332
      %v440 = vunpack.c.l.b16 %v333
      %v441 = vunpack.c.l.b16 %v334
      %v442 = vunpack.c.l.b16 %v335
      %v443 = vunpack.c.l.b16 %v336
      %v444 = vunpack.c.l.b16 %v337
      %v445 = vunpack.c.l.b16 %v338
      %v446 = vunpack.c.l.b16 %v339
      %v447 = vunpack.c.l.b16 %v340
      %v448 = vunpack.c.l.b16 %v341
      %v449 = vunpack.c.l.b16 %v342
      %v450 = vunpack.c.l.b16 %v343
      %v451 = vunpack.c.l.b16 %v344
      %v452 = vunpack.c.l.b16 %v345
      %v453 = vunpack.c.l.b16 %v346
      %v454 = vunpack.c.l.b16 %v347
      %v455 = vunpack.c.l.b16 %v348
      %v456 = vunpack.c.l.b16 %v349
      %v457 = vunpack.c.l.b16 %v350
      %v458 = vunpack.c.l.b16 %v351
      %v459 = vunpack.c.l.b16 %v352
      %v460 = vunpack.c.l.b16 %v353
      %v461 = vunpack.c.l.b16 %v354
      %v462 = vunpack.c.l.b16 %v355
      %v463 = vpack.c.b16 %v416, %v415
      %v464 = vpack.c.b16 %v418, %v417
      %v465 = vpack.c.b16 %v420, %v419
      %v466 = vpack.c.b16 %v422, %v421
      %v467 = vpack.c.b16 %v424, %v423
      %v468 = vpack.c.b16 %v426, %v425
      %v469 = vpack.c.b16 %v428, %v427
      %v470 = vpack.c.b16 %v430, %v429
      %v471 = vpack.c.b16 %v432, %v431
      %v472 = vpack.c.b16 %v434, %v433
      %v473 = vpack.c.b16 %v436, %v435
      %v474 = vpack.c.b16 %v438, %v437
      %v475 = vpack.c.b16 %v440, %v439
      %v476 = vpack.c.b16 %v442, %v441
      %v477 = vpack.c.b16 %v444, %v443
      %v478 = vpack.c.b16 %v446, %v445
      %v479 = vpack.c.b16 %v448, %v447
      %v480 = vpack.c.b16 %v450, %v449
      %v481 = vpack.c.b16 %v452, %v451
      %v482 = vpack.c.b16 %v454, %v453
      %v483 = vpack.c.b16 %v456, %v455
      %v484 = vpack.c.b16 %v458, %v457
      %v485 = vpack.c.b16 %v460, %v459
      %v486 = vpack.c.b16 %v462, %v461
      %511 = vmatpush.bf16.msra.mxu0 %v470
      %512 = vmatpush.bf16.msra.mxu0 %v469
      %513 = vmatpush.bf16.msra.mxu0 %v468
      %514 = vmatpush.bf16.msra.mxu0 %v467
      %515 = vmatpush.bf16.msra.mxu0 %v466
      %516 = vmatpush.bf16.msra.mxu0 %v465
      %517 = vmatpush.bf16.msra.mxu0 %v464
      %518 = vmatpush.bf16.msra.mxu0 %v463
      %519 = vmatmul.bf16.gmra.mxu0 %v361
      %v520 = vpop.f32.mrf.mxu0
      %v521 = vadd.f32 0.0, %v520
      %v522 = vpop.f32.mrf.mxu0
      %523 = vdwg.mxu0
      %524 = vmatpush.bf16.msra.mxu0 %v478
      %525 = vmatpush.bf16.msra.mxu0 %v477
      %526 = vmatpush.bf16.msra.mxu0 %v476
      %527 = vmatpush.bf16.msra.mxu0 %v475
      %528 = vmatpush.bf16.msra.mxu0 %v474
      %529 = vmatpush.bf16.msra.mxu0 %v473
      %530 = vmatpush.bf16.msra.mxu0 %v472
      %531 = vmatpush.bf16.msra.mxu0 %v471
      %532 = vmatmul.bf16.gmra.mxu0 %v362
      %v533 = vpop.f32.mrf.mxu0
      %v534 = vadd.f32 %v521, %v533
      %v535 = vpop.f32.mrf.mxu0
      %536 = vdwg.mxu0
      %537 = vmatpush.bf16.msra.mxu0 %v486
      %538 = vmatpush.bf16.msra.mxu0 %v485
      %539 = vmatpush.bf16.msra.mxu0 %v484
      %540 = vmatpush.bf16.msra.mxu0 %v483
      %541 = vmatpush.bf16.msra.mxu0 %v482
      %542 = vmatpush.bf16.msra.mxu0 %v481
      %543 = vmatpush.bf16.msra.mxu0 %v480
      %544 = vmatpush.bf16.msra.mxu0 %v479
      %545 = vmatmul.bf16.gmra.mxu0 %v363
      %v546 = vpop.f32.mrf.mxu0
      %v547 = vadd.f32 %v534, %v546
      %v548 = vpop.f32.mrf.mxu0
      %549 = vdwg.mxu0
      %v550 = vadd.f32 %v305, %v547
      %551 = vst [vmem:[#allocation2] sm:$0xff] %v550
      %p552 = scmp.eq.s32.totalorder %s22, 2
      // Predicated region
      $region41: #{resnet_forward.19} parent=35 // pred_check
        %p553 = pneg %p552
      $region42: #{resnet_forward.19} parent=35 // pred_check_branch
        %555 = sbr.rel (%p553) target = $region44
      $region43: #{resnet_forward.19} parent=35 // pred_region
        %v556 = vld [vmem:[#allocation2] sm:$0xff]
        %v557 = vld [vmem:[%s289] sm:$0x1]
        %v559 = vperm.slane %v557, 0
        %v561 = vmul.f32 %v556, %v559
        %v562 = vld [vmem:[%s292] sm:$0x1]
        %v564 = vperm.slane %v562, 0
        %v566 = vadd.f32 %v561, %v564
        %v567 = vmax.f32 %v566, 0.0
        %v568 = vpack.c.bf16 %v567, %v567
        %569 = vst [vmem:[%s299] sm:$0xf] %v568
      $region44: #{resnet_forward.19} parent=35 // pred_fallthru
        _
      %p570 = scmp.lt.s32.totalorder %s20, 0
      %s571 = scalar_select %p570, %s20, 0
      %p572 = scmp.lt.s32.totalorder %s21, 0
      %s573 = scalar_select %p572, %s21, 0
      %s574 = sadd.s32 %s573, %s571
      %s575 = smul.addr %s574, 4
      %s576 = scalar_lea.vmem %s4, %s575
      // Predicated region
      $region45: #{resnet_forward.19} parent=35 // pred_check
        %p577 = pneg %p162
      $region46: #{resnet_forward.19} parent=35 // pred_check_branch
        %579 = sbr.rel (%p577) target = $region48
      $region47: #{resnet_forward.19} parent=35 // pred_region
        _
      $region48: #{resnet_forward.19} parent=35 // pred_fallthru
        _
      // Predicated region
      $region49: #{resnet_forward.19} parent=35 // pred_check
        %p580 = pneg %p162
      $region50: #{resnet_forward.19} parent=35 // pred_check_branch
        %582 = sbr.rel (%p580) target = $region52
      $region51: #{resnet_forward.19} parent=35 // pred_region
        %p583 = scmp.lt.s32.totalorder %s20, 0
        %s584 = scalar_select %p583, %s20, 0
        %p585 = scmp.lt.s32.totalorder %s21, 0
        %s586 = scalar_select %p585, %s21, 0
        %s587 = sadd.s32 %s586, %s584
        %s588 = smul.addr %s587, 4
        %s589 = scalar_lea.vmem %s4, %s588
      $region52: #{resnet_forward.19} parent=35 // pred_fallthru
        _
    $region36: #{resnet_forward.19} parent=5 // pred_fallthru
      _
    %p590 = scmp.le.s32.totalorder 2, %s10
    // Predicated region
    $region53: #{resnet_forward.19} parent=5 // pred_check
      %p591 = pneg %p590
    $region54: #{resnet_forward.19} parent=5 // pred_check_branch
      %593 = sbr.rel (%p591) target = $region56
    $region55: #{resnet_forward.19} parent=5 // pred_region
      %s594 = ssub.s32 %s10, 2
    $region56: #{resnet_forward.19} parent=5 // pred_fallthru
      _
  $region6: #{resnet_forward.19} parent=0 // loop_footer
    %s14 = sadd.s32 1, %s10
  $region7: #{resnet_forward.19} parent=0 // loop_footer_branch
    %9 = sbr.rel target = $region3
  $region8: #{resnet_forward.19} parent=0 // loop_exit
    _

// kernel: resnet_forward.18
$region0: #{resnet_forward.18}
  #allocation0 [shape = 'u32[]', space=smem, size = 0x4, offset = 0x4, fixed_abs, tag = 'smem constant byte address 0x4 - core index']
  #allocation1 [shape = 'u32[72,128]{1,0:T(1,128)}', space=vmem, size = 0x9000, scoped, tag = 'internal scratch']
  #allocation2 [shape = 'f32[8,128]{1,0:T(8,128)}', space=vmem, size = 0x1000, scoped, tag = 'scratch operand']
  %s0 = inlined_call_operand.vmem [shape: bf16[8,128], index: 0, kind: input, shape index: {}]
  %s1 = inlined_call_operand.vmem [shape: bf16[128,128], index: 1, kind: input, shape index: {}]
  %s2 = inlined_call_operand.vmem [shape: f32[1,128], index: 2, kind: input, shape index: {}]
  %s3 = inlined_call_operand.vmem [shape: f32[1,128], index: 3, kind: input, shape index: {}]
  %s4 = inlined_call_operand.vmem [shape: bf16[8,128], index: 4, kind: output, shape index: {}]
  %s5 = sld [smem:[#allocation0]]
  $region34: #{resnet_forward.18} parent=0
    _
  %s7 = ssub.s32 1, %s5
  %s8 = scalar_select 0, %s7, %s5
  // Predicated region
  $region2: #{resnet_forward.18} parent=0 // pred_check
    _
  $region3: #{resnet_forward.18} parent=0 // pred_check_branch
    %10 = sbr.rel (0) target = $region5
  $region4: #{resnet_forward.18} parent=0 // pred_region
    _
  $region5: #{resnet_forward.18} parent=0 // pred_fallthru
    _
  // Predicated region
  $region6: #{resnet_forward.18} parent=0 // pred_check
    _
  $region7: #{resnet_forward.18} parent=0 // pred_check_branch
    %12 = sbr.rel (0) target = $region9
  $region8: #{resnet_forward.18} parent=0 // pred_region
    _
  $region9: #{resnet_forward.18} parent=0 // pred_fallthru
    _
  // Predicated region
  $region10: #{resnet_forward.18} parent=0 // pred_check
    _
  $region11: #{resnet_forward.18} parent=0 // pred_check_branch
    %14 = sbr.rel (0) target = $region13
  $region12: #{resnet_forward.18} parent=0 // pred_region
    _
  $region13: #{resnet_forward.18} parent=0 // pred_fallthru
    _
  // Predicated region
  $region14: #{resnet_forward.18} parent=0 // pred_check
    _
  $region15: #{resnet_forward.18} parent=0 // pred_check_branch
    %16 = sbr.rel (0) target = $region17
  $region16: #{resnet_forward.18} parent=0 // pred_region
    _
  $region17: #{resnet_forward.18} parent=0 // pred_fallthru
    _
  %p17 = scmp.eq.s32.totalorder 0, 0
  // Predicated region
  $region18: #{resnet_forward.18} parent=0 // pred_check
    %p18 = pneg %p17
  $region19: #{resnet_forward.18} parent=0 // pred_check_branch
    %20 = sbr.rel (%p18) target = $region21
  $region20: #{resnet_forward.18} parent=0 // pred_region
    %21 = vst [vmem:[#allocation2] sm:$0xff] 0.0
  $region21: #{resnet_forward.18} parent=0 // pred_fallthru
    _
  %v22 = vld [vmem:[#allocation2] sm:$0xff]
  %v23 = vld [vmem:[%s0] sm:$0xf]
  %v24 = vld [vmem:[%s1] sm:$0xf]
  %v25 = vld [vmem:[%s1 + $0x4] sm:$0xf]
  %v26 = vld [vmem:[%s1 + $0x8] sm:$0xf]
  %v27 = vld [vmem:[%s1 + $0xc] sm:$0xf]
  %v28 = vld [vmem:[%s1 + $0x10] sm:$0xf]
  %v29 = vld [vmem:[%s1 + $0x14] sm:$0xf]
  %v30 = vld [vmem:[%s1 + $0x18] sm:$0xf]
  %v31 = vld [vmem:[%s1 + $0x1c] sm:$0xf]
  %v32 = vld [vmem:[%s1 + $0x20] sm:$0xf]
  %v33 = vld [vmem:[%s1 + $0x24] sm:$0xf]
  %v34 = vld [vmem:[%s1 + $0x28] sm:$0xf]
  %v35 = vld [vmem:[%s1 + $0x2c] sm:$0xf]
  %v36 = vld [vmem:[%s1 + $0x30] sm:$0xf]
  %v37 = vld [vmem:[%s1 + $0x34] sm:$0xf]
  %v38 = vld [vmem:[%s1 + $0x38] sm:$0xf]
  %v39 = vld [vmem:[%s1 + $0x3c] sm:$0xf]
  %v56 = vunpack.c.l.b16 %v24
  %v57 = vunpack.c.l.b16 %v25
  %v58 = vunpack.c.l.b16 %v26
  %v59 = vunpack.c.l.b16 %v27
  %v60 = vunpack.c.l.b16 %v28
  %v61 = vunpack.c.l.b16 %v29
  %v62 = vunpack.c.l.b16 %v30
  %v63 = vunpack.c.l.b16 %v31
  %v64 = vunpack.c.l.b16 %v32
  %v65 = vunpack.c.l.b16 %v33
  %v66 = vunpack.c.l.b16 %v34
  %v67 = vunpack.c.l.b16 %v35
  %v68 = vunpack.c.l.b16 %v36
  %v69 = vunpack.c.l.b16 %v37
  %v70 = vunpack.c.l.b16 %v38
  %v71 = vunpack.c.l.b16 %v39
  %v72 = vpack.c.b16 %v57, %v56
  %v73 = vpack.c.b16 %v59, %v58
  %v74 = vpack.c.b16 %v61, %v60
  %v75 = vpack.c.b16 %v63, %v62
  %v76 = vpack.c.b16 %v65, %v64
  %v77 = vpack.c.b16 %v67, %v66
  %v78 = vpack.c.b16 %v69, %v68
  %v79 = vpack.c.b16 %v71, %v70
  %88 = vmatpush.bf16.msra.mxu0 %v79
  %89 = vmatpush.bf16.msra.mxu0 %v78
  %90 = vmatpush.bf16.msra.mxu0 %v77
  %91 = vmatpush.bf16.msra.mxu0 %v76
  %92 = vmatpush.bf16.msra.mxu0 %v75
  %93 = vmatpush.bf16.msra.mxu0 %v74
  %94 = vmatpush.bf16.msra.mxu0 %v73
  %95 = vmatpush.bf16.msra.mxu0 %v72
  %96 = vmatmul.bf16.gmra.mxu0 %v23
  %v97 = vpop.f32.mrf.mxu0
  %v98 = vadd.f32 0.0, %v97
  %v99 = vpop.f32.mrf.mxu0
  %100 = vdwg.mxu0
  %v101 = vadd.f32 %v22, %v98
  %102 = vst [vmem:[#allocation2] sm:$0xff] %v101
  // Predicated region
  $region22: #{resnet_forward.18} parent=0 // pred_check
    %p103 = pneg %p17
  $region23: #{resnet_forward.18} parent=0 // pred_check_branch
    %105 = sbr.rel (%p103) target = $region25
  $region24: #{resnet_forward.18} parent=0 // pred_region
    %v106 = vld [vmem:[#allocation2] sm:$0xff]
    %v107 = vld [vmem:[%s2] sm:$0x1]
    %v109 = vperm.slane %v107, 0
    %v111 = vmul.f32 %v106, %v109
    %v112 = vld [vmem:[%s3] sm:$0x1]
    %v114 = vperm.slane %v112, 0
    %v116 = vadd.f32 %v111, %v114
    %v117 = vpack.c.bf16 %v116, %v116
    %118 = vst [vmem:[%s4] sm:$0xf] %v117
  $region25: #{resnet_forward.18} parent=0 // pred_fallthru
    _
  // Predicated region
  $region26: #{resnet_forward.18} parent=0 // pred_check
    _
  $region27: #{resnet_forward.18} parent=0 // pred_check_branch
    %120 = sbr.rel (0) target = $region29
  $region28: #{resnet_forward.18} parent=0 // pred_region
    _
  $region29: #{resnet_forward.18} parent=0 // pred_fallthru
    _
  // Predicated region
  $region30: #{resnet_forward.18} parent=0 // pred_check
    _
  $region31: #{resnet_forward.18} parent=0 // pred_check_branch
    %122 = sbr.rel (0) target = $region33
  $region32: #{resnet_forward.18} parent=0 // pred_region
    _
  $region33: #{resnet_forward.18} parent=0 // pred_fallthru
    _

// kernel: resnet_forward.20
$region0: #{resnet_forward.20}
  #allocation0 [shape = 'u32[]', space=smem, size = 0x4, offset = 0x4, fixed_abs, tag = 'smem constant byte address 0x4 - core index']
  #allocation1 [shape = 'u32[72,128]{1,0:T(1,128)}', space=vmem, size = 0x9000, scoped, tag = 'internal scratch']
  #allocation2 [shape = 'f32[8,128]{1,0:T(8,128)}', space=vmem, size = 0x1000, scoped, tag = 'scratch operand']
  %s0 = inlined_call_operand.vmem [shape: bf16[8,1152], index: 0, kind: input, shape index: {}]
  %s1 = inlined_call_operand.vmem [shape: bf16[1152,128], index: 1, kind: input, shape index: {}]
  %s2 = inlined_call_operand.vmem [shape: f32[1,128], index: 2, kind: input, shape index: {}]
  %s3 = inlined_call_operand.vmem [shape: f32[1,128], index: 3, kind: input, shape index: {}]
  %s4 = inlined_call_operand.vmem [shape: bf16[8,128], index: 4, kind: input, shape index: {}]
  %s5 = inlined_call_operand.vmem [shape: bf16[8,128], index: 5, kind: output, shape index: {}]
  %s6 = sld [smem:[#allocation0]]
  $region61: #{resnet_forward.20} parent=0
    _
  %s8 = ssub.s32 1, %s6
  %s9 = scalar_select 0, %s8, %s6
  loop: start=0, step=1, limit=5
  $region2: #{resnet_forward.20} parent=0 // loop_pre_header
    _
  $region3: #{resnet_forward.20} parent=0 // loop_header
    %s11 = sphi 0, %s15
    %p12 = scmp.ge.s32.totalorder %s11, 5
    %s18 = sphi 0, %s37
    %s19 = sphi 0, %s33
    %s20 = sphi 0, %s29
    %s21 = sphi 0, %s18
    %s22 = sphi 0, %s19
    %s23 = sphi 0, %s20
    %s24 = sphi 0, %s21
    %s25 = sphi 0, %s22
    %s26 = sphi 0, %s23
    %s42 = sphi 0, %s44
    %s45 = sphi 0, %s42
    %s46 = sphi 0, %s45
    %s62 = sphi 0, %s46
    %s70 = sphi 0, %s72
    %s73 = sphi 0, %s70
    %s74 = sphi 0, %s73
    %s90 = sphi 0, %s74
    %s96 = sphi 0, %s98
    %s99 = sphi 0, %s96
    %s100 = sphi 0, %s99
    %s116 = sphi 0, %s100
    %s122 = sphi 0, %s124
    %s125 = sphi 0, %s122
    %s126 = sphi 0, %s125
    %s142 = sphi 0, %s126
    %s150 = sphi 0, %s152
    %s153 = sphi 0, %s150
    %s154 = sphi 0, %s153
    %s170 = sphi 0, %s154
    %s178 = sphi 0, %s180
    %s181 = sphi 0, %s178
    %s182 = sphi 0, %s181
    %s198 = sphi 0, %s182
  $region4: #{resnet_forward.20} parent=0 // loop_header_branch
    %14 = sbr.rel (%p12) target = $region8
  $region5: #{resnet_forward.20} parent=0 // loop_body
    %s16 = ssub.s32 %s11, 1
    %s17 = ssub.s32 %s11, 2
    %s27 = sadd.s32 1, %s20
    %p28 = scmp.ge.s32.totalorder %s27, 3
    %s29 = scalar_select %p28, 0, %s27
    %s30 = sadd.s32 1, %s19
    %s31 = scalar_select %p28, %s30, %s19
    %p32 = scmp.ge.s32.totalorder %s31, 1
    %s33 = scalar_select %p32, 0, %s31
    %s34 = sadd.s32 1, %s18
    %s35 = scalar_select %p32, %s34, %s18
    %p36 = scmp.ge.s32.totalorder %s35, 1
    %s37 = scalar_select %p36, 0, %s35
    %s38 = ssub.s32 %s18, %s37
    %s39 = ssub.s32 %s20, %s29
    %s40 = sor.u32 %s38, %s39
    %p41 = scmp.eq.s32.totalorder %s40, 0
    %s43 = sadd.s32 %s42, 1
    %s44 = scalar_select %p41, %s42, %s43
    %p47 = pneg %p41
    %p48 = scmp.eq.s32.totalorder %s11, 2
    %p49 = por %p47, %p48
    %p50 = scmp.ne.s32.totalorder %s42, %s45
    %p51 = scmp.eq.s32.totalorder %s11, 0
    %p52 = por %p50, %p51
    %p53 = scmp.ne.s32.totalorder %s42, %s45
    %p54 = scmp.eq.s32.totalorder %s16, 2
    %p55 = por %p53, %p54
    %p56 = scmp.ne.s32.totalorder %s45, %s46
    %p57 = scmp.eq.s32.totalorder %s16, 0
    %p58 = por %p56, %p57
    %p59 = scmp.ne.s32.totalorder %s45, %s46
    %p60 = scmp.eq.s32.totalorder %s17, 2
    %p61 = por %p59, %p60
    %p63 = scmp.ne.s32.totalorder %s46, %s62
    %p64 = scmp.eq.s32.totalorder %s17, 0
    %p65 = por %p63, %p64
    %s66 = ssub.s32 %s20, %s29
    %s67 = ssub.s32 %s19, %s33
    %s68 = sor.u32 %s66, %s67
    %p69 = scmp.eq.s32.totalorder %s68, 0
    %s71 = sadd.s32 %s70, 1
    %s72 = scalar_select %p69, %s70, %s71
    %p75 = pneg %p69
    %p76 = scmp.eq.s32.totalorder %s11, 2
    %p77 = por %p75, %p76
    %p78 = scmp.ne.s32.totalorder %s70, %s73
    %p79 = scmp.eq.s32.totalorder %s11, 0
    %p80 = por %p78, %p79
    %p81 = scmp.ne.s32.totalorder %s70, %s73
    %p82 = scmp.eq.s32.totalorder %s16, 2
    %p83 = por %p81, %p82
    %p84 = scmp.ne.s32.totalorder %s73, %s74
    %p85 = scmp.eq.s32.totalorder %s16, 0
    %p86 = por %p84, %p85
    %p87 = scmp.ne.s32.totalorder %s73, %s74
    %p88 = scmp.eq.s32.totalorder %s17, 2
    %p89 = por %p87, %p88
    %p91 = scmp.ne.s32.totalorder %s74, %s90
    %p92 = scmp.eq.s32.totalorder %s17, 0
    %p93 = por %p91, %p92
    %s94 = ssub.s32 %s19, %s33
    %p95 = scmp.eq.s32.totalorder %s94, 0
    %s97 = sadd.s32 %s96, 1
    %s98 = scalar_select %p95, %s96, %s97
    %p101 = pneg %p95
    %p102 = scmp.eq.s32.totalorder %s11, 2
    %p103 = por %p101, %p102
    %p104 = scmp.ne.s32.totalorder %s96, %s99
    %p105 = scmp.eq.s32.totalorder %s11, 0
    %p106 = por %p104, %p105
    %p107 = scmp.ne.s32.totalorder %s96, %s99
    %p108 = scmp.eq.s32.totalorder %s16, 2
    %p109 = por %p107, %p108
    %p110 = scmp.ne.s32.totalorder %s99, %s100
    %p111 = scmp.eq.s32.totalorder %s16, 0
    %p112 = por %p110, %p111
    %p113 = scmp.ne.s32.totalorder %s99, %s100
    %p114 = scmp.eq.s32.totalorder %s17, 2
    %p115 = por %p113, %p114
    %p117 = scmp.ne.s32.totalorder %s100, %s116
    %p118 = scmp.eq.s32.totalorder %s17, 0
    %p119 = por %p117, %p118
    %s120 = ssub.s32 %s19, %s33
    %p121 = scmp.eq.s32.totalorder %s120, 0
    %s123 = sadd.s32 %s122, 1
    %s124 = scalar_select %p121, %s122, %s123
    %p127 = pneg %p121
    %p128 = scmp.eq.s32.totalorder %s11, 2
    %p129 = por %p127, %p128
    %p130 = scmp.ne.s32.totalorder %s122, %s125
    %p131 = scmp.eq.s32.totalorder %s11, 0
    %p132 = por %p130, %p131
    %p133 = scmp.ne.s32.totalorder %s122, %s125
    %p134 = scmp.eq.s32.totalorder %s16, 2
    %p135 = por %p133, %p134
    %p136 = scmp.ne.s32.totalorder %s125, %s126
    %p137 = scmp.eq.s32.totalorder %s16, 0
    %p138 = por %p136, %p137
    %p139 = scmp.ne.s32.totalorder %s125, %s126
    %p140 = scmp.eq.s32.totalorder %s17, 2
    %p141 = por %p139, %p140
    %p143 = scmp.ne.s32.totalorder %s126, %s142
    %p144 = scmp.eq.s32.totalorder %s17, 0
    %p145 = por %p143, %p144
    %s146 = ssub.s32 %s18, %s37
    %s147 = ssub.s32 %s19, %s33
    %s148 = sor.u32 %s146, %s147
    %p149 = scmp.eq.s32.totalorder %s148, 0
    %s151 = sadd.s32 %s150, 1
    %s152 = scalar_select %p149, %s150, %s151
    %p155 = pneg %p149
    %p156 = scmp.eq.s32.totalorder %s11, 2
    %p157 = por %p155, %p156
    %p158 = scmp.ne.s32.totalorder %s150, %s153
    %p159 = scmp.eq.s32.totalorder %s11, 0
    %p160 = por %p158, %p159
    %p161 = scmp.ne.s32.totalorder %s150, %s153
    %p162 = scmp.eq.s32.totalorder %s16, 2
    %p163 = por %p161, %p162
    %p164 = scmp.ne.s32.totalorder %s153, %s154
    %p165 = scmp.eq.s32.totalorder %s16, 0
    %p166 = por %p164, %p165
    %p167 = scmp.ne.s32.totalorder %s153, %s154
    %p168 = scmp.eq.s32.totalorder %s17, 2
    %p169 = por %p167, %p168
    %p171 = scmp.ne.s32.totalorder %s154, %s170
    %p172 = scmp.eq.s32.totalorder %s17, 0
    %p173 = por %p171, %p172
    %s174 = ssub.s32 %s18, %s37
    %s175 = ssub.s32 %s19, %s33
    %s176 = sor.u32 %s174, %s175
    %p177 = scmp.eq.s32.totalorder %s176, 0
    %s179 = sadd.s32 %s178, 1
    %s180 = scalar_select %p177, %s178, %s179
    %p183 = pneg %p177
    %p184 = scmp.eq.s32.totalorder %s11, 2
    %p185 = por %p183, %p184
    %p186 = scmp.ne.s32.totalorder %s178, %s181
    %p187 = scmp.eq.s32.totalorder %s11, 0
    %p188 = por %p186, %p187
    %p189 = scmp.ne.s32.totalorder %s178, %s181
    %p190 = scmp.eq.s32.totalorder %s16, 2
    %p191 = por %p189, %p190
    %p192 = scmp.ne.s32.totalorder %s181, %s182
    %p193 = scmp.eq.s32.totalorder %s16, 0
    %p194 = por %p192, %p193
    %p195 = scmp.ne.s32.totalorder %s181, %s182
    %p196 = scmp.eq.s32.totalorder %s17, 2
    %p197 = por %p195, %p196
    %p199 = scmp.ne.s32.totalorder %s182, %s198
    %p200 = scmp.eq.s32.totalorder %s17, 0
    %p201 = por %p199, %p200
    %p202 = scmp.le.s32.totalorder 1, %s11
    %p203 = scmp.lt.s32.totalorder %s11, 4
    %p204 = pnand %p202, %p203
    %p205 = pneg %p204
    // Predicated region
    $region9: #{resnet_forward.20} parent=5 // pred_check
      _
    $region10: #{resnet_forward.20} parent=5 // pred_check_branch
      %207 = sbr.rel (%p204) target = $region12
    $region11: #{resnet_forward.20} parent=5 // pred_region
      %s208 = ssub.s32 %s11, 1
      // Predicated region
      $region13: #{resnet_forward.20} parent=11 // pred_check
        %p209 = pneg %p112
      $region14: #{resnet_forward.20} parent=11 // pred_check_branch
        %211 = sbr.rel (%p209) target = $region16
      $region15: #{resnet_forward.20} parent=11 // pred_region
        %p212 = scmp.lt.s32.totalorder %s22, 0
        %s213 = scalar_select %p212, %s22, 0
        %s214 = scalar_lea.vmem %s2, %s213
      $region16: #{resnet_forward.20} parent=11 // pred_fallthru
        _
      // Predicated region
      $region17: #{resnet_forward.20} parent=11 // pred_check
        %p215 = pneg %p138
      $region18: #{resnet_forward.20} parent=11 // pred_check_branch
        %217 = sbr.rel (%p215) target = $region20
      $region19: #{resnet_forward.20} parent=11 // pred_region
        %p218 = scmp.lt.s32.totalorder %s22, 0
        %s219 = scalar_select %p218, %s22, 0
        %s220 = scalar_lea.vmem %s3, %s219
      $region20: #{resnet_forward.20} parent=11 // pred_fallthru
        _
      // Predicated region
      $region21: #{resnet_forward.20} parent=11 // pred_check
        %p221 = pneg %p166
      $region22: #{resnet_forward.20} parent=11 // pred_check_branch
        %223 = sbr.rel (%p221) target = $region24
      $region23: #{resnet_forward.20} parent=11 // pred_region
        %p224 = scmp.lt.s32.totalorder %s21, 0
        %s225 = scalar_select %p224, %s21, 0
        %p226 = scmp.lt.s32.totalorder %s22, 0
        %s227 = scalar_select %p226, %s22, 0
        %s228 = sadd.s32 %s227, %s225
        %s229 = smul.addr %s228, 4
        %s230 = scalar_lea.vmem %s4, %s229
      $region24: #{resnet_forward.20} parent=11 // pred_fallthru
        _
    $region12: #{resnet_forward.20} parent=5 // pred_fallthru
      _
    %p231 = scmp.lt.s32.totalorder %s11, 3
    // Predicated region
    $region25: #{resnet_forward.20} parent=5 // pred_check
      %p232 = pneg %p231
    $region26: #{resnet_forward.20} parent=5 // pred_check_branch
      %234 = sbr.rel (%p232) target = $region28
    $region27: #{resnet_forward.20} parent=5 // pred_region
      // Predicated region
      $region29: #{resnet_forward.20} parent=27 // pred_check
        %p235 = pneg %p52
      $region30: #{resnet_forward.20} parent=27 // pred_check_branch
        %237 = sbr.rel (%p235) target = $region32
      $region31: #{resnet_forward.20} parent=27 // pred_region
        %s238 = smul.u32 3, %s20
        %p239 = scmp.lt.s32.totalorder %s18, 0
        %s240 = scalar_select %p239, %s18, 0
        %p241 = scmp.lt.s32.totalorder %s238, 8
        %s242 = scalar_select %p241, %s238, 8
        %s243 = smul.addr %s240, 9
        %s244 = sadd.s32 %s242, %s243
        %s245 = smul.addr %s244, 4
        %s246 = scalar_lea.vmem %s0, %s245
        %s247 = smul.u32 3, %s20
      $region32: #{resnet_forward.20} parent=27 // pred_fallthru
        _
      // Predicated region
      $region33: #{resnet_forward.20} parent=27 // pred_check
        %p248 = pneg %p80
      $region34: #{resnet_forward.20} parent=27 // pred_check_branch
        %250 = sbr.rel (%p248) target = $region36
      $region35: #{resnet_forward.20} parent=27 // pred_region
        %s251 = smul.u32 48, %s20
        %p252 = scmp.lt.s32.totalorder %s251, 143
        %s253 = scalar_select %p252, %s251, 143
        %p254 = scmp.lt.s32.totalorder %s19, 0
        %s255 = scalar_select %p254, %s19, 0
        %s256 = sadd.s32 %s255, %s253
        %s257 = smul.addr %s256, 4
        %s258 = scalar_lea.vmem %s1, %s257
        %s259 = smul.u32 48, %s20
      $region36: #{resnet_forward.20} parent=27 // pred_fallthru
        _
    $region28: #{resnet_forward.20} parent=5 // pred_fallthru
      _
    %p260 = scmp.le.s32.totalorder 1, %s11
    %p261 = scmp.lt.s32.totalorder %s11, 4
    %p262 = pnand %p260, %p261
    %p263 = pneg %p262
    // Predicated region
    $region37: #{resnet_forward.20} parent=5 // pred_check
      _
    $region38: #{resnet_forward.20} parent=5 // pred_check_branch
      %265 = sbr.rel (%p262) target = $region40
    $region39: #{resnet_forward.20} parent=5 // pred_region
      %s266 = ssub.s32 %s11, 1
      %s267 = smul.u32 3, %s23
      %p268 = scmp.lt.s32.totalorder %s21, 0
      %s269 = scalar_select %p268, %s21, 0
      %p270 = scmp.lt.s32.totalorder %s267, 8
      %s271 = scalar_select %p270, %s267, 8
      %s272 = smul.addr %s269, 9
      %s273 = sadd.s32 %s271, %s272
      %s274 = smul.addr %s273, 4
      %s275 = scalar_lea.vmem %s0, %s274
      %p276 = pneg %p58
      %p277 = pneg %p55
      %s278 = smul.u32 48, %s23
      %p279 = scmp.lt.s32.totalorder %s278, 143
      %s280 = scalar_select %p279, %s278, 143
      %p281 = scmp.lt.s32.totalorder %s22, 0
      %s282 = scalar_select %p281, %s22, 0
      %s283 = sadd.s32 %s282, %s280
      %s284 = smul.addr %s283, 4
      %s285 = scalar_lea.vmem %s1, %s284
      %p286 = pneg %p86
      %p287 = pneg %p83
      %p288 = scmp.lt.s32.totalorder %s22, 0
      %s289 = scalar_select %p288, %s22, 0
      %s290 = scalar_lea.vmem %s2, %s289
      %p291 = pneg %p112
      %p292 = pneg %p109
      %p293 = scmp.lt.s32.totalorder %s22, 0
      %s294 = scalar_select %p293, %s22, 0
      %s295 = scalar_lea.vmem %s3, %s294
      %p296 = pneg %p138
      %p297 = pneg %p135
      %p298 = scmp.lt.s32.totalorder %s21, 0
      %s299 = scalar_select %p298, %s21, 0
      %p300 = scmp.lt.s32.totalorder %s22, 0
      %s301 = scalar_select %p300, %s22, 0
      %s302 = sadd.s32 %s301, %s299
      %s303 = smul.addr %s302, 4
      %s304 = scalar_lea.vmem %s4, %s303
      %p305 = pneg %p166
      %p306 = pneg %p163
      %p307 = pneg %p194
      %p308 = pneg %p191
      %p309 = scmp.lt.s32.totalorder %s21, 0
      %s310 = scalar_select %p309, %s21, 0
      %p311 = scmp.lt.s32.totalorder %s22, 0
      %s312 = scalar_select %p311, %s22, 0
      %s313 = sadd.s32 %s312, %s310
      %s314 = smul.addr %s313, 4
      %s315 = scalar_lea.vmem %s5, %s314
      %s316 = smul.u32 3, %s23
      %p317 = scmp.lt.s32.totalorder %s21, 0
      %s318 = scalar_select %p317, %s21, 0
      %p319 = scmp.lt.s32.totalorder %s316, 8
      %s320 = scalar_select %p319, %s316, 8
      %s321 = smul.addr %s318, 9
      %s322 = sadd.s32 %s320, %s321
      %s323 = smul.addr %s322, 4
      %s324 = scalar_lea.vmem %s0, %s323
      %s325 = smul.u32 3, %s23
      %s326 = smul.u32 48, %s23
      %p327 = scmp.lt.s32.totalorder %s326, 143
      %s328 = scalar_select %p327, %s326, 143
      %p329 = scmp.lt.s32.totalorder %s22, 0
      %s330 = scalar_select %p329, %s22, 0
      %s331 = sadd.s32 %s330, %s328
      %s332 = smul.addr %s331, 4
      %s333 = scalar_lea.vmem %s1, %s332
      %s334 = smul.u32 48, %s23
      %p335 = scmp.lt.s32.totalorder %s22, 0
      %s336 = scalar_select %p335, %s22, 0
      %s337 = scalar_lea.vmem %s2, %s336
      %p338 = scmp.lt.s32.totalorder %s22, 0
      %s339 = scalar_select %p338, %s22, 0
      %s340 = scalar_lea.vmem %s3, %s339
      %p341 = scmp.lt.s32.totalorder %s21, 0
      %s342 = scalar_select %p341, %s21, 0
      %p343 = scmp.lt.s32.totalorder %s22, 0
      %s344 = scalar_select %p343, %s22, 0
      %s345 = sadd.s32 %s344, %s342
      %s346 = smul.addr %s345, 4
      %s347 = scalar_lea.vmem %s4, %s346
      %p348 = scmp.lt.s32.totalorder %s21, 0
      %s349 = scalar_select %p348, %s21, 0
      %p350 = scmp.lt.s32.totalorder %s22, 0
      %s351 = scalar_select %p350, %s22, 0
      %s352 = sadd.s32 %s351, %s349
      %s353 = smul.addr %s352, 4
      %s354 = scalar_lea.vmem %s5, %s353
      %p355 = scmp.eq.s32.totalorder %s23, 0
      // Predicated region
      $region41: #{resnet_forward.20} parent=39 // pred_check
        %p356 = pneg %p355
      $region42: #{resnet_forward.20} parent=39 // pred_check_branch
        %358 = sbr.rel (%p356) target = $region44
      $region43: #{resnet_forward.20} parent=39 // pred_region
        %359 = vst [vmem:[#allocation2] sm:$0xff] 0.0
      $region44: #{resnet_forward.20} parent=39 // pred_fallthru
        _
      %v360 = vld [vmem:[#allocation2] sm:$0xff]
      %v361 = vld [vmem:[%s324] sm:$0xff]
      %v362 = vld [vmem:[%s324 + $0x8] sm:$0xf]
      %v363 = vld [vmem:[%s333] sm:$0xf]
      %v364 = vld [vmem:[%s333 + $0x4] sm:$0xf]
      %v365 = vld [vmem:[%s333 + $0x8] sm:$0xf]
      %v366 = vld [vmem:[%s333 + $0xc] sm:$0xf]
      %v367 = vld [vmem:[%s333 + $0x10] sm:$0xf]
      %v368 = vld [vmem:[%s333 + $0x14] sm:$0xf]
      %v369 = vld [vmem:[%s333 + $0x18] sm:$0xf]
      %v370 = vld [vmem:[%s333 + $0x1c] sm:$0xf]
      %v371 = vld [vmem:[%s333 + $0x20] sm:$0xf]
      %v372 = vld [vmem:[%s333 + $0x24] sm:$0xf]
      %v373 = vld [vmem:[%s333 + $0x28] sm:$0xf]
      %v374 = vld [vmem:[%s333 + $0x2c] sm:$0xf]
      %v375 = vld [vmem:[%s333 + $0x30] sm:$0xf]
      %v376 = vld [vmem:[%s333 + $0x34] sm:$0xf]
      %v377 = vld [vmem:[%s333 + $0x38] sm:$0xf]
      %v378 = vld [vmem:[%s333 + $0x3c] sm:$0xf]
      %v379 = vld [vmem:[%s333 + $0x40] sm:$0xf]
      %v380 = vld [vmem:[%s333 + $0x44] sm:$0xf]
      %v381 = vld [vmem:[%s333 + $0x48] sm:$0xf]
      %v382 = vld [vmem:[%s333 + $0x4c] sm:$0xf]
      %v383 = vld [vmem:[%s333 + $0x50] sm:$0xf]
      %v384 = vld [vmem:[%s333 + $0x54] sm:$0xf]
      %v385 = vld [vmem:[%s333 + $0x58] sm:$0xf]
      %v386 = vld [vmem:[%s333 + $0x5c] sm:$0xf]
      %v387 = vld [vmem:[%s333 + $0x60] sm:$0xf]
      %v388 = vld [vmem:[%s333 + $0x64] sm:$0xf]
      %v389 = vld [vmem:[%s333 + $0x68] sm:$0xf]
      %v390 = vld [vmem:[%s333 + $0x6c] sm:$0xf]
      %v391 = vld [vmem:[%s333 + $0x70] sm:$0xf]
      %v392 = vld [vmem:[%s333 + $0x74] sm:$0xf]
      %v393 = vld [vmem:[%s333 + $0x78] sm:$0xf]
      %v394 = vld [vmem:[%s333 + $0x7c] sm:$0xf]
      %v395 = vld [vmem:[%s333 + $0x80] sm:$0xf]
      %v396 = vld [vmem:[%s333 + $0x84] sm:$0xf]
      %v397 = vld [vmem:[%s333 + $0x88] sm:$0xf]
      %v398 = vld [vmem:[%s333 + $0x8c] sm:$0xf]
      %v399 = vld [vmem:[%s333 + $0x90] sm:$0xf]
      %v400 = vld [vmem:[%s333 + $0x94] sm:$0xf]
      %v401 = vld [vmem:[%s333 + $0x98] sm:$0xf]
      %v402 = vld [vmem:[%s333 + $0x9c] sm:$0xf]
      %v403 = vld [vmem:[%s333 + $0xa0] sm:$0xf]
      %v404 = vld [vmem:[%s333 + $0xa4] sm:$0xf]
      %v405 = vld [vmem:[%s333 + $0xa8] sm:$0xf]
      %v406 = vld [vmem:[%s333 + $0xac] sm:$0xf]
      %v407 = vld [vmem:[%s333 + $0xb0] sm:$0xf]
      %v408 = vld [vmem:[%s333 + $0xb4] sm:$0xf]
      %v409 = vld [vmem:[%s333 + $0xb8] sm:$0xf]
      %v410 = vld [vmem:[%s333 + $0xbc] sm:$0xf]
      %v413 = vunpack.c.l.b16 %v361
      %v414 = vunpack.c.h.b16 %v361
      %v415 = vunpack.c.l.b16 %v362
      %v416 = vpack.c.b16 %v413, %v413
      %v417 = vpack.c.b16 %v414, %v414
      %v418 = vpack.c.b16 %v415, %v415
      %v470 = vunpack.c.l.b16 %v363
      %v471 = vunpack.c.l.b16 %v364
      %v472 = vunpack.c.l.b16 %v365
      %v473 = vunpack.c.l.b16 %v366
      %v474 = vunpack.c.l.b16 %v367
      %v475 = vunpack.c.l.b16 %v368
      %v476 = vunpack.c.l.b16 %v369
      %v477 = vunpack.c.l.b16 %v370
      %v478 = vunpack.c.l.b16 %v371
      %v479 = vunpack.c.l.b16 %v372
      %v480 = vunpack.c.l.b16 %v373
      %v481 = vunpack.c.l.b16 %v374
      %v482 = vunpack.c.l.b16 %v375
      %v483 = vunpack.c.l.b16 %v376
      %v484 = vunpack.c.l.b16 %v377
      %v485 = vunpack.c.l.b16 %v378
      %v486 = vunpack.c.l.b16 %v379
      %v487 = vunpack.c.l.b16 %v380
      %v488 = vunpack.c.l.b16 %v381
      %v489 = vunpack.c.l.b16 %v382
      %v490 = vunpack.c.l.b16 %v383
      %v491 = vunpack.c.l.b16 %v384
      %v492 = vunpack.c.l.b16 %v385
      %v493 = vunpack.c.l.b16 %v386
      %v494 = vunpack.c.l.b16 %v387
      %v495 = vunpack.c.l.b16 %v388
      %v496 = vunpack.c.l.b16 %v389
      %v497 = vunpack.c.l.b16 %v390
      %v498 = vunpack.c.l.b16 %v391
      %v499 = vunpack.c.l.b16 %v392
      %v500 = vunpack.c.l.b16 %v393
      %v501 = vunpack.c.l.b16 %v394
      %v502 = vunpack.c.l.b16 %v395
      %v503 = vunpack.c.l.b16 %v396
      %v504 = vunpack.c.l.b16 %v397
      %v505 = vunpack.c.l.b16 %v398
      %v506 = vunpack.c.l.b16 %v399
      %v507 = vunpack.c.l.b16 %v400
      %v508 = vunpack.c.l.b16 %v401
      %v509 = vunpack.c.l.b16 %v402
      %v510 = vunpack.c.l.b16 %v403
      %v511 = vunpack.c.l.b16 %v404
      %v512 = vunpack.c.l.b16 %v405
      %v513 = vunpack.c.l.b16 %v406
      %v514 = vunpack.c.l.b16 %v407
      %v515 = vunpack.c.l.b16 %v408
      %v516 = vunpack.c.l.b16 %v409
      %v517 = vunpack.c.l.b16 %v410
      %v518 = vpack.c.b16 %v471, %v470
      %v519 = vpack.c.b16 %v473, %v472
      %v520 = vpack.c.b16 %v475, %v474
      %v521 = vpack.c.b16 %v477, %v476
      %v522 = vpack.c.b16 %v479, %v478
      %v523 = vpack.c.b16 %v481, %v480
      %v524 = vpack.c.b16 %v483, %v482
      %v525 = vpack.c.b16 %v485, %v484
      %v526 = vpack.c.b16 %v487, %v486
      %v527 = vpack.c.b16 %v489, %v488
      %v528 = vpack.c.b16 %v491, %v490
      %v529 = vpack.c.b16 %v493, %v492
      %v530 = vpack.c.b16 %v495, %v494
      %v531 = vpack.c.b16 %v497, %v496
      %v532 = vpack.c.b16 %v499, %v498
      %v533 = vpack.c.b16 %v501, %v500
      %v534 = vpack.c.b16 %v503, %v502
      %v535 = vpack.c.b16 %v505, %v504
      %v536 = vpack.c.b16 %v507, %v506
      %v537 = vpack.c.b16 %v509, %v508
      %v538 = vpack.c.b16 %v511, %v510
      %v539 = vpack.c.b16 %v513, %v512
      %v540 = vpack.c.b16 %v515, %v514
      %v541 = vpack.c.b16 %v517, %v516
      %566 = vmatpush.bf16.msra.mxu0 %v525
      %567 = vmatpush.bf16.msra.mxu0 %v524
      %568 = vmatpush.bf16.msra.mxu0 %v523
      %569 = vmatpush.bf16.msra.mxu0 %v522
      %570 = vmatpush.bf16.msra.mxu0 %v521
      %571 = vmatpush.bf16.msra.mxu0 %v520
      %572 = vmatpush.bf16.msra.mxu0 %v519
      %573 = vmatpush.bf16.msra.mxu0 %v518
      %574 = vmatmul.bf16.gmra.mxu0 %v416
      %v575 = vpop.f32.mrf.mxu0
      %v576 = vadd.f32 0.0, %v575
      %v577 = vpop.f32.mrf.mxu0
      %578 = vdwg.mxu0
      %579 = vmatpush.bf16.msra.mxu0 %v533
      %580 = vmatpush.bf16.msra.mxu0 %v532
      %581 = vmatpush.bf16.msra.mxu0 %v531
      %582 = vmatpush.bf16.msra.mxu0 %v530
      %583 = vmatpush.bf16.msra.mxu0 %v529
      %584 = vmatpush.bf16.msra.mxu0 %v528
      %585 = vmatpush.bf16.msra.mxu0 %v527
      %586 = vmatpush.bf16.msra.mxu0 %v526
      %587 = vmatmul.bf16.gmra.mxu0 %v417
      %v588 = vpop.f32.mrf.mxu0
      %v589 = vadd.f32 %v576, %v588
      %v590 = vpop.f32.mrf.mxu0
      %591 = vdwg.mxu0
      %592 = vmatpush.bf16.msra.mxu0 %v541
      %593 = vmatpush.bf16.msra.mxu0 %v540
      %594 = vmatpush.bf16.msra.mxu0 %v539
      %595 = vmatpush.bf16.msra.mxu0 %v538
      %596 = vmatpush.bf16.msra.mxu0 %v537
      %597 = vmatpush.bf16.msra.mxu0 %v536
      %598 = vmatpush.bf16.msra.mxu0 %v535
      %599 = vmatpush.bf16.msra.mxu0 %v534
      %600 = vmatmul.bf16.gmra.mxu0 %v418
      %v601 = vpop.f32.mrf.mxu0
      %v602 = vadd.f32 %v589, %v601
      %v603 = vpop.f32.mrf.mxu0
      %604 = vdwg.mxu0
      %v605 = vadd.f32 %v360, %v602
      %606 = vst [vmem:[#allocation2] sm:$0xff] %v605
      %p607 = scmp.eq.s32.totalorder %s23, 2
      // Predicated region
      $region45: #{resnet_forward.20} parent=39 // pred_check
        %p608 = pneg %p607
      $region46: #{resnet_forward.20} parent=39 // pred_check_branch
        %610 = sbr.rel (%p608) target = $region48
      $region47: #{resnet_forward.20} parent=39 // pred_region
        %v611 = vld [vmem:[#allocation2] sm:$0xff]
        %v612 = vld [vmem:[%s337] sm:$0x1]
        %v614 = vperm.slane %v612, 0
        %v616 = vmul.f32 %v611, %v614
        %v617 = vld [vmem:[%s340] sm:$0x1]
        %v619 = vperm.slane %v617, 0
        %v621 = vadd.f32 %v616, %v619
        %v622 = vld [vmem:[%s347] sm:$0xf]
        %v623 = vunpack.c.l.bf16 %v622
        %v624 = vadd.f32 %v621, %v623
        %v625 = vmax.f32 %v624, 0.0
        %v626 = vpack.c.bf16 %v625, %v625
        %627 = vst [vmem:[%s354] sm:$0xf] %v626
      $region48: #{resnet_forward.20} parent=39 // pred_fallthru
        _
      %p628 = scmp.lt.s32.totalorder %s21, 0
      %s629 = scalar_select %p628, %s21, 0
      %p630 = scmp.lt.s32.totalorder %s22, 0
      %s631 = scalar_select %p630, %s22, 0
      %s632 = sadd.s32 %s631, %s629
      %s633 = smul.addr %s632, 4
      %s634 = scalar_lea.vmem %s5, %s633
      // Predicated region
      $region49: #{resnet_forward.20} parent=39 // pred_check
        %p635 = pneg %p191
      $region50: #{resnet_forward.20} parent=39 // pred_check_branch
        %637 = sbr.rel (%p635) target = $region52
      $region51: #{resnet_forward.20} parent=39 // pred_region
        _
      $region52: #{resnet_forward.20} parent=39 // pred_fallthru
        _
      // Predicated region
      $region53: #{resnet_forward.20} parent=39 // pred_check
        %p638 = pneg %p191
      $region54: #{resnet_forward.20} parent=39 // pred_check_branch
        %640 = sbr.rel (%p638) target = $region56
      $region55: #{resnet_forward.20} parent=39 // pred_region
        %p641 = scmp.lt.s32.totalorder %s21, 0
        %s642 = scalar_select %p641, %s21, 0
        %p643 = scmp.lt.s32.totalorder %s22, 0
        %s644 = scalar_select %p643, %s22, 0
        %s645 = sadd.s32 %s644, %s642
        %s646 = smul.addr %s645, 4
        %s647 = scalar_lea.vmem %s5, %s646
      $region56: #{resnet_forward.20} parent=39 // pred_fallthru
        _
    $region40: #{resnet_forward.20} parent=5 // pred_fallthru
      _
    %p648 = scmp.le.s32.totalorder 2, %s11
    // Predicated region
    $region57: #{resnet_forward.20} parent=5 // pred_check
      %p649 = pneg %p648
    $region58: #{resnet_forward.20} parent=5 // pred_check_branch
      %651 = sbr.rel (%p649) target = $region60
    $region59: #{resnet_forward.20} parent=5 // pred_region
      %s652 = ssub.s32 %s11, 2
    $region60: #{resnet_forward.20} parent=5 // pred_fallthru
      _
  $region6: #{resnet_forward.20} parent=0 // loop_footer
    %s15 = sadd.s32 1, %s11
  $region7: #{resnet_forward.20} parent=0 // loop_footer_branch
    %10 = sbr.rel target = $region3
  $region8: #{resnet_forward.20} parent=0 // loop_exit
    _

// kernel: resnet_forward.22
$region0: #{resnet_forward.22}
  #allocation0 [shape = 'u32[]', space=smem, size = 0x4, offset = 0x4, fixed_abs, tag = 'smem constant byte address 0x4 - core index']
  #allocation1 [shape = 'u32[72,128]{1,0:T(1,128)}', space=vmem, size = 0x9000, scoped, tag = 'internal scratch']
  #allocation2 [shape = 'f32[8,256]{1,0:T(8,128)}', space=vmem, size = 0x2000, scoped, tag = 'scratch operand']
  %s0 = inlined_call_operand.vmem [shape: bf16[8,1152], index: 0, kind: input, shape index: {}]
  %s1 = inlined_call_operand.vmem [shape: bf16[1152,256], index: 1, kind: input, shape index: {}]
  %s2 = inlined_call_operand.vmem [shape: f32[1,256], index: 2, kind: input, shape index: {}]
  %s3 = inlined_call_operand.vmem [shape: f32[1,256], index: 3, kind: input, shape index: {}]
  %s4 = inlined_call_operand.vmem [shape: bf16[8,256], index: 4, kind: output, shape index: {}]
  %s5 = sld [smem:[#allocation0]]
  $region57: #{resnet_forward.22} parent=0
    _
  %s7 = ssub.s32 1, %s5
  %s8 = scalar_select 0, %s7, %s5
  loop: start=0, step=1, limit=5
  $region2: #{resnet_forward.22} parent=0 // loop_pre_header
    _
  $region3: #{resnet_forward.22} parent=0 // loop_header
    %s10 = sphi 0, %s14
    %p11 = scmp.ge.s32.totalorder %s10, 5
    %s17 = sphi 0, %s36
    %s18 = sphi 0, %s32
    %s19 = sphi 0, %s28
    %s20 = sphi 0, %s17
    %s21 = sphi 0, %s18
    %s22 = sphi 0, %s19
    %s23 = sphi 0, %s20
    %s24 = sphi 0, %s21
    %s25 = sphi 0, %s22
    %s41 = sphi 0, %s43
    %s44 = sphi 0, %s41
    %s45 = sphi 0, %s44
    %s61 = sphi 0, %s45
    %s69 = sphi 0, %s71
    %s72 = sphi 0, %s69
    %s73 = sphi 0, %s72
    %s89 = sphi 0, %s73
    %s95 = sphi 0, %s97
    %s98 = sphi 0, %s95
    %s99 = sphi 0, %s98
    %s115 = sphi 0, %s99
    %s121 = sphi 0, %s123
    %s124 = sphi 0, %s121
    %s125 = sphi 0, %s124
    %s141 = sphi 0, %s125
    %s149 = sphi 0, %s151
    %s152 = sphi 0, %s149
    %s153 = sphi 0, %s152
    %s169 = sphi 0, %s153
  $region4: #{resnet_forward.22} parent=0 // loop_header_branch
    %13 = sbr.rel (%p11) target = $region8
  $region5: #{resnet_forward.22} parent=0 // loop_body
    %s15 = ssub.s32 %s10, 1
    %s16 = ssub.s32 %s10, 2
    %s26 = sadd.s32 1, %s19
    %p27 = scmp.ge.s32.totalorder %s26, 3
    %s28 = scalar_select %p27, 0, %s26
    %s29 = sadd.s32 1, %s18
    %s30 = scalar_select %p27, %s29, %s18
    %p31 = scmp.ge.s32.totalorder %s30, 1
    %s32 = scalar_select %p31, 0, %s30
    %s33 = sadd.s32 1, %s17
    %s34 = scalar_select %p31, %s33, %s17
    %p35 = scmp.ge.s32.totalorder %s34, 1
    %s36 = scalar_select %p35, 0, %s34
    %s37 = ssub.s32 %s17, %s36
    %s38 = ssub.s32 %s19, %s28
    %s39 = sor.u32 %s37, %s38
    %p40 = scmp.eq.s32.totalorder %s39, 0
    %s42 = sadd.s32 %s41, 1
    %s43 = scalar_select %p40, %s41, %s42
    %p46 = pneg %p40
    %p47 = scmp.eq.s32.totalorder %s10, 2
    %p48 = por %p46, %p47
    %p49 = scmp.ne.s32.totalorder %s41, %s44
    %p50 = scmp.eq.s32.totalorder %s10, 0
    %p51 = por %p49, %p50
    %p52 = scmp.ne.s32.totalorder %s41, %s44
    %p53 = scmp.eq.s32.totalorder %s15, 2
    %p54 = por %p52, %p53
    %p55 = scmp.ne.s32.totalorder %s44, %s45
    %p56 = scmp.eq.s32.totalorder %s15, 0
    %p57 = por %p55, %p56
    %p58 = scmp.ne.s32.totalorder %s44, %s45
    %p59 = scmp.eq.s32.totalorder %s16, 2
    %p60 = por %p58, %p59
    %p62 = scmp.ne.s32.totalorder %s45, %s61
    %p63 = scmp.eq.s32.totalorder %s16, 0
    %p64 = por %p62, %p63
    %s65 = ssub.s32 %s19, %s28
    %s66 = ssub.s32 %s18, %s32
    %s67 = sor.u32 %s65, %s66
    %p68 = scmp.eq.s32.totalorder %s67, 0
    %s70 = sadd.s32 %s69, 1
    %s71 = scalar_select %p68, %s69, %s70
    %p74 = pneg %p68
    %p75 = scmp.eq.s32.totalorder %s10, 2
    %p76 = por %p74, %p75
    %p77 = scmp.ne.s32.totalorder %s69, %s72
    %p78 = scmp.eq.s32.totalorder %s10, 0
    %p79 = por %p77, %p78
    %p80 = scmp.ne.s32.totalorder %s69, %s72
    %p81 = scmp.eq.s32.totalorder %s15, 2
    %p82 = por %p80, %p81
    %p83 = scmp.ne.s32.totalorder %s72, %s73
    %p84 = scmp.eq.s32.totalorder %s15, 0
    %p85 = por %p83, %p84
    %p86 = scmp.ne.s32.totalorder %s72, %s73
    %p87 = scmp.eq.s32.totalorder %s16, 2
    %p88 = por %p86, %p87
    %p90 = scmp.ne.s32.totalorder %s73, %s89
    %p91 = scmp.eq.s32.totalorder %s16, 0
    %p92 = por %p90, %p91
    %s93 = ssub.s32 %s18, %s32
    %p94 = scmp.eq.s32.totalorder %s93, 0
    %s96 = sadd.s32 %s95, 1
    %s97 = scalar_select %p94, %s95, %s96
    %p100 = pneg %p94
    %p101 = scmp.eq.s32.totalorder %s10, 2
    %p102 = por %p100, %p101
    %p103 = scmp.ne.s32.totalorder %s95, %s98
    %p104 = scmp.eq.s32.totalorder %s10, 0
    %p105 = por %p103, %p104
    %p106 = scmp.ne.s32.totalorder %s95, %s98
    %p107 = scmp.eq.s32.totalorder %s15, 2
    %p108 = por %p106, %p107
    %p109 = scmp.ne.s32.totalorder %s98, %s99
    %p110 = scmp.eq.s32.totalorder %s15, 0
    %p111 = por %p109, %p110
    %p112 = scmp.ne.s32.totalorder %s98, %s99
    %p113 = scmp.eq.s32.totalorder %s16, 2
    %p114 = por %p112, %p113
    %p116 = scmp.ne.s32.totalorder %s99, %s115
    %p117 = scmp.eq.s32.totalorder %s16, 0
    %p118 = por %p116, %p117
    %s119 = ssub.s32 %s18, %s32
    %p120 = scmp.eq.s32.totalorder %s119, 0
    %s122 = sadd.s32 %s121, 1
    %s123 = scalar_select %p120, %s121, %s122
    %p126 = pneg %p120
    %p127 = scmp.eq.s32.totalorder %s10, 2
    %p128 = por %p126, %p127
    %p129 = scmp.ne.s32.totalorder %s121, %s124
    %p130 = scmp.eq.s32.totalorder %s10, 0
    %p131 = por %p129, %p130
    %p132 = scmp.ne.s32.totalorder %s121, %s124
    %p133 = scmp.eq.s32.totalorder %s15, 2
    %p134 = por %p132, %p133
    %p135 = scmp.ne.s32.totalorder %s124, %s125
    %p136 = scmp.eq.s32.totalorder %s15, 0
    %p137 = por %p135, %p136
    %p138 = scmp.ne.s32.totalorder %s124, %s125
    %p139 = scmp.eq.s32.totalorder %s16, 2
    %p140 = por %p138, %p139
    %p142 = scmp.ne.s32.totalorder %s125, %s141
    %p143 = scmp.eq.s32.totalorder %s16, 0
    %p144 = por %p142, %p143
    %s145 = ssub.s32 %s17, %s36
    %s146 = ssub.s32 %s18, %s32
    %s147 = sor.u32 %s145, %s146
    %p148 = scmp.eq.s32.totalorder %s147, 0
    %s150 = sadd.s32 %s149, 1
    %s151 = scalar_select %p148, %s149, %s150
    %p154 = pneg %p148
    %p155 = scmp.eq.s32.totalorder %s10, 2
    %p156 = por %p154, %p155
    %p157 = scmp.ne.s32.totalorder %s149, %s152
    %p158 = scmp.eq.s32.totalorder %s10, 0
    %p159 = por %p157, %p158
    %p160 = scmp.ne.s32.totalorder %s149, %s152
    %p161 = scmp.eq.s32.totalorder %s15, 2
    %p162 = por %p160, %p161
    %p163 = scmp.ne.s32.totalorder %s152, %s153
    %p164 = scmp.eq.s32.totalorder %s15, 0
    %p165 = por %p163, %p164
    %p166 = scmp.ne.s32.totalorder %s152, %s153
    %p167 = scmp.eq.s32.totalorder %s16, 2
    %p168 = por %p166, %p167
    %p170 = scmp.ne.s32.totalorder %s153, %s169
    %p171 = scmp.eq.s32.totalorder %s16, 0
    %p172 = por %p170, %p171
    %p173 = scmp.le.s32.totalorder 1, %s10
    %p174 = scmp.lt.s32.totalorder %s10, 4
    %p175 = pnand %p173, %p174
    %p176 = pneg %p175
    // Predicated region
    $region9: #{resnet_forward.22} parent=5 // pred_check
      _
    $region10: #{resnet_forward.22} parent=5 // pred_check_branch
      %178 = sbr.rel (%p175) target = $region12
    $region11: #{resnet_forward.22} parent=5 // pred_region
      %s179 = ssub.s32 %s10, 1
      // Predicated region
      $region13: #{resnet_forward.22} parent=11 // pred_check
        %p180 = pneg %p111
      $region14: #{resnet_forward.22} parent=11 // pred_check_branch
        %182 = sbr.rel (%p180) target = $region16
      $region15: #{resnet_forward.22} parent=11 // pred_region
        %s183 = smul.u32 2, %s21
        %p184 = scmp.lt.s32.totalorder %s183, 1
        %s185 = scalar_select %p184, %s183, 1
        %s186 = scalar_lea.vmem %s2, %s185
        %s187 = smul.u32 2, %s21
      $region16: #{resnet_forward.22} parent=11 // pred_fallthru
        _
      // Predicated region
      $region17: #{resnet_forward.22} parent=11 // pred_check
        %p188 = pneg %p137
      $region18: #{resnet_forward.22} parent=11 // pred_check_branch
        %190 = sbr.rel (%p188) target = $region20
      $region19: #{resnet_forward.22} parent=11 // pred_region
        %s191 = smul.u32 2, %s21
        %p192 = scmp.lt.s32.totalorder %s191, 1
        %s193 = scalar_select %p192, %s191, 1
        %s194 = scalar_lea.vmem %s3, %s193
        %s195 = smul.u32 2, %s21
      $region20: #{resnet_forward.22} parent=11 // pred_fallthru
        _
    $region12: #{resnet_forward.22} parent=5 // pred_fallthru
      _
    %p196 = scmp.lt.s32.totalorder %s10, 3
    // Predicated region
    $region21: #{resnet_forward.22} parent=5 // pred_check
      %p197 = pneg %p196
    $region22: #{resnet_forward.22} parent=5 // pred_check_branch
      %199 = sbr.rel (%p197) target = $region24
    $region23: #{resnet_forward.22} parent=5 // pred_region
      // Predicated region
      $region25: #{resnet_forward.22} parent=23 // pred_check
        %p200 = pneg %p51
      $region26: #{resnet_forward.22} parent=23 // pred_check_branch
        %202 = sbr.rel (%p200) target = $region28
      $region27: #{resnet_forward.22} parent=23 // pred_region
        %s203 = smul.u32 3, %s19
        %p204 = scmp.lt.s32.totalorder %s17, 0
        %s205 = scalar_select %p204, %s17, 0
        %p206 = scmp.lt.s32.totalorder %s203, 8
        %s207 = scalar_select %p206, %s203, 8
        %s208 = smul.addr %s205, 9
        %s209 = sadd.s32 %s207, %s208
        %s210 = smul.addr %s209, 4
        %s211 = scalar_lea.vmem %s0, %s210
        %s212 = smul.u32 3, %s19
      $region28: #{resnet_forward.22} parent=23 // pred_fallthru
        _
      // Predicated region
      $region29: #{resnet_forward.22} parent=23 // pred_check
        %p213 = pneg %p79
      $region30: #{resnet_forward.22} parent=23 // pred_check_branch
        %215 = sbr.rel (%p213) target = $region32
      $region31: #{resnet_forward.22} parent=23 // pred_region
        %s216 = smul.u32 48, %s19
        %s217 = smul.u32 2, %s18
        %p218 = scmp.lt.s32.totalorder %s216, 143
        %s219 = scalar_select %p218, %s216, 143
        %p220 = scmp.lt.s32.totalorder %s217, 1
        %s221 = scalar_select %p220, %s217, 1
        %s222 = smul.addr %s219, 2
        %s223 = sadd.s32 %s221, %s222
        %s224 = smul.addr %s223, 4
        %s225 = scalar_lea.vmem %s1, %s224
        %s226 = smul.u32 48, %s19
        %s227 = smul.u32 2, %s18
      $region32: #{resnet_forward.22} parent=23 // pred_fallthru
        _
    $region24: #{resnet_forward.22} parent=5 // pred_fallthru
      _
    %p228 = scmp.le.s32.totalorder 1, %s10
    %p229 = scmp.lt.s32.totalorder %s10, 4
    %p230 = pnand %p228, %p229
    %p231 = pneg %p230
    // Predicated region
    $region33: #{resnet_forward.22} parent=5 // pred_check
      _
    $region34: #{resnet_forward.22} parent=5 // pred_check_branch
      %233 = sbr.rel (%p230) target = $region36
    $region35: #{resnet_forward.22} parent=5 // pred_region
      %s234 = ssub.s32 %s10, 1
      %s235 = smul.u32 3, %s22
      %p236 = scmp.lt.s32.totalorder %s20, 0
      %s237 = scalar_select %p236, %s20, 0
      %p238 = scmp.lt.s32.totalorder %s235, 8
      %s239 = scalar_select %p238, %s235, 8
      %s240 = smul.addr %s237, 9
      %s241 = sadd.s32 %s239, %s240
      %s242 = smul.addr %s241, 4
      %s243 = scalar_lea.vmem %s0, %s242
      %p244 = pneg %p57
      %p245 = pneg %p54
      %s246 = smul.u32 48, %s22
      %s247 = smul.u32 2, %s21
      %p248 = scmp.lt.s32.totalorder %s246, 143
      %s249 = scalar_select %p248, %s246, 143
      %p250 = scmp.lt.s32.totalorder %s247, 1
      %s251 = scalar_select %p250, %s247, 1
      %s252 = smul.addr %s249, 2
      %s253 = sadd.s32 %s251, %s252
      %s254 = smul.addr %s253, 4
      %s255 = scalar_lea.vmem %s1, %s254
      %p256 = pneg %p85
      %p257 = pneg %p82
      %s258 = smul.u32 2, %s21
      %p259 = scmp.lt.s32.totalorder %s258, 1
      %s260 = scalar_select %p259, %s258, 1
      %s261 = scalar_lea.vmem %s2, %s260
      %p262 = pneg %p111
      %p263 = pneg %p108
      %s264 = smul.u32 2, %s21
      %p265 = scmp.lt.s32.totalorder %s264, 1
      %s266 = scalar_select %p265, %s264, 1
      %s267 = scalar_lea.vmem %s3, %s266
      %p268 = pneg %p137
      %p269 = pneg %p134
      %p270 = pneg %p165
      %p271 = pneg %p162
      %s272 = smul.u32 2, %s21
      %p273 = scmp.lt.s32.totalorder %s20, 0
      %s274 = scalar_select %p273, %s20, 0
      %p275 = scmp.lt.s32.totalorder %s272, 1
      %s276 = scalar_select %p275, %s272, 1
      %s277 = smul.addr %s274, 2
      %s278 = sadd.s32 %s276, %s277
      %s279 = smul.addr %s278, 4
      %s280 = scalar_lea.vmem %s4, %s279
      %s281 = smul.u32 3, %s22
      %p282 = scmp.lt.s32.totalorder %s20, 0
      %s283 = scalar_select %p282, %s20, 0
      %p284 = scmp.lt.s32.totalorder %s281, 8
      %s285 = scalar_select %p284, %s281, 8
      %s286 = smul.addr %s283, 9
      %s287 = sadd.s32 %s285, %s286
      %s288 = smul.addr %s287, 4
      %s289 = scalar_lea.vmem %s0, %s288
      %s290 = smul.u32 3, %s22
      %s291 = smul.u32 48, %s22
      %s292 = smul.u32 2, %s21
      %p293 = scmp.lt.s32.totalorder %s291, 143
      %s294 = scalar_select %p293, %s291, 143
      %p295 = scmp.lt.s32.totalorder %s292, 1
      %s296 = scalar_select %p295, %s292, 1
      %s297 = smul.addr %s294, 2
      %s298 = sadd.s32 %s296, %s297
      %s299 = smul.addr %s298, 4
      %s300 = scalar_lea.vmem %s1, %s299
      %s301 = smul.u32 48, %s22
      %s302 = smul.u32 2, %s21
      %s303 = smul.u32 2, %s21
      %p304 = scmp.lt.s32.totalorder %s303, 1
      %s305 = scalar_select %p304, %s303, 1
      %s306 = scalar_lea.vmem %s2, %s305
      %s307 = smul.u32 2, %s21
      %s308 = smul.u32 2, %s21
      %p309 = scmp.lt.s32.totalorder %s308, 1
      %s310 = scalar_select %p309, %s308, 1
      %s311 = scalar_lea.vmem %s3, %s310
      %s312 = smul.u32 2, %s21
      %s313 = smul.u32 2, %s21
      %p314 = scmp.lt.s32.totalorder %s20, 0
      %s315 = scalar_select %p314, %s20, 0
      %p316 = scmp.lt.s32.totalorder %s313, 1
      %s317 = scalar_select %p316, %s313, 1
      %s318 = smul.addr %s315, 2
      %s319 = sadd.s32 %s317, %s318
      %s320 = smul.addr %s319, 4
      %s321 = scalar_lea.vmem %s4, %s320
      %s322 = smul.u32 2, %s21
      %p323 = scmp.eq.s32.totalorder %s22, 0
      // Predicated region
      $region37: #{resnet_forward.22} parent=35 // pred_check
        %p324 = pneg %p323
      $region38: #{resnet_forward.22} parent=35 // pred_check_branch
        %326 = sbr.rel (%p324) target = $region40
      $region39: #{resnet_forward.22} parent=35 // pred_region
        %327 = vst [vmem:[#allocation2] sm:$0xff] 0.0
        %328 = vst [vmem:[#allocation2 + $0x8] sm:$0xff] 0.0
      $region40: #{resnet_forward.22} parent=35 // pred_fallthru
        _
      %v329 = vld [vmem:[#allocation2] sm:$0xff]
      %v330 = vld [vmem:[#allocation2 + $0x8] sm:$0xff]
      %v331 = vld [vmem:[%s289] sm:$0xff]
      %v332 = vld [vmem:[%s289 + $0x8] sm:$0xf]
      %v333 = vld [vmem:[%s300] sm:$0xff]
      %v334 = vld [vmem:[%s300 + $0x8] sm:$0xff]
      %v335 = vld [vmem:[%s300 + $0x10] sm:$0xff]
      %v336 = vld [vmem:[%s300 + $0x18] sm:$0xff]
      %v337 = vld [vmem:[%s300 + $0x20] sm:$0xff]
      %v338 = vld [vmem:[%s300 + $0x28] sm:$0xff]
      %v339 = vld [vmem:[%s300 + $0x30] sm:$0xff]
      %v340 = vld [vmem:[%s300 + $0x38] sm:$0xff]
      %v341 = vld [vmem:[%s300 + $0x40] sm:$0xff]
      %v342 = vld [vmem:[%s300 + $0x48] sm:$0xff]
      %v343 = vld [vmem:[%s300 + $0x50] sm:$0xff]
      %v344 = vld [vmem:[%s300 + $0x58] sm:$0xff]
      %v345 = vld [vmem:[%s300 + $0x60] sm:$0xff]
      %v346 = vld [vmem:[%s300 + $0x68] sm:$0xff]
      %v347 = vld [vmem:[%s300 + $0x70] sm:$0xff]
      %v348 = vld [vmem:[%s300 + $0x78] sm:$0xff]
      %v349 = vld [vmem:[%s300 + $0x80] sm:$0xff]
      %v350 = vld [vmem:[%s300 + $0x88] sm:$0xff]
      %v351 = vld [vmem:[%s300 + $0x90] sm:$0xff]
      %v352 = vld [vmem:[%s300 + $0x98] sm:$0xff]
      %v353 = vld [vmem:[%s300 + $0xa0] sm:$0xff]
      %v354 = vld [vmem:[%s300 + $0xa8] sm:$0xff]
      %v355 = vld [vmem:[%s300 + $0xb0] sm:$0xff]
      %v356 = vld [vmem:[%s300 + $0xb8] sm:$0xff]
      %v357 = vld [vmem:[%s300 + $0xc0] sm:$0xff]
      %v358 = vld [vmem:[%s300 + $0xc8] sm:$0xff]
      %v359 = vld [vmem:[%s300 + $0xd0] sm:$0xff]
      %v360 = vld [vmem:[%s300 + $0xd8] sm:$0xff]
      %v361 = vld [vmem:[%s300 + $0xe0] sm:$0xff]
      %v362 = vld [vmem:[%s300 + $0xe8] sm:$0xff]
      %v363 = vld [vmem:[%s300 + $0xf0] sm:$0xff]
      %v364 = vld [vmem:[%s300 + $0xf8] sm:$0xff]
      %v365 = vld [vmem:[%s300 + $0x100] sm:$0xff]
      %v366 = vld [vmem:[%s300 + $0x108] sm:$0xff]
      %v367 = vld [vmem:[%s300 + $0x110] sm:$0xff]
      %v368 = vld [vmem:[%s300 + $0x118] sm:$0xff]
      %v369 = vld [vmem:[%s300 + $0x120] sm:$0xff]
      %v370 = vld [vmem:[%s300 + $0x128] sm:$0xff]
      %v371 = vld [vmem:[%s300 + $0x130] sm:$0xff]
      %v372 = vld [vmem:[%s300 + $0x138] sm:$0xff]
      %v373 = vld [vmem:[%s300 + $0x140] sm:$0xff]
      %v374 = vld [vmem:[%s300 + $0x148] sm:$0xff]
      %v375 = vld [vmem:[%s300 + $0x150] sm:$0xff]
      %v376 = vld [vmem:[%s300 + $0x158] sm:$0xff]
      %v377 = vld [vmem:[%s300 + $0x160] sm:$0xff]
      %v378 = vld [vmem:[%s300 + $0x168] sm:$0xff]
      %v379 = vld [vmem:[%s300 + $0x170] sm:$0xff]
      %v380 = vld [vmem:[%s300 + $0x178] sm:$0xff]
      %v383 = vunpack.c.l.b16 %v331
      %v384 = vunpack.c.h.b16 %v331
      %v385 = vunpack.c.l.b16 %v332
      %v386 = vpack.c.b16 %v383, %v383
      %v387 = vpack.c.b16 %v384, %v384
      %v388 = vpack.c.b16 %v385, %v385
      %v440 = vunpack.c.l.b16 %v333
      %v441 = vunpack.c.h.b16 %v333
      %v442 = vunpack.c.l.b16 %v334
      %v443 = vunpack.c.h.b16 %v334
      %v444 = vunpack.c.l.b16 %v335
      %v445 = vunpack.c.h.b16 %v335
      %v446 = vunpack.c.l.b16 %v336
      %v447 = vunpack.c.h.b16 %v336
      %v448 = vunpack.c.l.b16 %v337
      %v449 = vunpack.c.h.b16 %v337
      %v450 = vunpack.c.l.b16 %v338
      %v451 = vunpack.c.h.b16 %v338
      %v452 = vunpack.c.l.b16 %v339
      %v453 = vunpack.c.h.b16 %v339
      %v454 = vunpack.c.l.b16 %v340
      %v455 = vunpack.c.h.b16 %v340
      %v456 = vunpack.c.l.b16 %v341
      %v457 = vunpack.c.h.b16 %v341
      %v458 = vunpack.c.l.b16 %v342
      %v459 = vunpack.c.h.b16 %v342
      %v460 = vunpack.c.l.b16 %v343
      %v461 = vunpack.c.h.b16 %v343
      %v462 = vunpack.c.l.b16 %v344
      %v463 = vunpack.c.h.b16 %v344
      %v464 = vunpack.c.l.b16 %v345
      %v465 = vunpack.c.h.b16 %v345
      %v466 = vunpack.c.l.b16 %v346
      %v467 = vunpack.c.h.b16 %v346
      %v468 = vunpack.c.l.b16 %v347
      %v469 = vunpack.c.h.b16 %v347
      %v470 = vunpack.c.l.b16 %v348
      %v471 = vunpack.c.h.b16 %v348
      %v472 = vunpack.c.l.b16 %v349
      %v473 = vunpack.c.h.b16 %v349
      %v474 = vunpack.c.l.b16 %v350
      %v475 = vunpack.c.h.b16 %v350
      %v476 = vunpack.c.l.b16 %v351
      %v477 = vunpack.c.h.b16 %v351
      %v478 = vunpack.c.l.b16 %v352
      %v479 = vunpack.c.h.b16 %v352
      %v480 = vunpack.c.l.b16 %v353
      %v481 = vunpack.c.h.b16 %v353
      %v482 = vunpack.c.l.b16 %v354
      %v483 = vunpack.c.h.b16 %v354
      %v484 = vunpack.c.l.b16 %v355
      %v485 = vunpack.c.h.b16 %v355
      %v486 = vunpack.c.l.b16 %v356
      %v487 = vunpack.c.h.b16 %v356
      %v488 = vunpack.c.l.b16 %v357
      %v489 = vunpack.c.h.b16 %v357
      %v490 = vunpack.c.l.b16 %v358
      %v491 = vunpack.c.h.b16 %v358
      %v492 = vunpack.c.l.b16 %v359
      %v493 = vunpack.c.h.b16 %v359
      %v494 = vunpack.c.l.b16 %v360
      %v495 = vunpack.c.h.b16 %v360
      %v496 = vunpack.c.l.b16 %v361
      %v497 = vunpack.c.h.b16 %v361
      %v498 = vunpack.c.l.b16 %v362
      %v499 = vunpack.c.h.b16 %v362
      %v500 = vunpack.c.l.b16 %v363
      %v501 = vunpack.c.h.b16 %v363
      %v502 = vunpack.c.l.b16 %v364
      %v503 = vunpack.c.h.b16 %v364
      %v504 = vunpack.c.l.b16 %v365
      %v505 = vunpack.c.h.b16 %v365
      %v506 = vunpack.c.l.b16 %v366
      %v507 = vunpack.c.h.b16 %v366
      %v508 = vunpack.c.l.b16 %v367
      %v509 = vunpack.c.h.b16 %v367
      %v510 = vunpack.c.l.b16 %v368
      %v511 = vunpack.c.h.b16 %v368
      %v512 = vunpack.c.l.b16 %v369
      %v513 = vunpack.c.h.b16 %v369
      %v514 = vunpack.c.l.b16 %v370
      %v515 = vunpack.c.h.b16 %v370
      %v516 = vunpack.c.l.b16 %v371
      %v517 = vunpack.c.h.b16 %v371
      %v518 = vunpack.c.l.b16 %v372
      %v519 = vunpack.c.h.b16 %v372
      %v520 = vunpack.c.l.b16 %v373
      %v521 = vunpack.c.h.b16 %v373
      %v522 = vunpack.c.l.b16 %v374
      %v523 = vunpack.c.h.b16 %v374
      %v524 = vunpack.c.l.b16 %v375
      %v525 = vunpack.c.h.b16 %v375
      %v526 = vunpack.c.l.b16 %v376
      %v527 = vunpack.c.h.b16 %v376
      %v528 = vunpack.c.l.b16 %v377
      %v529 = vunpack.c.h.b16 %v377
      %v530 = vunpack.c.l.b16 %v378
      %v531 = vunpack.c.h.b16 %v378
      %v532 = vunpack.c.l.b16 %v379
      %v533 = vunpack.c.h.b16 %v379
      %v534 = vunpack.c.l.b16 %v380
      %v535 = vunpack.c.h.b16 %v380
      %v536 = vpack.c.b16 %v442, %v440
      %v537 = vpack.c.b16 %v443, %v441
      %v538 = vpack.c.b16 %v446, %v444
      %v539 = vpack.c.b16 %v447, %v445
      %v540 = vpack.c.b16 %v450, %v448
      %v541 = vpack.c.b16 %v451, %v449
      %v542 = vpack.c.b16 %v454, %v452
      %v543 = vpack.c.b16 %v455, %v453
      %v544 = vpack.c.b16 %v458, %v456
      %v545 = vpack.c.b16 %v459, %v457
      %v546 = vpack.c.b16 %v462, %v460
      %v547 = vpack.c.b16 %v463, %v461
      %v548 = vpack.c.b16 %v466, %v464
      %v549 = vpack.c.b16 %v467, %v465
      %v550 = vpack.c.b16 %v470, %v468
      %v551 = vpack.c.b16 %v471, %v469
      %v552 = vpack.c.b16 %v474, %v472
      %v553 = vpack.c.b16 %v475, %v473
      %v554 = vpack.c.b16 %v478, %v476
      %v555 = vpack.c.b16 %v479, %v477
      %v556 = vpack.c.b16 %v482, %v480
      %v557 = vpack.c.b16 %v483, %v481
      %v558 = vpack.c.b16 %v486, %v484
      %v559 = vpack.c.b16 %v487, %v485
      %v560 = vpack.c.b16 %v490, %v488
      %v561 = vpack.c.b16 %v491, %v489
      %v562 = vpack.c.b16 %v494, %v492
      %v563 = vpack.c.b16 %v495, %v493
      %v564 = vpack.c.b16 %v498, %v496
      %v565 = vpack.c.b16 %v499, %v497
      %v566 = vpack.c.b16 %v502, %v500
      %v567 = vpack.c.b16 %v503, %v501
      %v568 = vpack.c.b16 %v506, %v504
      %v569 = vpack.c.b16 %v507, %v505
      %v570 = vpack.c.b16 %v510, %v508
      %v571 = vpack.c.b16 %v511, %v509
      %v572 = vpack.c.b16 %v514, %v512
      %v573 = vpack.c.b16 %v515, %v513
      %v574 = vpack.c.b16 %v518, %v516
      %v575 = vpack.c.b16 %v519, %v517
      %v576 = vpack.c.b16 %v522, %v520
      %v577 = vpack.c.b16 %v523, %v521
      %v578 = vpack.c.b16 %v526, %v524
      %v579 = vpack.c.b16 %v527, %v525
      %v580 = vpack.c.b16 %v530, %v528
      %v581 = vpack.c.b16 %v531, %v529
      %v582 = vpack.c.b16 %v534, %v532
      %v583 = vpack.c.b16 %v535, %v533
      %632 = vmatpush.bf16.msra.mxu0 %v550
      %633 = vmatpush.bf16.msra.mxu0 %v548
      %634 = vmatpush.bf16.msra.mxu0 %v546
      %635 = vmatpush.bf16.msra.mxu0 %v544
      %636 = vmatpush.bf16.msra.mxu0 %v542
      %637 = vmatpush.bf16.msra.mxu0 %v540
      %638 = vmatpush.bf16.msra.mxu0 %v538
      %639 = vmatpush.bf16.msra.mxu0 %v536
      %640 = vmatmul.bf16.gmra.mxu0 %v386
      %v641 = vpop.f32.mrf.mxu0
      %v642 = vadd.f32 0.0, %v641
      %v643 = vpop.f32.mrf.mxu0
      %644 = vdwg.mxu0
      %645 = vmatpush.bf16.msra.mxu0 %v566
      %646 = vmatpush.bf16.msra.mxu0 %v564
      %647 = vmatpush.bf16.msra.mxu0 %v562
      %648 = vmatpush.bf16.msra.mxu0 %v560
      %649 = vmatpush.bf16.msra.mxu0 %v558
      %650 = vmatpush.bf16.msra.mxu0 %v556
      %651 = vmatpush.bf16.msra.mxu0 %v554
      %652 = vmatpush.bf16.msra.mxu0 %v552
      %653 = vmatmul.bf16.gmra.mxu0 %v387
      %v654 = vpop.f32.mrf.mxu0
      %v655 = vadd.f32 %v642, %v654
      %v656 = vpop.f32.mrf.mxu0
      %657 = vdwg.mxu0
      %658 = vmatpush.bf16.msra.mxu0 %v582
      %659 = vmatpush.bf16.msra.mxu0 %v580
      %660 = vmatpush.bf16.msra.mxu0 %v578
      %661 = vmatpush.bf16.msra.mxu0 %v576
      %662 = vmatpush.bf16.msra.mxu0 %v574
      %663 = vmatpush.bf16.msra.mxu0 %v572
      %664 = vmatpush.bf16.msra.mxu0 %v570
      %665 = vmatpush.bf16.msra.mxu0 %v568
      %666 = vmatmul.bf16.gmra.mxu0 %v388
      %v667 = vpop.f32.mrf.mxu0
      %v668 = vadd.f32 %v655, %v667
      %v669 = vpop.f32.mrf.mxu0
      %670 = vdwg.mxu0
      %671 = vmatpush.bf16.msra.mxu0 %v551
      %672 = vmatpush.bf16.msra.mxu0 %v549
      %673 = vmatpush.bf16.msra.mxu0 %v547
      %674 = vmatpush.bf16.msra.mxu0 %v545
      %675 = vmatpush.bf16.msra.mxu0 %v543
      %676 = vmatpush.bf16.msra.mxu0 %v541
      %677 = vmatpush.bf16.msra.mxu0 %v539
      %678 = vmatpush.bf16.msra.mxu0 %v537
      %679 = vmatmul.bf16.gmra.mxu0 %v386
      %v680 = vpop.f32.mrf.mxu0
      %v681 = vadd.f32 0.0, %v680
      %v682 = vpop.f32.mrf.mxu0
      %683 = vdwg.mxu0
      %684 = vmatpush.bf16.msra.mxu0 %v567
      %685 = vmatpush.bf16.msra.mxu0 %v565
      %686 = vmatpush.bf16.msra.mxu0 %v563
      %687 = vmatpush.bf16.msra.mxu0 %v561
      %688 = vmatpush.bf16.msra.mxu0 %v559
      %689 = vmatpush.bf16.msra.mxu0 %v557
      %690 = vmatpush.bf16.msra.mxu0 %v555
      %691 = vmatpush.bf16.msra.mxu0 %v553
      %692 = vmatmul.bf16.gmra.mxu0 %v387
      %v693 = vpop.f32.mrf.mxu0
      %v694 = vadd.f32 %v681, %v693
      %v695 = vpop.f32.mrf.mxu0
      %696 = vdwg.mxu0
      %697 = vmatpush.bf16.msra.mxu0 %v583
      %698 = vmatpush.bf16.msra.mxu0 %v581
      %699 = vmatpush.bf16.msra.mxu0 %v579
      %700 = vmatpush.bf16.msra.mxu0 %v577
      %701 = vmatpush.bf16.msra.mxu0 %v575
      %702 = vmatpush.bf16.msra.mxu0 %v573
      %703 = vmatpush.bf16.msra.mxu0 %v571
      %704 = vmatpush.bf16.msra.mxu0 %v569
      %705 = vmatmul.bf16.gmra.mxu0 %v388
      %v706 = vpop.f32.mrf.mxu0
      %v707 = vadd.f32 %v694, %v706
      %v708 = vpop.f32.mrf.mxu0
      %709 = vdwg.mxu0
      %v710 = vadd.f32 %v329, %v668
      %v711 = vadd.f32 %v330, %v707
      %712 = vst [vmem:[#allocation2] sm:$0xff] %v710
      %713 = vst [vmem:[#allocation2 + $0x8] sm:$0xff] %v711
      %p714 = scmp.eq.s32.totalorder %s22, 2
      // Predicated region
      $region41: #{resnet_forward.22} parent=35 // pred_check
        %p715 = pneg %p714
      $region42: #{resnet_forward.22} parent=35 // pred_check_branch
        %717 = sbr.rel (%p715) target = $region44
      $region43: #{resnet_forward.22} parent=35 // pred_region
        %v718 = vld [vmem:[#allocation2] sm:$0xff]
        %v719 = vld [vmem:[#allocation2 + $0x8] sm:$0xff]
        %v720 = vld [vmem:[%s306] sm:$0x3]
        %v722 = vperm.slane %v720, 0
        %v723 = vperm.slane %v720, 1
        %v726 = vmul.f32 %v718, %v722
        %v727 = vmul.f32 %v719, %v723
        %v728 = vld [vmem:[%s311] sm:$0x3]
        %v730 = vperm.slane %v728, 0
        %v731 = vperm.slane %v728, 1
        %v734 = vadd.f32 %v726, %v730
        %v735 = vadd.f32 %v727, %v731
        %v736 = vmax.f32 %v734, 0.0
        %v737 = vmax.f32 %v735, 0.0
        %v738 = vpack.c.bf16 %v737, %v736
        %739 = vst [vmem:[%s321] sm:$0xff] %v738
      $region44: #{resnet_forward.22} parent=35 // pred_fallthru
        _
      %s740 = smul.u32 2, %s21
      %p741 = scmp.lt.s32.totalorder %s20, 0
      %s742 = scalar_select %p741, %s20, 0
      %p743 = scmp.lt.s32.totalorder %s740, 1
      %s744 = scalar_select %p743, %s740, 1
      %s745 = smul.addr %s742, 2
      %s746 = sadd.s32 %s744, %s745
      %s747 = smul.addr %s746, 4
      %s748 = scalar_lea.vmem %s4, %s747
      // Predicated region
      $region45: #{resnet_forward.22} parent=35 // pred_check
        %p749 = pneg %p162
      $region46: #{resnet_forward.22} parent=35 // pred_check_branch
        %751 = sbr.rel (%p749) target = $region48
      $region47: #{resnet_forward.22} parent=35 // pred_region
        %s752 = smul.u32 2, %s21
      $region48: #{resnet_forward.22} parent=35 // pred_fallthru
        _
      // Predicated region
      $region49: #{resnet_forward.22} parent=35 // pred_check
        %p753 = pneg %p162
      $region50: #{resnet_forward.22} parent=35 // pred_check_branch
        %755 = sbr.rel (%p753) target = $region52
      $region51: #{resnet_forward.22} parent=35 // pred_region
        %s756 = smul.u32 2, %s21
        %p757 = scmp.lt.s32.totalorder %s20, 0
        %s758 = scalar_select %p757, %s20, 0
        %p759 = scmp.lt.s32.totalorder %s756, 1
        %s760 = scalar_select %p759, %s756, 1
        %s761 = smul.addr %s758, 2
        %s762 = sadd.s32 %s760, %s761
        %s763 = smul.addr %s762, 4
        %s764 = scalar_lea.vmem %s4, %s763
      $region52: #{resnet_forward.22} parent=35 // pred_fallthru
        _
    $region36: #{resnet_forward.22} parent=5 // pred_fallthru
      _
    %p765 = scmp.le.s32.totalorder 2, %s10
    // Predicated region
    $region53: #{resnet_forward.22} parent=5 // pred_check
      %p766 = pneg %p765
    $region54: #{resnet_forward.22} parent=5 // pred_check_branch
      %768 = sbr.rel (%p766) target = $region56
    $region55: #{resnet_forward.22} parent=5 // pred_region
      %s769 = ssub.s32 %s10, 2
    $region56: #{resnet_forward.22} parent=5 // pred_fallthru
      _
  $region6: #{resnet_forward.22} parent=0 // loop_footer
    %s14 = sadd.s32 1, %s10
  $region7: #{resnet_forward.22} parent=0 // loop_footer_branch
    %9 = sbr.rel target = $region3
  $region8: #{resnet_forward.22} parent=0 // loop_exit
    _

// kernel: resnet_forward.21
$region0: #{resnet_forward.21}
  #allocation0 [shape = 'u32[]', space=smem, size = 0x4, offset = 0x4, fixed_abs, tag = 'smem constant byte address 0x4 - core index']
  #allocation1 [shape = 'u32[72,128]{1,0:T(1,128)}', space=vmem, size = 0x9000, scoped, tag = 'internal scratch']
  #allocation2 [shape = 'f32[8,256]{1,0:T(8,128)}', space=vmem, size = 0x2000, scoped, tag = 'scratch operand']
  %s0 = inlined_call_operand.vmem [shape: bf16[8,128], index: 0, kind: input, shape index: {}]
  %s1 = inlined_call_operand.vmem [shape: bf16[128,256], index: 1, kind: input, shape index: {}]
  %s2 = inlined_call_operand.vmem [shape: f32[1,256], index: 2, kind: input, shape index: {}]
  %s3 = inlined_call_operand.vmem [shape: f32[1,256], index: 3, kind: input, shape index: {}]
  %s4 = inlined_call_operand.vmem [shape: bf16[8,256], index: 4, kind: output, shape index: {}]
  %s5 = sld [smem:[#allocation0]]
  $region34: #{resnet_forward.21} parent=0
    _
  %s7 = ssub.s32 1, %s5
  %s8 = scalar_select 0, %s7, %s5
  // Predicated region
  $region2: #{resnet_forward.21} parent=0 // pred_check
    _
  $region3: #{resnet_forward.21} parent=0 // pred_check_branch
    %10 = sbr.rel (0) target = $region5
  $region4: #{resnet_forward.21} parent=0 // pred_region
    _
  $region5: #{resnet_forward.21} parent=0 // pred_fallthru
    _
  // Predicated region
  $region6: #{resnet_forward.21} parent=0 // pred_check
    _
  $region7: #{resnet_forward.21} parent=0 // pred_check_branch
    %12 = sbr.rel (0) target = $region9
  $region8: #{resnet_forward.21} parent=0 // pred_region
    _
  $region9: #{resnet_forward.21} parent=0 // pred_fallthru
    _
  // Predicated region
  $region10: #{resnet_forward.21} parent=0 // pred_check
    _
  $region11: #{resnet_forward.21} parent=0 // pred_check_branch
    %14 = sbr.rel (0) target = $region13
  $region12: #{resnet_forward.21} parent=0 // pred_region
    _
  $region13: #{resnet_forward.21} parent=0 // pred_fallthru
    _
  // Predicated region
  $region14: #{resnet_forward.21} parent=0 // pred_check
    _
  $region15: #{resnet_forward.21} parent=0 // pred_check_branch
    %16 = sbr.rel (0) target = $region17
  $region16: #{resnet_forward.21} parent=0 // pred_region
    _
  $region17: #{resnet_forward.21} parent=0 // pred_fallthru
    _
  %p17 = scmp.eq.s32.totalorder 0, 0
  // Predicated region
  $region18: #{resnet_forward.21} parent=0 // pred_check
    %p18 = pneg %p17
  $region19: #{resnet_forward.21} parent=0 // pred_check_branch
    %20 = sbr.rel (%p18) target = $region21
  $region20: #{resnet_forward.21} parent=0 // pred_region
    %21 = vst [vmem:[#allocation2] sm:$0xff] 0.0
    %22 = vst [vmem:[#allocation2 + $0x8] sm:$0xff] 0.0
  $region21: #{resnet_forward.21} parent=0 // pred_fallthru
    _
  %v23 = vld [vmem:[#allocation2] sm:$0xff]
  %v24 = vld [vmem:[#allocation2 + $0x8] sm:$0xff]
  %v25 = vld [vmem:[%s0] sm:$0xf]
  %v26 = vld [vmem:[%s1] sm:$0xff]
  %v27 = vld [vmem:[%s1 + $0x8] sm:$0xff]
  %v28 = vld [vmem:[%s1 + $0x10] sm:$0xff]
  %v29 = vld [vmem:[%s1 + $0x18] sm:$0xff]
  %v30 = vld [vmem:[%s1 + $0x20] sm:$0xff]
  %v31 = vld [vmem:[%s1 + $0x28] sm:$0xff]
  %v32 = vld [vmem:[%s1 + $0x30] sm:$0xff]
  %v33 = vld [vmem:[%s1 + $0x38] sm:$0xff]
  %v34 = vld [vmem:[%s1 + $0x40] sm:$0xff]
  %v35 = vld [vmem:[%s1 + $0x48] sm:$0xff]
  %v36 = vld [vmem:[%s1 + $0x50] sm:$0xff]
  %v37 = vld [vmem:[%s1 + $0x58] sm:$0xff]
  %v38 = vld [vmem:[%s1 + $0x60] sm:$0xff]
  %v39 = vld [vmem:[%s1 + $0x68] sm:$0xff]
  %v40 = vld [vmem:[%s1 + $0x70] sm:$0xff]
  %v41 = vld [vmem:[%s1 + $0x78] sm:$0xff]
  %v58 = vunpack.c.l.b16 %v26
  %v59 = vunpack.c.h.b16 %v26
  %v60 = vunpack.c.l.b16 %v27
  %v61 = vunpack.c.h.b16 %v27
  %v62 = vunpack.c.l.b16 %v28
  %v63 = vunpack.c.h.b16 %v28
  %v64 = vunpack.c.l.b16 %v29
  %v65 = vunpack.c.h.b16 %v29
  %v66 = vunpack.c.l.b16 %v30
  %v67 = vunpack.c.h.b16 %v30
  %v68 = vunpack.c.l.b16 %v31
  %v69 = vunpack.c.h.b16 %v31
  %v70 = vunpack.c.l.b16 %v32
  %v71 = vunpack.c.h.b16 %v32
  %v72 = vunpack.c.l.b16 %v33
  %v73 = vunpack.c.h.b16 %v33
  %v74 = vunpack.c.l.b16 %v34
  %v75 = vunpack.c.h.b16 %v34
  %v76 = vunpack.c.l.b16 %v35
  %v77 = vunpack.c.h.b16 %v35
  %v78 = vunpack.c.l.b16 %v36
  %v79 = vunpack.c.h.b16 %v36
  %v80 = vunpack.c.l.b16 %v37
  %v81 = vunpack.c.h.b16 %v37
  %v82 = vunpack.c.l.b16 %v38
  %v83 = vunpack.c.h.b16 %v38
  %v84 = vunpack.c.l.b16 %v39
  %v85 = vunpack.c.h.b16 %v39
  %v86 = vunpack.c.l.b16 %v40
  %v87 = vunpack.c.h.b16 %v40
  %v88 = vunpack.c.l.b16 %v41
  %v89 = vunpack.c.h.b16 %v41
  %v90 = vpack.c.b16 %v60, %v58
  %v91 = vpack.c.b16 %v61, %v59
  %v92 = vpack.c.b16 %v64, %v62
  %v93 = vpack.c.b16 %v65, %v63
  %v94 = vpack.c.b16 %v68, %v66
  %v95 = vpack.c.b16 %v69, %v67
  %v96 = vpack.c.b16 %v72, %v70
  %v97 = vpack.c.b16 %v73, %v71
  %v98 = vpack.c.b16 %v76, %v74
  %v99 = vpack.c.b16 %v77, %v75
  %v100 = vpack.c.b16 %v80, %v78
  %v101 = vpack.c.b16 %v81, %v79
  %v102 = vpack.c.b16 %v84, %v82
  %v103 = vpack.c.b16 %v85, %v83
  %v104 = vpack.c.b16 %v88, %v86
  %v105 = vpack.c.b16 %v89, %v87
  %122 = vmatpush.bf16.msra.mxu0 %v104
  %123 = vmatpush.bf16.msra.mxu0 %v102
  %124 = vmatpush.bf16.msra.mxu0 %v100
  %125 = vmatpush.bf16.msra.mxu0 %v98
  %126 = vmatpush.bf16.msra.mxu0 %v96
  %127 = vmatpush.bf16.msra.mxu0 %v94
  %128 = vmatpush.bf16.msra.mxu0 %v92
  %129 = vmatpush.bf16.msra.mxu0 %v90
  %130 = vmatmul.bf16.gmra.mxu0 %v25
  %v131 = vpop.f32.mrf.mxu0
  %v132 = vadd.f32 0.0, %v131
  %v133 = vpop.f32.mrf.mxu0
  %134 = vdwg.mxu0
  %135 = vmatpush.bf16.msra.mxu0 %v105
  %136 = vmatpush.bf16.msra.mxu0 %v103
  %137 = vmatpush.bf16.msra.mxu0 %v101
  %138 = vmatpush.bf16.msra.mxu0 %v99
  %139 = vmatpush.bf16.msra.mxu0 %v97
  %140 = vmatpush.bf16.msra.mxu0 %v95
  %141 = vmatpush.bf16.msra.mxu0 %v93
  %142 = vmatpush.bf16.msra.mxu0 %v91
  %143 = vmatmul.bf16.gmra.mxu0 %v25
  %v144 = vpop.f32.mrf.mxu0
  %v145 = vadd.f32 0.0, %v144
  %v146 = vpop.f32.mrf.mxu0
  %147 = vdwg.mxu0
  %v148 = vadd.f32 %v23, %v132
  %v149 = vadd.f32 %v24, %v145
  %150 = vst [vmem:[#allocation2] sm:$0xff] %v148
  %151 = vst [vmem:[#allocation2 + $0x8] sm:$0xff] %v149
  // Predicated region
  $region22: #{resnet_forward.21} parent=0 // pred_check
    %p152 = pneg %p17
  $region23: #{resnet_forward.21} parent=0 // pred_check_branch
    %154 = sbr.rel (%p152) target = $region25
  $region24: #{resnet_forward.21} parent=0 // pred_region
    %v155 = vld [vmem:[#allocation2] sm:$0xff]
    %v156 = vld [vmem:[#allocation2 + $0x8] sm:$0xff]
    %v157 = vld [vmem:[%s2] sm:$0x3]
    %v159 = vperm.slane %v157, 0
    %v160 = vperm.slane %v157, 1
    %v163 = vmul.f32 %v155, %v159
    %v164 = vmul.f32 %v156, %v160
    %v165 = vld [vmem:[%s3] sm:$0x3]
    %v167 = vperm.slane %v165, 0
    %v168 = vperm.slane %v165, 1
    %v171 = vadd.f32 %v163, %v167
    %v172 = vadd.f32 %v164, %v168
    %v173 = vpack.c.bf16 %v172, %v171
    %174 = vst [vmem:[%s4] sm:$0xff] %v173
  $region25: #{resnet_forward.21} parent=0 // pred_fallthru
    _
  // Predicated region
  $region26: #{resnet_forward.21} parent=0 // pred_check
    _
  $region27: #{resnet_forward.21} parent=0 // pred_check_branch
    %176 = sbr.rel (0) target = $region29
  $region28: #{resnet_forward.21} parent=0 // pred_region
    _
  $region29: #{resnet_forward.21} parent=0 // pred_fallthru
    _
  // Predicated region
  $region30: #{resnet_forward.21} parent=0 // pred_check
    _
  $region31: #{resnet_forward.21} parent=0 // pred_check_branch
    %178 = sbr.rel (0) target = $region33
  $region32: #{resnet_forward.21} parent=0 // pred_region
    _
  $region33: #{resnet_forward.21} parent=0 // pred_fallthru
    _

// kernel: resnet_forward.23
$region0: #{resnet_forward.23}
  #allocation0 [shape = 'u32[]', space=smem, size = 0x4, offset = 0x4, fixed_abs, tag = 'smem constant byte address 0x4 - core index']
  #allocation1 [shape = 'u32[72,128]{1,0:T(1,128)}', space=vmem, size = 0x9000, scoped, tag = 'internal scratch']
  #allocation2 [shape = 'f32[8,256]{1,0:T(8,128)}', space=vmem, size = 0x2000, scoped, tag = 'scratch operand']
  %s0 = inlined_call_operand.vmem [shape: bf16[8,2304], index: 0, kind: input, shape index: {}]
  %s1 = inlined_call_operand.vmem [shape: bf16[2304,256], index: 1, kind: input, shape index: {}]
  %s2 = inlined_call_operand.vmem [shape: f32[1,256], index: 2, kind: input, shape index: {}]
  %s3 = inlined_call_operand.vmem [shape: f32[1,256], index: 3, kind: input, shape index: {}]
  %s4 = inlined_call_operand.vmem [shape: bf16[8,256], index: 4, kind: input, shape index: {}]
  %s5 = inlined_call_operand.vmem [shape: bf16[8,256], index: 5, kind: output, shape index: {}]
  %s6 = sld [smem:[#allocation0]]
  $region61: #{resnet_forward.23} parent=0
    _
  %s8 = ssub.s32 1, %s6
  %s9 = scalar_select 0, %s8, %s6
  loop: start=0, step=1, limit=8
  $region2: #{resnet_forward.23} parent=0 // loop_pre_header
    _
  $region3: #{resnet_forward.23} parent=0 // loop_header
    %s11 = sphi 0, %s15
    %p12 = scmp.ge.s32.totalorder %s11, 8
    %s18 = sphi 0, %s37
    %s19 = sphi 0, %s33
    %s20 = sphi 0, %s29
    %s21 = sphi 0, %s18
    %s22 = sphi 0, %s19
    %s23 = sphi 0, %s20
    %s24 = sphi 0, %s21
    %s25 = sphi 0, %s22
    %s26 = sphi 0, %s23
    %s42 = sphi 0, %s44
    %s45 = sphi 0, %s42
    %s46 = sphi 0, %s45
    %s62 = sphi 0, %s46
    %s70 = sphi 0, %s72
    %s73 = sphi 0, %s70
    %s74 = sphi 0, %s73
    %s90 = sphi 0, %s74
    %s96 = sphi 0, %s98
    %s99 = sphi 0, %s96
    %s100 = sphi 0, %s99
    %s116 = sphi 0, %s100
    %s122 = sphi 0, %s124
    %s125 = sphi 0, %s122
    %s126 = sphi 0, %s125
    %s142 = sphi 0, %s126
    %s150 = sphi 0, %s152
    %s153 = sphi 0, %s150
    %s154 = sphi 0, %s153
    %s170 = sphi 0, %s154
    %s178 = sphi 0, %s180
    %s181 = sphi 0, %s178
    %s182 = sphi 0, %s181
    %s198 = sphi 0, %s182
  $region4: #{resnet_forward.23} parent=0 // loop_header_branch
    %14 = sbr.rel (%p12) target = $region8
  $region5: #{resnet_forward.23} parent=0 // loop_body
    %s16 = ssub.s32 %s11, 1
    %s17 = ssub.s32 %s11, 2
    %s27 = sadd.s32 1, %s20
    %p28 = scmp.ge.s32.totalorder %s27, 6
    %s29 = scalar_select %p28, 0, %s27
    %s30 = sadd.s32 1, %s19
    %s31 = scalar_select %p28, %s30, %s19
    %p32 = scmp.ge.s32.totalorder %s31, 1
    %s33 = scalar_select %p32, 0, %s31
    %s34 = sadd.s32 1, %s18
    %s35 = scalar_select %p32, %s34, %s18
    %p36 = scmp.ge.s32.totalorder %s35, 1
    %s37 = scalar_select %p36, 0, %s35
    %s38 = ssub.s32 %s18, %s37
    %s39 = ssub.s32 %s20, %s29
    %s40 = sor.u32 %s38, %s39
    %p41 = scmp.eq.s32.totalorder %s40, 0
    %s43 = sadd.s32 %s42, 1
    %s44 = scalar_select %p41, %s42, %s43
    %p47 = pneg %p41
    %p48 = scmp.eq.s32.totalorder %s11, 5
    %p49 = por %p47, %p48
    %p50 = scmp.ne.s32.totalorder %s42, %s45
    %p51 = scmp.eq.s32.totalorder %s11, 0
    %p52 = por %p50, %p51
    %p53 = scmp.ne.s32.totalorder %s42, %s45
    %p54 = scmp.eq.s32.totalorder %s16, 5
    %p55 = por %p53, %p54
    %p56 = scmp.ne.s32.totalorder %s45, %s46
    %p57 = scmp.eq.s32.totalorder %s16, 0
    %p58 = por %p56, %p57
    %p59 = scmp.ne.s32.totalorder %s45, %s46
    %p60 = scmp.eq.s32.totalorder %s17, 5
    %p61 = por %p59, %p60
    %p63 = scmp.ne.s32.totalorder %s46, %s62
    %p64 = scmp.eq.s32.totalorder %s17, 0
    %p65 = por %p63, %p64
    %s66 = ssub.s32 %s20, %s29
    %s67 = ssub.s32 %s19, %s33
    %s68 = sor.u32 %s66, %s67
    %p69 = scmp.eq.s32.totalorder %s68, 0
    %s71 = sadd.s32 %s70, 1
    %s72 = scalar_select %p69, %s70, %s71
    %p75 = pneg %p69
    %p76 = scmp.eq.s32.totalorder %s11, 5
    %p77 = por %p75, %p76
    %p78 = scmp.ne.s32.totalorder %s70, %s73
    %p79 = scmp.eq.s32.totalorder %s11, 0
    %p80 = por %p78, %p79
    %p81 = scmp.ne.s32.totalorder %s70, %s73
    %p82 = scmp.eq.s32.totalorder %s16, 5
    %p83 = por %p81, %p82
    %p84 = scmp.ne.s32.totalorder %s73, %s74
    %p85 = scmp.eq.s32.totalorder %s16, 0
    %p86 = por %p84, %p85
    %p87 = scmp.ne.s32.totalorder %s73, %s74
    %p88 = scmp.eq.s32.totalorder %s17, 5
    %p89 = por %p87, %p88
    %p91 = scmp.ne.s32.totalorder %s74, %s90
    %p92 = scmp.eq.s32.totalorder %s17, 0
    %p93 = por %p91, %p92
    %s94 = ssub.s32 %s19, %s33
    %p95 = scmp.eq.s32.totalorder %s94, 0
    %s97 = sadd.s32 %s96, 1
    %s98 = scalar_select %p95, %s96, %s97
    %p101 = pneg %p95
    %p102 = scmp.eq.s32.totalorder %s11, 5
    %p103 = por %p101, %p102
    %p104 = scmp.ne.s32.totalorder %s96, %s99
    %p105 = scmp.eq.s32.totalorder %s11, 0
    %p106 = por %p104, %p105
    %p107 = scmp.ne.s32.totalorder %s96, %s99
    %p108 = scmp.eq.s32.totalorder %s16, 5
    %p109 = por %p107, %p108
    %p110 = scmp.ne.s32.totalorder %s99, %s100
    %p111 = scmp.eq.s32.totalorder %s16, 0
    %p112 = por %p110, %p111
    %p113 = scmp.ne.s32.totalorder %s99, %s100
    %p114 = scmp.eq.s32.totalorder %s17, 5
    %p115 = por %p113, %p114
    %p117 = scmp.ne.s32.totalorder %s100, %s116
    %p118 = scmp.eq.s32.totalorder %s17, 0
    %p119 = por %p117, %p118
    %s120 = ssub.s32 %s19, %s33
    %p121 = scmp.eq.s32.totalorder %s120, 0
    %s123 = sadd.s32 %s122, 1
    %s124 = scalar_select %p121, %s122, %s123
    %p127 = pneg %p121
    %p128 = scmp.eq.s32.totalorder %s11, 5
    %p129 = por %p127, %p128
    %p130 = scmp.ne.s32.totalorder %s122, %s125
    %p131 = scmp.eq.s32.totalorder %s11, 0
    %p132 = por %p130, %p131
    %p133 = scmp.ne.s32.totalorder %s122, %s125
    %p134 = scmp.eq.s32.totalorder %s16, 5
    %p135 = por %p133, %p134
    %p136 = scmp.ne.s32.totalorder %s125, %s126
    %p137 = scmp.eq.s32.totalorder %s16, 0
    %p138 = por %p136, %p137
    %p139 = scmp.ne.s32.totalorder %s125, %s126
    %p140 = scmp.eq.s32.totalorder %s17, 5
    %p141 = por %p139, %p140
    %p143 = scmp.ne.s32.totalorder %s126, %s142
    %p144 = scmp.eq.s32.totalorder %s17, 0
    %p145 = por %p143, %p144
    %s146 = ssub.s32 %s18, %s37
    %s147 = ssub.s32 %s19, %s33
    %s148 = sor.u32 %s146, %s147
    %p149 = scmp.eq.s32.totalorder %s148, 0
    %s151 = sadd.s32 %s150, 1
    %s152 = scalar_select %p149, %s150, %s151
    %p155 = pneg %p149
    %p156 = scmp.eq.s32.totalorder %s11, 5
    %p157 = por %p155, %p156
    %p158 = scmp.ne.s32.totalorder %s150, %s153
    %p159 = scmp.eq.s32.totalorder %s11, 0
    %p160 = por %p158, %p159
    %p161 = scmp.ne.s32.totalorder %s150, %s153
    %p162 = scmp.eq.s32.totalorder %s16, 5
    %p163 = por %p161, %p162
    %p164 = scmp.ne.s32.totalorder %s153, %s154
    %p165 = scmp.eq.s32.totalorder %s16, 0
    %p166 = por %p164, %p165
    %p167 = scmp.ne.s32.totalorder %s153, %s154
    %p168 = scmp.eq.s32.totalorder %s17, 5
    %p169 = por %p167, %p168
    %p171 = scmp.ne.s32.totalorder %s154, %s170
    %p172 = scmp.eq.s32.totalorder %s17, 0
    %p173 = por %p171, %p172
    %s174 = ssub.s32 %s18, %s37
    %s175 = ssub.s32 %s19, %s33
    %s176 = sor.u32 %s174, %s175
    %p177 = scmp.eq.s32.totalorder %s176, 0
    %s179 = sadd.s32 %s178, 1
    %s180 = scalar_select %p177, %s178, %s179
    %p183 = pneg %p177
    %p184 = scmp.eq.s32.totalorder %s11, 5
    %p185 = por %p183, %p184
    %p186 = scmp.ne.s32.totalorder %s178, %s181
    %p187 = scmp.eq.s32.totalorder %s11, 0
    %p188 = por %p186, %p187
    %p189 = scmp.ne.s32.totalorder %s178, %s181
    %p190 = scmp.eq.s32.totalorder %s16, 5
    %p191 = por %p189, %p190
    %p192 = scmp.ne.s32.totalorder %s181, %s182
    %p193 = scmp.eq.s32.totalorder %s16, 0
    %p194 = por %p192, %p193
    %p195 = scmp.ne.s32.totalorder %s181, %s182
    %p196 = scmp.eq.s32.totalorder %s17, 5
    %p197 = por %p195, %p196
    %p199 = scmp.ne.s32.totalorder %s182, %s198
    %p200 = scmp.eq.s32.totalorder %s17, 0
    %p201 = por %p199, %p200
    %p202 = scmp.le.s32.totalorder 1, %s11
    %p203 = scmp.lt.s32.totalorder %s11, 7
    %p204 = pnand %p202, %p203
    %p205 = pneg %p204
    // Predicated region
    $region9: #{resnet_forward.23} parent=5 // pred_check
      _
    $region10: #{resnet_forward.23} parent=5 // pred_check_branch
      %207 = sbr.rel (%p204) target = $region12
    $region11: #{resnet_forward.23} parent=5 // pred_region
      %s208 = ssub.s32 %s11, 1
      // Predicated region
      $region13: #{resnet_forward.23} parent=11 // pred_check
        %p209 = pneg %p112
      $region14: #{resnet_forward.23} parent=11 // pred_check_branch
        %211 = sbr.rel (%p209) target = $region16
      $region15: #{resnet_forward.23} parent=11 // pred_region
        %s212 = smul.u32 2, %s22
        %p213 = scmp.lt.s32.totalorder %s212, 1
        %s214 = scalar_select %p213, %s212, 1
        %s215 = scalar_lea.vmem %s2, %s214
        %s216 = smul.u32 2, %s22
      $region16: #{resnet_forward.23} parent=11 // pred_fallthru
        _
      // Predicated region
      $region17: #{resnet_forward.23} parent=11 // pred_check
        %p217 = pneg %p138
      $region18: #{resnet_forward.23} parent=11 // pred_check_branch
        %219 = sbr.rel (%p217) target = $region20
      $region19: #{resnet_forward.23} parent=11 // pred_region
        %s220 = smul.u32 2, %s22
        %p221 = scmp.lt.s32.totalorder %s220, 1
        %s222 = scalar_select %p221, %s220, 1
        %s223 = scalar_lea.vmem %s3, %s222
        %s224 = smul.u32 2, %s22
      $region20: #{resnet_forward.23} parent=11 // pred_fallthru
        _
      // Predicated region
      $region21: #{resnet_forward.23} parent=11 // pred_check
        %p225 = pneg %p166
      $region22: #{resnet_forward.23} parent=11 // pred_check_branch
        %227 = sbr.rel (%p225) target = $region24
      $region23: #{resnet_forward.23} parent=11 // pred_region
        %s228 = smul.u32 2, %s22
        %p229 = scmp.lt.s32.totalorder %s21, 0
        %s230 = scalar_select %p229, %s21, 0
        %p231 = scmp.lt.s32.totalorder %s228, 1
        %s232 = scalar_select %p231, %s228, 1
        %s233 = smul.addr %s230, 2
        %s234 = sadd.s32 %s232, %s233
        %s235 = smul.addr %s234, 4
        %s236 = scalar_lea.vmem %s4, %s235
        %s237 = smul.u32 2, %s22
      $region24: #{resnet_forward.23} parent=11 // pred_fallthru
        _
    $region12: #{resnet_forward.23} parent=5 // pred_fallthru
      _
    %p238 = scmp.lt.s32.totalorder %s11, 6
    // Predicated region
    $region25: #{resnet_forward.23} parent=5 // pred_check
      %p239 = pneg %p238
    $region26: #{resnet_forward.23} parent=5 // pred_check_branch
      %241 = sbr.rel (%p239) target = $region28
    $region27: #{resnet_forward.23} parent=5 // pred_region
      // Predicated region
      $region29: #{resnet_forward.23} parent=27 // pred_check
        %p242 = pneg %p52
      $region30: #{resnet_forward.23} parent=27 // pred_check_branch
        %244 = sbr.rel (%p242) target = $region32
      $region31: #{resnet_forward.23} parent=27 // pred_region
        %s245 = smul.u32 3, %s20
        %p246 = scmp.lt.s32.totalorder %s18, 0
        %s247 = scalar_select %p246, %s18, 0
        %p248 = scmp.lt.s32.totalorder %s245, 17
        %s249 = scalar_select %p248, %s245, 17
        %s250 = smul.addr %s247, 18
        %s251 = sadd.s32 %s249, %s250
        %s252 = smul.addr %s251, 4
        %s253 = scalar_lea.vmem %s0, %s252
        %s254 = smul.u32 3, %s20
      $region32: #{resnet_forward.23} parent=27 // pred_fallthru
        _
      // Predicated region
      $region33: #{resnet_forward.23} parent=27 // pred_check
        %p255 = pneg %p80
      $region34: #{resnet_forward.23} parent=27 // pred_check_branch
        %257 = sbr.rel (%p255) target = $region36
      $region35: #{resnet_forward.23} parent=27 // pred_region
        %s258 = smul.u32 48, %s20
        %s259 = smul.u32 2, %s19
        %p260 = scmp.lt.s32.totalorder %s258, 287
        %s261 = scalar_select %p260, %s258, 287
        %p262 = scmp.lt.s32.totalorder %s259, 1
        %s263 = scalar_select %p262, %s259, 1
        %s264 = smul.addr %s261, 2
        %s265 = sadd.s32 %s263, %s264
        %s266 = smul.addr %s265, 4
        %s267 = scalar_lea.vmem %s1, %s266
        %s268 = smul.u32 48, %s20
        %s269 = smul.u32 2, %s19
      $region36: #{resnet_forward.23} parent=27 // pred_fallthru
        _
    $region28: #{resnet_forward.23} parent=5 // pred_fallthru
      _
    %p270 = scmp.le.s32.totalorder 1, %s11
    %p271 = scmp.lt.s32.totalorder %s11, 7
    %p272 = pnand %p270, %p271
    %p273 = pneg %p272
    // Predicated region
    $region37: #{resnet_forward.23} parent=5 // pred_check
      _
    $region38: #{resnet_forward.23} parent=5 // pred_check_branch
      %275 = sbr.rel (%p272) target = $region40
    $region39: #{resnet_forward.23} parent=5 // pred_region
      %s276 = ssub.s32 %s11, 1
      %s277 = smul.u32 3, %s23
      %p278 = scmp.lt.s32.totalorder %s21, 0
      %s279 = scalar_select %p278, %s21, 0
      %p280 = scmp.lt.s32.totalorder %s277, 17
      %s281 = scalar_select %p280, %s277, 17
      %s282 = smul.addr %s279, 18
      %s283 = sadd.s32 %s281, %s282
      %s284 = smul.addr %s283, 4
      %s285 = scalar_lea.vmem %s0, %s284
      %p286 = pneg %p58
      %p287 = pneg %p55
      %s288 = smul.u32 48, %s23
      %s289 = smul.u32 2, %s22
      %p290 = scmp.lt.s32.totalorder %s288, 287
      %s291 = scalar_select %p290, %s288, 287
      %p292 = scmp.lt.s32.totalorder %s289, 1
      %s293 = scalar_select %p292, %s289, 1
      %s294 = smul.addr %s291, 2
      %s295 = sadd.s32 %s293, %s294
      %s296 = smul.addr %s295, 4
      %s297 = scalar_lea.vmem %s1, %s296
      %p298 = pneg %p86
      %p299 = pneg %p83
      %s300 = smul.u32 2, %s22
      %p301 = scmp.lt.s32.totalorder %s300, 1
      %s302 = scalar_select %p301, %s300, 1
      %s303 = scalar_lea.vmem %s2, %s302
      %p304 = pneg %p112
      %p305 = pneg %p109
      %s306 = smul.u32 2, %s22
      %p307 = scmp.lt.s32.totalorder %s306, 1
      %s308 = scalar_select %p307, %s306, 1
      %s309 = scalar_lea.vmem %s3, %s308
      %p310 = pneg %p138
      %p311 = pneg %p135
      %s312 = smul.u32 2, %s22
      %p313 = scmp.lt.s32.totalorder %s21, 0
      %s314 = scalar_select %p313, %s21, 0
      %p315 = scmp.lt.s32.totalorder %s312, 1
      %s316 = scalar_select %p315, %s312, 1
      %s317 = smul.addr %s314, 2
      %s318 = sadd.s32 %s316, %s317
      %s319 = smul.addr %s318, 4
      %s320 = scalar_lea.vmem %s4, %s319
      %p321 = pneg %p166
      %p322 = pneg %p163
      %p323 = pneg %p194
      %p324 = pneg %p191
      %s325 = smul.u32 2, %s22
      %p326 = scmp.lt.s32.totalorder %s21, 0
      %s327 = scalar_select %p326, %s21, 0
      %p328 = scmp.lt.s32.totalorder %s325, 1
      %s329 = scalar_select %p328, %s325, 1
      %s330 = smul.addr %s327, 2
      %s331 = sadd.s32 %s329, %s330
      %s332 = smul.addr %s331, 4
      %s333 = scalar_lea.vmem %s5, %s332
      %s334 = smul.u32 3, %s23
      %p335 = scmp.lt.s32.totalorder %s21, 0
      %s336 = scalar_select %p335, %s21, 0
      %p337 = scmp.lt.s32.totalorder %s334, 17
      %s338 = scalar_select %p337, %s334, 17
      %s339 = smul.addr %s336, 18
      %s340 = sadd.s32 %s338, %s339
      %s341 = smul.addr %s340, 4
      %s342 = scalar_lea.vmem %s0, %s341
      %s343 = smul.u32 3, %s23
      %s344 = smul.u32 48, %s23
      %s345 = smul.u32 2, %s22
      %p346 = scmp.lt.s32.totalorder %s344, 287
      %s347 = scalar_select %p346, %s344, 287
      %p348 = scmp.lt.s32.totalorder %s345, 1
      %s349 = scalar_select %p348, %s345, 1
      %s350 = smul.addr %s347, 2
      %s351 = sadd.s32 %s349, %s350
      %s352 = smul.addr %s351, 4
      %s353 = scalar_lea.vmem %s1, %s352
      %s354 = smul.u32 48, %s23
      %s355 = smul.u32 2, %s22
      %s356 = smul.u32 2, %s22
      %p357 = scmp.lt.s32.totalorder %s356, 1
      %s358 = scalar_select %p357, %s356, 1
      %s359 = scalar_lea.vmem %s2, %s358
      %s360 = smul.u32 2, %s22
      %s361 = smul.u32 2, %s22
      %p362 = scmp.lt.s32.totalorder %s361, 1
      %s363 = scalar_select %p362, %s361, 1
      %s364 = scalar_lea.vmem %s3, %s363
      %s365 = smul.u32 2, %s22
      %s366 = smul.u32 2, %s22
      %p367 = scmp.lt.s32.totalorder %s21, 0
      %s368 = scalar_select %p367, %s21, 0
      %p369 = scmp.lt.s32.totalorder %s366, 1
      %s370 = scalar_select %p369, %s366, 1
      %s371 = smul.addr %s368, 2
      %s372 = sadd.s32 %s370, %s371
      %s373 = smul.addr %s372, 4
      %s374 = scalar_lea.vmem %s4, %s373
      %s375 = smul.u32 2, %s22
      %s376 = smul.u32 2, %s22
      %p377 = scmp.lt.s32.totalorder %s21, 0
      %s378 = scalar_select %p377, %s21, 0
      %p379 = scmp.lt.s32.totalorder %s376, 1
      %s380 = scalar_select %p379, %s376, 1
      %s381 = smul.addr %s378, 2
      %s382 = sadd.s32 %s380, %s381
      %s383 = smul.addr %s382, 4
      %s384 = scalar_lea.vmem %s5, %s383
      %s385 = smul.u32 2, %s22
      %p386 = scmp.eq.s32.totalorder %s23, 0
      // Predicated region
      $region41: #{resnet_forward.23} parent=39 // pred_check
        %p387 = pneg %p386
      $region42: #{resnet_forward.23} parent=39 // pred_check_branch
        %389 = sbr.rel (%p387) target = $region44
      $region43: #{resnet_forward.23} parent=39 // pred_region
        %390 = vst [vmem:[#allocation2] sm:$0xff] 0.0
        %391 = vst [vmem:[#allocation2 + $0x8] sm:$0xff] 0.0
      $region44: #{resnet_forward.23} parent=39 // pred_fallthru
        _
      %v392 = vld [vmem:[#allocation2] sm:$0xff]
      %v393 = vld [vmem:[#allocation2 + $0x8] sm:$0xff]
      %v394 = vld [vmem:[%s342] sm:$0xff]
      %v395 = vld [vmem:[%s342 + $0x8] sm:$0xf]
      %v396 = vld [vmem:[%s353] sm:$0xff]
      %v397 = vld [vmem:[%s353 + $0x8] sm:$0xff]
      %v398 = vld [vmem:[%s353 + $0x10] sm:$0xff]
      %v399 = vld [vmem:[%s353 + $0x18] sm:$0xff]
      %v400 = vld [vmem:[%s353 + $0x20] sm:$0xff]
      %v401 = vld [vmem:[%s353 + $0x28] sm:$0xff]
      %v402 = vld [vmem:[%s353 + $0x30] sm:$0xff]
      %v403 = vld [vmem:[%s353 + $0x38] sm:$0xff]
      %v404 = vld [vmem:[%s353 + $0x40] sm:$0xff]
      %v405 = vld [vmem:[%s353 + $0x48] sm:$0xff]
      %v406 = vld [vmem:[%s353 + $0x50] sm:$0xff]
      %v407 = vld [vmem:[%s353 + $0x58] sm:$0xff]
      %v408 = vld [vmem:[%s353 + $0x60] sm:$0xff]
      %v409 = vld [vmem:[%s353 + $0x68] sm:$0xff]
      %v410 = vld [vmem:[%s353 + $0x70] sm:$0xff]
      %v411 = vld [vmem:[%s353 + $0x78] sm:$0xff]
      %v412 = vld [vmem:[%s353 + $0x80] sm:$0xff]
      %v413 = vld [vmem:[%s353 + $0x88] sm:$0xff]
      %v414 = vld [vmem:[%s353 + $0x90] sm:$0xff]
      %v415 = vld [vmem:[%s353 + $0x98] sm:$0xff]
      %v416 = vld [vmem:[%s353 + $0xa0] sm:$0xff]
      %v417 = vld [vmem:[%s353 + $0xa8] sm:$0xff]
      %v418 = vld [vmem:[%s353 + $0xb0] sm:$0xff]
      %v419 = vld [vmem:[%s353 + $0xb8] sm:$0xff]
      %v420 = vld [vmem:[%s353 + $0xc0] sm:$0xff]
      %v421 = vld [vmem:[%s353 + $0xc8] sm:$0xff]
      %v422 = vld [vmem:[%s353 + $0xd0] sm:$0xff]
      %v423 = vld [vmem:[%s353 + $0xd8] sm:$0xff]
      %v424 = vld [vmem:[%s353 + $0xe0] sm:$0xff]
      %v425 = vld [vmem:[%s353 + $0xe8] sm:$0xff]
      %v426 = vld [vmem:[%s353 + $0xf0] sm:$0xff]
      %v427 = vld [vmem:[%s353 + $0xf8] sm:$0xff]
      %v428 = vld [vmem:[%s353 + $0x100] sm:$0xff]
      %v429 = vld [vmem:[%s353 + $0x108] sm:$0xff]
      %v430 = vld [vmem:[%s353 + $0x110] sm:$0xff]
      %v431 = vld [vmem:[%s353 + $0x118] sm:$0xff]
      %v432 = vld [vmem:[%s353 + $0x120] sm:$0xff]
      %v433 = vld [vmem:[%s353 + $0x128] sm:$0xff]
      %v434 = vld [vmem:[%s353 + $0x130] sm:$0xff]
      %v435 = vld [vmem:[%s353 + $0x138] sm:$0xff]
      %v436 = vld [vmem:[%s353 + $0x140] sm:$0xff]
      %v437 = vld [vmem:[%s353 + $0x148] sm:$0xff]
      %v438 = vld [vmem:[%s353 + $0x150] sm:$0xff]
      %v439 = vld [vmem:[%s353 + $0x158] sm:$0xff]
      %v440 = vld [vmem:[%s353 + $0x160] sm:$0xff]
      %v441 = vld [vmem:[%s353 + $0x168] sm:$0xff]
      %v442 = vld [vmem:[%s353 + $0x170] sm:$0xff]
      %v443 = vld [vmem:[%s353 + $0x178] sm:$0xff]
      %v446 = vunpack.c.l.b16 %v394
      %v447 = vunpack.c.h.b16 %v394
      %v448 = vunpack.c.l.b16 %v395
      %v449 = vpack.c.b16 %v446, %v446
      %v450 = vpack.c.b16 %v447, %v447
      %v451 = vpack.c.b16 %v448, %v448
      %v503 = vunpack.c.l.b16 %v396
      %v504 = vunpack.c.h.b16 %v396
      %v505 = vunpack.c.l.b16 %v397
      %v506 = vunpack.c.h.b16 %v397
      %v507 = vunpack.c.l.b16 %v398
      %v508 = vunpack.c.h.b16 %v398
      %v509 = vunpack.c.l.b16 %v399
      %v510 = vunpack.c.h.b16 %v399
      %v511 = vunpack.c.l.b16 %v400
      %v512 = vunpack.c.h.b16 %v400
      %v513 = vunpack.c.l.b16 %v401
      %v514 = vunpack.c.h.b16 %v401
      %v515 = vunpack.c.l.b16 %v402
      %v516 = vunpack.c.h.b16 %v402
      %v517 = vunpack.c.l.b16 %v403
      %v518 = vunpack.c.h.b16 %v403
      %v519 = vunpack.c.l.b16 %v404
      %v520 = vunpack.c.h.b16 %v404
      %v521 = vunpack.c.l.b16 %v405
      %v522 = vunpack.c.h.b16 %v405
      %v523 = vunpack.c.l.b16 %v406
      %v524 = vunpack.c.h.b16 %v406
      %v525 = vunpack.c.l.b16 %v407
      %v526 = vunpack.c.h.b16 %v407
      %v527 = vunpack.c.l.b16 %v408
      %v528 = vunpack.c.h.b16 %v408
      %v529 = vunpack.c.l.b16 %v409
      %v530 = vunpack.c.h.b16 %v409
      %v531 = vunpack.c.l.b16 %v410
      %v532 = vunpack.c.h.b16 %v410
      %v533 = vunpack.c.l.b16 %v411
      %v534 = vunpack.c.h.b16 %v411
      %v535 = vunpack.c.l.b16 %v412
      %v536 = vunpack.c.h.b16 %v412
      %v537 = vunpack.c.l.b16 %v413
      %v538 = vunpack.c.h.b16 %v413
      %v539 = vunpack.c.l.b16 %v414
      %v540 = vunpack.c.h.b16 %v414
      %v541 = vunpack.c.l.b16 %v415
      %v542 = vunpack.c.h.b16 %v415
      %v543 = vunpack.c.l.b16 %v416
      %v544 = vunpack.c.h.b16 %v416
      %v545 = vunpack.c.l.b16 %v417
      %v546 = vunpack.c.h.b16 %v417
      %v547 = vunpack.c.l.b16 %v418
      %v548 = vunpack.c.h.b16 %v418
      %v549 = vunpack.c.l.b16 %v419
      %v550 = vunpack.c.h.b16 %v419
      %v551 = vunpack.c.l.b16 %v420
      %v552 = vunpack.c.h.b16 %v420
      %v553 = vunpack.c.l.b16 %v421
      %v554 = vunpack.c.h.b16 %v421
      %v555 = vunpack.c.l.b16 %v422
      %v556 = vunpack.c.h.b16 %v422
      %v557 = vunpack.c.l.b16 %v423
      %v558 = vunpack.c.h.b16 %v423
      %v559 = vunpack.c.l.b16 %v424
      %v560 = vunpack.c.h.b16 %v424
      %v561 = vunpack.c.l.b16 %v425
      %v562 = vunpack.c.h.b16 %v425
      %v563 = vunpack.c.l.b16 %v426
      %v564 = vunpack.c.h.b16 %v426
      %v565 = vunpack.c.l.b16 %v427
      %v566 = vunpack.c.h.b16 %v427
      %v567 = vunpack.c.l.b16 %v428
      %v568 = vunpack.c.h.b16 %v428
      %v569 = vunpack.c.l.b16 %v429
      %v570 = vunpack.c.h.b16 %v429
      %v571 = vunpack.c.l.b16 %v430
      %v572 = vunpack.c.h.b16 %v430
      %v573 = vunpack.c.l.b16 %v431
      %v574 = vunpack.c.h.b16 %v431
      %v575 = vunpack.c.l.b16 %v432
      %v576 = vunpack.c.h.b16 %v432
      %v577 = vunpack.c.l.b16 %v433
      %v578 = vunpack.c.h.b16 %v433
      %v579 = vunpack.c.l.b16 %v434
      %v580 = vunpack.c.h.b16 %v434
      %v581 = vunpack.c.l.b16 %v435
      %v582 = vunpack.c.h.b16 %v435
      %v583 = vunpack.c.l.b16 %v436
      %v584 = vunpack.c.h.b16 %v436
      %v585 = vunpack.c.l.b16 %v437
      %v586 = vunpack.c.h.b16 %v437
      %v587 = vunpack.c.l.b16 %v438
      %v588 = vunpack.c.h.b16 %v438
      %v589 = vunpack.c.l.b16 %v439
      %v590 = vunpack.c.h.b16 %v439
      %v591 = vunpack.c.l.b16 %v440
      %v592 = vunpack.c.h.b16 %v440
      %v593 = vunpack.c.l.b16 %v441
      %v594 = vunpack.c.h.b16 %v441
      %v595 = vunpack.c.l.b16 %v442
      %v596 = vunpack.c.h.b16 %v442
      %v597 = vunpack.c.l.b16 %v443
      %v598 = vunpack.c.h.b16 %v443
      %v599 = vpack.c.b16 %v505, %v503
      %v600 = vpack.c.b16 %v506, %v504
      %v601 = vpack.c.b16 %v509, %v507
      %v602 = vpack.c.b16 %v510, %v508
      %v603 = vpack.c.b16 %v513, %v511
      %v604 = vpack.c.b16 %v514, %v512
      %v605 = vpack.c.b16 %v517, %v515
      %v606 = vpack.c.b16 %v518, %v516
      %v607 = vpack.c.b16 %v521, %v519
      %v608 = vpack.c.b16 %v522, %v520
      %v609 = vpack.c.b16 %v525, %v523
      %v610 = vpack.c.b16 %v526, %v524
      %v611 = vpack.c.b16 %v529, %v527
      %v612 = vpack.c.b16 %v530, %v528
      %v613 = vpack.c.b16 %v533, %v531
      %v614 = vpack.c.b16 %v534, %v532
      %v615 = vpack.c.b16 %v537, %v535
      %v616 = vpack.c.b16 %v538, %v536
      %v617 = vpack.c.b16 %v541, %v539
      %v618 = vpack.c.b16 %v542, %v540
      %v619 = vpack.c.b16 %v545, %v543
      %v620 = vpack.c.b16 %v546, %v544
      %v621 = vpack.c.b16 %v549, %v547
      %v622 = vpack.c.b16 %v550, %v548
      %v623 = vpack.c.b16 %v553, %v551
      %v624 = vpack.c.b16 %v554, %v552
      %v625 = vpack.c.b16 %v557, %v555
      %v626 = vpack.c.b16 %v558, %v556
      %v627 = vpack.c.b16 %v561, %v559
      %v628 = vpack.c.b16 %v562, %v560
      %v629 = vpack.c.b16 %v565, %v563
      %v630 = vpack.c.b16 %v566, %v564
      %v631 = vpack.c.b16 %v569, %v567
      %v632 = vpack.c.b16 %v570, %v568
      %v633 = vpack.c.b16 %v573, %v571
      %v634 = vpack.c.b16 %v574, %v572
      %v635 = vpack.c.b16 %v577, %v575
      %v636 = vpack.c.b16 %v578, %v576
      %v637 = vpack.c.b16 %v581, %v579
      %v638 = vpack.c.b16 %v582, %v580
      %v639 = vpack.c.b16 %v585, %v583
      %v640 = vpack.c.b16 %v586, %v584
      %v641 = vpack.c.b16 %v589, %v587
      %v642 = vpack.c.b16 %v590, %v588
      %v643 = vpack.c.b16 %v593, %v591
      %v644 = vpack.c.b16 %v594, %v592
      %v645 = vpack.c.b16 %v597, %v595
      %v646 = vpack.c.b16 %v598, %v596
      %695 = vmatpush.bf16.msra.mxu0 %v613
      %696 = vmatpush.bf16.msra.mxu0 %v611
      %697 = vmatpush.bf16.msra.mxu0 %v609
      %698 = vmatpush.bf16.msra.mxu0 %v607
      %699 = vmatpush.bf16.msra.mxu0 %v605
      %700 = vmatpush.bf16.msra.mxu0 %v603
      %701 = vmatpush.bf16.msra.mxu0 %v601
      %702 = vmatpush.bf16.msra.mxu0 %v599
      %703 = vmatmul.bf16.gmra.mxu0 %v449
      %v704 = vpop.f32.mrf.mxu0
      %v705 = vadd.f32 0.0, %v704
      %v706 = vpop.f32.mrf.mxu0
      %707 = vdwg.mxu0
      %708 = vmatpush.bf16.msra.mxu0 %v629
      %709 = vmatpush.bf16.msra.mxu0 %v627
      %710 = vmatpush.bf16.msra.mxu0 %v625
      %711 = vmatpush.bf16.msra.mxu0 %v623
      %712 = vmatpush.bf16.msra.mxu0 %v621
      %713 = vmatpush.bf16.msra.mxu0 %v619
      %714 = vmatpush.bf16.msra.mxu0 %v617
      %715 = vmatpush.bf16.msra.mxu0 %v615
      %716 = vmatmul.bf16.gmra.mxu0 %v450
      %v717 = vpop.f32.mrf.mxu0
      %v718 = vadd.f32 %v705, %v717
      %v719 = vpop.f32.mrf.mxu0
      %720 = vdwg.mxu0
      %721 = vmatpush.bf16.msra.mxu0 %v645
      %722 = vmatpush.bf16.msra.mxu0 %v643
      %723 = vmatpush.bf16.msra.mxu0 %v641
      %724 = vmatpush.bf16.msra.mxu0 %v639
      %725 = vmatpush.bf16.msra.mxu0 %v637
      %726 = vmatpush.bf16.msra.mxu0 %v635
      %727 = vmatpush.bf16.msra.mxu0 %v633
      %728 = vmatpush.bf16.msra.mxu0 %v631
      %729 = vmatmul.bf16.gmra.mxu0 %v451
      %v730 = vpop.f32.mrf.mxu0
      %v731 = vadd.f32 %v718, %v730
      %v732 = vpop.f32.mrf.mxu0
      %733 = vdwg.mxu0
      %734 = vmatpush.bf16.msra.mxu0 %v614
      %735 = vmatpush.bf16.msra.mxu0 %v612
      %736 = vmatpush.bf16.msra.mxu0 %v610
      %737 = vmatpush.bf16.msra.mxu0 %v608
      %738 = vmatpush.bf16.msra.mxu0 %v606
      %739 = vmatpush.bf16.msra.mxu0 %v604
      %740 = vmatpush.bf16.msra.mxu0 %v602
      %741 = vmatpush.bf16.msra.mxu0 %v600
      %742 = vmatmul.bf16.gmra.mxu0 %v449
      %v743 = vpop.f32.mrf.mxu0
      %v744 = vadd.f32 0.0, %v743
      %v745 = vpop.f32.mrf.mxu0
      %746 = vdwg.mxu0
      %747 = vmatpush.bf16.msra.mxu0 %v630
      %748 = vmatpush.bf16.msra.mxu0 %v628
      %749 = vmatpush.bf16.msra.mxu0 %v626
      %750 = vmatpush.bf16.msra.mxu0 %v624
      %751 = vmatpush.bf16.msra.mxu0 %v622
      %752 = vmatpush.bf16.msra.mxu0 %v620
      %753 = vmatpush.bf16.msra.mxu0 %v618
      %754 = vmatpush.bf16.msra.mxu0 %v616
      %755 = vmatmul.bf16.gmra.mxu0 %v450
      %v756 = vpop.f32.mrf.mxu0
      %v757 = vadd.f32 %v744, %v756
      %v758 = vpop.f32.mrf.mxu0
      %759 = vdwg.mxu0
      %760 = vmatpush.bf16.msra.mxu0 %v646
      %761 = vmatpush.bf16.msra.mxu0 %v644
      %762 = vmatpush.bf16.msra.mxu0 %v642
      %763 = vmatpush.bf16.msra.mxu0 %v640
      %764 = vmatpush.bf16.msra.mxu0 %v638
      %765 = vmatpush.bf16.msra.mxu0 %v636
      %766 = vmatpush.bf16.msra.mxu0 %v634
      %767 = vmatpush.bf16.msra.mxu0 %v632
      %768 = vmatmul.bf16.gmra.mxu0 %v451
      %v769 = vpop.f32.mrf.mxu0
      %v770 = vadd.f32 %v757, %v769
      %v771 = vpop.f32.mrf.mxu0
      %772 = vdwg.mxu0
      %v773 = vadd.f32 %v392, %v731
      %v774 = vadd.f32 %v393, %v770
      %775 = vst [vmem:[#allocation2] sm:$0xff] %v773
      %776 = vst [vmem:[#allocation2 + $0x8] sm:$0xff] %v774
      %p777 = scmp.eq.s32.totalorder %s23, 5
      // Predicated region
      $region45: #{resnet_forward.23} parent=39 // pred_check
        %p778 = pneg %p777
      $region46: #{resnet_forward.23} parent=39 // pred_check_branch
        %780 = sbr.rel (%p778) target = $region48
      $region47: #{resnet_forward.23} parent=39 // pred_region
        %v781 = vld [vmem:[#allocation2] sm:$0xff]
        %v782 = vld [vmem:[#allocation2 + $0x8] sm:$0xff]
        %v783 = vld [vmem:[%s359] sm:$0x3]
        %v785 = vperm.slane %v783, 0
        %v786 = vperm.slane %v783, 1
        %v789 = vmul.f32 %v781, %v785
        %v790 = vmul.f32 %v782, %v786
        %v791 = vld [vmem:[%s364] sm:$0x3]
        %v793 = vperm.slane %v791, 0
        %v794 = vperm.slane %v791, 1
        %v797 = vadd.f32 %v789, %v793
        %v798 = vadd.f32 %v790, %v794
        %v799 = vld [vmem:[%s374] sm:$0xff]
        %v800 = vunpack.c.l.bf16 %v799
        %v801 = vunpack.c.h.bf16 %v799
        %v802 = vadd.f32 %v797, %v800
        %v803 = vadd.f32 %v798, %v801
        %v804 = vmax.f32 %v802, 0.0
        %v805 = vmax.f32 %v803, 0.0
        %v806 = vpack.c.bf16 %v805, %v804
        %807 = vst [vmem:[%s384] sm:$0xff] %v806
      $region48: #{resnet_forward.23} parent=39 // pred_fallthru
        _
      %s808 = smul.u32 2, %s22
      %p809 = scmp.lt.s32.totalorder %s21, 0
      %s810 = scalar_select %p809, %s21, 0
      %p811 = scmp.lt.s32.totalorder %s808, 1
      %s812 = scalar_select %p811, %s808, 1
      %s813 = smul.addr %s810, 2
      %s814 = sadd.s32 %s812, %s813
      %s815 = smul.addr %s814, 4
      %s816 = scalar_lea.vmem %s5, %s815
      // Predicated region
      $region49: #{resnet_forward.23} parent=39 // pred_check
        %p817 = pneg %p191
      $region50: #{resnet_forward.23} parent=39 // pred_check_branch
        %819 = sbr.rel (%p817) target = $region52
      $region51: #{resnet_forward.23} parent=39 // pred_region
        %s820 = smul.u32 2, %s22
      $region52: #{resnet_forward.23} parent=39 // pred_fallthru
        _
      // Predicated region
      $region53: #{resnet_forward.23} parent=39 // pred_check
        %p821 = pneg %p191
      $region54: #{resnet_forward.23} parent=39 // pred_check_branch
        %823 = sbr.rel (%p821) target = $region56
      $region55: #{resnet_forward.23} parent=39 // pred_region
        %s824 = smul.u32 2, %s22
        %p825 = scmp.lt.s32.totalorder %s21, 0
        %s826 = scalar_select %p825, %s21, 0
        %p827 = scmp.lt.s32.totalorder %s824, 1
        %s828 = scalar_select %p827, %s824, 1
        %s829 = smul.addr %s826, 2
        %s830 = sadd.s32 %s828, %s829
        %s831 = smul.addr %s830, 4
        %s832 = scalar_lea.vmem %s5, %s831
      $region56: #{resnet_forward.23} parent=39 // pred_fallthru
        _
    $region40: #{resnet_forward.23} parent=5 // pred_fallthru
      _
    %p833 = scmp.le.s32.totalorder 2, %s11
    // Predicated region
    $region57: #{resnet_forward.23} parent=5 // pred_check
      %p834 = pneg %p833
    $region58: #{resnet_forward.23} parent=5 // pred_check_branch
      %836 = sbr.rel (%p834) target = $region60
    $region59: #{resnet_forward.23} parent=5 // pred_region
      %s837 = ssub.s32 %s11, 2
    $region60: #{resnet_forward.23} parent=5 // pred_fallthru
      _
  $region6: #{resnet_forward.23} parent=0 // loop_footer
    %s15 = sadd.s32 1, %s11
  $region7: #{resnet_forward.23} parent=0 // loop_footer_branch
    %10 = sbr.rel target = $region3
  $region8: #{resnet_forward.23} parent=0 // loop_exit
    _

// kernel: resnet_forward.25
$region0: #{resnet_forward.25}
  #allocation0 [shape = 'u32[]', space=smem, size = 0x4, offset = 0x4, fixed_abs, tag = 'smem constant byte address 0x4 - core index']
  #allocation1 [shape = 'u32[72,128]{1,0:T(1,128)}', space=vmem, size = 0x9000, scoped, tag = 'internal scratch']
  #allocation2 [shape = 'f32[8,256]{1,0:T(8,128)}', space=vmem, size = 0x2000, scoped, tag = 'scratch operand']
  %s0 = inlined_call_operand.vmem [shape: bf16[8,2304], index: 0, kind: input, shape index: {}]
  %s1 = inlined_call_operand.vmem [shape: bf16[2304,512], index: 1, kind: input, shape index: {}]
  %s2 = inlined_call_operand.vmem [shape: f32[1,512], index: 2, kind: input, shape index: {}]
  %s3 = inlined_call_operand.vmem [shape: f32[1,512], index: 3, kind: input, shape index: {}]
  %s4 = inlined_call_operand.vmem [shape: bf16[8,512], index: 4, kind: output, shape index: {}]
  %s5 = sld [smem:[#allocation0]]
  $region95: #{resnet_forward.25} parent=0
    _
  %s7 = ssub.s32 1, %s5
  %s8 = scalar_select 0, %s7, %s5
  $region1: #{resnet_forward.25} parent=0
    #allocation3 [shape = 'u8[393216]{0}', space=vmem, size = 0x60000, scoped, tag = 'input window, operand 1']
    loop: start=0, step=1, limit=14
    $region2: #{resnet_forward.25} parent=1 // loop_pre_header
      _
    $region3: #{resnet_forward.25} parent=1 // loop_header
      %s10 = sphi 0, %s14
      %p11 = scmp.ge.s32.totalorder %s10, 14
      %s17 = sphi 0, %s36
      %s18 = sphi 0, %s32
      %s19 = sphi 0, %s28
      %s20 = sphi 0, %s17
      %s21 = sphi 0, %s18
      %s22 = sphi 0, %s19
      %s23 = sphi 0, %s20
      %s24 = sphi 0, %s21
      %s25 = sphi 0, %s22
      %s41 = sphi 0, %s43
      %s44 = sphi 0, %s41
      %s45 = sphi 0, %s44
      %s61 = sphi 0, %s45
      %s69 = sphi 0, %s71
      %s72 = sphi 0, %s69
      %s73 = sphi 0, %s72
      %s89 = sphi 0, %s73
      %s95 = sphi 0, %s97
      %s98 = sphi 0, %s95
      %s99 = sphi 0, %s98
      %s115 = sphi 0, %s99
      %s121 = sphi 0, %s123
      %s124 = sphi 0, %s121
      %s125 = sphi 0, %s124
      %s141 = sphi 0, %s125
      %s149 = sphi 0, %s151
      %s152 = sphi 0, %s149
      %s153 = sphi 0, %s152
      %s169 = sphi 0, %s153
    $region4: #{resnet_forward.25} parent=1 // loop_header_branch
      %13 = sbr.rel (%p11) target = $region8
    $region5: #{resnet_forward.25} parent=1 // loop_body
      %s15 = ssub.s32 %s10, 1
      %s16 = ssub.s32 %s10, 2
      %s26 = sadd.s32 1, %s19
      %p27 = scmp.ge.s32.totalorder %s26, 6
      %s28 = scalar_select %p27, 0, %s26
      %s29 = sadd.s32 1, %s18
      %s30 = scalar_select %p27, %s29, %s18
      %p31 = scmp.ge.s32.totalorder %s30, 2
      %s32 = scalar_select %p31, 0, %s30
      %s33 = sadd.s32 1, %s17
      %s34 = scalar_select %p31, %s33, %s17
      %p35 = scmp.ge.s32.totalorder %s34, 1
      %s36 = scalar_select %p35, 0, %s34
      %s37 = ssub.s32 %s17, %s36
      %s38 = ssub.s32 %s19, %s28
      %s39 = sor.u32 %s37, %s38
      %p40 = scmp.eq.s32.totalorder %s39, 0
      %s42 = sadd.s32 %s41, 1
      %s43 = scalar_select %p40, %s41, %s42
      %p46 = pneg %p40
      %p47 = scmp.eq.s32.totalorder %s10, 11
      %p48 = por %p46, %p47
      %p49 = scmp.ne.s32.totalorder %s41, %s44
      %p50 = scmp.eq.s32.totalorder %s10, 0
      %p51 = por %p49, %p50
      %p52 = scmp.ne.s32.totalorder %s41, %s44
      %p53 = scmp.eq.s32.totalorder %s15, 11
      %p54 = por %p52, %p53
      %p55 = scmp.ne.s32.totalorder %s44, %s45
      %p56 = scmp.eq.s32.totalorder %s15, 0
      %p57 = por %p55, %p56
      %p58 = scmp.ne.s32.totalorder %s44, %s45
      %p59 = scmp.eq.s32.totalorder %s16, 11
      %p60 = por %p58, %p59
      %p62 = scmp.ne.s32.totalorder %s45, %s61
      %p63 = scmp.eq.s32.totalorder %s16, 0
      %p64 = por %p62, %p63
      %s65 = ssub.s32 %s19, %s28
      %s66 = ssub.s32 %s18, %s32
      %s67 = sor.u32 %s65, %s66
      %p68 = scmp.eq.s32.totalorder %s67, 0
      %s70 = sadd.s32 %s69, 1
      %s71 = scalar_select %p68, %s69, %s70
      %p74 = pneg %p68
      %p75 = scmp.eq.s32.totalorder %s10, 11
      %p76 = por %p74, %p75
      %p77 = scmp.ne.s32.totalorder %s69, %s72
      %p78 = scmp.eq.s32.totalorder %s10, 0
      %p79 = por %p77, %p78
      %p80 = scmp.ne.s32.totalorder %s69, %s72
      %p81 = scmp.eq.s32.totalorder %s15, 11
      %p82 = por %p80, %p81
      %p83 = scmp.ne.s32.totalorder %s72, %s73
      %p84 = scmp.eq.s32.totalorder %s15, 0
      %p85 = por %p83, %p84
      %p86 = scmp.ne.s32.totalorder %s72, %s73
      %p87 = scmp.eq.s32.totalorder %s16, 11
      %p88 = por %p86, %p87
      %p90 = scmp.ne.s32.totalorder %s73, %s89
      %p91 = scmp.eq.s32.totalorder %s16, 0
      %p92 = por %p90, %p91
      %s93 = ssub.s32 %s18, %s32
      %p94 = scmp.eq.s32.totalorder %s93, 0
      %s96 = sadd.s32 %s95, 1
      %s97 = scalar_select %p94, %s95, %s96
      %p100 = pneg %p94
      %p101 = scmp.eq.s32.totalorder %s10, 11
      %p102 = por %p100, %p101
      %p103 = scmp.ne.s32.totalorder %s95, %s98
      %p104 = scmp.eq.s32.totalorder %s10, 0
      %p105 = por %p103, %p104
      %p106 = scmp.ne.s32.totalorder %s95, %s98
      %p107 = scmp.eq.s32.totalorder %s15, 11
      %p108 = por %p106, %p107
      %p109 = scmp.ne.s32.totalorder %s98, %s99
      %p110 = scmp.eq.s32.totalorder %s15, 0
      %p111 = por %p109, %p110
      %p112 = scmp.ne.s32.totalorder %s98, %s99
      %p113 = scmp.eq.s32.totalorder %s16, 11
      %p114 = por %p112, %p113
      %p116 = scmp.ne.s32.totalorder %s99, %s115
      %p117 = scmp.eq.s32.totalorder %s16, 0
      %p118 = por %p116, %p117
      %s119 = ssub.s32 %s18, %s32
      %p120 = scmp.eq.s32.totalorder %s119, 0
      %s122 = sadd.s32 %s121, 1
      %s123 = scalar_select %p120, %s121, %s122
      %p126 = pneg %p120
      %p127 = scmp.eq.s32.totalorder %s10, 11
      %p128 = por %p126, %p127
      %p129 = scmp.ne.s32.totalorder %s121, %s124
      %p130 = scmp.eq.s32.totalorder %s10, 0
      %p131 = por %p129, %p130
      %p132 = scmp.ne.s32.totalorder %s121, %s124
      %p133 = scmp.eq.s32.totalorder %s15, 11
      %p134 = por %p132, %p133
      %p135 = scmp.ne.s32.totalorder %s124, %s125
      %p136 = scmp.eq.s32.totalorder %s15, 0
      %p137 = por %p135, %p136
      %p138 = scmp.ne.s32.totalorder %s124, %s125
      %p139 = scmp.eq.s32.totalorder %s16, 11
      %p140 = por %p138, %p139
      %p142 = scmp.ne.s32.totalorder %s125, %s141
      %p143 = scmp.eq.s32.totalorder %s16, 0
      %p144 = por %p142, %p143
      %s145 = ssub.s32 %s17, %s36
      %s146 = ssub.s32 %s18, %s32
      %s147 = sor.u32 %s145, %s146
      %p148 = scmp.eq.s32.totalorder %s147, 0
      %s150 = sadd.s32 %s149, 1
      %s151 = scalar_select %p148, %s149, %s150
      %p154 = pneg %p148
      %p155 = scmp.eq.s32.totalorder %s10, 11
      %p156 = por %p154, %p155
      %p157 = scmp.ne.s32.totalorder %s149, %s152
      %p158 = scmp.eq.s32.totalorder %s10, 0
      %p159 = por %p157, %p158
      %p160 = scmp.ne.s32.totalorder %s149, %s152
      %p161 = scmp.eq.s32.totalorder %s15, 11
      %p162 = por %p160, %p161
      %p163 = scmp.ne.s32.totalorder %s152, %s153
      %p164 = scmp.eq.s32.totalorder %s15, 0
      %p165 = por %p163, %p164
      %p166 = scmp.ne.s32.totalorder %s152, %s153
      %p167 = scmp.eq.s32.totalorder %s16, 11
      %p168 = por %p166, %p167
      %p170 = scmp.ne.s32.totalorder %s153, %s169
      %p171 = scmp.eq.s32.totalorder %s16, 0
      %p172 = por %p170, %p171
      %p173 = scmp.le.s32.totalorder 1, %s10
      %p174 = scmp.lt.s32.totalorder %s10, 13
      %p175 = pnand %p173, %p174
      %p176 = pneg %p175
      // Predicated region
      $region9: #{resnet_forward.25} parent=5 // pred_check
        _
      $region10: #{resnet_forward.25} parent=5 // pred_check_branch
        %178 = sbr.rel (%p175) target = $region12
      $region11: #{resnet_forward.25} parent=5 // pred_region
        %s179 = ssub.s32 %s10, 1
      $region12: #{resnet_forward.25} parent=5 // pred_fallthru
        _
      %p180 = scmp.lt.s32.totalorder %s10, 12
      // Predicated region
      $region13: #{resnet_forward.25} parent=5 // pred_check
        %p181 = pneg %p180
      $region14: #{resnet_forward.25} parent=5 // pred_check_branch
        %183 = sbr.rel (%p181) target = $region16
      $region15: #{resnet_forward.25} parent=5 // pred_region
        // Predicated region
        $region17: #{resnet_forward.25} parent=15 // pred_check
          %p184 = pneg %p51
        $region18: #{resnet_forward.25} parent=15 // pred_check_branch
          %186 = sbr.rel (%p184) target = $region20
        $region19: #{resnet_forward.25} parent=15 // pred_region
          %s187 = smul.u32 3, %s19
          %p188 = scmp.lt.s32.totalorder %s17, 0
          %s189 = scalar_select %p188, %s17, 0
          %p190 = scmp.lt.s32.totalorder %s187, 17
          %s191 = scalar_select %p190, %s187, 17
          %s192 = smul.addr %s189, 18
          %s193 = sadd.s32 %s191, %s192
          %s194 = smul.addr %s193, 4
          %s195 = scalar_lea.vmem %s0, %s194
          %s196 = smul.u32 3, %s19
        $region20: #{resnet_forward.25} parent=15 // pred_fallthru
          _
        // Predicated region
        $region21: #{resnet_forward.25} parent=15 // pred_check
          %p197 = pneg %p79
        $region22: #{resnet_forward.25} parent=15 // pred_check_branch
          %199 = sbr.rel (%p197) target = $region24
        $region23: #{resnet_forward.25} parent=15 // pred_region
          %s200 = sand.u32 %s69, 1
          %s201 = sand.u32 %s69, 1
          %s202 = smul.addr %s201, 384
          %s203 = scalar_lea.vmem [#allocation3], %s202
          %s204 = smul.u32 48, %s19
          %s205 = smul.u32 2, %s18
          %s206 = smul.addr %s204, 4
          %s207 = sadd.s32 %s205, %s206
          %s208 = smul.addr %s207, 4
          %s209 = scalar_lea.vmem %s1, %s208
          // Predicated region
          $region25: #{resnet_forward.25} parent=23 // pred_check
            _
          $region26: #{resnet_forward.25} parent=23 // pred_check_branch
            %211 = sbr.rel (0) target = $region28
          $region27: #{resnet_forward.25} parent=23 // pred_region
            // Predicated region
            $region29: #{resnet_forward.25} parent=27 // pred_check
              _
            $region30: #{resnet_forward.25} parent=27 // pred_check_branch
              %213 = sbr.rel (0) target = $region32
            $region31: #{resnet_forward.25} parent=27 // pred_region
              // Predicated region
              $region44: #{resnet_forward.25} parent=31 // pred_check
                _
              $region45: #{resnet_forward.25} parent=31 // pred_check_branch
                %323 = sbr.rel (0) target = $region47
              $region46: #{resnet_forward.25} parent=31 // pred_region
                loop: start=0, step=1, limit=1
                $region48: #{resnet_forward.25} parent=46 // loop_pre_header
                  _
                $region49: #{resnet_forward.25} parent=46 // loop_header
                  %s325 = sphi 0, %s329
                  %p326 = scmp.ge.s32.totalorder %s325, 1
                  %s330 = sphi %s209, %s209
                  %s331 = sphi %s203, %s203
                $region50: #{resnet_forward.25} parent=46 // loop_header_branch
                  %328 = sbr.rel (%p326) target = $region54
                $region51: #{resnet_forward.25} parent=46 // loop_body
                  %v332 = vld [vmem:[%s330] sm:$0xff]
                  %333 = vst [vmem:[%s331] sm:$0xff] %v332
                  %v334 = vld [vmem:[%s330 + $0x10] sm:$0xff]
                  %335 = vst [vmem:[%s331 + $0x8] sm:$0xff] %v334
                  %v336 = vld [vmem:[%s330 + $0x20] sm:$0xff]
                  %337 = vst [vmem:[%s331 + $0x10] sm:$0xff] %v336
                  %v338 = vld [vmem:[%s330 + $0x30] sm:$0xff]
                  %339 = vst [vmem:[%s331 + $0x18] sm:$0xff] %v338
                  %v340 = vld [vmem:[%s330 + $0x40] sm:$0xff]
                  %341 = vst [vmem:[%s331 + $0x20] sm:$0xff] %v340
                  %v342 = vld [vmem:[%s330 + $0x50] sm:$0xff]
                  %343 = vst [vmem:[%s331 + $0x28] sm:$0xff] %v342
                  %v344 = vld [vmem:[%s330 + $0x60] sm:$0xff]
                  %345 = vst [vmem:[%s331 + $0x30] sm:$0xff] %v344
                  %v346 = vld [vmem:[%s330 + $0x70] sm:$0xff]
                  %347 = vst [vmem:[%s331 + $0x38] sm:$0xff] %v346
                  %v348 = vld [vmem:[%s330 + $0x80] sm:$0xff]
                  %349 = vst [vmem:[%s331 + $0x40] sm:$0xff] %v348
                  %v350 = vld [vmem:[%s330 + $0x90] sm:$0xff]
                  %351 = vst [vmem:[%s331 + $0x48] sm:$0xff] %v350
                  %v352 = vld [vmem:[%s330 + $0xa0] sm:$0xff]
                  %353 = vst [vmem:[%s331 + $0x50] sm:$0xff] %v352
                  %v354 = vld [vmem:[%s330 + $0xb0] sm:$0xff]
                  %355 = vst [vmem:[%s331 + $0x58] sm:$0xff] %v354
                  %v356 = vld [vmem:[%s330 + $0xc0] sm:$0xff]
                  %357 = vst [vmem:[%s331 + $0x60] sm:$0xff] %v356
                  %v358 = vld [vmem:[%s330 + $0xd0] sm:$0xff]
                  %359 = vst [vmem:[%s331 + $0x68] sm:$0xff] %v358
                  %v360 = vld [vmem:[%s330 + $0xe0] sm:$0xff]
                  %361 = vst [vmem:[%s331 + $0x70] sm:$0xff] %v360
                  %v362 = vld [vmem:[%s330 + $0xf0] sm:$0xff]
                  %363 = vst [vmem:[%s331 + $0x78] sm:$0xff] %v362
                  %v364 = vld [vmem:[%s330 + $0x100] sm:$0xff]
                  %365 = vst [vmem:[%s331 + $0x80] sm:$0xff] %v364
                  %v366 = vld [vmem:[%s330 + $0x110] sm:$0xff]
                  %367 = vst [vmem:[%s331 + $0x88] sm:$0xff] %v366
                  %v368 = vld [vmem:[%s330 + $0x120] sm:$0xff]
                  %369 = vst [vmem:[%s331 + $0x90] sm:$0xff] %v368
                  %v370 = vld [vmem:[%s330 + $0x130] sm:$0xff]
                  %371 = vst [vmem:[%s331 + $0x98] sm:$0xff] %v370
                  %v372 = vld [vmem:[%s330 + $0x140] sm:$0xff]
                  %373 = vst [vmem:[%s331 + $0xa0] sm:$0xff] %v372
                  %v374 = vld [vmem:[%s330 + $0x150] sm:$0xff]
                  %375 = vst [vmem:[%s331 + $0xa8] sm:$0xff] %v374
                  %v376 = vld [vmem:[%s330 + $0x160] sm:$0xff]
                  %377 = vst [vmem:[%s331 + $0xb0] sm:$0xff] %v376
                  %v378 = vld [vmem:[%s330 + $0x170] sm:$0xff]
                  %379 = vst [vmem:[%s331 + $0xb8] sm:$0xff] %v378
                  %v380 = vld [vmem:[%s330 + $0x180] sm:$0xff]
                  %381 = vst [vmem:[%s331 + $0xc0] sm:$0xff] %v380
                  %v382 = vld [vmem:[%s330 + $0x190] sm:$0xff]
                  %383 = vst [vmem:[%s331 + $0xc8] sm:$0xff] %v382
                  %v384 = vld [vmem:[%s330 + $0x1a0] sm:$0xff]
                  %385 = vst [vmem:[%s331 + $0xd0] sm:$0xff] %v384
                  %v386 = vld [vmem:[%s330 + $0x1b0] sm:$0xff]
                  %387 = vst [vmem:[%s331 + $0xd8] sm:$0xff] %v386
                  %v388 = vld [vmem:[%s330 + $0x1c0] sm:$0xff]
                  %389 = vst [vmem:[%s331 + $0xe0] sm:$0xff] %v388
                  %v390 = vld [vmem:[%s330 + $0x1d0] sm:$0xff]
                  %391 = vst [vmem:[%s331 + $0xe8] sm:$0xff] %v390
                  %v392 = vld [vmem:[%s330 + $0x1e0] sm:$0xff]
                  %393 = vst [vmem:[%s331 + $0xf0] sm:$0xff] %v392
                  %v394 = vld [vmem:[%s330 + $0x1f0] sm:$0xff]
                  %395 = vst [vmem:[%s331 + $0xf8] sm:$0xff] %v394
                  %v396 = vld [vmem:[%s330 + $0x200] sm:$0xff]
                  %397 = vst [vmem:[%s331 + $0x100] sm:$0xff] %v396
                  %v398 = vld [vmem:[%s330 + $0x210] sm:$0xff]
                  %399 = vst [vmem:[%s331 + $0x108] sm:$0xff] %v398
                  %v400 = vld [vmem:[%s330 + $0x220] sm:$0xff]
                  %401 = vst [vmem:[%s331 + $0x110] sm:$0xff] %v400
                  %v402 = vld [vmem:[%s330 + $0x230] sm:$0xff]
                  %403 = vst [vmem:[%s331 + $0x118] sm:$0xff] %v402
                  %v404 = vld [vmem:[%s330 + $0x240] sm:$0xff]
                  %405 = vst [vmem:[%s331 + $0x120] sm:$0xff] %v404
                  %v406 = vld [vmem:[%s330 + $0x250] sm:$0xff]
                  %407 = vst [vmem:[%s331 + $0x128] sm:$0xff] %v406
                  %v408 = vld [vmem:[%s330 + $0x260] sm:$0xff]
                  %409 = vst [vmem:[%s331 + $0x130] sm:$0xff] %v408
                  %v410 = vld [vmem:[%s330 + $0x270] sm:$0xff]
                  %411 = vst [vmem:[%s331 + $0x138] sm:$0xff] %v410
                  %v412 = vld [vmem:[%s330 + $0x280] sm:$0xff]
                  %413 = vst [vmem:[%s331 + $0x140] sm:$0xff] %v412
                  %v414 = vld [vmem:[%s330 + $0x290] sm:$0xff]
                  %415 = vst [vmem:[%s331 + $0x148] sm:$0xff] %v414
                  %v416 = vld [vmem:[%s330 + $0x2a0] sm:$0xff]
                  %417 = vst [vmem:[%s331 + $0x150] sm:$0xff] %v416
                  %v418 = vld [vmem:[%s330 + $0x2b0] sm:$0xff]
                  %419 = vst [vmem:[%s331 + $0x158] sm:$0xff] %v418
                  %v420 = vld [vmem:[%s330 + $0x2c0] sm:$0xff]
                  %421 = vst [vmem:[%s331 + $0x160] sm:$0xff] %v420
                  %v422 = vld [vmem:[%s330 + $0x2d0] sm:$0xff]
                  %423 = vst [vmem:[%s331 + $0x168] sm:$0xff] %v422
                  %v424 = vld [vmem:[%s330 + $0x2e0] sm:$0xff]
                  %425 = vst [vmem:[%s331 + $0x170] sm:$0xff] %v424
                  %v426 = vld [vmem:[%s330 + $0x2f0] sm:$0xff]
                  %427 = vst [vmem:[%s331 + $0x178] sm:$0xff] %v426
                $region52: #{resnet_forward.25} parent=46 // loop_footer
                  %s329 = sadd.s32 1, %s325
                $region53: #{resnet_forward.25} parent=46 // loop_footer_branch
                  %324 = sbr.rel target = $region49
                $region54: #{resnet_forward.25} parent=46 // loop_exit
                  _
              $region47: #{resnet_forward.25} parent=31 // pred_fallthru
                _
              // Predicated region
              $region55: #{resnet_forward.25} parent=31 // pred_check
                _
              $region56: #{resnet_forward.25} parent=31 // pred_check_branch
                %429 = sbr.rel target = $region58
              $region57: #{resnet_forward.25} parent=31 // pred_region
                _
              $region58: #{resnet_forward.25} parent=31 // pred_fallthru
                _
            $region32: #{resnet_forward.25} parent=27 // pred_fallthru
              _
            // Predicated region
            $region33: #{resnet_forward.25} parent=27 // pred_check
              _
            $region34: #{resnet_forward.25} parent=27 // pred_check_branch
              %215 = sbr.rel target = $region36
            $region35: #{resnet_forward.25} parent=27 // pred_region
              %s217 = ssub.s32 256, 1
              loop: start=0, step=1, limit=1
              $region37: #{resnet_forward.25} parent=35 // loop_pre_header
                _
              $region38: #{resnet_forward.25} parent=35 // loop_header
                %s219 = sphi 0, %s223
                %p220 = scmp.ge.s32.totalorder %s219, 1
                %s224 = sphi %s209, %s209
                %s225 = sphi %s203, %s203
              $region39: #{resnet_forward.25} parent=35 // loop_header_branch
                %222 = sbr.rel (%p220) target = $region43
              $region40: #{resnet_forward.25} parent=35 // loop_body
                %v226 = vld [vmem:[%s224] sm:%s217]
                %227 = vst [vmem:[%s225] sm:%s217] %v226
                %v228 = vld [vmem:[%s224 + $0x10] sm:%s217]
                %229 = vst [vmem:[%s225 + $0x8] sm:%s217] %v228
                %v230 = vld [vmem:[%s224 + $0x20] sm:%s217]
                %231 = vst [vmem:[%s225 + $0x10] sm:%s217] %v230
                %v232 = vld [vmem:[%s224 + $0x30] sm:%s217]
                %233 = vst [vmem:[%s225 + $0x18] sm:%s217] %v232
                %v234 = vld [vmem:[%s224 + $0x40] sm:%s217]
                %235 = vst [vmem:[%s225 + $0x20] sm:%s217] %v234
                %v236 = vld [vmem:[%s224 + $0x50] sm:%s217]
                %237 = vst [vmem:[%s225 + $0x28] sm:%s217] %v236
                %v238 = vld [vmem:[%s224 + $0x60] sm:%s217]
                %239 = vst [vmem:[%s225 + $0x30] sm:%s217] %v238
                %v240 = vld [vmem:[%s224 + $0x70] sm:%s217]
                %241 = vst [vmem:[%s225 + $0x38] sm:%s217] %v240
                %v242 = vld [vmem:[%s224 + $0x80] sm:%s217]
                %243 = vst [vmem:[%s225 + $0x40] sm:%s217] %v242
                %v244 = vld [vmem:[%s224 + $0x90] sm:%s217]
                %245 = vst [vmem:[%s225 + $0x48] sm:%s217] %v244
                %v246 = vld [vmem:[%s224 + $0xa0] sm:%s217]
                %247 = vst [vmem:[%s225 + $0x50] sm:%s217] %v246
                %v248 = vld [vmem:[%s224 + $0xb0] sm:%s217]
                %249 = vst [vmem:[%s225 + $0x58] sm:%s217] %v248
                %v250 = vld [vmem:[%s224 + $0xc0] sm:%s217]
                %251 = vst [vmem:[%s225 + $0x60] sm:%s217] %v250
                %v252 = vld [vmem:[%s224 + $0xd0] sm:%s217]
                %253 = vst [vmem:[%s225 + $0x68] sm:%s217] %v252
                %v254 = vld [vmem:[%s224 + $0xe0] sm:%s217]
                %255 = vst [vmem:[%s225 + $0x70] sm:%s217] %v254
                %v256 = vld [vmem:[%s224 + $0xf0] sm:%s217]
                %257 = vst [vmem:[%s225 + $0x78] sm:%s217] %v256
                %v258 = vld [vmem:[%s224 + $0x100] sm:%s217]
                %259 = vst [vmem:[%s225 + $0x80] sm:%s217] %v258
                %v260 = vld [vmem:[%s224 + $0x110] sm:%s217]
                %261 = vst [vmem:[%s225 + $0x88] sm:%s217] %v260
                %v262 = vld [vmem:[%s224 + $0x120] sm:%s217]
                %263 = vst [vmem:[%s225 + $0x90] sm:%s217] %v262
                %v264 = vld [vmem:[%s224 + $0x130] sm:%s217]
                %265 = vst [vmem:[%s225 + $0x98] sm:%s217] %v264
                %v266 = vld [vmem:[%s224 + $0x140] sm:%s217]
                %267 = vst [vmem:[%s225 + $0xa0] sm:%s217] %v266
                %v268 = vld [vmem:[%s224 + $0x150] sm:%s217]
                %269 = vst [vmem:[%s225 + $0xa8] sm:%s217] %v268
                %v270 = vld [vmem:[%s224 + $0x160] sm:%s217]
                %271 = vst [vmem:[%s225 + $0xb0] sm:%s217] %v270
                %v272 = vld [vmem:[%s224 + $0x170] sm:%s217]
                %273 = vst [vmem:[%s225 + $0xb8] sm:%s217] %v272
                %v274 = vld [vmem:[%s224 + $0x180] sm:%s217]
                %275 = vst [vmem:[%s225 + $0xc0] sm:%s217] %v274
                %v276 = vld [vmem:[%s224 + $0x190] sm:%s217]
                %277 = vst [vmem:[%s225 + $0xc8] sm:%s217] %v276
                %v278 = vld [vmem:[%s224 + $0x1a0] sm:%s217]
                %279 = vst [vmem:[%s225 + $0xd0] sm:%s217] %v278
                %v280 = vld [vmem:[%s224 + $0x1b0] sm:%s217]
                %281 = vst [vmem:[%s225 + $0xd8] sm:%s217] %v280
                %v282 = vld [vmem:[%s224 + $0x1c0] sm:%s217]
                %283 = vst [vmem:[%s225 + $0xe0] sm:%s217] %v282
                %v284 = vld [vmem:[%s224 + $0x1d0] sm:%s217]
                %285 = vst [vmem:[%s225 + $0xe8] sm:%s217] %v284
                %v286 = vld [vmem:[%s224 + $0x1e0] sm:%s217]
                %287 = vst [vmem:[%s225 + $0xf0] sm:%s217] %v286
                %v288 = vld [vmem:[%s224 + $0x1f0] sm:%s217]
                %289 = vst [vmem:[%s225 + $0xf8] sm:%s217] %v288
                %v290 = vld [vmem:[%s224 + $0x200] sm:%s217]
                %291 = vst [vmem:[%s225 + $0x100] sm:%s217] %v290
                %v292 = vld [vmem:[%s224 + $0x210] sm:%s217]
                %293 = vst [vmem:[%s225 + $0x108] sm:%s217] %v292
                %v294 = vld [vmem:[%s224 + $0x220] sm:%s217]
                %295 = vst [vmem:[%s225 + $0x110] sm:%s217] %v294
                %v296 = vld [vmem:[%s224 + $0x230] sm:%s217]
                %297 = vst [vmem:[%s225 + $0x118] sm:%s217] %v296
                %v298 = vld [vmem:[%s224 + $0x240] sm:%s217]
                %299 = vst [vmem:[%s225 + $0x120] sm:%s217] %v298
                %v300 = vld [vmem:[%s224 + $0x250] sm:%s217]
                %301 = vst [vmem:[%s225 + $0x128] sm:%s217] %v300
                %v302 = vld [vmem:[%s224 + $0x260] sm:%s217]
                %303 = vst [vmem:[%s225 + $0x130] sm:%s217] %v302
                %v304 = vld [vmem:[%s224 + $0x270] sm:%s217]
                %305 = vst [vmem:[%s225 + $0x138] sm:%s217] %v304
                %v306 = vld [vmem:[%s224 + $0x280] sm:%s217]
                %307 = vst [vmem:[%s225 + $0x140] sm:%s217] %v306
                %v308 = vld [vmem:[%s224 + $0x290] sm:%s217]
                %309 = vst [vmem:[%s225 + $0x148] sm:%s217] %v308
                %v310 = vld [vmem:[%s224 + $0x2a0] sm:%s217]
                %311 = vst [vmem:[%s225 + $0x150] sm:%s217] %v310
                %v312 = vld [vmem:[%s224 + $0x2b0] sm:%s217]
                %313 = vst [vmem:[%s225 + $0x158] sm:%s217] %v312
                %v314 = vld [vmem:[%s224 + $0x2c0] sm:%s217]
                %315 = vst [vmem:[%s225 + $0x160] sm:%s217] %v314
                %v316 = vld [vmem:[%s224 + $0x2d0] sm:%s217]
                %317 = vst [vmem:[%s225 + $0x168] sm:%s217] %v316
                %v318 = vld [vmem:[%s224 + $0x2e0] sm:%s217]
                %319 = vst [vmem:[%s225 + $0x170] sm:%s217] %v318
                %v320 = vld [vmem:[%s224 + $0x2f0] sm:%s217]
                %321 = vst [vmem:[%s225 + $0x178] sm:%s217] %v320
              $region41: #{resnet_forward.25} parent=35 // loop_footer
                %s223 = sadd.s32 1, %s219
              $region42: #{resnet_forward.25} parent=35 // loop_footer_branch
                %218 = sbr.rel target = $region38
              $region43: #{resnet_forward.25} parent=35 // loop_exit
                _
            $region36: #{resnet_forward.25} parent=27 // pred_fallthru
              _
          $region28: #{resnet_forward.25} parent=23 // pred_fallthru
            _
          %430 = vnop
        $region24: #{resnet_forward.25} parent=15 // pred_fallthru
          _
        // Predicated region
        $region59: #{resnet_forward.25} parent=15 // pred_check
          %p431 = pneg %p105
        $region60: #{resnet_forward.25} parent=15 // pred_check_branch
          %433 = sbr.rel (%p431) target = $region62
        $region61: #{resnet_forward.25} parent=15 // pred_region
          %s434 = smul.u32 2, %s18
          %p435 = scmp.lt.s32.totalorder %s434, 3
          %s436 = scalar_select %p435, %s434, 3
          %s437 = scalar_lea.vmem %s2, %s436
          %s438 = smul.u32 2, %s18
        $region62: #{resnet_forward.25} parent=15 // pred_fallthru
          _
        // Predicated region
        $region63: #{resnet_forward.25} parent=15 // pred_check
          %p439 = pneg %p131
        $region64: #{resnet_forward.25} parent=15 // pred_check_branch
          %441 = sbr.rel (%p439) target = $region66
        $region65: #{resnet_forward.25} parent=15 // pred_region
          %s442 = smul.u32 2, %s18
          %p443 = scmp.lt.s32.totalorder %s442, 3
          %s444 = scalar_select %p443, %s442, 3
          %s445 = scalar_lea.vmem %s3, %s444
          %s446 = smul.u32 2, %s18
        $region66: #{resnet_forward.25} parent=15 // pred_fallthru
          _
      $region16: #{resnet_forward.25} parent=5 // pred_fallthru
        _
      %p447 = scmp.le.s32.totalorder 1, %s10
      %p448 = scmp.lt.s32.totalorder %s10, 13
      %p449 = pnand %p447, %p448
      %p450 = pneg %p449
      // Predicated region
      $region67: #{resnet_forward.25} parent=5 // pred_check
        _
      $region68: #{resnet_forward.25} parent=5 // pred_check_branch
        %452 = sbr.rel (%p449) target = $region70
      $region69: #{resnet_forward.25} parent=5 // pred_region
        %s453 = ssub.s32 %s10, 1
        %s454 = sand.u32 %s72, 1
        %s455 = sand.u32 %s72, 1
        %s456 = smul.addr %s455, 384
        %s457 = scalar_lea.vmem [#allocation3], %s456
        // Predicated region
        $region71: #{resnet_forward.25} parent=69 // pred_check
          %p458 = pneg %p85
        $region72: #{resnet_forward.25} parent=69 // pred_check_branch
          %460 = sbr.rel (%p458) target = $region74
        $region73: #{resnet_forward.25} parent=69 // pred_region
          _
        $region74: #{resnet_forward.25} parent=69 // pred_fallthru
          _
        %s461 = smul.u32 3, %s22
        %p462 = scmp.lt.s32.totalorder %s20, 0
        %s463 = scalar_select %p462, %s20, 0
        %p464 = scmp.lt.s32.totalorder %s461, 17
        %s465 = scalar_select %p464, %s461, 17
        %s466 = smul.addr %s463, 18
        %s467 = sadd.s32 %s465, %s466
        %s468 = smul.addr %s467, 4
        %s469 = scalar_lea.vmem %s0, %s468
        %p470 = pneg %p57
        %p471 = pneg %p54
        %s472 = sand.u32 %s72, 1
        %s473 = sand.u32 %s72, 1
        %s474 = smul.addr %s473, 384
        %s475 = scalar_lea.vmem [#allocation3], %s474
        %p476 = pneg %p85
        %p477 = pneg %p82
        %s478 = smul.u32 2, %s21
        %p479 = scmp.lt.s32.totalorder %s478, 3
        %s480 = scalar_select %p479, %s478, 3
        %s481 = scalar_lea.vmem %s2, %s480
        %p482 = pneg %p111
        %p483 = pneg %p108
        %s484 = smul.u32 2, %s21
        %p485 = scmp.lt.s32.totalorder %s484, 3
        %s486 = scalar_select %p485, %s484, 3
        %s487 = scalar_lea.vmem %s3, %s486
        %p488 = pneg %p137
        %p489 = pneg %p134
        %p490 = pneg %p165
        %p491 = pneg %p162
        %s492 = smul.u32 2, %s21
        %p493 = scmp.lt.s32.totalorder %s20, 0
        %s494 = scalar_select %p493, %s20, 0
        %p495 = scmp.lt.s32.totalorder %s492, 3
        %s496 = scalar_select %p495, %s492, 3
        %s497 = smul.addr %s494, 4
        %s498 = sadd.s32 %s496, %s497
        %s499 = smul.addr %s498, 4
        %s500 = scalar_lea.vmem %s4, %s499
        %s501 = smul.u32 3, %s22
        %p502 = scmp.lt.s32.totalorder %s20, 0
        %s503 = scalar_select %p502, %s20, 0
        %p504 = scmp.lt.s32.totalorder %s501, 17
        %s505 = scalar_select %p504, %s501, 17
        %s506 = smul.addr %s503, 18
        %s507 = sadd.s32 %s505, %s506
        %s508 = smul.addr %s507, 4
        %s509 = scalar_lea.vmem %s0, %s508
        %s510 = smul.u32 3, %s22
        %s511 = smul.u32 48, %s22
        %s512 = smul.u32 2, %s21
        %s513 = smul.u32 2, %s21
        %p514 = scmp.lt.s32.totalorder %s513, 3
        %s515 = scalar_select %p514, %s513, 3
        %s516 = scalar_lea.vmem %s2, %s515
        %s517 = smul.u32 2, %s21
        %s518 = smul.u32 2, %s21
        %p519 = scmp.lt.s32.totalorder %s518, 3
        %s520 = scalar_select %p519, %s518, 3
        %s521 = scalar_lea.vmem %s3, %s520
        %s522 = smul.u32 2, %s21
        %s523 = smul.u32 2, %s21
        %p524 = scmp.lt.s32.totalorder %s20, 0
        %s525 = scalar_select %p524, %s20, 0
        %p526 = scmp.lt.s32.totalorder %s523, 3
        %s527 = scalar_select %p526, %s523, 3
        %s528 = smul.addr %s525, 4
        %s529 = sadd.s32 %s527, %s528
        %s530 = smul.addr %s529, 4
        %s531 = scalar_lea.vmem %s4, %s530
        %s532 = smul.u32 2, %s21
        %p533 = scmp.eq.s32.totalorder %s22, 0
        // Predicated region
        $region75: #{resnet_forward.25} parent=69 // pred_check
          %p534 = pneg %p533
        $region76: #{resnet_forward.25} parent=69 // pred_check_branch
          %536 = sbr.rel (%p534) target = $region78
        $region77: #{resnet_forward.25} parent=69 // pred_region
          %537 = vst [vmem:[#allocation2] sm:$0xff] 0.0
          %538 = vst [vmem:[#allocation2 + $0x8] sm:$0xff] 0.0
        $region78: #{resnet_forward.25} parent=69 // pred_fallthru
          _
        %v539 = vld [vmem:[#allocation2] sm:$0xff]
        %v540 = vld [vmem:[#allocation2 + $0x8] sm:$0xff]
        %v541 = vld [vmem:[%s509] sm:$0xff]
        %v542 = vld [vmem:[%s509 + $0x8] sm:$0xf]
        %v543 = vld [vmem:[%s457] sm:$0xff]
        %v544 = vld [vmem:[%s457 + $0x8] sm:$0xff]
        %v545 = vld [vmem:[%s457 + $0x10] sm:$0xff]
        %v546 = vld [vmem:[%s457 + $0x18] sm:$0xff]
        %v547 = vld [vmem:[%s457 + $0x20] sm:$0xff]
        %v548 = vld [vmem:[%s457 + $0x28] sm:$0xff]
        %v549 = vld [vmem:[%s457 + $0x30] sm:$0xff]
        %v550 = vld [vmem:[%s457 + $0x38] sm:$0xff]
        %v551 = vld [vmem:[%s457 + $0x40] sm:$0xff]
        %v552 = vld [vmem:[%s457 + $0x48] sm:$0xff]
        %v553 = vld [vmem:[%s457 + $0x50] sm:$0xff]
        %v554 = vld [vmem:[%s457 + $0x58] sm:$0xff]
        %v555 = vld [vmem:[%s457 + $0x60] sm:$0xff]
        %v556 = vld [vmem:[%s457 + $0x68] sm:$0xff]
        %v557 = vld [vmem:[%s457 + $0x70] sm:$0xff]
        %v558 = vld [vmem:[%s457 + $0x78] sm:$0xff]
        %v559 = vld [vmem:[%s457 + $0x80] sm:$0xff]
        %v560 = vld [vmem:[%s457 + $0x88] sm:$0xff]
        %v561 = vld [vmem:[%s457 + $0x90] sm:$0xff]
        %v562 = vld [vmem:[%s457 + $0x98] sm:$0xff]
        %v563 = vld [vmem:[%s457 + $0xa0] sm:$0xff]
        %v564 = vld [vmem:[%s457 + $0xa8] sm:$0xff]
        %v565 = vld [vmem:[%s457 + $0xb0] sm:$0xff]
        %v566 = vld [vmem:[%s457 + $0xb8] sm:$0xff]
        %v567 = vld [vmem:[%s457 + $0xc0] sm:$0xff]
        %v568 = vld [vmem:[%s457 + $0xc8] sm:$0xff]
        %v569 = vld [vmem:[%s457 + $0xd0] sm:$0xff]
        %v570 = vld [vmem:[%s457 + $0xd8] sm:$0xff]
        %v571 = vld [vmem:[%s457 + $0xe0] sm:$0xff]
        %v572 = vld [vmem:[%s457 + $0xe8] sm:$0xff]
        %v573 = vld [vmem:[%s457 + $0xf0] sm:$0xff]
        %v574 = vld [vmem:[%s457 + $0xf8] sm:$0xff]
        %v575 = vld [vmem:[%s457 + $0x100] sm:$0xff]
        %v576 = vld [vmem:[%s457 + $0x108] sm:$0xff]
        %v577 = vld [vmem:[%s457 + $0x110] sm:$0xff]
        %v578 = vld [vmem:[%s457 + $0x118] sm:$0xff]
        %v579 = vld [vmem:[%s457 + $0x120] sm:$0xff]
        %v580 = vld [vmem:[%s457 + $0x128] sm:$0xff]
        %v581 = vld [vmem:[%s457 + $0x130] sm:$0xff]
        %v582 = vld [vmem:[%s457 + $0x138] sm:$0xff]
        %v583 = vld [vmem:[%s457 + $0x140] sm:$0xff]
        %v584 = vld [vmem:[%s457 + $0x148] sm:$0xff]
        %v585 = vld [vmem:[%s457 + $0x150] sm:$0xff]
        %v586 = vld [vmem:[%s457 + $0x158] sm:$0xff]
        %v587 = vld [vmem:[%s457 + $0x160] sm:$0xff]
        %v588 = vld [vmem:[%s457 + $0x168] sm:$0xff]
        %v589 = vld [vmem:[%s457 + $0x170] sm:$0xff]
        %v590 = vld [vmem:[%s457 + $0x178] sm:$0xff]
        %v593 = vunpack.c.l.b16 %v541
        %v594 = vunpack.c.h.b16 %v541
        %v595 = vunpack.c.l.b16 %v542
        %v596 = vpack.c.b16 %v593, %v593
        %v597 = vpack.c.b16 %v594, %v594
        %v598 = vpack.c.b16 %v595, %v595
        %v650 = vunpack.c.l.b16 %v543
        %v651 = vunpack.c.h.b16 %v543
        %v652 = vunpack.c.l.b16 %v544
        %v653 = vunpack.c.h.b16 %v544
        %v654 = vunpack.c.l.b16 %v545
        %v655 = vunpack.c.h.b16 %v545
        %v656 = vunpack.c.l.b16 %v546
        %v657 = vunpack.c.h.b16 %v546
        %v658 = vunpack.c.l.b16 %v547
        %v659 = vunpack.c.h.b16 %v547
        %v660 = vunpack.c.l.b16 %v548
        %v661 = vunpack.c.h.b16 %v548
        %v662 = vunpack.c.l.b16 %v549
        %v663 = vunpack.c.h.b16 %v549
        %v664 = vunpack.c.l.b16 %v550
        %v665 = vunpack.c.h.b16 %v550
        %v666 = vunpack.c.l.b16 %v551
        %v667 = vunpack.c.h.b16 %v551
        %v668 = vunpack.c.l.b16 %v552
        %v669 = vunpack.c.h.b16 %v552
        %v670 = vunpack.c.l.b16 %v553
        %v671 = vunpack.c.h.b16 %v553
        %v672 = vunpack.c.l.b16 %v554
        %v673 = vunpack.c.h.b16 %v554
        %v674 = vunpack.c.l.b16 %v555
        %v675 = vunpack.c.h.b16 %v555
        %v676 = vunpack.c.l.b16 %v556
        %v677 = vunpack.c.h.b16 %v556
        %v678 = vunpack.c.l.b16 %v557
        %v679 = vunpack.c.h.b16 %v557
        %v680 = vunpack.c.l.b16 %v558
        %v681 = vunpack.c.h.b16 %v558
        %v682 = vunpack.c.l.b16 %v559
        %v683 = vunpack.c.h.b16 %v559
        %v684 = vunpack.c.l.b16 %v560
        %v685 = vunpack.c.h.b16 %v560
        %v686 = vunpack.c.l.b16 %v561
        %v687 = vunpack.c.h.b16 %v561
        %v688 = vunpack.c.l.b16 %v562
        %v689 = vunpack.c.h.b16 %v562
        %v690 = vunpack.c.l.b16 %v563
        %v691 = vunpack.c.h.b16 %v563
        %v692 = vunpack.c.l.b16 %v564
        %v693 = vunpack.c.h.b16 %v564
        %v694 = vunpack.c.l.b16 %v565
        %v695 = vunpack.c.h.b16 %v565
        %v696 = vunpack.c.l.b16 %v566
        %v697 = vunpack.c.h.b16 %v566
        %v698 = vunpack.c.l.b16 %v567
        %v699 = vunpack.c.h.b16 %v567
        %v700 = vunpack.c.l.b16 %v568
        %v701 = vunpack.c.h.b16 %v568
        %v702 = vunpack.c.l.b16 %v569
        %v703 = vunpack.c.h.b16 %v569
        %v704 = vunpack.c.l.b16 %v570
        %v705 = vunpack.c.h.b16 %v570
        %v706 = vunpack.c.l.b16 %v571
        %v707 = vunpack.c.h.b16 %v571
        %v708 = vunpack.c.l.b16 %v572
        %v709 = vunpack.c.h.b16 %v572
        %v710 = vunpack.c.l.b16 %v573
        %v711 = vunpack.c.h.b16 %v573
        %v712 = vunpack.c.l.b16 %v574
        %v713 = vunpack.c.h.b16 %v574
        %v714 = vunpack.c.l.b16 %v575
        %v715 = vunpack.c.h.b16 %v575
        %v716 = vunpack.c.l.b16 %v576
        %v717 = vunpack.c.h.b16 %v576
        %v718 = vunpack.c.l.b16 %v577
        %v719 = vunpack.c.h.b16 %v577
        %v720 = vunpack.c.l.b16 %v578
        %v721 = vunpack.c.h.b16 %v578
        %v722 = vunpack.c.l.b16 %v579
        %v723 = vunpack.c.h.b16 %v579
        %v724 = vunpack.c.l.b16 %v580
        %v725 = vunpack.c.h.b16 %v580
        %v726 = vunpack.c.l.b16 %v581
        %v727 = vunpack.c.h.b16 %v581
        %v728 = vunpack.c.l.b16 %v582
        %v729 = vunpack.c.h.b16 %v582
        %v730 = vunpack.c.l.b16 %v583
        %v731 = vunpack.c.h.b16 %v583
        %v732 = vunpack.c.l.b16 %v584
        %v733 = vunpack.c.h.b16 %v584
        %v734 = vunpack.c.l.b16 %v585
        %v735 = vunpack.c.h.b16 %v585
        %v736 = vunpack.c.l.b16 %v586
        %v737 = vunpack.c.h.b16 %v586
        %v738 = vunpack.c.l.b16 %v587
        %v739 = vunpack.c.h.b16 %v587
        %v740 = vunpack.c.l.b16 %v588
        %v741 = vunpack.c.h.b16 %v588
        %v742 = vunpack.c.l.b16 %v589
        %v743 = vunpack.c.h.b16 %v589
        %v744 = vunpack.c.l.b16 %v590
        %v745 = vunpack.c.h.b16 %v590
        %v746 = vpack.c.b16 %v652, %v650
        %v747 = vpack.c.b16 %v653, %v651
        %v748 = vpack.c.b16 %v656, %v654
        %v749 = vpack.c.b16 %v657, %v655
        %v750 = vpack.c.b16 %v660, %v658
        %v751 = vpack.c.b16 %v661, %v659
        %v752 = vpack.c.b16 %v664, %v662
        %v753 = vpack.c.b16 %v665, %v663
        %v754 = vpack.c.b16 %v668, %v666
        %v755 = vpack.c.b16 %v669, %v667
        %v756 = vpack.c.b16 %v672, %v670
        %v757 = vpack.c.b16 %v673, %v671
        %v758 = vpack.c.b16 %v676, %v674
        %v759 = vpack.c.b16 %v677, %v675
        %v760 = vpack.c.b16 %v680, %v678
        %v761 = vpack.c.b16 %v681, %v679
        %v762 = vpack.c.b16 %v684, %v682
        %v763 = vpack.c.b16 %v685, %v683
        %v764 = vpack.c.b16 %v688, %v686
        %v765 = vpack.c.b16 %v689, %v687
        %v766 = vpack.c.b16 %v692, %v690
        %v767 = vpack.c.b16 %v693, %v691
        %v768 = vpack.c.b16 %v696, %v694
        %v769 = vpack.c.b16 %v697, %v695
        %v770 = vpack.c.b16 %v700, %v698
        %v771 = vpack.c.b16 %v701, %v699
        %v772 = vpack.c.b16 %v704, %v702
        %v773 = vpack.c.b16 %v705, %v703
        %v774 = vpack.c.b16 %v708, %v706
        %v775 = vpack.c.b16 %v709, %v707
        %v776 = vpack.c.b16 %v712, %v710
        %v777 = vpack.c.b16 %v713, %v711
        %v778 = vpack.c.b16 %v716, %v714
        %v779 = vpack.c.b16 %v717, %v715
        %v780 = vpack.c.b16 %v720, %v718
        %v781 = vpack.c.b16 %v721, %v719
        %v782 = vpack.c.b16 %v724, %v722
        %v783 = vpack.c.b16 %v725, %v723
        %v784 = vpack.c.b16 %v728, %v726
        %v785 = vpack.c.b16 %v729, %v727
        %v786 = vpack.c.b16 %v732, %v730
        %v787 = vpack.c.b16 %v733, %v731
        %v788 = vpack.c.b16 %v736, %v734
        %v789 = vpack.c.b16 %v737, %v735
        %v790 = vpack.c.b16 %v740, %v738
        %v791 = vpack.c.b16 %v741, %v739
        %v792 = vpack.c.b16 %v744, %v742
        %v793 = vpack.c.b16 %v745, %v743
        %842 = vmatpush.bf16.msra.mxu0 %v760
        %843 = vmatpush.bf16.msra.mxu0 %v758
        %844 = vmatpush.bf16.msra.mxu0 %v756
        %845 = vmatpush.bf16.msra.mxu0 %v754
        %846 = vmatpush.bf16.msra.mxu0 %v752
        %847 = vmatpush.bf16.msra.mxu0 %v750
        %848 = vmatpush.bf16.msra.mxu0 %v748
        %849 = vmatpush.bf16.msra.mxu0 %v746
        %850 = vmatmul.bf16.gmra.mxu0 %v596
        %v851 = vpop.f32.mrf.mxu0
        %v852 = vadd.f32 0.0, %v851
        %v853 = vpop.f32.mrf.mxu0
        %854 = vdwg.mxu0
        %855 = vmatpush.bf16.msra.mxu0 %v776
        %856 = vmatpush.bf16.msra.mxu0 %v774
        %857 = vmatpush.bf16.msra.mxu0 %v772
        %858 = vmatpush.bf16.msra.mxu0 %v770
        %859 = vmatpush.bf16.msra.mxu0 %v768
        %860 = vmatpush.bf16.msra.mxu0 %v766
        %861 = vmatpush.bf16.msra.mxu0 %v764
        %862 = vmatpush.bf16.msra.mxu0 %v762
        %863 = vmatmul.bf16.gmra.mxu0 %v597
        %v864 = vpop.f32.mrf.mxu0
        %v865 = vadd.f32 %v852, %v864
        %v866 = vpop.f32.mrf.mxu0
        %867 = vdwg.mxu0
        %868 = vmatpush.bf16.msra.mxu0 %v792
        %869 = vmatpush.bf16.msra.mxu0 %v790
        %870 = vmatpush.bf16.msra.mxu0 %v788
        %871 = vmatpush.bf16.msra.mxu0 %v786
        %872 = vmatpush.bf16.msra.mxu0 %v784
        %873 = vmatpush.bf16.msra.mxu0 %v782
        %874 = vmatpush.bf16.msra.mxu0 %v780
        %875 = vmatpush.bf16.msra.mxu0 %v778
        %876 = vmatmul.bf16.gmra.mxu0 %v598
        %v877 = vpop.f32.mrf.mxu0
        %v878 = vadd.f32 %v865, %v877
        %v879 = vpop.f32.mrf.mxu0
        %880 = vdwg.mxu0
        %881 = vmatpush.bf16.msra.mxu0 %v761
        %882 = vmatpush.bf16.msra.mxu0 %v759
        %883 = vmatpush.bf16.msra.mxu0 %v757
        %884 = vmatpush.bf16.msra.mxu0 %v755
        %885 = vmatpush.bf16.msra.mxu0 %v753
        %886 = vmatpush.bf16.msra.mxu0 %v751
        %887 = vmatpush.bf16.msra.mxu0 %v749
        %888 = vmatpush.bf16.msra.mxu0 %v747
        %889 = vmatmul.bf16.gmra.mxu0 %v596
        %v890 = vpop.f32.mrf.mxu0
        %v891 = vadd.f32 0.0, %v890
        %v892 = vpop.f32.mrf.mxu0
        %893 = vdwg.mxu0
        %894 = vmatpush.bf16.msra.mxu0 %v777
        %895 = vmatpush.bf16.msra.mxu0 %v775
        %896 = vmatpush.bf16.msra.mxu0 %v773
        %897 = vmatpush.bf16.msra.mxu0 %v771
        %898 = vmatpush.bf16.msra.mxu0 %v769
        %899 = vmatpush.bf16.msra.mxu0 %v767
        %900 = vmatpush.bf16.msra.mxu0 %v765
        %901 = vmatpush.bf16.msra.mxu0 %v763
        %902 = vmatmul.bf16.gmra.mxu0 %v597
        %v903 = vpop.f32.mrf.mxu0
        %v904 = vadd.f32 %v891, %v903
        %v905 = vpop.f32.mrf.mxu0
        %906 = vdwg.mxu0
        %907 = vmatpush.bf16.msra.mxu0 %v793
        %908 = vmatpush.bf16.msra.mxu0 %v791
        %909 = vmatpush.bf16.msra.mxu0 %v789
        %910 = vmatpush.bf16.msra.mxu0 %v787
        %911 = vmatpush.bf16.msra.mxu0 %v785
        %912 = vmatpush.bf16.msra.mxu0 %v783
        %913 = vmatpush.bf16.msra.mxu0 %v781
        %914 = vmatpush.bf16.msra.mxu0 %v779
        %915 = vmatmul.bf16.gmra.mxu0 %v598
        %v916 = vpop.f32.mrf.mxu0
        %v917 = vadd.f32 %v904, %v916
        %v918 = vpop.f32.mrf.mxu0
        %919 = vdwg.mxu0
        %v920 = vadd.f32 %v539, %v878
        %v921 = vadd.f32 %v540, %v917
        %922 = vst [vmem:[#allocation2] sm:$0xff] %v920
        %923 = vst [vmem:[#allocation2 + $0x8] sm:$0xff] %v921
        %p924 = scmp.eq.s32.totalorder %s22, 5
        // Predicated region
        $region79: #{resnet_forward.25} parent=69 // pred_check
          %p925 = pneg %p924
        $region80: #{resnet_forward.25} parent=69 // pred_check_branch
          %927 = sbr.rel (%p925) target = $region82
        $region81: #{resnet_forward.25} parent=69 // pred_region
          %v928 = vld [vmem:[#allocation2] sm:$0xff]
          %v929 = vld [vmem:[#allocation2 + $0x8] sm:$0xff]
          %v930 = vld [vmem:[%s516] sm:$0x3]
          %v932 = vperm.slane %v930, 0
          %v933 = vperm.slane %v930, 1
          %v936 = vmul.f32 %v928, %v932
          %v937 = vmul.f32 %v929, %v933
          %v938 = vld [vmem:[%s521] sm:$0x3]
          %v940 = vperm.slane %v938, 0
          %v941 = vperm.slane %v938, 1
          %v944 = vadd.f32 %v936, %v940
          %v945 = vadd.f32 %v937, %v941
          %v946 = vmax.f32 %v944, 0.0
          %v947 = vmax.f32 %v945, 0.0
          %v948 = vpack.c.bf16 %v947, %v946
          %949 = vst [vmem:[%s531] sm:$0xff] %v948
        $region82: #{resnet_forward.25} parent=69 // pred_fallthru
          _
        %s950 = smul.u32 2, %s21
        %p951 = scmp.lt.s32.totalorder %s20, 0
        %s952 = scalar_select %p951, %s20, 0
        %p953 = scmp.lt.s32.totalorder %s950, 3
        %s954 = scalar_select %p953, %s950, 3
        %s955 = smul.addr %s952, 4
        %s956 = sadd.s32 %s954, %s955
        %s957 = smul.addr %s956, 4
        %s958 = scalar_lea.vmem %s4, %s957
        // Predicated region
        $region83: #{resnet_forward.25} parent=69 // pred_check
          %p959 = pneg %p162
        $region84: #{resnet_forward.25} parent=69 // pred_check_branch
          %961 = sbr.rel (%p959) target = $region86
        $region85: #{resnet_forward.25} parent=69 // pred_region
          %s962 = smul.u32 2, %s21
        $region86: #{resnet_forward.25} parent=69 // pred_fallthru
          _
      $region70: #{resnet_forward.25} parent=5 // pred_fallthru
        _
      %p963 = scmp.le.s32.totalorder 2, %s10
      // Predicated region
      $region87: #{resnet_forward.25} parent=5 // pred_check
        %p964 = pneg %p963
      $region88: #{resnet_forward.25} parent=5 // pred_check_branch
        %966 = sbr.rel (%p964) target = $region90
      $region89: #{resnet_forward.25} parent=5 // pred_region
        %s967 = ssub.s32 %s10, 2
        // Predicated region
        $region91: #{resnet_forward.25} parent=89 // pred_check
          %p968 = pneg %p168
        $region92: #{resnet_forward.25} parent=89 // pred_check_branch
          %970 = sbr.rel (%p968) target = $region94
        $region93: #{resnet_forward.25} parent=89 // pred_region
          %s971 = smul.u32 2, %s24
          %p972 = scmp.lt.s32.totalorder %s23, 0
          %s973 = scalar_select %p972, %s23, 0
          %p974 = scmp.lt.s32.totalorder %s971, 3
          %s975 = scalar_select %p974, %s971, 3
          %s976 = smul.addr %s973, 4
          %s977 = sadd.s32 %s975, %s976
          %s978 = smul.addr %s977, 4
          %s979 = scalar_lea.vmem %s4, %s978
        $region94: #{resnet_forward.25} parent=89 // pred_fallthru
          _
      $region90: #{resnet_forward.25} parent=5 // pred_fallthru
        _
    $region6: #{resnet_forward.25} parent=1 // loop_footer
      %s14 = sadd.s32 1, %s10
    $region7: #{resnet_forward.25} parent=1 // loop_footer_branch
      %9 = sbr.rel target = $region3
    $region8: #{resnet_forward.25} parent=1 // loop_exit
      _

// kernel: resnet_forward.24
$region0: #{resnet_forward.24}
  #allocation0 [shape = 'u32[]', space=smem, size = 0x4, offset = 0x4, fixed_abs, tag = 'smem constant byte address 0x4 - core index']
  #allocation1 [shape = 'u32[72,128]{1,0:T(1,128)}', space=vmem, size = 0x9000, scoped, tag = 'internal scratch']
  #allocation2 [shape = 'f32[8,256]{1,0:T(8,128)}', space=vmem, size = 0x2000, scoped, tag = 'scratch operand']
  %s0 = inlined_call_operand.vmem [shape: bf16[8,256], index: 0, kind: input, shape index: {}]
  %s1 = inlined_call_operand.vmem [shape: bf16[256,512], index: 1, kind: input, shape index: {}]
  %s2 = inlined_call_operand.vmem [shape: f32[1,512], index: 2, kind: input, shape index: {}]
  %s3 = inlined_call_operand.vmem [shape: f32[1,512], index: 3, kind: input, shape index: {}]
  %s4 = inlined_call_operand.vmem [shape: bf16[8,512], index: 4, kind: output, shape index: {}]
  %s5 = sld [smem:[#allocation0]]
  $region95: #{resnet_forward.24} parent=0
    _
  %s7 = ssub.s32 1, %s5
  %s8 = scalar_select 0, %s7, %s5
  $region1: #{resnet_forward.24} parent=0
    #allocation3 [shape = 'u8[262144]{0}', space=vmem, size = 0x40000, scoped, tag = 'input window, operand 1']
    loop: start=0, step=1, limit=4
    $region2: #{resnet_forward.24} parent=1 // loop_pre_header
      _
    $region3: #{resnet_forward.24} parent=1 // loop_header
      %s10 = sphi 0, %s14
      %p11 = scmp.ge.s32.totalorder %s10, 4
      %s17 = sphi 0, %s36
      %s18 = sphi 0, %s32
      %s19 = sphi 0, %s28
      %s20 = sphi 0, %s17
      %s21 = sphi 0, %s18
      %s22 = sphi 0, %s19
      %s23 = sphi 0, %s20
      %s24 = sphi 0, %s21
      %s25 = sphi 0, %s22
      %s41 = sphi 0, %s43
      %s44 = sphi 0, %s41
      %s45 = sphi 0, %s44
      %s61 = sphi 0, %s45
      %s69 = sphi 0, %s71
      %s72 = sphi 0, %s69
      %s73 = sphi 0, %s72
      %s89 = sphi 0, %s73
      %s95 = sphi 0, %s97
      %s98 = sphi 0, %s95
      %s99 = sphi 0, %s98
      %s115 = sphi 0, %s99
      %s121 = sphi 0, %s123
      %s124 = sphi 0, %s121
      %s125 = sphi 0, %s124
      %s141 = sphi 0, %s125
      %s149 = sphi 0, %s151
      %s152 = sphi 0, %s149
      %s153 = sphi 0, %s152
      %s169 = sphi 0, %s153
    $region4: #{resnet_forward.24} parent=1 // loop_header_branch
      %13 = sbr.rel (%p11) target = $region8
    $region5: #{resnet_forward.24} parent=1 // loop_body
      %s15 = ssub.s32 %s10, 1
      %s16 = ssub.s32 %s10, 2
      %s26 = sadd.s32 1, %s19
      %p27 = scmp.ge.s32.totalorder %s26, 1
      %s28 = scalar_select %p27, 0, %s26
      %s29 = sadd.s32 1, %s18
      %s30 = scalar_select %p27, %s29, %s18
      %p31 = scmp.ge.s32.totalorder %s30, 2
      %s32 = scalar_select %p31, 0, %s30
      %s33 = sadd.s32 1, %s17
      %s34 = scalar_select %p31, %s33, %s17
      %p35 = scmp.ge.s32.totalorder %s34, 1
      %s36 = scalar_select %p35, 0, %s34
      %s37 = ssub.s32 %s17, %s36
      %s38 = ssub.s32 %s19, %s28
      %s39 = sor.u32 %s37, %s38
      %p40 = scmp.eq.s32.totalorder %s39, 0
      %s42 = sadd.s32 %s41, 1
      %s43 = scalar_select %p40, %s41, %s42
      %p46 = pneg %p40
      %p47 = scmp.eq.s32.totalorder %s10, 1
      %p48 = por %p46, %p47
      %p49 = scmp.ne.s32.totalorder %s41, %s44
      %p50 = scmp.eq.s32.totalorder %s10, 0
      %p51 = por %p49, %p50
      %p52 = scmp.ne.s32.totalorder %s41, %s44
      %p53 = scmp.eq.s32.totalorder %s15, 1
      %p54 = por %p52, %p53
      %p55 = scmp.ne.s32.totalorder %s44, %s45
      %p56 = scmp.eq.s32.totalorder %s15, 0
      %p57 = por %p55, %p56
      %p58 = scmp.ne.s32.totalorder %s44, %s45
      %p59 = scmp.eq.s32.totalorder %s16, 1
      %p60 = por %p58, %p59
      %p62 = scmp.ne.s32.totalorder %s45, %s61
      %p63 = scmp.eq.s32.totalorder %s16, 0
      %p64 = por %p62, %p63
      %s65 = ssub.s32 %s19, %s28
      %s66 = ssub.s32 %s18, %s32
      %s67 = sor.u32 %s65, %s66
      %p68 = scmp.eq.s32.totalorder %s67, 0
      %s70 = sadd.s32 %s69, 1
      %s71 = scalar_select %p68, %s69, %s70
      %p74 = pneg %p68
      %p75 = scmp.eq.s32.totalorder %s10, 1
      %p76 = por %p74, %p75
      %p77 = scmp.ne.s32.totalorder %s69, %s72
      %p78 = scmp.eq.s32.totalorder %s10, 0
      %p79 = por %p77, %p78
      %p80 = scmp.ne.s32.totalorder %s69, %s72
      %p81 = scmp.eq.s32.totalorder %s15, 1
      %p82 = por %p80, %p81
      %p83 = scmp.ne.s32.totalorder %s72, %s73
      %p84 = scmp.eq.s32.totalorder %s15, 0
      %p85 = por %p83, %p84
      %p86 = scmp.ne.s32.totalorder %s72, %s73
      %p87 = scmp.eq.s32.totalorder %s16, 1
      %p88 = por %p86, %p87
      %p90 = scmp.ne.s32.totalorder %s73, %s89
      %p91 = scmp.eq.s32.totalorder %s16, 0
      %p92 = por %p90, %p91
      %s93 = ssub.s32 %s18, %s32
      %p94 = scmp.eq.s32.totalorder %s93, 0
      %s96 = sadd.s32 %s95, 1
      %s97 = scalar_select %p94, %s95, %s96
      %p100 = pneg %p94
      %p101 = scmp.eq.s32.totalorder %s10, 1
      %p102 = por %p100, %p101
      %p103 = scmp.ne.s32.totalorder %s95, %s98
      %p104 = scmp.eq.s32.totalorder %s10, 0
      %p105 = por %p103, %p104
      %p106 = scmp.ne.s32.totalorder %s95, %s98
      %p107 = scmp.eq.s32.totalorder %s15, 1
      %p108 = por %p106, %p107
      %p109 = scmp.ne.s32.totalorder %s98, %s99
      %p110 = scmp.eq.s32.totalorder %s15, 0
      %p111 = por %p109, %p110
      %p112 = scmp.ne.s32.totalorder %s98, %s99
      %p113 = scmp.eq.s32.totalorder %s16, 1
      %p114 = por %p112, %p113
      %p116 = scmp.ne.s32.totalorder %s99, %s115
      %p117 = scmp.eq.s32.totalorder %s16, 0
      %p118 = por %p116, %p117
      %s119 = ssub.s32 %s18, %s32
      %p120 = scmp.eq.s32.totalorder %s119, 0
      %s122 = sadd.s32 %s121, 1
      %s123 = scalar_select %p120, %s121, %s122
      %p126 = pneg %p120
      %p127 = scmp.eq.s32.totalorder %s10, 1
      %p128 = por %p126, %p127
      %p129 = scmp.ne.s32.totalorder %s121, %s124
      %p130 = scmp.eq.s32.totalorder %s10, 0
      %p131 = por %p129, %p130
      %p132 = scmp.ne.s32.totalorder %s121, %s124
      %p133 = scmp.eq.s32.totalorder %s15, 1
      %p134 = por %p132, %p133
      %p135 = scmp.ne.s32.totalorder %s124, %s125
      %p136 = scmp.eq.s32.totalorder %s15, 0
      %p137 = por %p135, %p136
      %p138 = scmp.ne.s32.totalorder %s124, %s125
      %p139 = scmp.eq.s32.totalorder %s16, 1
      %p140 = por %p138, %p139
      %p142 = scmp.ne.s32.totalorder %s125, %s141
      %p143 = scmp.eq.s32.totalorder %s16, 0
      %p144 = por %p142, %p143
      %s145 = ssub.s32 %s17, %s36
      %s146 = ssub.s32 %s18, %s32
      %s147 = sor.u32 %s145, %s146
      %p148 = scmp.eq.s32.totalorder %s147, 0
      %s150 = sadd.s32 %s149, 1
      %s151 = scalar_select %p148, %s149, %s150
      %p154 = pneg %p148
      %p155 = scmp.eq.s32.totalorder %s10, 1
      %p156 = por %p154, %p155
      %p157 = scmp.ne.s32.totalorder %s149, %s152
      %p158 = scmp.eq.s32.totalorder %s10, 0
      %p159 = por %p157, %p158
      %p160 = scmp.ne.s32.totalorder %s149, %s152
      %p161 = scmp.eq.s32.totalorder %s15, 1
      %p162 = por %p160, %p161
      %p163 = scmp.ne.s32.totalorder %s152, %s153
      %p164 = scmp.eq.s32.totalorder %s15, 0
      %p165 = por %p163, %p164
      %p166 = scmp.ne.s32.totalorder %s152, %s153
      %p167 = scmp.eq.s32.totalorder %s16, 1
      %p168 = por %p166, %p167
      %p170 = scmp.ne.s32.totalorder %s153, %s169
      %p171 = scmp.eq.s32.totalorder %s16, 0
      %p172 = por %p170, %p171
      %p173 = scmp.le.s32.totalorder 1, %s10
      %p174 = scmp.lt.s32.totalorder %s10, 3
      %p175 = pnand %p173, %p174
      %p176 = pneg %p175
      // Predicated region
      $region9: #{resnet_forward.24} parent=5 // pred_check
        _
      $region10: #{resnet_forward.24} parent=5 // pred_check_branch
        %178 = sbr.rel (%p175) target = $region12
      $region11: #{resnet_forward.24} parent=5 // pred_region
        %s179 = ssub.s32 %s10, 1
        // Predicated region
        $region13: #{resnet_forward.24} parent=11 // pred_check
          %p180 = pneg %p57
        $region14: #{resnet_forward.24} parent=11 // pred_check_branch
          %182 = sbr.rel (%p180) target = $region16
        $region15: #{resnet_forward.24} parent=11 // pred_region
          %s183 = smul.u32 2, %s22
          %p184 = scmp.lt.s32.totalorder %s20, 0
          %s185 = scalar_select %p184, %s20, 0
          %p186 = scmp.lt.s32.totalorder %s183, 1
          %s187 = scalar_select %p186, %s183, 1
          %s188 = smul.addr %s185, 2
          %s189 = sadd.s32 %s187, %s188
          %s190 = smul.addr %s189, 4
          %s191 = scalar_lea.vmem %s0, %s190
          %s192 = smul.u32 2, %s22
        $region16: #{resnet_forward.24} parent=11 // pred_fallthru
          _
      $region12: #{resnet_forward.24} parent=5 // pred_fallthru
        _
      %p193 = scmp.lt.s32.totalorder %s10, 2
      // Predicated region
      $region17: #{resnet_forward.24} parent=5 // pred_check
        %p194 = pneg %p193
      $region18: #{resnet_forward.24} parent=5 // pred_check_branch
        %196 = sbr.rel (%p194) target = $region20
      $region19: #{resnet_forward.24} parent=5 // pred_region
        // Predicated region
        $region21: #{resnet_forward.24} parent=19 // pred_check
          %p197 = pneg %p79
        $region22: #{resnet_forward.24} parent=19 // pred_check_branch
          %199 = sbr.rel (%p197) target = $region24
        $region23: #{resnet_forward.24} parent=19 // pred_region
          %s200 = sand.u32 %s69, 1
          %s201 = sand.u32 %s69, 1
          %s202 = smul.addr %s201, 256
          %s203 = scalar_lea.vmem [#allocation3], %s202
          %s204 = smul.u32 32, %s19
          %s205 = smul.u32 2, %s18
          %s206 = smul.addr %s204, 4
          %s207 = sadd.s32 %s205, %s206
          %s208 = smul.addr %s207, 4
          %s209 = scalar_lea.vmem %s1, %s208
          // Predicated region
          $region25: #{resnet_forward.24} parent=23 // pred_check
            _
          $region26: #{resnet_forward.24} parent=23 // pred_check_branch
            %211 = sbr.rel (0) target = $region28
          $region27: #{resnet_forward.24} parent=23 // pred_region
            // Predicated region
            $region29: #{resnet_forward.24} parent=27 // pred_check
              _
            $region30: #{resnet_forward.24} parent=27 // pred_check_branch
              %213 = sbr.rel (0) target = $region32
            $region31: #{resnet_forward.24} parent=27 // pred_region
              // Predicated region
              $region44: #{resnet_forward.24} parent=31 // pred_check
                _
              $region45: #{resnet_forward.24} parent=31 // pred_check_branch
                %291 = sbr.rel (0) target = $region47
              $region46: #{resnet_forward.24} parent=31 // pred_region
                loop: start=0, step=1, limit=1
                $region48: #{resnet_forward.24} parent=46 // loop_pre_header
                  _
                $region49: #{resnet_forward.24} parent=46 // loop_header
                  %s293 = sphi 0, %s297
                  %p294 = scmp.ge.s32.totalorder %s293, 1
                  %s298 = sphi %s209, %s209
                  %s299 = sphi %s203, %s203
                $region50: #{resnet_forward.24} parent=46 // loop_header_branch
                  %296 = sbr.rel (%p294) target = $region54
                $region51: #{resnet_forward.24} parent=46 // loop_body
                  %v300 = vld [vmem:[%s298] sm:$0xff]
                  %301 = vst [vmem:[%s299] sm:$0xff] %v300
                  %v302 = vld [vmem:[%s298 + $0x10] sm:$0xff]
                  %303 = vst [vmem:[%s299 + $0x8] sm:$0xff] %v302
                  %v304 = vld [vmem:[%s298 + $0x20] sm:$0xff]
                  %305 = vst [vmem:[%s299 + $0x10] sm:$0xff] %v304
                  %v306 = vld [vmem:[%s298 + $0x30] sm:$0xff]
                  %307 = vst [vmem:[%s299 + $0x18] sm:$0xff] %v306
                  %v308 = vld [vmem:[%s298 + $0x40] sm:$0xff]
                  %309 = vst [vmem:[%s299 + $0x20] sm:$0xff] %v308
                  %v310 = vld [vmem:[%s298 + $0x50] sm:$0xff]
                  %311 = vst [vmem:[%s299 + $0x28] sm:$0xff] %v310
                  %v312 = vld [vmem:[%s298 + $0x60] sm:$0xff]
                  %313 = vst [vmem:[%s299 + $0x30] sm:$0xff] %v312
                  %v314 = vld [vmem:[%s298 + $0x70] sm:$0xff]
                  %315 = vst [vmem:[%s299 + $0x38] sm:$0xff] %v314
                  %v316 = vld [vmem:[%s298 + $0x80] sm:$0xff]
                  %317 = vst [vmem:[%s299 + $0x40] sm:$0xff] %v316
                  %v318 = vld [vmem:[%s298 + $0x90] sm:$0xff]
                  %319 = vst [vmem:[%s299 + $0x48] sm:$0xff] %v318
                  %v320 = vld [vmem:[%s298 + $0xa0] sm:$0xff]
                  %321 = vst [vmem:[%s299 + $0x50] sm:$0xff] %v320
                  %v322 = vld [vmem:[%s298 + $0xb0] sm:$0xff]
                  %323 = vst [vmem:[%s299 + $0x58] sm:$0xff] %v322
                  %v324 = vld [vmem:[%s298 + $0xc0] sm:$0xff]
                  %325 = vst [vmem:[%s299 + $0x60] sm:$0xff] %v324
                  %v326 = vld [vmem:[%s298 + $0xd0] sm:$0xff]
                  %327 = vst [vmem:[%s299 + $0x68] sm:$0xff] %v326
                  %v328 = vld [vmem:[%s298 + $0xe0] sm:$0xff]
                  %329 = vst [vmem:[%s299 + $0x70] sm:$0xff] %v328
                  %v330 = vld [vmem:[%s298 + $0xf0] sm:$0xff]
                  %331 = vst [vmem:[%s299 + $0x78] sm:$0xff] %v330
                  %v332 = vld [vmem:[%s298 + $0x100] sm:$0xff]
                  %333 = vst [vmem:[%s299 + $0x80] sm:$0xff] %v332
                  %v334 = vld [vmem:[%s298 + $0x110] sm:$0xff]
                  %335 = vst [vmem:[%s299 + $0x88] sm:$0xff] %v334
                  %v336 = vld [vmem:[%s298 + $0x120] sm:$0xff]
                  %337 = vst [vmem:[%s299 + $0x90] sm:$0xff] %v336
                  %v338 = vld [vmem:[%s298 + $0x130] sm:$0xff]
                  %339 = vst [vmem:[%s299 + $0x98] sm:$0xff] %v338
                  %v340 = vld [vmem:[%s298 + $0x140] sm:$0xff]
                  %341 = vst [vmem:[%s299 + $0xa0] sm:$0xff] %v340
                  %v342 = vld [vmem:[%s298 + $0x150] sm:$0xff]
                  %343 = vst [vmem:[%s299 + $0xa8] sm:$0xff] %v342
                  %v344 = vld [vmem:[%s298 + $0x160] sm:$0xff]
                  %345 = vst [vmem:[%s299 + $0xb0] sm:$0xff] %v344
                  %v346 = vld [vmem:[%s298 + $0x170] sm:$0xff]
                  %347 = vst [vmem:[%s299 + $0xb8] sm:$0xff] %v346
                  %v348 = vld [vmem:[%s298 + $0x180] sm:$0xff]
                  %349 = vst [vmem:[%s299 + $0xc0] sm:$0xff] %v348
                  %v350 = vld [vmem:[%s298 + $0x190] sm:$0xff]
                  %351 = vst [vmem:[%s299 + $0xc8] sm:$0xff] %v350
                  %v352 = vld [vmem:[%s298 + $0x1a0] sm:$0xff]
                  %353 = vst [vmem:[%s299 + $0xd0] sm:$0xff] %v352
                  %v354 = vld [vmem:[%s298 + $0x1b0] sm:$0xff]
                  %355 = vst [vmem:[%s299 + $0xd8] sm:$0xff] %v354
                  %v356 = vld [vmem:[%s298 + $0x1c0] sm:$0xff]
                  %357 = vst [vmem:[%s299 + $0xe0] sm:$0xff] %v356
                  %v358 = vld [vmem:[%s298 + $0x1d0] sm:$0xff]
                  %359 = vst [vmem:[%s299 + $0xe8] sm:$0xff] %v358
                  %v360 = vld [vmem:[%s298 + $0x1e0] sm:$0xff]
                  %361 = vst [vmem:[%s299 + $0xf0] sm:$0xff] %v360
                  %v362 = vld [vmem:[%s298 + $0x1f0] sm:$0xff]
                  %363 = vst [vmem:[%s299 + $0xf8] sm:$0xff] %v362
                $region52: #{resnet_forward.24} parent=46 // loop_footer
                  %s297 = sadd.s32 1, %s293
                $region53: #{resnet_forward.24} parent=46 // loop_footer_branch
                  %292 = sbr.rel target = $region49
                $region54: #{resnet_forward.24} parent=46 // loop_exit
                  _
              $region47: #{resnet_forward.24} parent=31 // pred_fallthru
                _
              // Predicated region
              $region55: #{resnet_forward.24} parent=31 // pred_check
                _
              $region56: #{resnet_forward.24} parent=31 // pred_check_branch
                %365 = sbr.rel target = $region58
              $region57: #{resnet_forward.24} parent=31 // pred_region
                _
              $region58: #{resnet_forward.24} parent=31 // pred_fallthru
                _
            $region32: #{resnet_forward.24} parent=27 // pred_fallthru
              _
            // Predicated region
            $region33: #{resnet_forward.24} parent=27 // pred_check
              _
            $region34: #{resnet_forward.24} parent=27 // pred_check_branch
              %215 = sbr.rel target = $region36
            $region35: #{resnet_forward.24} parent=27 // pred_region
              %s217 = ssub.s32 256, 1
              loop: start=0, step=1, limit=1
              $region37: #{resnet_forward.24} parent=35 // loop_pre_header
                _
              $region38: #{resnet_forward.24} parent=35 // loop_header
                %s219 = sphi 0, %s223
                %p220 = scmp.ge.s32.totalorder %s219, 1
                %s224 = sphi %s209, %s209
                %s225 = sphi %s203, %s203
              $region39: #{resnet_forward.24} parent=35 // loop_header_branch
                %222 = sbr.rel (%p220) target = $region43
              $region40: #{resnet_forward.24} parent=35 // loop_body
                %v226 = vld [vmem:[%s224] sm:%s217]
                %227 = vst [vmem:[%s225] sm:%s217] %v226
                %v228 = vld [vmem:[%s224 + $0x10] sm:%s217]
                %229 = vst [vmem:[%s225 + $0x8] sm:%s217] %v228
                %v230 = vld [vmem:[%s224 + $0x20] sm:%s217]
                %231 = vst [vmem:[%s225 + $0x10] sm:%s217] %v230
                %v232 = vld [vmem:[%s224 + $0x30] sm:%s217]
                %233 = vst [vmem:[%s225 + $0x18] sm:%s217] %v232
                %v234 = vld [vmem:[%s224 + $0x40] sm:%s217]
                %235 = vst [vmem:[%s225 + $0x20] sm:%s217] %v234
                %v236 = vld [vmem:[%s224 + $0x50] sm:%s217]
                %237 = vst [vmem:[%s225 + $0x28] sm:%s217] %v236
                %v238 = vld [vmem:[%s224 + $0x60] sm:%s217]
                %239 = vst [vmem:[%s225 + $0x30] sm:%s217] %v238
                %v240 = vld [vmem:[%s224 + $0x70] sm:%s217]
                %241 = vst [vmem:[%s225 + $0x38] sm:%s217] %v240
                %v242 = vld [vmem:[%s224 + $0x80] sm:%s217]
                %243 = vst [vmem:[%s225 + $0x40] sm:%s217] %v242
                %v244 = vld [vmem:[%s224 + $0x90] sm:%s217]
                %245 = vst [vmem:[%s225 + $0x48] sm:%s217] %v244
                %v246 = vld [vmem:[%s224 + $0xa0] sm:%s217]
                %247 = vst [vmem:[%s225 + $0x50] sm:%s217] %v246
                %v248 = vld [vmem:[%s224 + $0xb0] sm:%s217]
                %249 = vst [vmem:[%s225 + $0x58] sm:%s217] %v248
                %v250 = vld [vmem:[%s224 + $0xc0] sm:%s217]
                %251 = vst [vmem:[%s225 + $0x60] sm:%s217] %v250
                %v252 = vld [vmem:[%s224 + $0xd0] sm:%s217]
                %253 = vst [vmem:[%s225 + $0x68] sm:%s217] %v252
                %v254 = vld [vmem:[%s224 + $0xe0] sm:%s217]
                %255 = vst [vmem:[%s225 + $0x70] sm:%s217] %v254
                %v256 = vld [vmem:[%s224 + $0xf0] sm:%s217]
                %257 = vst [vmem:[%s225 + $0x78] sm:%s217] %v256
                %v258 = vld [vmem:[%s224 + $0x100] sm:%s217]
                %259 = vst [vmem:[%s225 + $0x80] sm:%s217] %v258
                %v260 = vld [vmem:[%s224 + $0x110] sm:%s217]
                %261 = vst [vmem:[%s225 + $0x88] sm:%s217] %v260
                %v262 = vld [vmem:[%s224 + $0x120] sm:%s217]
                %263 = vst [vmem:[%s225 + $0x90] sm:%s217] %v262
                %v264 = vld [vmem:[%s224 + $0x130] sm:%s217]
                %265 = vst [vmem:[%s225 + $0x98] sm:%s217] %v264
                %v266 = vld [vmem:[%s224 + $0x140] sm:%s217]
                %267 = vst [vmem:[%s225 + $0xa0] sm:%s217] %v266
                %v268 = vld [vmem:[%s224 + $0x150] sm:%s217]
                %269 = vst [vmem:[%s225 + $0xa8] sm:%s217] %v268
                %v270 = vld [vmem:[%s224 + $0x160] sm:%s217]
                %271 = vst [vmem:[%s225 + $0xb0] sm:%s217] %v270
                %v272 = vld [vmem:[%s224 + $0x170] sm:%s217]
                %273 = vst [vmem:[%s225 + $0xb8] sm:%s217] %v272
                %v274 = vld [vmem:[%s224 + $0x180] sm:%s217]
                %275 = vst [vmem:[%s225 + $0xc0] sm:%s217] %v274
                %v276 = vld [vmem:[%s224 + $0x190] sm:%s217]
                %277 = vst [vmem:[%s225 + $0xc8] sm:%s217] %v276
                %v278 = vld [vmem:[%s224 + $0x1a0] sm:%s217]
                %279 = vst [vmem:[%s225 + $0xd0] sm:%s217] %v278
                %v280 = vld [vmem:[%s224 + $0x1b0] sm:%s217]
                %281 = vst [vmem:[%s225 + $0xd8] sm:%s217] %v280
                %v282 = vld [vmem:[%s224 + $0x1c0] sm:%s217]
                %283 = vst [vmem:[%s225 + $0xe0] sm:%s217] %v282
                %v284 = vld [vmem:[%s224 + $0x1d0] sm:%s217]
                %285 = vst [vmem:[%s225 + $0xe8] sm:%s217] %v284
                %v286 = vld [vmem:[%s224 + $0x1e0] sm:%s217]
                %287 = vst [vmem:[%s225 + $0xf0] sm:%s217] %v286
                %v288 = vld [vmem:[%s224 + $0x1f0] sm:%s217]
                %289 = vst [vmem:[%s225 + $0xf8] sm:%s217] %v288
              $region41: #{resnet_forward.24} parent=35 // loop_footer
                %s223 = sadd.s32 1, %s219
              $region42: #{resnet_forward.24} parent=35 // loop_footer_branch
                %218 = sbr.rel target = $region38
              $region43: #{resnet_forward.24} parent=35 // loop_exit
                _
            $region36: #{resnet_forward.24} parent=27 // pred_fallthru
              _
          $region28: #{resnet_forward.24} parent=23 // pred_fallthru
            _
          %366 = vnop
        $region24: #{resnet_forward.24} parent=19 // pred_fallthru
          _
        // Predicated region
        $region59: #{resnet_forward.24} parent=19 // pred_check
          %p367 = pneg %p105
        $region60: #{resnet_forward.24} parent=19 // pred_check_branch
          %369 = sbr.rel (%p367) target = $region62
        $region61: #{resnet_forward.24} parent=19 // pred_region
          %s370 = smul.u32 2, %s18
          %p371 = scmp.lt.s32.totalorder %s370, 3
          %s372 = scalar_select %p371, %s370, 3
          %s373 = scalar_lea.vmem %s2, %s372
          %s374 = smul.u32 2, %s18
        $region62: #{resnet_forward.24} parent=19 // pred_fallthru
          _
        // Predicated region
        $region63: #{resnet_forward.24} parent=19 // pred_check
          %p375 = pneg %p131
        $region64: #{resnet_forward.24} parent=19 // pred_check_branch
          %377 = sbr.rel (%p375) target = $region66
        $region65: #{resnet_forward.24} parent=19 // pred_region
          %s378 = smul.u32 2, %s18
          %p379 = scmp.lt.s32.totalorder %s378, 3
          %s380 = scalar_select %p379, %s378, 3
          %s381 = scalar_lea.vmem %s3, %s380
          %s382 = smul.u32 2, %s18
        $region66: #{resnet_forward.24} parent=19 // pred_fallthru
          _
      $region20: #{resnet_forward.24} parent=5 // pred_fallthru
        _
      %p383 = scmp.le.s32.totalorder 1, %s10
      %p384 = scmp.lt.s32.totalorder %s10, 3
      %p385 = pnand %p383, %p384
      %p386 = pneg %p385
      // Predicated region
      $region67: #{resnet_forward.24} parent=5 // pred_check
        _
      $region68: #{resnet_forward.24} parent=5 // pred_check_branch
        %388 = sbr.rel (%p385) target = $region70
      $region69: #{resnet_forward.24} parent=5 // pred_region
        %s389 = ssub.s32 %s10, 1
        %s390 = sand.u32 %s72, 1
        %s391 = sand.u32 %s72, 1
        %s392 = smul.addr %s391, 256
        %s393 = scalar_lea.vmem [#allocation3], %s392
        // Predicated region
        $region71: #{resnet_forward.24} parent=69 // pred_check
          %p394 = pneg %p85
        $region72: #{resnet_forward.24} parent=69 // pred_check_branch
          %396 = sbr.rel (%p394) target = $region74
        $region73: #{resnet_forward.24} parent=69 // pred_region
          _
        $region74: #{resnet_forward.24} parent=69 // pred_fallthru
          _
        %s397 = smul.u32 2, %s22
        %p398 = scmp.lt.s32.totalorder %s20, 0
        %s399 = scalar_select %p398, %s20, 0
        %p400 = scmp.lt.s32.totalorder %s397, 1
        %s401 = scalar_select %p400, %s397, 1
        %s402 = smul.addr %s399, 2
        %s403 = sadd.s32 %s401, %s402
        %s404 = smul.addr %s403, 4
        %s405 = scalar_lea.vmem %s0, %s404
        %p406 = pneg %p57
        %p407 = pneg %p54
        %s408 = sand.u32 %s72, 1
        %s409 = sand.u32 %s72, 1
        %s410 = smul.addr %s409, 256
        %s411 = scalar_lea.vmem [#allocation3], %s410
        %p412 = pneg %p85
        %p413 = pneg %p82
        %s414 = smul.u32 2, %s21
        %p415 = scmp.lt.s32.totalorder %s414, 3
        %s416 = scalar_select %p415, %s414, 3
        %s417 = scalar_lea.vmem %s2, %s416
        %p418 = pneg %p111
        %p419 = pneg %p108
        %s420 = smul.u32 2, %s21
        %p421 = scmp.lt.s32.totalorder %s420, 3
        %s422 = scalar_select %p421, %s420, 3
        %s423 = scalar_lea.vmem %s3, %s422
        %p424 = pneg %p137
        %p425 = pneg %p134
        %p426 = pneg %p165
        %p427 = pneg %p162
        %s428 = smul.u32 2, %s21
        %p429 = scmp.lt.s32.totalorder %s20, 0
        %s430 = scalar_select %p429, %s20, 0
        %p431 = scmp.lt.s32.totalorder %s428, 3
        %s432 = scalar_select %p431, %s428, 3
        %s433 = smul.addr %s430, 4
        %s434 = sadd.s32 %s432, %s433
        %s435 = smul.addr %s434, 4
        %s436 = scalar_lea.vmem %s4, %s435
        %s437 = smul.u32 2, %s22
        %p438 = scmp.lt.s32.totalorder %s20, 0
        %s439 = scalar_select %p438, %s20, 0
        %p440 = scmp.lt.s32.totalorder %s437, 1
        %s441 = scalar_select %p440, %s437, 1
        %s442 = smul.addr %s439, 2
        %s443 = sadd.s32 %s441, %s442
        %s444 = smul.addr %s443, 4
        %s445 = scalar_lea.vmem %s0, %s444
        %s446 = smul.u32 2, %s22
        %s447 = smul.u32 32, %s22
        %s448 = smul.u32 2, %s21
        %s449 = smul.u32 2, %s21
        %p450 = scmp.lt.s32.totalorder %s449, 3
        %s451 = scalar_select %p450, %s449, 3
        %s452 = scalar_lea.vmem %s2, %s451
        %s453 = smul.u32 2, %s21
        %s454 = smul.u32 2, %s21
        %p455 = scmp.lt.s32.totalorder %s454, 3
        %s456 = scalar_select %p455, %s454, 3
        %s457 = scalar_lea.vmem %s3, %s456
        %s458 = smul.u32 2, %s21
        %s459 = smul.u32 2, %s21
        %p460 = scmp.lt.s32.totalorder %s20, 0
        %s461 = scalar_select %p460, %s20, 0
        %p462 = scmp.lt.s32.totalorder %s459, 3
        %s463 = scalar_select %p462, %s459, 3
        %s464 = smul.addr %s461, 4
        %s465 = sadd.s32 %s463, %s464
        %s466 = smul.addr %s465, 4
        %s467 = scalar_lea.vmem %s4, %s466
        %s468 = smul.u32 2, %s21
        %p469 = scmp.eq.s32.totalorder %s22, 0
        // Predicated region
        $region75: #{resnet_forward.24} parent=69 // pred_check
          %p470 = pneg %p469
        $region76: #{resnet_forward.24} parent=69 // pred_check_branch
          %472 = sbr.rel (%p470) target = $region78
        $region77: #{resnet_forward.24} parent=69 // pred_region
          %473 = vst [vmem:[#allocation2] sm:$0xff] 0.0
          %474 = vst [vmem:[#allocation2 + $0x8] sm:$0xff] 0.0
        $region78: #{resnet_forward.24} parent=69 // pred_fallthru
          _
        %v475 = vld [vmem:[#allocation2] sm:$0xff]
        %v476 = vld [vmem:[#allocation2 + $0x8] sm:$0xff]
        %v477 = vld [vmem:[%s445] sm:$0xff]
        %v478 = vld [vmem:[%s393] sm:$0xff]
        %v479 = vld [vmem:[%s393 + $0x8] sm:$0xff]
        %v480 = vld [vmem:[%s393 + $0x10] sm:$0xff]
        %v481 = vld [vmem:[%s393 + $0x18] sm:$0xff]
        %v482 = vld [vmem:[%s393 + $0x20] sm:$0xff]
        %v483 = vld [vmem:[%s393 + $0x28] sm:$0xff]
        %v484 = vld [vmem:[%s393 + $0x30] sm:$0xff]
        %v485 = vld [vmem:[%s393 + $0x38] sm:$0xff]
        %v486 = vld [vmem:[%s393 + $0x40] sm:$0xff]
        %v487 = vld [vmem:[%s393 + $0x48] sm:$0xff]
        %v488 = vld [vmem:[%s393 + $0x50] sm:$0xff]
        %v489 = vld [vmem:[%s393 + $0x58] sm:$0xff]
        %v490 = vld [vmem:[%s393 + $0x60] sm:$0xff]
        %v491 = vld [vmem:[%s393 + $0x68] sm:$0xff]
        %v492 = vld [vmem:[%s393 + $0x70] sm:$0xff]
        %v493 = vld [vmem:[%s393 + $0x78] sm:$0xff]
        %v494 = vld [vmem:[%s393 + $0x80] sm:$0xff]
        %v495 = vld [vmem:[%s393 + $0x88] sm:$0xff]
        %v496 = vld [vmem:[%s393 + $0x90] sm:$0xff]
        %v497 = vld [vmem:[%s393 + $0x98] sm:$0xff]
        %v498 = vld [vmem:[%s393 + $0xa0] sm:$0xff]
        %v499 = vld [vmem:[%s393 + $0xa8] sm:$0xff]
        %v500 = vld [vmem:[%s393 + $0xb0] sm:$0xff]
        %v501 = vld [vmem:[%s393 + $0xb8] sm:$0xff]
        %v502 = vld [vmem:[%s393 + $0xc0] sm:$0xff]
        %v503 = vld [vmem:[%s393 + $0xc8] sm:$0xff]
        %v504 = vld [vmem:[%s393 + $0xd0] sm:$0xff]
        %v505 = vld [vmem:[%s393 + $0xd8] sm:$0xff]
        %v506 = vld [vmem:[%s393 + $0xe0] sm:$0xff]
        %v507 = vld [vmem:[%s393 + $0xe8] sm:$0xff]
        %v508 = vld [vmem:[%s393 + $0xf0] sm:$0xff]
        %v509 = vld [vmem:[%s393 + $0xf8] sm:$0xff]
        %v511 = vunpack.c.l.b16 %v477
        %v512 = vunpack.c.h.b16 %v477
        %v513 = vpack.c.b16 %v511, %v511
        %v514 = vpack.c.b16 %v512, %v512
        %v549 = vunpack.c.l.b16 %v478
        %v550 = vunpack.c.h.b16 %v478
        %v551 = vunpack.c.l.b16 %v479
        %v552 = vunpack.c.h.b16 %v479
        %v553 = vunpack.c.l.b16 %v480
        %v554 = vunpack.c.h.b16 %v480
        %v555 = vunpack.c.l.b16 %v481
        %v556 = vunpack.c.h.b16 %v481
        %v557 = vunpack.c.l.b16 %v482
        %v558 = vunpack.c.h.b16 %v482
        %v559 = vunpack.c.l.b16 %v483
        %v560 = vunpack.c.h.b16 %v483
        %v561 = vunpack.c.l.b16 %v484
        %v562 = vunpack.c.h.b16 %v484
        %v563 = vunpack.c.l.b16 %v485
        %v564 = vunpack.c.h.b16 %v485
        %v565 = vunpack.c.l.b16 %v486
        %v566 = vunpack.c.h.b16 %v486
        %v567 = vunpack.c.l.b16 %v487
        %v568 = vunpack.c.h.b16 %v487
        %v569 = vunpack.c.l.b16 %v488
        %v570 = vunpack.c.h.b16 %v488
        %v571 = vunpack.c.l.b16 %v489
        %v572 = vunpack.c.h.b16 %v489
        %v573 = vunpack.c.l.b16 %v490
        %v574 = vunpack.c.h.b16 %v490
        %v575 = vunpack.c.l.b16 %v491
        %v576 = vunpack.c.h.b16 %v491
        %v577 = vunpack.c.l.b16 %v492
        %v578 = vunpack.c.h.b16 %v492
        %v579 = vunpack.c.l.b16 %v493
        %v580 = vunpack.c.h.b16 %v493
        %v581 = vunpack.c.l.b16 %v494
        %v582 = vunpack.c.h.b16 %v494
        %v583 = vunpack.c.l.b16 %v495
        %v584 = vunpack.c.h.b16 %v495
        %v585 = vunpack.c.l.b16 %v496
        %v586 = vunpack.c.h.b16 %v496
        %v587 = vunpack.c.l.b16 %v497
        %v588 = vunpack.c.h.b16 %v497
        %v589 = vunpack.c.l.b16 %v498
        %v590 = vunpack.c.h.b16 %v498
        %v591 = vunpack.c.l.b16 %v499
        %v592 = vunpack.c.h.b16 %v499
        %v593 = vunpack.c.l.b16 %v500
        %v594 = vunpack.c.h.b16 %v500
        %v595 = vunpack.c.l.b16 %v501
        %v596 = vunpack.c.h.b16 %v501
        %v597 = vunpack.c.l.b16 %v502
        %v598 = vunpack.c.h.b16 %v502
        %v599 = vunpack.c.l.b16 %v503
        %v600 = vunpack.c.h.b16 %v503
        %v601 = vunpack.c.l.b16 %v504
        %v602 = vunpack.c.h.b16 %v504
        %v603 = vunpack.c.l.b16 %v505
        %v604 = vunpack.c.h.b16 %v505
        %v605 = vunpack.c.l.b16 %v506
        %v606 = vunpack.c.h.b16 %v506
        %v607 = vunpack.c.l.b16 %v507
        %v608 = vunpack.c.h.b16 %v507
        %v609 = vunpack.c.l.b16 %v508
        %v610 = vunpack.c.h.b16 %v508
        %v611 = vunpack.c.l.b16 %v509
        %v612 = vunpack.c.h.b16 %v509
        %v613 = vpack.c.b16 %v551, %v549
        %v614 = vpack.c.b16 %v552, %v550
        %v615 = vpack.c.b16 %v555, %v553
        %v616 = vpack.c.b16 %v556, %v554
        %v617 = vpack.c.b16 %v559, %v557
        %v618 = vpack.c.b16 %v560, %v558
        %v619 = vpack.c.b16 %v563, %v561
        %v620 = vpack.c.b16 %v564, %v562
        %v621 = vpack.c.b16 %v567, %v565
        %v622 = vpack.c.b16 %v568, %v566
        %v623 = vpack.c.b16 %v571, %v569
        %v624 = vpack.c.b16 %v572, %v570
        %v625 = vpack.c.b16 %v575, %v573
        %v626 = vpack.c.b16 %v576, %v574
        %v627 = vpack.c.b16 %v579, %v577
        %v628 = vpack.c.b16 %v580, %v578
        %v629 = vpack.c.b16 %v583, %v581
        %v630 = vpack.c.b16 %v584, %v582
        %v631 = vpack.c.b16 %v587, %v585
        %v632 = vpack.c.b16 %v588, %v586
        %v633 = vpack.c.b16 %v591, %v589
        %v634 = vpack.c.b16 %v592, %v590
        %v635 = vpack.c.b16 %v595, %v593
        %v636 = vpack.c.b16 %v596, %v594
        %v637 = vpack.c.b16 %v599, %v597
        %v638 = vpack.c.b16 %v600, %v598
        %v639 = vpack.c.b16 %v603, %v601
        %v640 = vpack.c.b16 %v604, %v602
        %v641 = vpack.c.b16 %v607, %v605
        %v642 = vpack.c.b16 %v608, %v606
        %v643 = vpack.c.b16 %v611, %v609
        %v644 = vpack.c.b16 %v612, %v610
        %677 = vmatpush.bf16.msra.mxu0 %v627
        %678 = vmatpush.bf16.msra.mxu0 %v625
        %679 = vmatpush.bf16.msra.mxu0 %v623
        %680 = vmatpush.bf16.msra.mxu0 %v621
        %681 = vmatpush.bf16.msra.mxu0 %v619
        %682 = vmatpush.bf16.msra.mxu0 %v617
        %683 = vmatpush.bf16.msra.mxu0 %v615
        %684 = vmatpush.bf16.msra.mxu0 %v613
        %685 = vmatmul.bf16.gmra.mxu0 %v513
        %v686 = vpop.f32.mrf.mxu0
        %v687 = vadd.f32 0.0, %v686
        %v688 = vpop.f32.mrf.mxu0
        %689 = vdwg.mxu0
        %690 = vmatpush.bf16.msra.mxu0 %v643
        %691 = vmatpush.bf16.msra.mxu0 %v641
        %692 = vmatpush.bf16.msra.mxu0 %v639
        %693 = vmatpush.bf16.msra.mxu0 %v637
        %694 = vmatpush.bf16.msra.mxu0 %v635
        %695 = vmatpush.bf16.msra.mxu0 %v633
        %696 = vmatpush.bf16.msra.mxu0 %v631
        %697 = vmatpush.bf16.msra.mxu0 %v629
        %698 = vmatmul.bf16.gmra.mxu0 %v514
        %v699 = vpop.f32.mrf.mxu0
        %v700 = vadd.f32 %v687, %v699
        %v701 = vpop.f32.mrf.mxu0
        %702 = vdwg.mxu0
        %703 = vmatpush.bf16.msra.mxu0 %v628
        %704 = vmatpush.bf16.msra.mxu0 %v626
        %705 = vmatpush.bf16.msra.mxu0 %v624
        %706 = vmatpush.bf16.msra.mxu0 %v622
        %707 = vmatpush.bf16.msra.mxu0 %v620
        %708 = vmatpush.bf16.msra.mxu0 %v618
        %709 = vmatpush.bf16.msra.mxu0 %v616
        %710 = vmatpush.bf16.msra.mxu0 %v614
        %711 = vmatmul.bf16.gmra.mxu0 %v513
        %v712 = vpop.f32.mrf.mxu0
        %v713 = vadd.f32 0.0, %v712
        %v714 = vpop.f32.mrf.mxu0
        %715 = vdwg.mxu0
        %716 = vmatpush.bf16.msra.mxu0 %v644
        %717 = vmatpush.bf16.msra.mxu0 %v642
        %718 = vmatpush.bf16.msra.mxu0 %v640
        %719 = vmatpush.bf16.msra.mxu0 %v638
        %720 = vmatpush.bf16.msra.mxu0 %v636
        %721 = vmatpush.bf16.msra.mxu0 %v634
        %722 = vmatpush.bf16.msra.mxu0 %v632
        %723 = vmatpush.bf16.msra.mxu0 %v630
        %724 = vmatmul.bf16.gmra.mxu0 %v514
        %v725 = vpop.f32.mrf.mxu0
        %v726 = vadd.f32 %v713, %v725
        %v727 = vpop.f32.mrf.mxu0
        %728 = vdwg.mxu0
        %v729 = vadd.f32 %v475, %v700
        %v730 = vadd.f32 %v476, %v726
        %731 = vst [vmem:[#allocation2] sm:$0xff] %v729
        %732 = vst [vmem:[#allocation2 + $0x8] sm:$0xff] %v730
        // Predicated region
        $region79: #{resnet_forward.24} parent=69 // pred_check
          %p733 = pneg %p469
        $region80: #{resnet_forward.24} parent=69 // pred_check_branch
          %735 = sbr.rel (%p733) target = $region82
        $region81: #{resnet_forward.24} parent=69 // pred_region
          %v736 = vld [vmem:[#allocation2] sm:$0xff]
          %v737 = vld [vmem:[#allocation2 + $0x8] sm:$0xff]
          %v738 = vld [vmem:[%s452] sm:$0x3]
          %v740 = vperm.slane %v738, 0
          %v741 = vperm.slane %v738, 1
          %v744 = vmul.f32 %v736, %v740
          %v745 = vmul.f32 %v737, %v741
          %v746 = vld [vmem:[%s457] sm:$0x3]
          %v748 = vperm.slane %v746, 0
          %v749 = vperm.slane %v746, 1
          %v752 = vadd.f32 %v744, %v748
          %v753 = vadd.f32 %v745, %v749
          %v754 = vpack.c.bf16 %v753, %v752
          %755 = vst [vmem:[%s467] sm:$0xff] %v754
        $region82: #{resnet_forward.24} parent=69 // pred_fallthru
          _
        %s756 = smul.u32 2, %s21
        %p757 = scmp.lt.s32.totalorder %s20, 0
        %s758 = scalar_select %p757, %s20, 0
        %p759 = scmp.lt.s32.totalorder %s756, 3
        %s760 = scalar_select %p759, %s756, 3
        %s761 = smul.addr %s758, 4
        %s762 = sadd.s32 %s760, %s761
        %s763 = smul.addr %s762, 4
        %s764 = scalar_lea.vmem %s4, %s763
        // Predicated region
        $region83: #{resnet_forward.24} parent=69 // pred_check
          %p765 = pneg %p162
        $region84: #{resnet_forward.24} parent=69 // pred_check_branch
          %767 = sbr.rel (%p765) target = $region86
        $region85: #{resnet_forward.24} parent=69 // pred_region
          %s768 = smul.u32 2, %s21
        $region86: #{resnet_forward.24} parent=69 // pred_fallthru
          _
      $region70: #{resnet_forward.24} parent=5 // pred_fallthru
        _
      %p769 = scmp.le.s32.totalorder 2, %s10
      // Predicated region
      $region87: #{resnet_forward.24} parent=5 // pred_check
        %p770 = pneg %p769
      $region88: #{resnet_forward.24} parent=5 // pred_check_branch
        %772 = sbr.rel (%p770) target = $region90
      $region89: #{resnet_forward.24} parent=5 // pred_region
        %s773 = ssub.s32 %s10, 2
        // Predicated region
        $region91: #{resnet_forward.24} parent=89 // pred_check
          %p774 = pneg %p168
        $region92: #{resnet_forward.24} parent=89 // pred_check_branch
          %776 = sbr.rel (%p774) target = $region94
        $region93: #{resnet_forward.24} parent=89 // pred_region
          %s777 = smul.u32 2, %s24
          %p778 = scmp.lt.s32.totalorder %s23, 0
          %s779 = scalar_select %p778, %s23, 0
          %p780 = scmp.lt.s32.totalorder %s777, 3
          %s781 = scalar_select %p780, %s777, 3
          %s782 = smul.addr %s779, 4
          %s783 = sadd.s32 %s781, %s782
          %s784 = smul.addr %s783, 4
          %s785 = scalar_lea.vmem %s4, %s784
        $region94: #{resnet_forward.24} parent=89 // pred_fallthru
          _
      $region90: #{resnet_forward.24} parent=5 // pred_fallthru
        _
    $region6: #{resnet_forward.24} parent=1 // loop_footer
      %s14 = sadd.s32 1, %s10
    $region7: #{resnet_forward.24} parent=1 // loop_footer_branch
      %9 = sbr.rel target = $region3
    $region8: #{resnet_forward.24} parent=1 // loop_exit
      _

// kernel: resnet_forward.26
$region0: #{resnet_forward.26}
  #allocation0 [shape = 'u32[]', space=smem, size = 0x4, offset = 0x4, fixed_abs, tag = 'smem constant byte address 0x4 - core index']
  #allocation1 [shape = 'u32[72,128]{1,0:T(1,128)}', space=vmem, size = 0x9000, scoped, tag = 'internal scratch']
  #allocation2 [shape = 'f32[8,256]{1,0:T(8,128)}', space=vmem, size = 0x2000, scoped, tag = 'scratch operand']
  %s0 = inlined_call_operand.vmem [shape: bf16[8,4608], index: 0, kind: input, shape index: {}]
  %s1 = inlined_call_operand.vmem [shape: bf16[4608,512], index: 1, kind: input, shape index: {}]
  %s2 = inlined_call_operand.vmem [shape: f32[1,512], index: 2, kind: input, shape index: {}]
  %s3 = inlined_call_operand.vmem [shape: f32[1,512], index: 3, kind: input, shape index: {}]
  %s4 = inlined_call_operand.vmem [shape: bf16[8,512], index: 4, kind: input, shape index: {}]
  %s5 = inlined_call_operand.vmem [shape: bf16[8,512], index: 5, kind: output, shape index: {}]
  %s6 = sld [smem:[#allocation0]]
  $region99: #{resnet_forward.26} parent=0
    _
  %s8 = ssub.s32 1, %s6
  %s9 = scalar_select 0, %s8, %s6
  $region1: #{resnet_forward.26} parent=0
    #allocation3 [shape = 'u8[524288]{0}', space=vmem, size = 0x80000, scoped, tag = 'input window, operand 1']
    loop: start=0, step=1, limit=20
    $region2: #{resnet_forward.26} parent=1 // loop_pre_header
      _
    $region3: #{resnet_forward.26} parent=1 // loop_header
      %s11 = sphi 0, %s15
      %p12 = scmp.ge.s32.totalorder %s11, 20
      %s18 = sphi 0, %s37
      %s19 = sphi 0, %s33
      %s20 = sphi 0, %s29
      %s21 = sphi 0, %s18
      %s22 = sphi 0, %s19
      %s23 = sphi 0, %s20
      %s24 = sphi 0, %s21
      %s25 = sphi 0, %s22
      %s26 = sphi 0, %s23
      %s42 = sphi 0, %s44
      %s45 = sphi 0, %s42
      %s46 = sphi 0, %s45
      %s62 = sphi 0, %s46
      %s70 = sphi 0, %s72
      %s73 = sphi 0, %s70
      %s74 = sphi 0, %s73
      %s90 = sphi 0, %s74
      %s96 = sphi 0, %s98
      %s99 = sphi 0, %s96
      %s100 = sphi 0, %s99
      %s116 = sphi 0, %s100
      %s122 = sphi 0, %s124
      %s125 = sphi 0, %s122
      %s126 = sphi 0, %s125
      %s142 = sphi 0, %s126
      %s150 = sphi 0, %s152
      %s153 = sphi 0, %s150
      %s154 = sphi 0, %s153
      %s170 = sphi 0, %s154
      %s178 = sphi 0, %s180
      %s181 = sphi 0, %s178
      %s182 = sphi 0, %s181
      %s198 = sphi 0, %s182
    $region4: #{resnet_forward.26} parent=1 // loop_header_branch
      %14 = sbr.rel (%p12) target = $region8
    $region5: #{resnet_forward.26} parent=1 // loop_body
      %s16 = ssub.s32 %s11, 1
      %s17 = ssub.s32 %s11, 2
      %s27 = sadd.s32 1, %s20
      %p28 = scmp.ge.s32.totalorder %s27, 9
      %s29 = scalar_select %p28, 0, %s27
      %s30 = sadd.s32 1, %s19
      %s31 = scalar_select %p28, %s30, %s19
      %p32 = scmp.ge.s32.totalorder %s31, 2
      %s33 = scalar_select %p32, 0, %s31
      %s34 = sadd.s32 1, %s18
      %s35 = scalar_select %p32, %s34, %s18
      %p36 = scmp.ge.s32.totalorder %s35, 1
      %s37 = scalar_select %p36, 0, %s35
      %s38 = ssub.s32 %s18, %s37
      %s39 = ssub.s32 %s20, %s29
      %s40 = sor.u32 %s38, %s39
      %p41 = scmp.eq.s32.totalorder %s40, 0
      %s43 = sadd.s32 %s42, 1
      %s44 = scalar_select %p41, %s42, %s43
      %p47 = pneg %p41
      %p48 = scmp.eq.s32.totalorder %s11, 17
      %p49 = por %p47, %p48
      %p50 = scmp.ne.s32.totalorder %s42, %s45
      %p51 = scmp.eq.s32.totalorder %s11, 0
      %p52 = por %p50, %p51
      %p53 = scmp.ne.s32.totalorder %s42, %s45
      %p54 = scmp.eq.s32.totalorder %s16, 17
      %p55 = por %p53, %p54
      %p56 = scmp.ne.s32.totalorder %s45, %s46
      %p57 = scmp.eq.s32.totalorder %s16, 0
      %p58 = por %p56, %p57
      %p59 = scmp.ne.s32.totalorder %s45, %s46
      %p60 = scmp.eq.s32.totalorder %s17, 17
      %p61 = por %p59, %p60
      %p63 = scmp.ne.s32.totalorder %s46, %s62
      %p64 = scmp.eq.s32.totalorder %s17, 0
      %p65 = por %p63, %p64
      %s66 = ssub.s32 %s20, %s29
      %s67 = ssub.s32 %s19, %s33
      %s68 = sor.u32 %s66, %s67
      %p69 = scmp.eq.s32.totalorder %s68, 0
      %s71 = sadd.s32 %s70, 1
      %s72 = scalar_select %p69, %s70, %s71
      %p75 = pneg %p69
      %p76 = scmp.eq.s32.totalorder %s11, 17
      %p77 = por %p75, %p76
      %p78 = scmp.ne.s32.totalorder %s70, %s73
      %p79 = scmp.eq.s32.totalorder %s11, 0
      %p80 = por %p78, %p79
      %p81 = scmp.ne.s32.totalorder %s70, %s73
      %p82 = scmp.eq.s32.totalorder %s16, 17
      %p83 = por %p81, %p82
      %p84 = scmp.ne.s32.totalorder %s73, %s74
      %p85 = scmp.eq.s32.totalorder %s16, 0
      %p86 = por %p84, %p85
      %p87 = scmp.ne.s32.totalorder %s73, %s74
      %p88 = scmp.eq.s32.totalorder %s17, 17
      %p89 = por %p87, %p88
      %p91 = scmp.ne.s32.totalorder %s74, %s90
      %p92 = scmp.eq.s32.totalorder %s17, 0
      %p93 = por %p91, %p92
      %s94 = ssub.s32 %s19, %s33
      %p95 = scmp.eq.s32.totalorder %s94, 0
      %s97 = sadd.s32 %s96, 1
      %s98 = scalar_select %p95, %s96, %s97
      %p101 = pneg %p95
      %p102 = scmp.eq.s32.totalorder %s11, 17
      %p103 = por %p101, %p102
      %p104 = scmp.ne.s32.totalorder %s96, %s99
      %p105 = scmp.eq.s32.totalorder %s11, 0
      %p106 = por %p104, %p105
      %p107 = scmp.ne.s32.totalorder %s96, %s99
      %p108 = scmp.eq.s32.totalorder %s16, 17
      %p109 = por %p107, %p108
      %p110 = scmp.ne.s32.totalorder %s99, %s100
      %p111 = scmp.eq.s32.totalorder %s16, 0
      %p112 = por %p110, %p111
      %p113 = scmp.ne.s32.totalorder %s99, %s100
      %p114 = scmp.eq.s32.totalorder %s17, 17
      %p115 = por %p113, %p114
      %p117 = scmp.ne.s32.totalorder %s100, %s116
      %p118 = scmp.eq.s32.totalorder %s17, 0
      %p119 = por %p117, %p118
      %s120 = ssub.s32 %s19, %s33
      %p121 = scmp.eq.s32.totalorder %s120, 0
      %s123 = sadd.s32 %s122, 1
      %s124 = scalar_select %p121, %s122, %s123
      %p127 = pneg %p121
      %p128 = scmp.eq.s32.totalorder %s11, 17
      %p129 = por %p127, %p128
      %p130 = scmp.ne.s32.totalorder %s122, %s125
      %p131 = scmp.eq.s32.totalorder %s11, 0
      %p132 = por %p130, %p131
      %p133 = scmp.ne.s32.totalorder %s122, %s125
      %p134 = scmp.eq.s32.totalorder %s16, 17
      %p135 = por %p133, %p134
      %p136 = scmp.ne.s32.totalorder %s125, %s126
      %p137 = scmp.eq.s32.totalorder %s16, 0
      %p138 = por %p136, %p137
      %p139 = scmp.ne.s32.totalorder %s125, %s126
      %p140 = scmp.eq.s32.totalorder %s17, 17
      %p141 = por %p139, %p140
      %p143 = scmp.ne.s32.totalorder %s126, %s142
      %p144 = scmp.eq.s32.totalorder %s17, 0
      %p145 = por %p143, %p144
      %s146 = ssub.s32 %s18, %s37
      %s147 = ssub.s32 %s19, %s33
      %s148 = sor.u32 %s146, %s147
      %p149 = scmp.eq.s32.totalorder %s148, 0
      %s151 = sadd.s32 %s150, 1
      %s152 = scalar_select %p149, %s150, %s151
      %p155 = pneg %p149
      %p156 = scmp.eq.s32.totalorder %s11, 17
      %p157 = por %p155, %p156
      %p158 = scmp.ne.s32.totalorder %s150, %s153
      %p159 = scmp.eq.s32.totalorder %s11, 0
      %p160 = por %p158, %p159
      %p161 = scmp.ne.s32.totalorder %s150, %s153
      %p162 = scmp.eq.s32.totalorder %s16, 17
      %p163 = por %p161, %p162
      %p164 = scmp.ne.s32.totalorder %s153, %s154
      %p165 = scmp.eq.s32.totalorder %s16, 0
      %p166 = por %p164, %p165
      %p167 = scmp.ne.s32.totalorder %s153, %s154
      %p168 = scmp.eq.s32.totalorder %s17, 17
      %p169 = por %p167, %p168
      %p171 = scmp.ne.s32.totalorder %s154, %s170
      %p172 = scmp.eq.s32.totalorder %s17, 0
      %p173 = por %p171, %p172
      %s174 = ssub.s32 %s18, %s37
      %s175 = ssub.s32 %s19, %s33
      %s176 = sor.u32 %s174, %s175
      %p177 = scmp.eq.s32.totalorder %s176, 0
      %s179 = sadd.s32 %s178, 1
      %s180 = scalar_select %p177, %s178, %s179
      %p183 = pneg %p177
      %p184 = scmp.eq.s32.totalorder %s11, 17
      %p185 = por %p183, %p184
      %p186 = scmp.ne.s32.totalorder %s178, %s181
      %p187 = scmp.eq.s32.totalorder %s11, 0
      %p188 = por %p186, %p187
      %p189 = scmp.ne.s32.totalorder %s178, %s181
      %p190 = scmp.eq.s32.totalorder %s16, 17
      %p191 = por %p189, %p190
      %p192 = scmp.ne.s32.totalorder %s181, %s182
      %p193 = scmp.eq.s32.totalorder %s16, 0
      %p194 = por %p192, %p193
      %p195 = scmp.ne.s32.totalorder %s181, %s182
      %p196 = scmp.eq.s32.totalorder %s17, 17
      %p197 = por %p195, %p196
      %p199 = scmp.ne.s32.totalorder %s182, %s198
      %p200 = scmp.eq.s32.totalorder %s17, 0
      %p201 = por %p199, %p200
      %p202 = scmp.le.s32.totalorder 1, %s11
      %p203 = scmp.lt.s32.totalorder %s11, 19
      %p204 = pnand %p202, %p203
      %p205 = pneg %p204
      // Predicated region
      $region9: #{resnet_forward.26} parent=5 // pred_check
        _
      $region10: #{resnet_forward.26} parent=5 // pred_check_branch
        %207 = sbr.rel (%p204) target = $region12
      $region11: #{resnet_forward.26} parent=5 // pred_region
        %s208 = ssub.s32 %s11, 1
      $region12: #{resnet_forward.26} parent=5 // pred_fallthru
        _
      %p209 = scmp.lt.s32.totalorder %s11, 18
      // Predicated region
      $region13: #{resnet_forward.26} parent=5 // pred_check
        %p210 = pneg %p209
      $region14: #{resnet_forward.26} parent=5 // pred_check_branch
        %212 = sbr.rel (%p210) target = $region16
      $region15: #{resnet_forward.26} parent=5 // pred_region
        // Predicated region
        $region17: #{resnet_forward.26} parent=15 // pred_check
          %p213 = pneg %p52
        $region18: #{resnet_forward.26} parent=15 // pred_check_branch
          %215 = sbr.rel (%p213) target = $region20
        $region19: #{resnet_forward.26} parent=15 // pred_region
          %s216 = smul.u32 4, %s20
          %p217 = scmp.lt.s32.totalorder %s18, 0
          %s218 = scalar_select %p217, %s18, 0
          %p219 = scmp.lt.s32.totalorder %s216, 35
          %s220 = scalar_select %p219, %s216, 35
          %s221 = smul.addr %s218, 36
          %s222 = sadd.s32 %s220, %s221
          %s223 = smul.addr %s222, 4
          %s224 = scalar_lea.vmem %s0, %s223
          %s225 = smul.u32 4, %s20
        $region20: #{resnet_forward.26} parent=15 // pred_fallthru
          _
        // Predicated region
        $region21: #{resnet_forward.26} parent=15 // pred_check
          %p226 = pneg %p80
        $region22: #{resnet_forward.26} parent=15 // pred_check_branch
          %228 = sbr.rel (%p226) target = $region24
        $region23: #{resnet_forward.26} parent=15 // pred_region
          %s229 = sand.u32 %s70, 1
          %s230 = sand.u32 %s70, 1
          %s231 = smul.addr %s230, 512
          %s232 = scalar_lea.vmem [#allocation3], %s231
          %s233 = smul.u32 64, %s20
          %s234 = smul.u32 2, %s19
          %s235 = smul.addr %s233, 4
          %s236 = sadd.s32 %s234, %s235
          %s237 = smul.addr %s236, 4
          %s238 = scalar_lea.vmem %s1, %s237
          // Predicated region
          $region25: #{resnet_forward.26} parent=23 // pred_check
            _
          $region26: #{resnet_forward.26} parent=23 // pred_check_branch
            %240 = sbr.rel (0) target = $region28
          $region27: #{resnet_forward.26} parent=23 // pred_region
            // Predicated region
            $region29: #{resnet_forward.26} parent=27 // pred_check
              _
            $region30: #{resnet_forward.26} parent=27 // pred_check_branch
              %242 = sbr.rel (0) target = $region32
            $region31: #{resnet_forward.26} parent=27 // pred_region
              // Predicated region
              $region44: #{resnet_forward.26} parent=31 // pred_check
                _
              $region45: #{resnet_forward.26} parent=31 // pred_check_branch
                %384 = sbr.rel (0) target = $region47
              $region46: #{resnet_forward.26} parent=31 // pred_region
                loop: start=0, step=1, limit=1
                $region48: #{resnet_forward.26} parent=46 // loop_pre_header
                  _
                $region49: #{resnet_forward.26} parent=46 // loop_header
                  %s386 = sphi 0, %s390
                  %p387 = scmp.ge.s32.totalorder %s386, 1
                  %s391 = sphi %s238, %s238
                  %s392 = sphi %s232, %s232
                $region50: #{resnet_forward.26} parent=46 // loop_header_branch
                  %389 = sbr.rel (%p387) target = $region54
                $region51: #{resnet_forward.26} parent=46 // loop_body
                  %v393 = vld [vmem:[%s391] sm:$0xff]
                  %394 = vst [vmem:[%s392] sm:$0xff] %v393
                  %v395 = vld [vmem:[%s391 + $0x10] sm:$0xff]
                  %396 = vst [vmem:[%s392 + $0x8] sm:$0xff] %v395
                  %v397 = vld [vmem:[%s391 + $0x20] sm:$0xff]
                  %398 = vst [vmem:[%s392 + $0x10] sm:$0xff] %v397
                  %v399 = vld [vmem:[%s391 + $0x30] sm:$0xff]
                  %400 = vst [vmem:[%s392 + $0x18] sm:$0xff] %v399
                  %v401 = vld [vmem:[%s391 + $0x40] sm:$0xff]
                  %402 = vst [vmem:[%s392 + $0x20] sm:$0xff] %v401
                  %v403 = vld [vmem:[%s391 + $0x50] sm:$0xff]
                  %404 = vst [vmem:[%s392 + $0x28] sm:$0xff] %v403
                  %v405 = vld [vmem:[%s391 + $0x60] sm:$0xff]
                  %406 = vst [vmem:[%s392 + $0x30] sm:$0xff] %v405
                  %v407 = vld [vmem:[%s391 + $0x70] sm:$0xff]
                  %408 = vst [vmem:[%s392 + $0x38] sm:$0xff] %v407
                  %v409 = vld [vmem:[%s391 + $0x80] sm:$0xff]
                  %410 = vst [vmem:[%s392 + $0x40] sm:$0xff] %v409
                  %v411 = vld [vmem:[%s391 + $0x90] sm:$0xff]
                  %412 = vst [vmem:[%s392 + $0x48] sm:$0xff] %v411
                  %v413 = vld [vmem:[%s391 + $0xa0] sm:$0xff]
                  %414 = vst [vmem:[%s392 + $0x50] sm:$0xff] %v413
                  %v415 = vld [vmem:[%s391 + $0xb0] sm:$0xff]
                  %416 = vst [vmem:[%s392 + $0x58] sm:$0xff] %v415
                  %v417 = vld [vmem:[%s391 + $0xc0] sm:$0xff]
                  %418 = vst [vmem:[%s392 + $0x60] sm:$0xff] %v417
                  %v419 = vld [vmem:[%s391 + $0xd0] sm:$0xff]
                  %420 = vst [vmem:[%s392 + $0x68] sm:$0xff] %v419
                  %v421 = vld [vmem:[%s391 + $0xe0] sm:$0xff]
                  %422 = vst [vmem:[%s392 + $0x70] sm:$0xff] %v421
                  %v423 = vld [vmem:[%s391 + $0xf0] sm:$0xff]
                  %424 = vst [vmem:[%s392 + $0x78] sm:$0xff] %v423
                  %v425 = vld [vmem:[%s391 + $0x100] sm:$0xff]
                  %426 = vst [vmem:[%s392 + $0x80] sm:$0xff] %v425
                  %v427 = vld [vmem:[%s391 + $0x110] sm:$0xff]
                  %428 = vst [vmem:[%s392 + $0x88] sm:$0xff] %v427
                  %v429 = vld [vmem:[%s391 + $0x120] sm:$0xff]
                  %430 = vst [vmem:[%s392 + $0x90] sm:$0xff] %v429
                  %v431 = vld [vmem:[%s391 + $0x130] sm:$0xff]
                  %432 = vst [vmem:[%s392 + $0x98] sm:$0xff] %v431
                  %v433 = vld [vmem:[%s391 + $0x140] sm:$0xff]
                  %434 = vst [vmem:[%s392 + $0xa0] sm:$0xff] %v433
                  %v435 = vld [vmem:[%s391 + $0x150] sm:$0xff]
                  %436 = vst [vmem:[%s392 + $0xa8] sm:$0xff] %v435
                  %v437 = vld [vmem:[%s391 + $0x160] sm:$0xff]
                  %438 = vst [vmem:[%s392 + $0xb0] sm:$0xff] %v437
                  %v439 = vld [vmem:[%s391 + $0x170] sm:$0xff]
                  %440 = vst [vmem:[%s392 + $0xb8] sm:$0xff] %v439
                  %v441 = vld [vmem:[%s391 + $0x180] sm:$0xff]
                  %442 = vst [vmem:[%s392 + $0xc0] sm:$0xff] %v441
                  %v443 = vld [vmem:[%s391 + $0x190] sm:$0xff]
                  %444 = vst [vmem:[%s392 + $0xc8] sm:$0xff] %v443
                  %v445 = vld [vmem:[%s391 + $0x1a0] sm:$0xff]
                  %446 = vst [vmem:[%s392 + $0xd0] sm:$0xff] %v445
                  %v447 = vld [vmem:[%s391 + $0x1b0] sm:$0xff]
                  %448 = vst [vmem:[%s392 + $0xd8] sm:$0xff] %v447
                  %v449 = vld [vmem:[%s391 + $0x1c0] sm:$0xff]
                  %450 = vst [vmem:[%s392 + $0xe0] sm:$0xff] %v449
                  %v451 = vld [vmem:[%s391 + $0x1d0] sm:$0xff]
                  %452 = vst [vmem:[%s392 + $0xe8] sm:$0xff] %v451
                  %v453 = vld [vmem:[%s391 + $0x1e0] sm:$0xff]
                  %454 = vst [vmem:[%s392 + $0xf0] sm:$0xff] %v453
                  %v455 = vld [vmem:[%s391 + $0x1f0] sm:$0xff]
                  %456 = vst [vmem:[%s392 + $0xf8] sm:$0xff] %v455
                  %v457 = vld [vmem:[%s391 + $0x200] sm:$0xff]
                  %458 = vst [vmem:[%s392 + $0x100] sm:$0xff] %v457
                  %v459 = vld [vmem:[%s391 + $0x210] sm:$0xff]
                  %460 = vst [vmem:[%s392 + $0x108] sm:$0xff] %v459
                  %v461 = vld [vmem:[%s391 + $0x220] sm:$0xff]
                  %462 = vst [vmem:[%s392 + $0x110] sm:$0xff] %v461
                  %v463 = vld [vmem:[%s391 + $0x230] sm:$0xff]
                  %464 = vst [vmem:[%s392 + $0x118] sm:$0xff] %v463
                  %v465 = vld [vmem:[%s391 + $0x240] sm:$0xff]
                  %466 = vst [vmem:[%s392 + $0x120] sm:$0xff] %v465
                  %v467 = vld [vmem:[%s391 + $0x250] sm:$0xff]
                  %468 = vst [vmem:[%s392 + $0x128] sm:$0xff] %v467
                  %v469 = vld [vmem:[%s391 + $0x260] sm:$0xff]
                  %470 = vst [vmem:[%s392 + $0x130] sm:$0xff] %v469
                  %v471 = vld [vmem:[%s391 + $0x270] sm:$0xff]
                  %472 = vst [vmem:[%s392 + $0x138] sm:$0xff] %v471
                  %v473 = vld [vmem:[%s391 + $0x280] sm:$0xff]
                  %474 = vst [vmem:[%s392 + $0x140] sm:$0xff] %v473
                  %v475 = vld [vmem:[%s391 + $0x290] sm:$0xff]
                  %476 = vst [vmem:[%s392 + $0x148] sm:$0xff] %v475
                  %v477 = vld [vmem:[%s391 + $0x2a0] sm:$0xff]
                  %478 = vst [vmem:[%s392 + $0x150] sm:$0xff] %v477
                  %v479 = vld [vmem:[%s391 + $0x2b0] sm:$0xff]
                  %480 = vst [vmem:[%s392 + $0x158] sm:$0xff] %v479
                  %v481 = vld [vmem:[%s391 + $0x2c0] sm:$0xff]
                  %482 = vst [vmem:[%s392 + $0x160] sm:$0xff] %v481
                  %v483 = vld [vmem:[%s391 + $0x2d0] sm:$0xff]
                  %484 = vst [vmem:[%s392 + $0x168] sm:$0xff] %v483
                  %v485 = vld [vmem:[%s391 + $0x2e0] sm:$0xff]
                  %486 = vst [vmem:[%s392 + $0x170] sm:$0xff] %v485
                  %v487 = vld [vmem:[%s391 + $0x2f0] sm:$0xff]
                  %488 = vst [vmem:[%s392 + $0x178] sm:$0xff] %v487
                  %v489 = vld [vmem:[%s391 + $0x300] sm:$0xff]
                  %490 = vst [vmem:[%s392 + $0x180] sm:$0xff] %v489
                  %v491 = vld [vmem:[%s391 + $0x310] sm:$0xff]
                  %492 = vst [vmem:[%s392 + $0x188] sm:$0xff] %v491
                  %v493 = vld [vmem:[%s391 + $0x320] sm:$0xff]
                  %494 = vst [vmem:[%s392 + $0x190] sm:$0xff] %v493
                  %v495 = vld [vmem:[%s391 + $0x330] sm:$0xff]
                  %496 = vst [vmem:[%s392 + $0x198] sm:$0xff] %v495
                  %v497 = vld [vmem:[%s391 + $0x340] sm:$0xff]
                  %498 = vst [vmem:[%s392 + $0x1a0] sm:$0xff] %v497
                  %v499 = vld [vmem:[%s391 + $0x350] sm:$0xff]
                  %500 = vst [vmem:[%s392 + $0x1a8] sm:$0xff] %v499
                  %v501 = vld [vmem:[%s391 + $0x360] sm:$0xff]
                  %502 = vst [vmem:[%s392 + $0x1b0] sm:$0xff] %v501
                  %v503 = vld [vmem:[%s391 + $0x370] sm:$0xff]
                  %504 = vst [vmem:[%s392 + $0x1b8] sm:$0xff] %v503
                  %v505 = vld [vmem:[%s391 + $0x380] sm:$0xff]
                  %506 = vst [vmem:[%s392 + $0x1c0] sm:$0xff] %v505
                  %v507 = vld [vmem:[%s391 + $0x390] sm:$0xff]
                  %508 = vst [vmem:[%s392 + $0x1c8] sm:$0xff] %v507
                  %v509 = vld [vmem:[%s391 + $0x3a0] sm:$0xff]
                  %510 = vst [vmem:[%s392 + $0x1d0] sm:$0xff] %v509
                  %v511 = vld [vmem:[%s391 + $0x3b0] sm:$0xff]
                  %512 = vst [vmem:[%s392 + $0x1d8] sm:$0xff] %v511
                  %v513 = vld [vmem:[%s391 + $0x3c0] sm:$0xff]
                  %514 = vst [vmem:[%s392 + $0x1e0] sm:$0xff] %v513
                  %v515 = vld [vmem:[%s391 + $0x3d0] sm:$0xff]
                  %516 = vst [vmem:[%s392 + $0x1e8] sm:$0xff] %v515
                  %v517 = vld [vmem:[%s391 + $0x3e0] sm:$0xff]
                  %518 = vst [vmem:[%s392 + $0x1f0] sm:$0xff] %v517
                  %v519 = vld [vmem:[%s391 + $0x3f0] sm:$0xff]
                  %520 = vst [vmem:[%s392 + $0x1f8] sm:$0xff] %v519
                $region52: #{resnet_forward.26} parent=46 // loop_footer
                  %s390 = sadd.s32 1, %s386
                $region53: #{resnet_forward.26} parent=46 // loop_footer_branch
                  %385 = sbr.rel target = $region49
                $region54: #{resnet_forward.26} parent=46 // loop_exit
                  _
              $region47: #{resnet_forward.26} parent=31 // pred_fallthru
                _
              // Predicated region
              $region55: #{resnet_forward.26} parent=31 // pred_check
                _
              $region56: #{resnet_forward.26} parent=31 // pred_check_branch
                %522 = sbr.rel target = $region58
              $region57: #{resnet_forward.26} parent=31 // pred_region
                _
              $region58: #{resnet_forward.26} parent=31 // pred_fallthru
                _
            $region32: #{resnet_forward.26} parent=27 // pred_fallthru
              _
            // Predicated region
            $region33: #{resnet_forward.26} parent=27 // pred_check
              _
            $region34: #{resnet_forward.26} parent=27 // pred_check_branch
              %244 = sbr.rel target = $region36
            $region35: #{resnet_forward.26} parent=27 // pred_region
              %s246 = ssub.s32 256, 1
              loop: start=0, step=1, limit=1
              $region37: #{resnet_forward.26} parent=35 // loop_pre_header
                _
              $region38: #{resnet_forward.26} parent=35 // loop_header
                %s248 = sphi 0, %s252
                %p249 = scmp.ge.s32.totalorder %s248, 1
                %s253 = sphi %s238, %s238
                %s254 = sphi %s232, %s232
              $region39: #{resnet_forward.26} parent=35 // loop_header_branch
                %251 = sbr.rel (%p249) target = $region43
              $region40: #{resnet_forward.26} parent=35 // loop_body
                %v255 = vld [vmem:[%s253] sm:%s246]
                %256 = vst [vmem:[%s254] sm:%s246] %v255
                %v257 = vld [vmem:[%s253 + $0x10] sm:%s246]
                %258 = vst [vmem:[%s254 + $0x8] sm:%s246] %v257
                %v259 = vld [vmem:[%s253 + $0x20] sm:%s246]
                %260 = vst [vmem:[%s254 + $0x10] sm:%s246] %v259
                %v261 = vld [vmem:[%s253 + $0x30] sm:%s246]
                %262 = vst [vmem:[%s254 + $0x18] sm:%s246] %v261
                %v263 = vld [vmem:[%s253 + $0x40] sm:%s246]
                %264 = vst [vmem:[%s254 + $0x20] sm:%s246] %v263
                %v265 = vld [vmem:[%s253 + $0x50] sm:%s246]
                %266 = vst [vmem:[%s254 + $0x28] sm:%s246] %v265
                %v267 = vld [vmem:[%s253 + $0x60] sm:%s246]
                %268 = vst [vmem:[%s254 + $0x30] sm:%s246] %v267
                %v269 = vld [vmem:[%s253 + $0x70] sm:%s246]
                %270 = vst [vmem:[%s254 + $0x38] sm:%s246] %v269
                %v271 = vld [vmem:[%s253 + $0x80] sm:%s246]
                %272 = vst [vmem:[%s254 + $0x40] sm:%s246] %v271
                %v273 = vld [vmem:[%s253 + $0x90] sm:%s246]
                %274 = vst [vmem:[%s254 + $0x48] sm:%s246] %v273
                %v275 = vld [vmem:[%s253 + $0xa0] sm:%s246]
                %276 = vst [vmem:[%s254 + $0x50] sm:%s246] %v275
                %v277 = vld [vmem:[%s253 + $0xb0] sm:%s246]
                %278 = vst [vmem:[%s254 + $0x58] sm:%s246] %v277
                %v279 = vld [vmem:[%s253 + $0xc0] sm:%s246]
                %280 = vst [vmem:[%s254 + $0x60] sm:%s246] %v279
                %v281 = vld [vmem:[%s253 + $0xd0] sm:%s246]
                %282 = vst [vmem:[%s254 + $0x68] sm:%s246] %v281
                %v283 = vld [vmem:[%s253 + $0xe0] sm:%s246]
                %284 = vst [vmem:[%s254 + $0x70] sm:%s246] %v283
                %v285 = vld [vmem:[%s253 + $0xf0] sm:%s246]
                %286 = vst [vmem:[%s254 + $0x78] sm:%s246] %v285
                %v287 = vld [vmem:[%s253 + $0x100] sm:%s246]
                %288 = vst [vmem:[%s254 + $0x80] sm:%s246] %v287
                %v289 = vld [vmem:[%s253 + $0x110] sm:%s246]
                %290 = vst [vmem:[%s254 + $0x88] sm:%s246] %v289
                %v291 = vld [vmem:[%s253 + $0x120] sm:%s246]
                %292 = vst [vmem:[%s254 + $0x90] sm:%s246] %v291
                %v293 = vld [vmem:[%s253 + $0x130] sm:%s246]
                %294 = vst [vmem:[%s254 + $0x98] sm:%s246] %v293
                %v295 = vld [vmem:[%s253 + $0x140] sm:%s246]
                %296 = vst [vmem:[%s254 + $0xa0] sm:%s246] %v295
                %v297 = vld [vmem:[%s253 + $0x150] sm:%s246]
                %298 = vst [vmem:[%s254 + $0xa8] sm:%s246] %v297
                %v299 = vld [vmem:[%s253 + $0x160] sm:%s246]
                %300 = vst [vmem:[%s254 + $0xb0] sm:%s246] %v299
                %v301 = vld [vmem:[%s253 + $0x170] sm:%s246]
                %302 = vst [vmem:[%s254 + $0xb8] sm:%s246] %v301
                %v303 = vld [vmem:[%s253 + $0x180] sm:%s246]
                %304 = vst [vmem:[%s254 + $0xc0] sm:%s246] %v303
                %v305 = vld [vmem:[%s253 + $0x190] sm:%s246]
                %306 = vst [vmem:[%s254 + $0xc8] sm:%s246] %v305
                %v307 = vld [vmem:[%s253 + $0x1a0] sm:%s246]
                %308 = vst [vmem:[%s254 + $0xd0] sm:%s246] %v307
                %v309 = vld [vmem:[%s253 + $0x1b0] sm:%s246]
                %310 = vst [vmem:[%s254 + $0xd8] sm:%s246] %v309
                %v311 = vld [vmem:[%s253 + $0x1c0] sm:%s246]
                %312 = vst [vmem:[%s254 + $0xe0] sm:%s246] %v311
                %v313 = vld [vmem:[%s253 + $0x1d0] sm:%s246]
                %314 = vst [vmem:[%s254 + $0xe8] sm:%s246] %v313
                %v315 = vld [vmem:[%s253 + $0x1e0] sm:%s246]
                %316 = vst [vmem:[%s254 + $0xf0] sm:%s246] %v315
                %v317 = vld [vmem:[%s253 + $0x1f0] sm:%s246]
                %318 = vst [vmem:[%s254 + $0xf8] sm:%s246] %v317
                %v319 = vld [vmem:[%s253 + $0x200] sm:%s246]
                %320 = vst [vmem:[%s254 + $0x100] sm:%s246] %v319
                %v321 = vld [vmem:[%s253 + $0x210] sm:%s246]
                %322 = vst [vmem:[%s254 + $0x108] sm:%s246] %v321
                %v323 = vld [vmem:[%s253 + $0x220] sm:%s246]
                %324 = vst [vmem:[%s254 + $0x110] sm:%s246] %v323
                %v325 = vld [vmem:[%s253 + $0x230] sm:%s246]
                %326 = vst [vmem:[%s254 + $0x118] sm:%s246] %v325
                %v327 = vld [vmem:[%s253 + $0x240] sm:%s246]
                %328 = vst [vmem:[%s254 + $0x120] sm:%s246] %v327
                %v329 = vld [vmem:[%s253 + $0x250] sm:%s246]
                %330 = vst [vmem:[%s254 + $0x128] sm:%s246] %v329
                %v331 = vld [vmem:[%s253 + $0x260] sm:%s246]
                %332 = vst [vmem:[%s254 + $0x130] sm:%s246] %v331
                %v333 = vld [vmem:[%s253 + $0x270] sm:%s246]
                %334 = vst [vmem:[%s254 + $0x138] sm:%s246] %v333
                %v335 = vld [vmem:[%s253 + $0x280] sm:%s246]
                %336 = vst [vmem:[%s254 + $0x140] sm:%s246] %v335
                %v337 = vld [vmem:[%s253 + $0x290] sm:%s246]
                %338 = vst [vmem:[%s254 + $0x148] sm:%s246] %v337
                %v339 = vld [vmem:[%s253 + $0x2a0] sm:%s246]
                %340 = vst [vmem:[%s254 + $0x150] sm:%s246] %v339
                %v341 = vld [vmem:[%s253 + $0x2b0] sm:%s246]
                %342 = vst [vmem:[%s254 + $0x158] sm:%s246] %v341
                %v343 = vld [vmem:[%s253 + $0x2c0] sm:%s246]
                %344 = vst [vmem:[%s254 + $0x160] sm:%s246] %v343
                %v345 = vld [vmem:[%s253 + $0x2d0] sm:%s246]
                %346 = vst [vmem:[%s254 + $0x168] sm:%s246] %v345
                %v347 = vld [vmem:[%s253 + $0x2e0] sm:%s246]
                %348 = vst [vmem:[%s254 + $0x170] sm:%s246] %v347
                %v349 = vld [vmem:[%s253 + $0x2f0] sm:%s246]
                %350 = vst [vmem:[%s254 + $0x178] sm:%s246] %v349
                %v351 = vld [vmem:[%s253 + $0x300] sm:%s246]
                %352 = vst [vmem:[%s254 + $0x180] sm:%s246] %v351
                %v353 = vld [vmem:[%s253 + $0x310] sm:%s246]
                %354 = vst [vmem:[%s254 + $0x188] sm:%s246] %v353
                %v355 = vld [vmem:[%s253 + $0x320] sm:%s246]
                %356 = vst [vmem:[%s254 + $0x190] sm:%s246] %v355
                %v357 = vld [vmem:[%s253 + $0x330] sm:%s246]
                %358 = vst [vmem:[%s254 + $0x198] sm:%s246] %v357
                %v359 = vld [vmem:[%s253 + $0x340] sm:%s246]
                %360 = vst [vmem:[%s254 + $0x1a0] sm:%s246] %v359
                %v361 = vld [vmem:[%s253 + $0x350] sm:%s246]
                %362 = vst [vmem:[%s254 + $0x1a8] sm:%s246] %v361
                %v363 = vld [vmem:[%s253 + $0x360] sm:%s246]
                %364 = vst [vmem:[%s254 + $0x1b0] sm:%s246] %v363
                %v365 = vld [vmem:[%s253 + $0x370] sm:%s246]
                %366 = vst [vmem:[%s254 + $0x1b8] sm:%s246] %v365
                %v367 = vld [vmem:[%s253 + $0x380] sm:%s246]
                %368 = vst [vmem:[%s254 + $0x1c0] sm:%s246] %v367
                %v369 = vld [vmem:[%s253 + $0x390] sm:%s246]
                %370 = vst [vmem:[%s254 + $0x1c8] sm:%s246] %v369
                %v371 = vld [vmem:[%s253 + $0x3a0] sm:%s246]
                %372 = vst [vmem:[%s254 + $0x1d0] sm:%s246] %v371
                %v373 = vld [vmem:[%s253 + $0x3b0] sm:%s246]
                %374 = vst [vmem:[%s254 + $0x1d8] sm:%s246] %v373
                %v375 = vld [vmem:[%s253 + $0x3c0] sm:%s246]
                %376 = vst [vmem:[%s254 + $0x1e0] sm:%s246] %v375
                %v377 = vld [vmem:[%s253 + $0x3d0] sm:%s246]
                %378 = vst [vmem:[%s254 + $0x1e8] sm:%s246] %v377
                %v379 = vld [vmem:[%s253 + $0x3e0] sm:%s246]
                %380 = vst [vmem:[%s254 + $0x1f0] sm:%s246] %v379
                %v381 = vld [vmem:[%s253 + $0x3f0] sm:%s246]
                %382 = vst [vmem:[%s254 + $0x1f8] sm:%s246] %v381
              $region41: #{resnet_forward.26} parent=35 // loop_footer
                %s252 = sadd.s32 1, %s248
              $region42: #{resnet_forward.26} parent=35 // loop_footer_branch
                %247 = sbr.rel target = $region38
              $region43: #{resnet_forward.26} parent=35 // loop_exit
                _
            $region36: #{resnet_forward.26} parent=27 // pred_fallthru
              _
          $region28: #{resnet_forward.26} parent=23 // pred_fallthru
            _
          %523 = vnop
        $region24: #{resnet_forward.26} parent=15 // pred_fallthru
          _
        // Predicated region
        $region59: #{resnet_forward.26} parent=15 // pred_check
          %p524 = pneg %p106
        $region60: #{resnet_forward.26} parent=15 // pred_check_branch
          %526 = sbr.rel (%p524) target = $region62
        $region61: #{resnet_forward.26} parent=15 // pred_region
          %s527 = smul.u32 2, %s19
          %p528 = scmp.lt.s32.totalorder %s527, 3
          %s529 = scalar_select %p528, %s527, 3
          %s530 = scalar_lea.vmem %s2, %s529
          %s531 = smul.u32 2, %s19
        $region62: #{resnet_forward.26} parent=15 // pred_fallthru
          _
        // Predicated region
        $region63: #{resnet_forward.26} parent=15 // pred_check
          %p532 = pneg %p132
        $region64: #{resnet_forward.26} parent=15 // pred_check_branch
          %534 = sbr.rel (%p532) target = $region66
        $region65: #{resnet_forward.26} parent=15 // pred_region
          %s535 = smul.u32 2, %s19
          %p536 = scmp.lt.s32.totalorder %s535, 3
          %s537 = scalar_select %p536, %s535, 3
          %s538 = scalar_lea.vmem %s3, %s537
          %s539 = smul.u32 2, %s19
        $region66: #{resnet_forward.26} parent=15 // pred_fallthru
          _
        // Predicated region
        $region67: #{resnet_forward.26} parent=15 // pred_check
          %p540 = pneg %p160
        $region68: #{resnet_forward.26} parent=15 // pred_check_branch
          %542 = sbr.rel (%p540) target = $region70
        $region69: #{resnet_forward.26} parent=15 // pred_region
          %s543 = smul.u32 2, %s19
          %p544 = scmp.lt.s32.totalorder %s18, 0
          %s545 = scalar_select %p544, %s18, 0
          %p546 = scmp.lt.s32.totalorder %s543, 3
          %s547 = scalar_select %p546, %s543, 3
          %s548 = smul.addr %s545, 4
          %s549 = sadd.s32 %s547, %s548
          %s550 = smul.addr %s549, 4
          %s551 = scalar_lea.vmem %s4, %s550
          %s552 = smul.u32 2, %s19
        $region70: #{resnet_forward.26} parent=15 // pred_fallthru
          _
      $region16: #{resnet_forward.26} parent=5 // pred_fallthru
        _
      %p553 = scmp.le.s32.totalorder 1, %s11
      %p554 = scmp.lt.s32.totalorder %s11, 19
      %p555 = pnand %p553, %p554
      %p556 = pneg %p555
      // Predicated region
      $region71: #{resnet_forward.26} parent=5 // pred_check
        _
      $region72: #{resnet_forward.26} parent=5 // pred_check_branch
        %558 = sbr.rel (%p555) target = $region74
      $region73: #{resnet_forward.26} parent=5 // pred_region
        %s559 = ssub.s32 %s11, 1
        %s560 = sand.u32 %s73, 1
        %s561 = sand.u32 %s73, 1
        %s562 = smul.addr %s561, 512
        %s563 = scalar_lea.vmem [#allocation3], %s562
        // Predicated region
        $region75: #{resnet_forward.26} parent=73 // pred_check
          %p564 = pneg %p86
        $region76: #{resnet_forward.26} parent=73 // pred_check_branch
          %566 = sbr.rel (%p564) target = $region78
        $region77: #{resnet_forward.26} parent=73 // pred_region
          _
        $region78: #{resnet_forward.26} parent=73 // pred_fallthru
          _
        %s567 = smul.u32 4, %s23
        %p568 = scmp.lt.s32.totalorder %s21, 0
        %s569 = scalar_select %p568, %s21, 0
        %p570 = scmp.lt.s32.totalorder %s567, 35
        %s571 = scalar_select %p570, %s567, 35
        %s572 = smul.addr %s569, 36
        %s573 = sadd.s32 %s571, %s572
        %s574 = smul.addr %s573, 4
        %s575 = scalar_lea.vmem %s0, %s574
        %p576 = pneg %p58
        %p577 = pneg %p55
        %s578 = sand.u32 %s73, 1
        %s579 = sand.u32 %s73, 1
        %s580 = smul.addr %s579, 512
        %s581 = scalar_lea.vmem [#allocation3], %s580
        %p582 = pneg %p86
        %p583 = pneg %p83
        %s584 = smul.u32 2, %s22
        %p585 = scmp.lt.s32.totalorder %s584, 3
        %s586 = scalar_select %p585, %s584, 3
        %s587 = scalar_lea.vmem %s2, %s586
        %p588 = pneg %p112
        %p589 = pneg %p109
        %s590 = smul.u32 2, %s22
        %p591 = scmp.lt.s32.totalorder %s590, 3
        %s592 = scalar_select %p591, %s590, 3
        %s593 = scalar_lea.vmem %s3, %s592
        %p594 = pneg %p138
        %p595 = pneg %p135
        %s596 = smul.u32 2, %s22
        %p597 = scmp.lt.s32.totalorder %s21, 0
        %s598 = scalar_select %p597, %s21, 0
        %p599 = scmp.lt.s32.totalorder %s596, 3
        %s600 = scalar_select %p599, %s596, 3
        %s601 = smul.addr %s598, 4
        %s602 = sadd.s32 %s600, %s601
        %s603 = smul.addr %s602, 4
        %s604 = scalar_lea.vmem %s4, %s603
        %p605 = pneg %p166
        %p606 = pneg %p163
        %p607 = pneg %p194
        %p608 = pneg %p191
        %s609 = smul.u32 2, %s22
        %p610 = scmp.lt.s32.totalorder %s21, 0
        %s611 = scalar_select %p610, %s21, 0
        %p612 = scmp.lt.s32.totalorder %s609, 3
        %s613 = scalar_select %p612, %s609, 3
        %s614 = smul.addr %s611, 4
        %s615 = sadd.s32 %s613, %s614
        %s616 = smul.addr %s615, 4
        %s617 = scalar_lea.vmem %s5, %s616
        %s618 = smul.u32 4, %s23
        %p619 = scmp.lt.s32.totalorder %s21, 0
        %s620 = scalar_select %p619, %s21, 0
        %p621 = scmp.lt.s32.totalorder %s618, 35
        %s622 = scalar_select %p621, %s618, 35
        %s623 = smul.addr %s620, 36
        %s624 = sadd.s32 %s622, %s623
        %s625 = smul.addr %s624, 4
        %s626 = scalar_lea.vmem %s0, %s625
        %s627 = smul.u32 4, %s23
        %s628 = smul.u32 64, %s23
        %s629 = smul.u32 2, %s22
        %s630 = smul.u32 2, %s22
        %p631 = scmp.lt.s32.totalorder %s630, 3
        %s632 = scalar_select %p631, %s630, 3
        %s633 = scalar_lea.vmem %s2, %s632
        %s634 = smul.u32 2, %s22
        %s635 = smul.u32 2, %s22
        %p636 = scmp.lt.s32.totalorder %s635, 3
        %s637 = scalar_select %p636, %s635, 3
        %s638 = scalar_lea.vmem %s3, %s637
        %s639 = smul.u32 2, %s22
        %s640 = smul.u32 2, %s22
        %p641 = scmp.lt.s32.totalorder %s21, 0
        %s642 = scalar_select %p641, %s21, 0
        %p643 = scmp.lt.s32.totalorder %s640, 3
        %s644 = scalar_select %p643, %s640, 3
        %s645 = smul.addr %s642, 4
        %s646 = sadd.s32 %s644, %s645
        %s647 = smul.addr %s646, 4
        %s648 = scalar_lea.vmem %s4, %s647
        %s649 = smul.u32 2, %s22
        %s650 = smul.u32 2, %s22
        %p651 = scmp.lt.s32.totalorder %s21, 0
        %s652 = scalar_select %p651, %s21, 0
        %p653 = scmp.lt.s32.totalorder %s650, 3
        %s654 = scalar_select %p653, %s650, 3
        %s655 = smul.addr %s652, 4
        %s656 = sadd.s32 %s654, %s655
        %s657 = smul.addr %s656, 4
        %s658 = scalar_lea.vmem %s5, %s657
        %s659 = smul.u32 2, %s22
        %p660 = scmp.eq.s32.totalorder %s23, 0
        // Predicated region
        $region79: #{resnet_forward.26} parent=73 // pred_check
          %p661 = pneg %p660
        $region80: #{resnet_forward.26} parent=73 // pred_check_branch
          %663 = sbr.rel (%p661) target = $region82
        $region81: #{resnet_forward.26} parent=73 // pred_region
          %664 = vst [vmem:[#allocation2] sm:$0xff] 0.0
          %665 = vst [vmem:[#allocation2 + $0x8] sm:$0xff] 0.0
        $region82: #{resnet_forward.26} parent=73 // pred_fallthru
          _
        %v666 = vld [vmem:[#allocation2] sm:$0xff]
        %v667 = vld [vmem:[#allocation2 + $0x8] sm:$0xff]
        %v668 = vld [vmem:[%s626] sm:$0xff]
        %v669 = vld [vmem:[%s626 + $0x8] sm:$0xff]
        %v670 = vld [vmem:[%s563] sm:$0xff]
        %v671 = vld [vmem:[%s563 + $0x8] sm:$0xff]
        %v672 = vld [vmem:[%s563 + $0x10] sm:$0xff]
        %v673 = vld [vmem:[%s563 + $0x18] sm:$0xff]
        %v674 = vld [vmem:[%s563 + $0x20] sm:$0xff]
        %v675 = vld [vmem:[%s563 + $0x28] sm:$0xff]
        %v676 = vld [vmem:[%s563 + $0x30] sm:$0xff]
        %v677 = vld [vmem:[%s563 + $0x38] sm:$0xff]
        %v678 = vld [vmem:[%s563 + $0x40] sm:$0xff]
        %v679 = vld [vmem:[%s563 + $0x48] sm:$0xff]
        %v680 = vld [vmem:[%s563 + $0x50] sm:$0xff]
        %v681 = vld [vmem:[%s563 + $0x58] sm:$0xff]
        %v682 = vld [vmem:[%s563 + $0x60] sm:$0xff]
        %v683 = vld [vmem:[%s563 + $0x68] sm:$0xff]
        %v684 = vld [vmem:[%s563 + $0x70] sm:$0xff]
        %v685 = vld [vmem:[%s563 + $0x78] sm:$0xff]
        %v686 = vld [vmem:[%s563 + $0x80] sm:$0xff]
        %v687 = vld [vmem:[%s563 + $0x88] sm:$0xff]
        %v688 = vld [vmem:[%s563 + $0x90] sm:$0xff]
        %v689 = vld [vmem:[%s563 + $0x98] sm:$0xff]
        %v690 = vld [vmem:[%s563 + $0xa0] sm:$0xff]
        %v691 = vld [vmem:[%s563 + $0xa8] sm:$0xff]
        %v692 = vld [vmem:[%s563 + $0xb0] sm:$0xff]
        %v693 = vld [vmem:[%s563 + $0xb8] sm:$0xff]
        %v694 = vld [vmem:[%s563 + $0xc0] sm:$0xff]
        %v695 = vld [vmem:[%s563 + $0xc8] sm:$0xff]
        %v696 = vld [vmem:[%s563 + $0xd0] sm:$0xff]
        %v697 = vld [vmem:[%s563 + $0xd8] sm:$0xff]
        %v698 = vld [vmem:[%s563 + $0xe0] sm:$0xff]
        %v699 = vld [vmem:[%s563 + $0xe8] sm:$0xff]
        %v700 = vld [vmem:[%s563 + $0xf0] sm:$0xff]
        %v701 = vld [vmem:[%s563 + $0xf8] sm:$0xff]
        %v702 = vld [vmem:[%s563 + $0x100] sm:$0xff]
        %v703 = vld [vmem:[%s563 + $0x108] sm:$0xff]
        %v704 = vld [vmem:[%s563 + $0x110] sm:$0xff]
        %v705 = vld [vmem:[%s563 + $0x118] sm:$0xff]
        %v706 = vld [vmem:[%s563 + $0x120] sm:$0xff]
        %v707 = vld [vmem:[%s563 + $0x128] sm:$0xff]
        %v708 = vld [vmem:[%s563 + $0x130] sm:$0xff]
        %v709 = vld [vmem:[%s563 + $0x138] sm:$0xff]
        %v710 = vld [vmem:[%s563 + $0x140] sm:$0xff]
        %v711 = vld [vmem:[%s563 + $0x148] sm:$0xff]
        %v712 = vld [vmem:[%s563 + $0x150] sm:$0xff]
        %v713 = vld [vmem:[%s563 + $0x158] sm:$0xff]
        %v714 = vld [vmem:[%s563 + $0x160] sm:$0xff]
        %v715 = vld [vmem:[%s563 + $0x168] sm:$0xff]
        %v716 = vld [vmem:[%s563 + $0x170] sm:$0xff]
        %v717 = vld [vmem:[%s563 + $0x178] sm:$0xff]
        %v718 = vld [vmem:[%s563 + $0x180] sm:$0xff]
        %v719 = vld [vmem:[%s563 + $0x188] sm:$0xff]
        %v720 = vld [vmem:[%s563 + $0x190] sm:$0xff]
        %v721 = vld [vmem:[%s563 + $0x198] sm:$0xff]
        %v722 = vld [vmem:[%s563 + $0x1a0] sm:$0xff]
        %v723 = vld [vmem:[%s563 + $0x1a8] sm:$0xff]
        %v724 = vld [vmem:[%s563 + $0x1b0] sm:$0xff]
        %v725 = vld [vmem:[%s563 + $0x1b8] sm:$0xff]
        %v726 = vld [vmem:[%s563 + $0x1c0] sm:$0xff]
        %v727 = vld [vmem:[%s563 + $0x1c8] sm:$0xff]
        %v728 = vld [vmem:[%s563 + $0x1d0] sm:$0xff]
        %v729 = vld [vmem:[%s563 + $0x1d8] sm:$0xff]
        %v730 = vld [vmem:[%s563 + $0x1e0] sm:$0xff]
        %v731 = vld [vmem:[%s563 + $0x1e8] sm:$0xff]
        %v732 = vld [vmem:[%s563 + $0x1f0] sm:$0xff]
        %v733 = vld [vmem:[%s563 + $0x1f8] sm:$0xff]
        %v736 = vunpack.c.l.b16 %v668
        %v737 = vunpack.c.h.b16 %v668
        %v738 = vunpack.c.l.b16 %v669
        %v739 = vunpack.c.h.b16 %v669
        %v740 = vpack.c.b16 %v736, %v736
        %v741 = vpack.c.b16 %v737, %v737
        %v742 = vpack.c.b16 %v738, %v738
        %v743 = vpack.c.b16 %v739, %v739
        %v812 = vunpack.c.l.b16 %v670
        %v813 = vunpack.c.h.b16 %v670
        %v814 = vunpack.c.l.b16 %v671
        %v815 = vunpack.c.h.b16 %v671
        %v816 = vunpack.c.l.b16 %v672
        %v817 = vunpack.c.h.b16 %v672
        %v818 = vunpack.c.l.b16 %v673
        %v819 = vunpack.c.h.b16 %v673
        %v820 = vunpack.c.l.b16 %v674
        %v821 = vunpack.c.h.b16 %v674
        %v822 = vunpack.c.l.b16 %v675
        %v823 = vunpack.c.h.b16 %v675
        %v824 = vunpack.c.l.b16 %v676
        %v825 = vunpack.c.h.b16 %v676
        %v826 = vunpack.c.l.b16 %v677
        %v827 = vunpack.c.h.b16 %v677
        %v828 = vunpack.c.l.b16 %v678
        %v829 = vunpack.c.h.b16 %v678
        %v830 = vunpack.c.l.b16 %v679
        %v831 = vunpack.c.h.b16 %v679
        %v832 = vunpack.c.l.b16 %v680
        %v833 = vunpack.c.h.b16 %v680
        %v834 = vunpack.c.l.b16 %v681
        %v835 = vunpack.c.h.b16 %v681
        %v836 = vunpack.c.l.b16 %v682
        %v837 = vunpack.c.h.b16 %v682
        %v838 = vunpack.c.l.b16 %v683
        %v839 = vunpack.c.h.b16 %v683
        %v840 = vunpack.c.l.b16 %v684
        %v841 = vunpack.c.h.b16 %v684
        %v842 = vunpack.c.l.b16 %v685
        %v843 = vunpack.c.h.b16 %v685
        %v844 = vunpack.c.l.b16 %v686
        %v845 = vunpack.c.h.b16 %v686
        %v846 = vunpack.c.l.b16 %v687
        %v847 = vunpack.c.h.b16 %v687
        %v848 = vunpack.c.l.b16 %v688
        %v849 = vunpack.c.h.b16 %v688
        %v850 = vunpack.c.l.b16 %v689
        %v851 = vunpack.c.h.b16 %v689
        %v852 = vunpack.c.l.b16 %v690
        %v853 = vunpack.c.h.b16 %v690
        %v854 = vunpack.c.l.b16 %v691
        %v855 = vunpack.c.h.b16 %v691
        %v856 = vunpack.c.l.b16 %v692
        %v857 = vunpack.c.h.b16 %v692
        %v858 = vunpack.c.l.b16 %v693
        %v859 = vunpack.c.h.b16 %v693
        %v860 = vunpack.c.l.b16 %v694
        %v861 = vunpack.c.h.b16 %v694
        %v862 = vunpack.c.l.b16 %v695
        %v863 = vunpack.c.h.b16 %v695
        %v864 = vunpack.c.l.b16 %v696
        %v865 = vunpack.c.h.b16 %v696
        %v866 = vunpack.c.l.b16 %v697
        %v867 = vunpack.c.h.b16 %v697
        %v868 = vunpack.c.l.b16 %v698
        %v869 = vunpack.c.h.b16 %v698
        %v870 = vunpack.c.l.b16 %v699
        %v871 = vunpack.c.h.b16 %v699
        %v872 = vunpack.c.l.b16 %v700
        %v873 = vunpack.c.h.b16 %v700
        %v874 = vunpack.c.l.b16 %v701
        %v875 = vunpack.c.h.b16 %v701
        %v876 = vunpack.c.l.b16 %v702
        %v877 = vunpack.c.h.b16 %v702
        %v878 = vunpack.c.l.b16 %v703
        %v879 = vunpack.c.h.b16 %v703
        %v880 = vunpack.c.l.b16 %v704
        %v881 = vunpack.c.h.b16 %v704
        %v882 = vunpack.c.l.b16 %v705
        %v883 = vunpack.c.h.b16 %v705
        %v884 = vunpack.c.l.b16 %v706
        %v885 = vunpack.c.h.b16 %v706
        %v886 = vunpack.c.l.b16 %v707
        %v887 = vunpack.c.h.b16 %v707
        %v888 = vunpack.c.l.b16 %v708
        %v889 = vunpack.c.h.b16 %v708
        %v890 = vunpack.c.l.b16 %v709
        %v891 = vunpack.c.h.b16 %v709
        %v892 = vunpack.c.l.b16 %v710
        %v893 = vunpack.c.h.b16 %v710
        %v894 = vunpack.c.l.b16 %v711
        %v895 = vunpack.c.h.b16 %v711
        %v896 = vunpack.c.l.b16 %v712
        %v897 = vunpack.c.h.b16 %v712
        %v898 = vunpack.c.l.b16 %v713
        %v899 = vunpack.c.h.b16 %v713
        %v900 = vunpack.c.l.b16 %v714
        %v901 = vunpack.c.h.b16 %v714
        %v902 = vunpack.c.l.b16 %v715
        %v903 = vunpack.c.h.b16 %v715
        %v904 = vunpack.c.l.b16 %v716
        %v905 = vunpack.c.h.b16 %v716
        %v906 = vunpack.c.l.b16 %v717
        %v907 = vunpack.c.h.b16 %v717
        %v908 = vunpack.c.l.b16 %v718
        %v909 = vunpack.c.h.b16 %v718
        %v910 = vunpack.c.l.b16 %v719
        %v911 = vunpack.c.h.b16 %v719
        %v912 = vunpack.c.l.b16 %v720
        %v913 = vunpack.c.h.b16 %v720
        %v914 = vunpack.c.l.b16 %v721
        %v915 = vunpack.c.h.b16 %v721
        %v916 = vunpack.c.l.b16 %v722
        %v917 = vunpack.c.h.b16 %v722
        %v918 = vunpack.c.l.b16 %v723
        %v919 = vunpack.c.h.b16 %v723
        %v920 = vunpack.c.l.b16 %v724
        %v921 = vunpack.c.h.b16 %v724
        %v922 = vunpack.c.l.b16 %v725
        %v923 = vunpack.c.h.b16 %v725
        %v924 = vunpack.c.l.b16 %v726
        %v925 = vunpack.c.h.b16 %v726
        %v926 = vunpack.c.l.b16 %v727
        %v927 = vunpack.c.h.b16 %v727
        %v928 = vunpack.c.l.b16 %v728
        %v929 = vunpack.c.h.b16 %v728
        %v930 = vunpack.c.l.b16 %v729
        %v931 = vunpack.c.h.b16 %v729
        %v932 = vunpack.c.l.b16 %v730
        %v933 = vunpack.c.h.b16 %v730
        %v934 = vunpack.c.l.b16 %v731
        %v935 = vunpack.c.h.b16 %v731
        %v936 = vunpack.c.l.b16 %v732
        %v937 = vunpack.c.h.b16 %v732
        %v938 = vunpack.c.l.b16 %v733
        %v939 = vunpack.c.h.b16 %v733
        %v940 = vpack.c.b16 %v814, %v812
        %v941 = vpack.c.b16 %v815, %v813
        %v942 = vpack.c.b16 %v818, %v816
        %v943 = vpack.c.b16 %v819, %v817
        %v944 = vpack.c.b16 %v822, %v820
        %v945 = vpack.c.b16 %v823, %v821
        %v946 = vpack.c.b16 %v826, %v824
        %v947 = vpack.c.b16 %v827, %v825
        %v948 = vpack.c.b16 %v830, %v828
        %v949 = vpack.c.b16 %v831, %v829
        %v950 = vpack.c.b16 %v834, %v832
        %v951 = vpack.c.b16 %v835, %v833
        %v952 = vpack.c.b16 %v838, %v836
        %v953 = vpack.c.b16 %v839, %v837
        %v954 = vpack.c.b16 %v842, %v840
        %v955 = vpack.c.b16 %v843, %v841
        %v956 = vpack.c.b16 %v846, %v844
        %v957 = vpack.c.b16 %v847, %v845
        %v958 = vpack.c.b16 %v850, %v848
        %v959 = vpack.c.b16 %v851, %v849
        %v960 = vpack.c.b16 %v854, %v852
        %v961 = vpack.c.b16 %v855, %v853
        %v962 = vpack.c.b16 %v858, %v856
        %v963 = vpack.c.b16 %v859, %v857
        %v964 = vpack.c.b16 %v862, %v860
        %v965 = vpack.c.b16 %v863, %v861
        %v966 = vpack.c.b16 %v866, %v864
        %v967 = vpack.c.b16 %v867, %v865
        %v968 = vpack.c.b16 %v870, %v868
        %v969 = vpack.c.b16 %v871, %v869
        %v970 = vpack.c.b16 %v874, %v872
        %v971 = vpack.c.b16 %v875, %v873
        %v972 = vpack.c.b16 %v878, %v876
        %v973 = vpack.c.b16 %v879, %v877
        %v974 = vpack.c.b16 %v882, %v880
        %v975 = vpack.c.b16 %v883, %v881
        %v976 = vpack.c.b16 %v886, %v884
        %v977 = vpack.c.b16 %v887, %v885
        %v978 = vpack.c.b16 %v890, %v888
        %v979 = vpack.c.b16 %v891, %v889
        %v980 = vpack.c.b16 %v894, %v892
        %v981 = vpack.c.b16 %v895, %v893
        %v982 = vpack.c.b16 %v898, %v896
        %v983 = vpack.c.b16 %v899, %v897
        %v984 = vpack.c.b16 %v902, %v900
        %v985 = vpack.c.b16 %v903, %v901
        %v986 = vpack.c.b16 %v906, %v904
        %v987 = vpack.c.b16 %v907, %v905
        %v988 = vpack.c.b16 %v910, %v908
        %v989 = vpack.c.b16 %v911, %v909
        %v990 = vpack.c.b16 %v914, %v912
        %v991 = vpack.c.b16 %v915, %v913
        %v992 = vpack.c.b16 %v918, %v916
        %v993 = vpack.c.b16 %v919, %v917
        %v994 = vpack.c.b16 %v922, %v920
        %v995 = vpack.c.b16 %v923, %v921
        %v996 = vpack.c.b16 %v926, %v924
        %v997 = vpack.c.b16 %v927, %v925
        %v998 = vpack.c.b16 %v930, %v928
        %v999 = vpack.c.b16 %v931, %v929
        %v1000 = vpack.c.b16 %v934, %v932
        %v1001 = vpack.c.b16 %v935, %v933
        %v1002 = vpack.c.b16 %v938, %v936
        %v1003 = vpack.c.b16 %v939, %v937
        %1068 = vmatpush.bf16.msra.mxu0 %v954
        %1069 = vmatpush.bf16.msra.mxu0 %v952
        %1070 = vmatpush.bf16.msra.mxu0 %v950
        %1071 = vmatpush.bf16.msra.mxu0 %v948
        %1072 = vmatpush.bf16.msra.mxu0 %v946
        %1073 = vmatpush.bf16.msra.mxu0 %v944
        %1074 = vmatpush.bf16.msra.mxu0 %v942
        %1075 = vmatpush.bf16.msra.mxu0 %v940
        %1076 = vmatmul.bf16.gmra.mxu0 %v740
        %v1077 = vpop.f32.mrf.mxu0
        %v1078 = vadd.f32 0.0, %v1077
        %v1079 = vpop.f32.mrf.mxu0
        %1080 = vdwg.mxu0
        %1081 = vmatpush.bf16.msra.mxu0 %v970
        %1082 = vmatpush.bf16.msra.mxu0 %v968
        %1083 = vmatpush.bf16.msra.mxu0 %v966
        %1084 = vmatpush.bf16.msra.mxu0 %v964
        %1085 = vmatpush.bf16.msra.mxu0 %v962
        %1086 = vmatpush.bf16.msra.mxu0 %v960
        %1087 = vmatpush.bf16.msra.mxu0 %v958
        %1088 = vmatpush.bf16.msra.mxu0 %v956
        %1089 = vmatmul.bf16.gmra.mxu0 %v741
        %v1090 = vpop.f32.mrf.mxu0
        %v1091 = vadd.f32 %v1078, %v1090
        %v1092 = vpop.f32.mrf.mxu0
        %1093 = vdwg.mxu0
        %1094 = vmatpush.bf16.msra.mxu0 %v986
        %1095 = vmatpush.bf16.msra.mxu0 %v984
        %1096 = vmatpush.bf16.msra.mxu0 %v982
        %1097 = vmatpush.bf16.msra.mxu0 %v980
        %1098 = vmatpush.bf16.msra.mxu0 %v978
        %1099 = vmatpush.bf16.msra.mxu0 %v976
        %1100 = vmatpush.bf16.msra.mxu0 %v974
        %1101 = vmatpush.bf16.msra.mxu0 %v972
        %1102 = vmatmul.bf16.gmra.mxu0 %v742
        %v1103 = vpop.f32.mrf.mxu0
        %v1104 = vadd.f32 %v1091, %v1103
        %v1105 = vpop.f32.mrf.mxu0
        %1106 = vdwg.mxu0
        %1107 = vmatpush.bf16.msra.mxu0 %v1002
        %1108 = vmatpush.bf16.msra.mxu0 %v1000
        %1109 = vmatpush.bf16.msra.mxu0 %v998
        %1110 = vmatpush.bf16.msra.mxu0 %v996
        %1111 = vmatpush.bf16.msra.mxu0 %v994
        %1112 = vmatpush.bf16.msra.mxu0 %v992
        %1113 = vmatpush.bf16.msra.mxu0 %v990
        %1114 = vmatpush.bf16.msra.mxu0 %v988
        %1115 = vmatmul.bf16.gmra.mxu0 %v743
        %v1116 = vpop.f32.mrf.mxu0
        %v1117 = vadd.f32 %v1104, %v1116
        %v1118 = vpop.f32.mrf.mxu0
        %1119 = vdwg.mxu0
        %1120 = vmatpush.bf16.msra.mxu0 %v955
        %1121 = vmatpush.bf16.msra.mxu0 %v953
        %1122 = vmatpush.bf16.msra.mxu0 %v951
        %1123 = vmatpush.bf16.msra.mxu0 %v949
        %1124 = vmatpush.bf16.msra.mxu0 %v947
        %1125 = vmatpush.bf16.msra.mxu0 %v945
        %1126 = vmatpush.bf16.msra.mxu0 %v943
        %1127 = vmatpush.bf16.msra.mxu0 %v941
        %1128 = vmatmul.bf16.gmra.mxu0 %v740
        %v1129 = vpop.f32.mrf.mxu0
        %v1130 = vadd.f32 0.0, %v1129
        %v1131 = vpop.f32.mrf.mxu0
        %1132 = vdwg.mxu0
        %1133 = vmatpush.bf16.msra.mxu0 %v971
        %1134 = vmatpush.bf16.msra.mxu0 %v969
        %1135 = vmatpush.bf16.msra.mxu0 %v967
        %1136 = vmatpush.bf16.msra.mxu0 %v965
        %1137 = vmatpush.bf16.msra.mxu0 %v963
        %1138 = vmatpush.bf16.msra.mxu0 %v961
        %1139 = vmatpush.bf16.msra.mxu0 %v959
        %1140 = vmatpush.bf16.msra.mxu0 %v957
        %1141 = vmatmul.bf16.gmra.mxu0 %v741
        %v1142 = vpop.f32.mrf.mxu0
        %v1143 = vadd.f32 %v1130, %v1142
        %v1144 = vpop.f32.mrf.mxu0
        %1145 = vdwg.mxu0
        %1146 = vmatpush.bf16.msra.mxu0 %v987
        %1147 = vmatpush.bf16.msra.mxu0 %v985
        %1148 = vmatpush.bf16.msra.mxu0 %v983
        %1149 = vmatpush.bf16.msra.mxu0 %v981
        %1150 = vmatpush.bf16.msra.mxu0 %v979
        %1151 = vmatpush.bf16.msra.mxu0 %v977
        %1152 = vmatpush.bf16.msra.mxu0 %v975
        %1153 = vmatpush.bf16.msra.mxu0 %v973
        %1154 = vmatmul.bf16.gmra.mxu0 %v742
        %v1155 = vpop.f32.mrf.mxu0
        %v1156 = vadd.f32 %v1143, %v1155
        %v1157 = vpop.f32.mrf.mxu0
        %1158 = vdwg.mxu0
        %1159 = vmatpush.bf16.msra.mxu0 %v1003
        %1160 = vmatpush.bf16.msra.mxu0 %v1001
        %1161 = vmatpush.bf16.msra.mxu0 %v999
        %1162 = vmatpush.bf16.msra.mxu0 %v997
        %1163 = vmatpush.bf16.msra.mxu0 %v995
        %1164 = vmatpush.bf16.msra.mxu0 %v993
        %1165 = vmatpush.bf16.msra.mxu0 %v991
        %1166 = vmatpush.bf16.msra.mxu0 %v989
        %1167 = vmatmul.bf16.gmra.mxu0 %v743
        %v1168 = vpop.f32.mrf.mxu0
        %v1169 = vadd.f32 %v1156, %v1168
        %v1170 = vpop.f32.mrf.mxu0
        %1171 = vdwg.mxu0
        %v1172 = vadd.f32 %v666, %v1117
        %v1173 = vadd.f32 %v667, %v1169
        %1174 = vst [vmem:[#allocation2] sm:$0xff] %v1172
        %1175 = vst [vmem:[#allocation2 + $0x8] sm:$0xff] %v1173
        %p1176 = scmp.eq.s32.totalorder %s23, 8
        // Predicated region
        $region83: #{resnet_forward.26} parent=73 // pred_check
          %p1177 = pneg %p1176
        $region84: #{resnet_forward.26} parent=73 // pred_check_branch
          %1179 = sbr.rel (%p1177) target = $region86
        $region85: #{resnet_forward.26} parent=73 // pred_region
          %v1180 = vld [vmem:[#allocation2] sm:$0xff]
          %v1181 = vld [vmem:[#allocation2 + $0x8] sm:$0xff]
          %v1182 = vld [vmem:[%s633] sm:$0x3]
          %v1184 = vperm.slane %v1182, 0
          %v1185 = vperm.slane %v1182, 1
          %v1188 = vmul.f32 %v1180, %v1184
          %v1189 = vmul.f32 %v1181, %v1185
          %v1190 = vld [vmem:[%s638] sm:$0x3]
          %v1192 = vperm.slane %v1190, 0
          %v1193 = vperm.slane %v1190, 1
          %v1196 = vadd.f32 %v1188, %v1192
          %v1197 = vadd.f32 %v1189, %v1193
          %v1198 = vld [vmem:[%s648] sm:$0xff]
          %v1199 = vunpack.c.l.bf16 %v1198
          %v1200 = vunpack.c.h.bf16 %v1198
          %v1201 = vadd.f32 %v1196, %v1199
          %v1202 = vadd.f32 %v1197, %v1200
          %v1203 = vmax.f32 %v1201, 0.0
          %v1204 = vmax.f32 %v1202, 0.0
          %v1205 = vpack.c.bf16 %v1204, %v1203
          %1206 = vst [vmem:[%s658] sm:$0xff] %v1205
        $region86: #{resnet_forward.26} parent=73 // pred_fallthru
          _
        %s1207 = smul.u32 2, %s22
        %p1208 = scmp.lt.s32.totalorder %s21, 0
        %s1209 = scalar_select %p1208, %s21, 0
        %p1210 = scmp.lt.s32.totalorder %s1207, 3
        %s1211 = scalar_select %p1210, %s1207, 3
        %s1212 = smul.addr %s1209, 4
        %s1213 = sadd.s32 %s1211, %s1212
        %s1214 = smul.addr %s1213, 4
        %s1215 = scalar_lea.vmem %s5, %s1214
        // Predicated region
        $region87: #{resnet_forward.26} parent=73 // pred_check
          %p1216 = pneg %p191
        $region88: #{resnet_forward.26} parent=73 // pred_check_branch
          %1218 = sbr.rel (%p1216) target = $region90
        $region89: #{resnet_forward.26} parent=73 // pred_region
          %s1219 = smul.u32 2, %s22
        $region90: #{resnet_forward.26} parent=73 // pred_fallthru
          _
      $region74: #{resnet_forward.26} parent=5 // pred_fallthru
        _
      %p1220 = scmp.le.s32.totalorder 2, %s11
      // Predicated region
      $region91: #{resnet_forward.26} parent=5 // pred_check
        %p1221 = pneg %p1220
      $region92: #{resnet_forward.26} parent=5 // pred_check_branch
        %1223 = sbr.rel (%p1221) target = $region94
      $region93: #{resnet_forward.26} parent=5 // pred_region
        %s1224 = ssub.s32 %s11, 2
        // Predicated region
        $region95: #{resnet_forward.26} parent=93 // pred_check
          %p1225 = pneg %p197
        $region96: #{resnet_forward.26} parent=93 // pred_check_branch
          %1227 = sbr.rel (%p1225) target = $region98
        $region97: #{resnet_forward.26} parent=93 // pred_region
          %s1228 = smul.u32 2, %s25
          %p1229 = scmp.lt.s32.totalorder %s24, 0
          %s1230 = scalar_select %p1229, %s24, 0
          %p1231 = scmp.lt.s32.totalorder %s1228, 3
          %s1232 = scalar_select %p1231, %s1228, 3
          %s1233 = smul.addr %s1230, 4
          %s1234 = sadd.s32 %s1232, %s1233
          %s1235 = smul.addr %s1234, 4
          %s1236 = scalar_lea.vmem %s5, %s1235
        $region98: #{resnet_forward.26} parent=93 // pred_fallthru
          _
      $region94: #{resnet_forward.26} parent=5 // pred_fallthru
        _
    $region6: #{resnet_forward.26} parent=1 // loop_footer
      %s15 = sadd.s32 1, %s11
    $region7: #{resnet_forward.26} parent=1 // loop_footer_branch
      %10 = sbr.rel target = $region3
    $region8: #{resnet_forward.26} parent=1 // loop_exit
      _

// kernel: resnet_forward.27
$region0: #{resnet_forward.27}
  #allocation0 [shape = 'u32[]', space=smem, size = 0x4, offset = 0x4, fixed_abs, tag = 'smem constant byte address 0x4 - core index']
  #allocation1 [shape = 'u32[72,128]{1,0:T(1,128)}', space=vmem, size = 0x9000, scoped, tag = 'internal scratch']
  %s0 = inlined_call_operand.vmem [shape: bf16[2,1,512], index: 0, kind: input, shape index: {}]
  %s1 = inlined_call_operand.vmem [shape: f32[512,128], index: 1, kind: input, shape index: {}]
  %s2 = inlined_call_operand.vmem [shape: f32[1,128], index: 2, kind: input, shape index: {}]
  %s3 = inlined_call_operand.hbm [shape: f32[2,128], index: 3, kind: output, shape index: {}]
  %s4 = sld [smem:[#allocation0]]
  $region22: #{resnet_forward.27} parent=0
    _
  %s6 = ssub.s32 1, %s4
  %s7 = scalar_select 0, %s6, %s4
  $region1: #{resnet_forward.27} parent=0
    #allocation2 [shape = 'u8[1024]{0}', space=vmem, size = 0x400, scoped, tag = 'output window, operand 0, single buffered']
    #allocation3 [shape = 's32[1]{0}', space=sflag, size = 0x4, scoped, tag = 'scoped memory for resnet_forward.27']
    %8 = vsyncpa [#allocation3], 0
    // Predicated region
    $region2: #{resnet_forward.27} parent=1 // pred_check
      _
    $region3: #{resnet_forward.27} parent=1 // pred_check_branch
      %10 = sbr.rel (0) target = $region5
    $region4: #{resnet_forward.27} parent=1 // pred_region
      _
    $region5: #{resnet_forward.27} parent=1 // pred_fallthru
      _
    // Predicated region
    $region6: #{resnet_forward.27} parent=1 // pred_check
      _
    $region7: #{resnet_forward.27} parent=1 // pred_check_branch
      %12 = sbr.rel (0) target = $region9
    $region8: #{resnet_forward.27} parent=1 // pred_region
      _
    $region9: #{resnet_forward.27} parent=1 // pred_fallthru
      _
    // Predicated region
    $region10: #{resnet_forward.27} parent=1 // pred_check
      _
    $region11: #{resnet_forward.27} parent=1 // pred_check_branch
      %14 = sbr.rel (0) target = $region13
    $region12: #{resnet_forward.27} parent=1 // pred_region
      _
    $region13: #{resnet_forward.27} parent=1 // pred_fallthru
      _
    %v15 = vld [vmem:[%s0] sm:$0xf]
    %v16 = vld [vmem:[%s0 + $0x4] sm:$0xf]
    %v17 = vunpack.c.l.bf16 %v15
    %v18 = vunpack.c.l.bf16 %v16
    %v19 = vadd.f32 %v17, 0.0
    %v20 = vadd.f32 %v18, 0.0
    %v21 = vld [vmem:[%s1] sm:$0xff]
    %v22 = vld [vmem:[%s1 + $0x8] sm:$0xff]
    %v23 = vld [vmem:[%s1 + $0x10] sm:$0xff]
    %v24 = vld [vmem:[%s1 + $0x18] sm:$0xff]
    %v25 = vld [vmem:[%s1 + $0x20] sm:$0xff]
    %v26 = vld [vmem:[%s1 + $0x28] sm:$0xff]
    %v27 = vld [vmem:[%s1 + $0x30] sm:$0xff]
    %v28 = vld [vmem:[%s1 + $0x38] sm:$0xff]
    %v29 = vld [vmem:[%s1 + $0x40] sm:$0xff]
    %v30 = vld [vmem:[%s1 + $0x48] sm:$0xff]
    %v31 = vld [vmem:[%s1 + $0x50] sm:$0xff]
    %v32 = vld [vmem:[%s1 + $0x58] sm:$0xff]
    %v33 = vld [vmem:[%s1 + $0x60] sm:$0xff]
    %v34 = vld [vmem:[%s1 + $0x68] sm:$0xff]
    %v35 = vld [vmem:[%s1 + $0x70] sm:$0xff]
    %v36 = vld [vmem:[%s1 + $0x78] sm:$0xff]
    %v37 = vld [vmem:[%s1 + $0x80] sm:$0xff]
    %v38 = vld [vmem:[%s1 + $0x88] sm:$0xff]
    %v39 = vld [vmem:[%s1 + $0x90] sm:$0xff]
    %v40 = vld [vmem:[%s1 + $0x98] sm:$0xff]
    %v41 = vld [vmem:[%s1 + $0xa0] sm:$0xff]
    %v42 = vld [vmem:[%s1 + $0xa8] sm:$0xff]
    %v43 = vld [vmem:[%s1 + $0xb0] sm:$0xff]
    %v44 = vld [vmem:[%s1 + $0xb8] sm:$0xff]
    %v45 = vld [vmem:[%s1 + $0xc0] sm:$0xff]
    %v46 = vld [vmem:[%s1 + $0xc8] sm:$0xff]
    %v47 = vld [vmem:[%s1 + $0xd0] sm:$0xff]
    %v48 = vld [vmem:[%s1 + $0xd8] sm:$0xff]
    %v49 = vld [vmem:[%s1 + $0xe0] sm:$0xff]
    %v50 = vld [vmem:[%s1 + $0xe8] sm:$0xff]
    %v51 = vld [vmem:[%s1 + $0xf0] sm:$0xff]
    %v52 = vld [vmem:[%s1 + $0xf8] sm:$0xff]
    %v53 = vld [vmem:[%s1 + $0x100] sm:$0xff]
    %v54 = vld [vmem:[%s1 + $0x108] sm:$0xff]
    %v55 = vld [vmem:[%s1 + $0x110] sm:$0xff]
    %v56 = vld [vmem:[%s1 + $0x118] sm:$0xff]
    %v57 = vld [vmem:[%s1 + $0x120] sm:$0xff]
    %v58 = vld [vmem:[%s1 + $0x128] sm:$0xff]
    %v59 = vld [vmem:[%s1 + $0x130] sm:$0xff]
    %v60 = vld [vmem:[%s1 + $0x138] sm:$0xff]
    %v61 = vld [vmem:[%s1 + $0x140] sm:$0xff]
    %v62 = vld [vmem:[%s1 + $0x148] sm:$0xff]
    %v63 = vld [vmem:[%s1 + $0x150] sm:$0xff]
    %v64 = vld [vmem:[%s1 + $0x158] sm:$0xff]
    %v65 = vld [vmem:[%s1 + $0x160] sm:$0xff]
    %v66 = vld [vmem:[%s1 + $0x168] sm:$0xff]
    %v67 = vld [vmem:[%s1 + $0x170] sm:$0xff]
    %v68 = vld [vmem:[%s1 + $0x178] sm:$0xff]
    %v69 = vld [vmem:[%s1 + $0x180] sm:$0xff]
    %v70 = vld [vmem:[%s1 + $0x188] sm:$0xff]
    %v71 = vld [vmem:[%s1 + $0x190] sm:$0xff]
    %v72 = vld [vmem:[%s1 + $0x198] sm:$0xff]
    %v73 = vld [vmem:[%s1 + $0x1a0] sm:$0xff]
    %v74 = vld [vmem:[%s1 + $0x1a8] sm:$0xff]
    %v75 = vld [vmem:[%s1 + $0x1b0] sm:$0xff]
    %v76 = vld [vmem:[%s1 + $0x1b8] sm:$0xff]
    %v77 = vld [vmem:[%s1 + $0x1c0] sm:$0xff]
    %v78 = vld [vmem:[%s1 + $0x1c8] sm:$0xff]
    %v79 = vld [vmem:[%s1 + $0x1d0] sm:$0xff]
    %v80 = vld [vmem:[%s1 + $0x1d8] sm:$0xff]
    %v81 = vld [vmem:[%s1 + $0x1e0] sm:$0xff]
    %v82 = vld [vmem:[%s1 + $0x1e8] sm:$0xff]
    %v83 = vld [vmem:[%s1 + $0x1f0] sm:$0xff]
    %v84 = vld [vmem:[%s1 + $0x1f8] sm:$0xff]
    %v85 = vld [vmem:[%s2] sm:$0x1]
    %v87 = vperm.slane %v85, 0
    %v91 = vperm.slane %v19, 0
    %v92 = vperm.slane %v19, 2
    %v93 = vperm.slane %v19, 4
    %v94 = vperm.slane %v19, 6
    %v95 = vperm.slane %v20, 0
    %v96 = vperm.slane %v20, 2
    %v97 = vperm.slane %v20, 4
    %v98 = vperm.slane %v20, 6
    %vm99 = vcmask 1041409
    %v100 = vsel %vm99, %v95, %v91
    %v101 = vsel %vm99, %v96, %v92
    %v102 = vsel %vm99, %v97, %v93
    %v103 = vsel %vm99, %v98, %v94
    %108 = vmatpush.msra.mxu0 %v36
    %109 = vmatpush.msra.mxu0 %v35
    %110 = vmatpush.msra.mxu0 %v34
    %111 = vmatpush.msra.mxu0 %v33
    %112 = vmatpush.msra.mxu0 %v32
    %113 = vmatpush.msra.mxu0 %v31
    %114 = vmatpush.msra.mxu0 %v30
    %115 = vmatpush.msra.mxu0 %v29
    %116 = vmatpush.msra.mxu0 %v28
    %117 = vmatpush.msra.mxu0 %v27
    %118 = vmatpush.msra.mxu0 %v26
    %119 = vmatpush.msra.mxu0 %v25
    %120 = vmatpush.msra.mxu0 %v24
    %121 = vmatpush.msra.mxu0 %v23
    %122 = vmatpush.msra.mxu0 %v22
    %123 = vmatpush.msra.mxu0 %v21
    %124 = vmatmul.f32.gmra.mxu0 %v100
    %v125 = vpop.f32.mrf.mxu0
    %v126 = vadd.f32 %v87, %v125
    %127 = vdwg.mxu0
    %128 = vmatpush.msra.mxu0 %v52
    %129 = vmatpush.msra.mxu0 %v51
    %130 = vmatpush.msra.mxu0 %v50
    %131 = vmatpush.msra.mxu0 %v49
    %132 = vmatpush.msra.mxu0 %v48
    %133 = vmatpush.msra.mxu0 %v47
    %134 = vmatpush.msra.mxu0 %v46
    %135 = vmatpush.msra.mxu0 %v45
    %136 = vmatpush.msra.mxu0 %v44
    %137 = vmatpush.msra.mxu0 %v43
    %138 = vmatpush.msra.mxu0 %v42
    %139 = vmatpush.msra.mxu0 %v41
    %140 = vmatpush.msra.mxu0 %v40
    %141 = vmatpush.msra.mxu0 %v39
    %142 = vmatpush.msra.mxu0 %v38
    %143 = vmatpush.msra.mxu0 %v37
    %144 = vmatmul.f32.gmra.mxu0 %v101
    %v145 = vpop.f32.mrf.mxu0
    %v146 = vadd.f32 %v126, %v145
    %147 = vdwg.mxu0
    %148 = vmatpush.msra.mxu0 %v68
    %149 = vmatpush.msra.mxu0 %v67
    %150 = vmatpush.msra.mxu0 %v66
    %151 = vmatpush.msra.mxu0 %v65
    %152 = vmatpush.msra.mxu0 %v64
    %153 = vmatpush.msra.mxu0 %v63
    %154 = vmatpush.msra.mxu0 %v62
    %155 = vmatpush.msra.mxu0 %v61
    %156 = vmatpush.msra.mxu0 %v60
    %157 = vmatpush.msra.mxu0 %v59
    %158 = vmatpush.msra.mxu0 %v58
    %159 = vmatpush.msra.mxu0 %v57
    %160 = vmatpush.msra.mxu0 %v56
    %161 = vmatpush.msra.mxu0 %v55
    %162 = vmatpush.msra.mxu0 %v54
    %163 = vmatpush.msra.mxu0 %v53
    %164 = vmatmul.f32.gmra.mxu0 %v102
    %v165 = vpop.f32.mrf.mxu0
    %v166 = vadd.f32 %v146, %v165
    %167 = vdwg.mxu0
    %168 = vmatpush.msra.mxu0 %v84
    %169 = vmatpush.msra.mxu0 %v83
    %170 = vmatpush.msra.mxu0 %v82
    %171 = vmatpush.msra.mxu0 %v81
    %172 = vmatpush.msra.mxu0 %v80
    %173 = vmatpush.msra.mxu0 %v79
    %174 = vmatpush.msra.mxu0 %v78
    %175 = vmatpush.msra.mxu0 %v77
    %176 = vmatpush.msra.mxu0 %v76
    %177 = vmatpush.msra.mxu0 %v75
    %178 = vmatpush.msra.mxu0 %v74
    %179 = vmatpush.msra.mxu0 %v73
    %180 = vmatpush.msra.mxu0 %v72
    %181 = vmatpush.msra.mxu0 %v71
    %182 = vmatpush.msra.mxu0 %v70
    %183 = vmatpush.msra.mxu0 %v69
    %184 = vmatmul.f32.gmra.mxu0 %v103
    %v185 = vpop.f32.mrf.mxu0
    %v186 = vadd.f32 %v166, %v185
    %187 = vdwg.mxu0
    %188 = vst [vmem:[#allocation2] sm:$0x3] %v186
    // Predicated region
    $region14: #{resnet_forward.27} parent=1 // pred_check
      _
    $region15: #{resnet_forward.27} parent=1 // pred_check_branch
      %190 = sbr.rel (0) target = $region17
    $region16: #{resnet_forward.27} parent=1 // pred_region
      %192 = vsyncadd [#allocation3], 0
      %s194 = sshll.u32 [#allocation2], 4
      %s195 = int_to_ptr.vmem [resolvable:$true] %s194
      %s196 = sshll.u32 %s3, 4
      %s197 = int_to_ptr.hbm [resolvable:$true] %s196
      %199 = dma.vmem_to_hbm [thread:$0]  %s195, 32, %s197, [#allocation3]
    $region17: #{resnet_forward.27} parent=1 // pred_fallthru
      _
    // Predicated region
    $region18: #{resnet_forward.27} parent=1 // pred_check
      _
    $region19: #{resnet_forward.27} parent=1 // pred_check_branch
      %201 = sbr.rel (0) target = $region21
    $region20: #{resnet_forward.27} parent=1 // pred_region
      %203 = dma.done [#allocation3], 32
    $region21: #{resnet_forward.27} parent=1 // pred_fallthru
      _
    %204 = vsyncpa [#allocation3], 1

</llo_original>
